<compile_context>
chip_gen: v5e
topology: v5e:2x2
jax: 0.10.0
libtpu: 0.0.40
codegen_flags: <defaults>
</compile_context>

<pallas_src>
import numpy as np
import jax
import jax.numpy as jnp
from jax import lax
from jax.experimental import pallas as pl
from jax.experimental.pallas import tpu as pltpu

_MAX_CHUNK_T = 128       # max time steps per grid step
_K_BLOCK = 8             # A-power blocking factor (time steps per serial matmul)
_LANE = 128
_SUBLANE = 8
_VMEM_BUDGET = 24 * 1024 * 1024   # stay inside the default 32 MiB scoped VMEM


def _round_up(x, m):
    return (x + m - 1) // m * m


def _ceil_div(a, b):
    return -(-a // b)


def _make_kernel(depth, chunk_t, bsz_p, n_p, k):
    num_blocks = chunk_t // k
    nb_b = num_blocks * bsz_p                 # rows of one offset slab
    unroll = num_blocks if num_blocks <= 8 else 4

    def kernel(*refs):
        # inputs : x2d, (AtW_l, Bt_l) * depth, Ct_last, Dt_last
        # outputs: y2d
        # scratch: h_carry (depth, bsz_p, n_p), ping (tb, n_p), pong (tb, n_p)
        n_in = 1 + 2 * depth + 2
        x_ref = refs[0]
        w_refs = refs[1:1 + 2 * depth]
        ct_ref = refs[1 + 2 * depth]
        dt_ref = refs[2 + 2 * depth]
        y_ref = refs[n_in]
        h_carry = refs[n_in + 1]
        bufs = (refs[n_in + 2], refs[n_in + 3])

        @pl.when(pl.program_id(0) == 0)
        def _init():
            h_carry[...] = jnp.zeros_like(h_carry)

        def run_layer(layer, in_ref, atw_ref, bt_ref, out_buf):
            # Phase 1: hoisted input projection U_t = x_t @ B^T for the whole
            # chunk (one big MXU matmul).  Rows are offset-major: (r, m, b).
            out_buf[...] = jnp.dot(in_ref[...], bt_ref[...],
                                   preferred_element_type=jnp.float32)

            # Phase 2: within-block prefix  P[r] = P[r-1] @ A^T + U[r].
            # Each slab holds (all blocks, offset r); chain of k-1 LARGE matmuls.
            for r in range(1, k):
                prev = out_buf[pl.ds((r - 1) * nb_b, nb_b), :]
                out_buf[pl.ds(r * nb_b, nb_b), :] += jnp.dot(
                    prev, atw_ref[:, :n_p], preferred_element_type=jnp.float32)

            # Phase 3: serial carry chain — k time steps per iteration.
            #   wide = c_m @ [A^T | A^T^2 | ... | A^T^k]
            #   h_{m*k+r} = wide[:, r*N:(r+1)*N] + P[m, r];  c_{m+1} = h_{m*k+k-1}
            def block_step(m, h):
                wide = jnp.dot(h, atw_ref[...],
                               preferred_element_type=jnp.float32)  # (bsz_p, k*n_p)
                row_last = pl.multiple_of((k - 1) * nb_b + m * bsz_p, bsz_p)
                h_new = out_buf[pl.ds(row_last, bsz_p), :] + wide[:, (k - 1) * n_p:]
                out_buf[pl.ds(row_last, bsz_p), :] = h_new
                for r in range(k - 1):
                    row = pl.multiple_of(r * nb_b + m * bsz_p, bsz_p)
                    out_buf[pl.ds(row, bsz_p), :] += wide[:, r * n_p:(r + 1) * n_p]
                return h_new

            h_last = lax.fori_loop(0, num_blocks, block_step, h_carry[layer],
                                   unroll=unroll)
            h_carry[layer] = h_last

        for layer in range(depth):
            in_ref = x_ref if layer == 0 else bufs[(layer - 1) % 2]
            run_layer(layer, in_ref, w_refs[2 * layer], w_refs[2 * layer + 1],
                      bufs[layer % 2])

        # Output projection of the LAST layer only.  Its input buffer (the one
        # NOT written by the last layer) is still intact for the D term.
        d_src = x_ref if depth == 1 else bufs[(depth - 2) % 2]
        y_ref[...] = (
            jnp.dot(bufs[(depth - 1) % 2][...], ct_ref[...],
                    preferred_element_type=jnp.float32)
            + jnp.dot(d_src[...], dt_ref[...],
                      preferred_element_type=jnp.float32)
        ).astype(y_ref.dtype)
        # TODO(synk): apply non_linearity here if it is not the identity.

    return kernel


def _prep_weights(params, k, n_p, d_out_p, d_in):
    """Pre-transposed, lane-padded weights; AtW = [A^T | A^T^2 | ... | A^T^k]."""
    depth = len(params)
    n = params[0][0].shape[0]
    flat = []
    for li, (A, B, C, D) in enumerate(params):
        at = jnp.zeros((n_p, n_p), jnp.float32).at[:n, :n].set(A.T)
        pows = [at]
        for _ in range(k - 1):
            pows.append(jnp.dot(pows[-1], at, precision="highest"))
        flat.append(jnp.concatenate(pows, axis=1))               # (n_p, k*n_p)
        in_dim = B.shape[1]
        in_rows = d_in if li == 0 else n_p
        bt = jnp.zeros((in_rows, n_p), jnp.float32).at[:in_dim, :n].set(B.T)
        flat.append(bt)
    C, D = params[-1][2], params[-1][3]
    d_out = C.shape[0]
    ct = jnp.zeros((n_p, d_out_p), jnp.float32).at[:n, :d_out].set(C.T)
    d_rows = d_in if depth == 1 else n_p
    dt = jnp.zeros((d_rows, d_out_p), jnp.float32).at[:D.shape[1], :d_out].set(D.T)
    return flat, ct, dt


def _deep_smm_forward_impl(x_btf, params):
    """DeepSMMModel.forward.  x_btf: (batch, seq, input_dim) -> (batch, seq, d_out)."""
    x = jnp.transpose(x_btf.astype(jnp.float32), (1, 0, 2))      # (T, B, F)
    T, bsz, d_in = x.shape
    depth = len(params)
    n = params[0][0].shape[0]
    d_out = params[-1][2].shape[0]

    n_p = _round_up(n, _LANE)                 # state dim padded to 128 lanes
    d_out_p = _round_up(d_out, _LANE)         # output dim padded to 128 lanes
    bsz_p = _round_up(bsz, _SUBLANE)          # batch padded to 8 sublanes
    k = _K_BLOCK

    # ---- VMEM-budgeted chunk geometry (also minimizes tail padding) ----
    w_bytes = 0
    for li in range(depth):
        in_rows = d_in if li == 0 else n_p
        w_bytes += (n_p * k * n_p + in_rows * n_p) * 4
    w_bytes += (n_p + (d_in if depth == 1 else n_p)) * d_out_p * 4
    w_bytes *= 2      # pipeline double-buffers every input block

    n_chunks = max(1, _ceil_div(T, _MAX_CHUNK_T))
    while True:
        chunk_t = _round_up(_ceil_div(T, n_chunks), k)
        tb = chunk_t * bsz_p
        dyn = 4 * (2 * tb * (d_in + d_out_p)      # double-buffered x / y blocks
                   + 2 * tb * n_p                 # ping/pong hidden buffers
                   + depth * bsz_p * n_p)         # carried state
        if w_bytes + dyn <= _VMEM_BUDGET or chunk_t <= k:
            break
        n_chunks += 1
    T_p = n_chunks * chunk_t
    num_blocks = chunk_t // k
    tb = chunk_t * bsz_p

    # ---- pad and permute x to chunk/offset-major rows: (chunk, offset, block, b) ----
    x = jnp.pad(x, ((0, T_p - T), (0, bsz_p - bsz), (0, 0)))
    x = x.reshape(n_chunks, num_blocks, k, bsz_p, d_in)
    x = jnp.transpose(x, (0, 2, 1, 3, 4))
    x2d = x.reshape(T_p * bsz_p, d_in)

    flat_w, ct, dt = _prep_weights(params, k, n_p, d_out_p, d_in)

    in_specs = [pl.BlockSpec((tb, d_in), lambda c: (c, 0))]
    for w in flat_w:
        in_specs.append(pl.BlockSpec(w.shape, lambda c: (0, 0)))
    in_specs.append(pl.BlockSpec(ct.shape, lambda c: (0, 0)))
    in_specs.append(pl.BlockSpec(dt.shape, lambda c: (0, 0)))

    # Advisory cost estimate for XLA's scheduler.
    nb_b = num_blocks * bsz_p
    flops = 0
    for li in range(depth):
        in_dim_l = d_in if li == 0 else n_p
        flops += 2 * tb * in_dim_l * n_p               # input projection
        flops += 2 * (k - 1) * nb_b * n_p * n_p        # within-block prefixes
        flops += 2 * tb * n_p * n_p                    # carry-chain wide matmuls
    flops += 2 * tb * (n_p + (d_in if depth == 1 else n_p)) * d_out_p
    flops *= n_chunks
    bytes_accessed = 4 * (T_p * bsz_p * (d_in + d_out_p)
                          + sum(int(np.prod(w.shape)) for w in flat_w)
                          + int(np.prod(ct.shape)) + int(np.prod(dt.shape)))

    grid_spec = pltpu.PrefetchScalarGridSpec(
        num_scalar_prefetch=0,
        grid=(n_chunks,),
        in_specs=in_specs,
        out_specs=pl.BlockSpec((tb, d_out_p), lambda c: (c, 0)),
        scratch_shapes=[
            pltpu.VMEM((depth, bsz_p, n_p), jnp.float32),   # carried h per layer
            pltpu.VMEM((tb, n_p), jnp.float32),             # ping
            pltpu.VMEM((tb, n_p), jnp.float32),             # pong
        ],
    )

    y2d = pl.pallas_call(
        _make_kernel(depth, chunk_t, bsz_p, n_p, k),
        out_shape=jax.ShapeDtypeStruct((T_p * bsz_p, d_out_p), jnp.float32),
        grid_spec=grid_spec,
        cost_estimate=pl.CostEstimate(flops=int(flops), transcendentals=0,
                                      bytes_accessed=int(bytes_accessed)),
        compiler_params=pltpu.CompilerParams(
            dimension_semantics=("arbitrary",)),   # time recurrence is sequential
    )(x2d, *flat_w, ct, dt)

    # Un-permute back to time-major and strip all padding.
    y = y2d.reshape(n_chunks, k, num_blocks, bsz_p, d_out_p)
    y = jnp.transpose(y, (0, 2, 1, 3, 4)).reshape(T_p, bsz_p, d_out_p)
    y = y[:T, :bsz, :d_out]
    return jnp.transpose(y, (1, 0, 2))              # (batch, seq, d_out)


deep_smm_forward = jax.jit(_deep_smm_forward_impl)


def deep_smm_reference(x_btf, params):
    """Pure-JAX reference (lax.scan) for correctness checking."""
    x = jnp.transpose(x_btf.astype(jnp.float32), (1, 0, 2))
    outputs = None
    cur = x
    for (A, B, C, D) in params:
        bsz = cur.shape[1]
        N = A.shape[0]

        def step(h, x_t):
            h_new = h @ A.T + x_t @ B.T
            y = h_new @ C.T + x_t @ D.T
            return h_new, (h_new, y)

        h0 = jnp.zeros((bsz, N), jnp.float32)
        _, (hiddens, outputs) = jax.lax.scan(step, h0, cur)
        cur = hiddens
    return jnp.transpose(outputs, (1, 0, 2))


def init_params(key, depth, num_hidden_state, input_dim, output_dim):
    """Deterministic (A, B, C, D) per layer, matching DeepSMMModel.__init__ dims."""
    params = []
    first = True
    for i in range(depth):
        d_in = input_dim if first else num_hidden_state
        d_out = num_hidden_state if i < depth - 1 else output_dim
        first = False
        k1, k2, k3, k4, key = jax.random.split(key, 5)
        A = 0.3 * jax.random.normal(k1, (num_hidden_state, num_hidden_state),
                                    jnp.float32) / np.sqrt(num_hidden_state)
        B = jax.random.normal(k2, (num_hidden_state, d_in), jnp.float32) / np.sqrt(d_in)
        C = jax.random.normal(k3, (d_out, num_hidden_state), jnp.float32) / np.sqrt(num_hidden_state)
        D = jax.random.normal(k4, (d_out, d_in), jnp.float32) / np.sqrt(d_in)
        params.append((A, B, C, D))
    return params


if __name__ == "__main__":
    batch, seq, input_dim = 2, 40, 4
    num_hidden_state, output_dim, depth = 32, 4, 3

    key = jax.random.PRNGKey(0)
    kx, kp = jax.random.split(key)
    x = jax.random.normal(kx, (batch, seq, input_dim), jnp.float32)
    params = init_params(kp, depth, num_hidden_state, input_dim, output_dim)

    out = jax.block_until_ready(deep_smm_forward(x, params))
    ref = jax.block_until_ready(deep_smm_reference(x, params))

    np.testing.assert_allclose(np.asarray(out), np.asarray(ref),
                               rtol=1e-3, atol=1e-3)
    assert out.shape == (batch, seq, output_dim)
    print("KERNEL_OK")
</pallas_src>

<mosaic_0001>
module attributes {stable_mosaic.version = 11 : i64} {
  func.func @kernel(%arg0: i32, %arg1: memref<320x4xf32, #tpu.memory_space<vmem>>, %arg2: memref<128x1024xf32, #tpu.memory_space<vmem>>, %arg3: memref<4x128xf32, #tpu.memory_space<vmem>>, %arg4: memref<128x1024xf32, #tpu.memory_space<vmem>>, %arg5: memref<128x128xf32, #tpu.memory_space<vmem>>, %arg6: memref<128x1024xf32, #tpu.memory_space<vmem>>, %arg7: memref<128x128xf32, #tpu.memory_space<vmem>>, %arg8: memref<128x128xf32, #tpu.memory_space<vmem>>, %arg9: memref<128x128xf32, #tpu.memory_space<vmem>>, %arg10: memref<320x128xf32, #tpu.memory_space<vmem>>, %arg11: memref<3x8x128xf32, #tpu.memory_space<vmem>>, %arg12: memref<320x128xf32, #tpu.memory_space<vmem>>, %arg13: memref<320x128xf32, #tpu.memory_space<vmem>>) attributes {dimension_semantics = [#tpu.dimension_semantics<arbitrary>], iteration_bounds = array<i64: 1>, scalar_prefetch = 0 : i64, scratch_operands = 3 : i64, tpu.core_type = #tpu.core_type<tc>, window_params = [{transform_indices = @transform_0, window_bounds = array<i64: 320, 4>}, {pipeline_mode = #tpu.pipeline_mode<synchronous>, transform_indices = @transform_1, window_bounds = array<i64: 128, 1024>}, {pipeline_mode = #tpu.pipeline_mode<synchronous>, transform_indices = @transform_2, window_bounds = array<i64: 4, 128>}, {pipeline_mode = #tpu.pipeline_mode<synchronous>, transform_indices = @transform_3, window_bounds = array<i64: 128, 1024>}, {pipeline_mode = #tpu.pipeline_mode<synchronous>, transform_indices = @transform_4, window_bounds = array<i64: 128, 128>}, {pipeline_mode = #tpu.pipeline_mode<synchronous>, transform_indices = @transform_5, window_bounds = array<i64: 128, 1024>}, {pipeline_mode = #tpu.pipeline_mode<synchronous>, transform_indices = @transform_6, window_bounds = array<i64: 128, 128>}, {pipeline_mode = #tpu.pipeline_mode<synchronous>, transform_indices = @transform_7, window_bounds = array<i64: 128, 128>}, {pipeline_mode = #tpu.pipeline_mode<synchronous>, transform_indices = @transform_8, window_bounds = array<i64: 128, 128>}, {transform_indices = @transform_9, window_bounds = array<i64: 320, 128>}]} {
    %c0_i32 = arith.constant 0 : i32
    %0 = arith.cmpi eq, %arg0, %c0_i32 : i32
    %1 = arith.extui %0 : i1 to i32
    %c0_i32_0 = arith.constant 0 : i32
    %2 = arith.cmpi ne, %1, %c0_i32_0 : i32
    scf.if %2 {
      %cst_760 = arith.constant 0.000000e+00 : f32
      %1274 = vector.broadcast %cst_760 : f32 to vector<3x8x128xf32>
      %c0_761 = arith.constant 0 : index
      %c0_762 = arith.constant 0 : index
      %c0_763 = arith.constant 0 : index
      %1275 = vector.load %arg11[%c0_761, %c0_762, %c0_763] : memref<3x8x128xf32, #tpu.memory_space<vmem>>, vector<3x8x128xf32>
      tpu.vector_store %arg11[%c0_761, %c0_762, %c0_763], %1274 {strides = array<i32>} : memref<3x8x128xf32, #tpu.memory_space<vmem>>, vector<3x8x128xf32>,
    } else {
    }
    %c0 = arith.constant 0 : index
    %c0_1 = arith.constant 0 : index
    %3 = vector.load %arg1[%c0, %c0_1] : memref<320x4xf32, #tpu.memory_space<vmem>>, vector<320x4xf32>
    %c0_2 = arith.constant 0 : index
    %c0_3 = arith.constant 0 : index
    %4 = vector.load %arg3[%c0_2, %c0_3] : memref<4x128xf32, #tpu.memory_space<vmem>>, vector<4x128xf32>
    %cst = arith.constant dense<0.000000e+00> : vector<320x128xf32>
    %5 = tpu.matmul %3, %4, %cst {dimension_numbers = #tpu.dot_dimension_numbers<[1], [0], [0], [1], [0, 0, 1, 1], [], []>} : vector<320x4xf32>, vector<4x128xf32>, vector<320x128xf32> -> vector<320x128xf32>
    %c0_4 = arith.constant 0 : index
    %c0_5 = arith.constant 0 : index
    %6 = vector.load %arg12[%c0_4, %c0_5] : memref<320x128xf32, #tpu.memory_space<vmem>>, vector<320x128xf32>
    tpu.vector_store %arg12[%c0_4, %c0_5], %5 {strides = array<i32>} : memref<320x128xf32, #tpu.memory_space<vmem>>, vector<320x128xf32>,
    %c0_6 = arith.constant 0 : index
    %c0_7 = arith.constant 0 : index
    %7 = vector.load %arg12[%c0_6, %c0_7] : memref<320x128xf32, #tpu.memory_space<vmem>>, vector<40x128xf32>
    %c40 = arith.constant 40 : index
    %c0_8 = arith.constant 0 : index
    %8 = vector.load %arg12[%c40, %c0_8] : memref<320x128xf32, #tpu.memory_space<vmem>>, vector<40x128xf32>
    %c0_9 = arith.constant 0 : index
    %c0_10 = arith.constant 0 : index
    %9 = vector.load %arg2[%c0_9, %c0_10] : memref<128x1024xf32, #tpu.memory_space<vmem>>, vector<128x128xf32>
    %cst_11 = arith.constant dense<0.000000e+00> : vector<40x128xf32>
    %10 = tpu.matmul %7, %9, %cst_11 {dimension_numbers = #tpu.dot_dimension_numbers<[1], [0], [0], [1], [0, 0, 1, 1], [], []>} : vector<40x128xf32>, vector<128x128xf32>, vector<40x128xf32> -> vector<40x128xf32>
    %11 = arith.addf %8, %10 : vector<40x128xf32>
    %c40_12 = arith.constant 40 : index
    %c0_13 = arith.constant 0 : index
    %12 = vector.load %arg12[%c40_12, %c0_13] : memref<320x128xf32, #tpu.memory_space<vmem>>, vector<40x128xf32>
    tpu.vector_store %arg12[%c40_12, %c0_13], %11 {strides = array<i32>} : memref<320x128xf32, #tpu.memory_space<vmem>>, vector<40x128xf32>,
    %c40_14 = arith.constant 40 : index
    %c0_15 = arith.constant 0 : index
    %13 = vector.load %arg12[%c40_14, %c0_15] : memref<320x128xf32, #tpu.memory_space<vmem>>, vector<40x128xf32>
    %c80 = arith.constant 80 : index
    %c0_16 = arith.constant 0 : index
    %14 = vector.load %arg12[%c80, %c0_16] : memref<320x128xf32, #tpu.memory_space<vmem>>, vector<40x128xf32>
    %c0_17 = arith.constant 0 : index
    %c0_18 = arith.constant 0 : index
    %15 = vector.load %arg2[%c0_17, %c0_18] : memref<128x1024xf32, #tpu.memory_space<vmem>>, vector<128x128xf32>
    %cst_19 = arith.constant dense<0.000000e+00> : vector<40x128xf32>
    %16 = tpu.matmul %13, %15, %cst_19 {dimension_numbers = #tpu.dot_dimension_numbers<[1], [0], [0], [1], [0, 0, 1, 1], [], []>} : vector<40x128xf32>, vector<128x128xf32>, vector<40x128xf32> -> vector<40x128xf32>
    %17 = arith.addf %14, %16 : vector<40x128xf32>
    %c80_20 = arith.constant 80 : index
    %c0_21 = arith.constant 0 : index
    %18 = vector.load %arg12[%c80_20, %c0_21] : memref<320x128xf32, #tpu.memory_space<vmem>>, vector<40x128xf32>
    tpu.vector_store %arg12[%c80_20, %c0_21], %17 {strides = array<i32>} : memref<320x128xf32, #tpu.memory_space<vmem>>, vector<40x128xf32>,
    %c80_22 = arith.constant 80 : index
    %c0_23 = arith.constant 0 : index
    %19 = vector.load %arg12[%c80_22, %c0_23] : memref<320x128xf32, #tpu.memory_space<vmem>>, vector<40x128xf32>
    %c120 = arith.constant 120 : index
    %c0_24 = arith.constant 0 : index
    %20 = vector.load %arg12[%c120, %c0_24] : memref<320x128xf32, #tpu.memory_space<vmem>>, vector<40x128xf32>
    %c0_25 = arith.constant 0 : index
    %c0_26 = arith.constant 0 : index
    %21 = vector.load %arg2[%c0_25, %c0_26] : memref<128x1024xf32, #tpu.memory_space<vmem>>, vector<128x128xf32>
    %cst_27 = arith.constant dense<0.000000e+00> : vector<40x128xf32>
    %22 = tpu.matmul %19, %21, %cst_27 {dimension_numbers = #tpu.dot_dimension_numbers<[1], [0], [0], [1], [0, 0, 1, 1], [], []>} : vector<40x128xf32>, vector<128x128xf32>, vector<40x128xf32> -> vector<40x128xf32>
    %23 = arith.addf %20, %22 : vector<40x128xf32>
    %c120_28 = arith.constant 120 : index
    %c0_29 = arith.constant 0 : index
    %24 = vector.load %arg12[%c120_28, %c0_29] : memref<320x128xf32, #tpu.memory_space<vmem>>, vector<40x128xf32>
    tpu.vector_store %arg12[%c120_28, %c0_29], %23 {strides = array<i32>} : memref<320x128xf32, #tpu.memory_space<vmem>>, vector<40x128xf32>,
    %c120_30 = arith.constant 120 : index
    %c0_31 = arith.constant 0 : index
    %25 = vector.load %arg12[%c120_30, %c0_31] : memref<320x128xf32, #tpu.memory_space<vmem>>, vector<40x128xf32>
    %c160 = arith.constant 160 : index
    %c0_32 = arith.constant 0 : index
    %26 = vector.load %arg12[%c160, %c0_32] : memref<320x128xf32, #tpu.memory_space<vmem>>, vector<40x128xf32>
    %c0_33 = arith.constant 0 : index
    %c0_34 = arith.constant 0 : index
    %27 = vector.load %arg2[%c0_33, %c0_34] : memref<128x1024xf32, #tpu.memory_space<vmem>>, vector<128x128xf32>
    %cst_35 = arith.constant dense<0.000000e+00> : vector<40x128xf32>
    %28 = tpu.matmul %25, %27, %cst_35 {dimension_numbers = #tpu.dot_dimension_numbers<[1], [0], [0], [1], [0, 0, 1, 1], [], []>} : vector<40x128xf32>, vector<128x128xf32>, vector<40x128xf32> -> vector<40x128xf32>
    %29 = arith.addf %26, %28 : vector<40x128xf32>
    %c160_36 = arith.constant 160 : index
    %c0_37 = arith.constant 0 : index
    %30 = vector.load %arg12[%c160_36, %c0_37] : memref<320x128xf32, #tpu.memory_space<vmem>>, vector<40x128xf32>
    tpu.vector_store %arg12[%c160_36, %c0_37], %29 {strides = array<i32>} : memref<320x128xf32, #tpu.memory_space<vmem>>, vector<40x128xf32>,
    %c160_38 = arith.constant 160 : index
    %c0_39 = arith.constant 0 : index
    %31 = vector.load %arg12[%c160_38, %c0_39] : memref<320x128xf32, #tpu.memory_space<vmem>>, vector<40x128xf32>
    %c200 = arith.constant 200 : index
    %c0_40 = arith.constant 0 : index
    %32 = vector.load %arg12[%c200, %c0_40] : memref<320x128xf32, #tpu.memory_space<vmem>>, vector<40x128xf32>
    %c0_41 = arith.constant 0 : index
    %c0_42 = arith.constant 0 : index
    %33 = vector.load %arg2[%c0_41, %c0_42] : memref<128x1024xf32, #tpu.memory_space<vmem>>, vector<128x128xf32>
    %cst_43 = arith.constant dense<0.000000e+00> : vector<40x128xf32>
    %34 = tpu.matmul %31, %33, %cst_43 {dimension_numbers = #tpu.dot_dimension_numbers<[1], [0], [0], [1], [0, 0, 1, 1], [], []>} : vector<40x128xf32>, vector<128x128xf32>, vector<40x128xf32> -> vector<40x128xf32>
    %35 = arith.addf %32, %34 : vector<40x128xf32>
    %c200_44 = arith.constant 200 : index
    %c0_45 = arith.constant 0 : index
    %36 = vector.load %arg12[%c200_44, %c0_45] : memref<320x128xf32, #tpu.memory_space<vmem>>, vector<40x128xf32>
    tpu.vector_store %arg12[%c200_44, %c0_45], %35 {strides = array<i32>} : memref<320x128xf32, #tpu.memory_space<vmem>>, vector<40x128xf32>,
    %c200_46 = arith.constant 200 : index
    %c0_47 = arith.constant 0 : index
    %37 = vector.load %arg12[%c200_46, %c0_47] : memref<320x128xf32, #tpu.memory_space<vmem>>, vector<40x128xf32>
    %c240 = arith.constant 240 : index
    %c0_48 = arith.constant 0 : index
    %38 = vector.load %arg12[%c240, %c0_48] : memref<320x128xf32, #tpu.memory_space<vmem>>, vector<40x128xf32>
    %c0_49 = arith.constant 0 : index
    %c0_50 = arith.constant 0 : index
    %39 = vector.load %arg2[%c0_49, %c0_50] : memref<128x1024xf32, #tpu.memory_space<vmem>>, vector<128x128xf32>
    %cst_51 = arith.constant dense<0.000000e+00> : vector<40x128xf32>
    %40 = tpu.matmul %37, %39, %cst_51 {dimension_numbers = #tpu.dot_dimension_numbers<[1], [0], [0], [1], [0, 0, 1, 1], [], []>} : vector<40x128xf32>, vector<128x128xf32>, vector<40x128xf32> -> vector<40x128xf32>
    %41 = arith.addf %38, %40 : vector<40x128xf32>
    %c240_52 = arith.constant 240 : index
    %c0_53 = arith.constant 0 : index
    %42 = vector.load %arg12[%c240_52, %c0_53] : memref<320x128xf32, #tpu.memory_space<vmem>>, vector<40x128xf32>
    tpu.vector_store %arg12[%c240_52, %c0_53], %41 {strides = array<i32>} : memref<320x128xf32, #tpu.memory_space<vmem>>, vector<40x128xf32>,
    %c240_54 = arith.constant 240 : index
    %c0_55 = arith.constant 0 : index
    %43 = vector.load %arg12[%c240_54, %c0_55] : memref<320x128xf32, #tpu.memory_space<vmem>>, vector<40x128xf32>
    %c280 = arith.constant 280 : index
    %c0_56 = arith.constant 0 : index
    %44 = vector.load %arg12[%c280, %c0_56] : memref<320x128xf32, #tpu.memory_space<vmem>>, vector<40x128xf32>
    %c0_57 = arith.constant 0 : index
    %c0_58 = arith.constant 0 : index
    %45 = vector.load %arg2[%c0_57, %c0_58] : memref<128x1024xf32, #tpu.memory_space<vmem>>, vector<128x128xf32>
    %cst_59 = arith.constant dense<0.000000e+00> : vector<40x128xf32>
    %46 = tpu.matmul %43, %45, %cst_59 {dimension_numbers = #tpu.dot_dimension_numbers<[1], [0], [0], [1], [0, 0, 1, 1], [], []>} : vector<40x128xf32>, vector<128x128xf32>, vector<40x128xf32> -> vector<40x128xf32>
    %47 = arith.addf %44, %46 : vector<40x128xf32>
    %c280_60 = arith.constant 280 : index
    %c0_61 = arith.constant 0 : index
    %48 = vector.load %arg12[%c280_60, %c0_61] : memref<320x128xf32, #tpu.memory_space<vmem>>, vector<40x128xf32>
    tpu.vector_store %arg12[%c280_60, %c0_61], %47 {strides = array<i32>} : memref<320x128xf32, #tpu.memory_space<vmem>>, vector<40x128xf32>,
    %c0_62 = arith.constant 0 : index
    %c0_63 = arith.constant 0 : index
    %c0_64 = arith.constant 0 : index
    %49 = vector.load %arg11[%c0_62, %c0_63, %c0_64] : memref<3x8x128xf32, #tpu.memory_space<vmem>>, vector<1x8x128xf32>
    %50 = vector.shape_cast %49 : vector<1x8x128xf32> to vector<8x128xf32>
    %c0_i32_65 = arith.constant 0 : i32
    %c0_66 = arith.constant 0 : index
    %c0_67 = arith.constant 0 : index
    %51 = vector.load %arg2[%c0_66, %c0_67] : memref<128x1024xf32, #tpu.memory_space<vmem>>, vector<128x1024xf32>
    %cst_68 = arith.constant dense<0.000000e+00> : vector<8x1024xf32>
    %52 = tpu.matmul %50, %51, %cst_68 {dimension_numbers = #tpu.dot_dimension_numbers<[1], [0], [0], [1], [0, 0, 1, 1], [], []>} : vector<8x128xf32>, vector<128x1024xf32>, vector<8x1024xf32> -> vector<8x1024xf32>
    %c8_i32 = arith.constant 8 : i32
    %53 = arith.muli %c0_i32_65, %c8_i32 : i32
    %c280_i32 = arith.constant 280 : i32
    %54 = arith.addi %c280_i32, %53 : i32
    %55 = tpu.assume_multiple %54, 8 : i32
    %56 = arith.index_cast %55 : i32 to index
    %c0_69 = arith.constant 0 : index
    %57 = vector.load %arg12[%56, %c0_69] : memref<320x128xf32, #tpu.memory_space<vmem>>, vector<8x128xf32>
    %58 = vector.extract_strided_slice %52 {offsets = [0, 896], sizes = [8, 128], strides = [1, 1]} : vector<8x1024xf32> to vector<8x128xf32>
    %59 = arith.addf %57, %58 : vector<8x128xf32>
    %60 = arith.index_cast %55 : i32 to index
    %c0_70 = arith.constant 0 : index
    %61 = vector.load %arg12[%60, %c0_70] : memref<320x128xf32, #tpu.memory_space<vmem>>, vector<8x128xf32>
    tpu.vector_store %arg12[%60, %c0_70], %59 {strides = array<i32>} : memref<320x128xf32, #tpu.memory_space<vmem>>, vector<8x128xf32>,
    %c8_i32_71 = arith.constant 8 : i32
    %62 = arith.muli %c0_i32_65, %c8_i32_71 : i32
    %c0_i32_72 = arith.constant 0 : i32
    %63 = arith.addi %c0_i32_72, %62 : i32
    %64 = tpu.assume_multiple %63, 8 : i32
    %65 = arith.index_cast %64 : i32 to index
    %c0_73 = arith.constant 0 : index
    %66 = vector.load %arg12[%65, %c0_73] : memref<320x128xf32, #tpu.memory_space<vmem>>, vector<8x128xf32>
    %67 = vector.extract_strided_slice %52 {offsets = [0, 0], sizes = [8, 128], strides = [1, 1]} : vector<8x1024xf32> to vector<8x128xf32>
    %68 = arith.addf %66, %67 : vector<8x128xf32>
    %69 = arith.index_cast %64 : i32 to index
    %c0_74 = arith.constant 0 : index
    %70 = vector.load %arg12[%69, %c0_74] : memref<320x128xf32, #tpu.memory_space<vmem>>, vector<8x128xf32>
    tpu.vector_store %arg12[%69, %c0_74], %68 {strides = array<i32>} : memref<320x128xf32, #tpu.memory_space<vmem>>, vector<8x128xf32>,
    %c8_i32_75 = arith.constant 8 : i32
    %71 = arith.muli %c0_i32_65, %c8_i32_75 : i32
    %c40_i32 = arith.constant 40 : i32
    %72 = arith.addi %c40_i32, %71 : i32
    %73 = tpu.assume_multiple %72, 8 : i32
    %74 = arith.index_cast %73 : i32 to index
    %c0_76 = arith.constant 0 : index
    %75 = vector.load %arg12[%74, %c0_76] : memref<320x128xf32, #tpu.memory_space<vmem>>, vector<8x128xf32>
    %76 = vector.extract_strided_slice %52 {offsets = [0, 128], sizes = [8, 128], strides = [1, 1]} : vector<8x1024xf32> to vector<8x128xf32>
    %77 = arith.addf %75, %76 : vector<8x128xf32>
    %78 = arith.index_cast %73 : i32 to index
    %c0_77 = arith.constant 0 : index
    %79 = vector.load %arg12[%78, %c0_77] : memref<320x128xf32, #tpu.memory_space<vmem>>, vector<8x128xf32>
    tpu.vector_store %arg12[%78, %c0_77], %77 {strides = array<i32>} : memref<320x128xf32, #tpu.memory_space<vmem>>, vector<8x128xf32>,
    %c8_i32_78 = arith.constant 8 : i32
    %80 = arith.muli %c0_i32_65, %c8_i32_78 : i32
    %c80_i32 = arith.constant 80 : i32
    %81 = arith.addi %c80_i32, %80 : i32
    %82 = tpu.assume_multiple %81, 8 : i32
    %83 = arith.index_cast %82 : i32 to index
    %c0_79 = arith.constant 0 : index
    %84 = vector.load %arg12[%83, %c0_79] : memref<320x128xf32, #tpu.memory_space<vmem>>, vector<8x128xf32>
    %85 = vector.extract_strided_slice %52 {offsets = [0, 256], sizes = [8, 128], strides = [1, 1]} : vector<8x1024xf32> to vector<8x128xf32>
    %86 = arith.addf %84, %85 : vector<8x128xf32>
    %87 = arith.index_cast %82 : i32 to index
    %c0_80 = arith.constant 0 : index
    %88 = vector.load %arg12[%87, %c0_80] : memref<320x128xf32, #tpu.memory_space<vmem>>, vector<8x128xf32>
    tpu.vector_store %arg12[%87, %c0_80], %86 {strides = array<i32>} : memref<320x128xf32, #tpu.memory_space<vmem>>, vector<8x128xf32>,
    %c8_i32_81 = arith.constant 8 : i32
    %89 = arith.muli %c0_i32_65, %c8_i32_81 : i32
    %c120_i32 = arith.constant 120 : i32
    %90 = arith.addi %c120_i32, %89 : i32
    %91 = tpu.assume_multiple %90, 8 : i32
    %92 = arith.index_cast %91 : i32 to index
    %c0_82 = arith.constant 0 : index
    %93 = vector.load %arg12[%92, %c0_82] : memref<320x128xf32, #tpu.memory_space<vmem>>, vector<8x128xf32>
    %94 = vector.extract_strided_slice %52 {offsets = [0, 384], sizes = [8, 128], strides = [1, 1]} : vector<8x1024xf32> to vector<8x128xf32>
    %95 = arith.addf %93, %94 : vector<8x128xf32>
    %96 = arith.index_cast %91 : i32 to index
    %c0_83 = arith.constant 0 : index
    %97 = vector.load %arg12[%96, %c0_83] : memref<320x128xf32, #tpu.memory_space<vmem>>, vector<8x128xf32>
    tpu.vector_store %arg12[%96, %c0_83], %95 {strides = array<i32>} : memref<320x128xf32, #tpu.memory_space<vmem>>, vector<8x128xf32>,
    %c8_i32_84 = arith.constant 8 : i32
    %98 = arith.muli %c0_i32_65, %c8_i32_84 : i32
    %c160_i32 = arith.constant 160 : i32
    %99 = arith.addi %c160_i32, %98 : i32
    %100 = tpu.assume_multiple %99, 8 : i32
    %101 = arith.index_cast %100 : i32 to index
    %c0_85 = arith.constant 0 : index
    %102 = vector.load %arg12[%101, %c0_85] : memref<320x128xf32, #tpu.memory_space<vmem>>, vector<8x128xf32>
    %103 = vector.extract_strided_slice %52 {offsets = [0, 512], sizes = [8, 128], strides = [1, 1]} : vector<8x1024xf32> to vector<8x128xf32>
    %104 = arith.addf %102, %103 : vector<8x128xf32>
    %105 = arith.index_cast %100 : i32 to index
    %c0_86 = arith.constant 0 : index
    %106 = vector.load %arg12[%105, %c0_86] : memref<320x128xf32, #tpu.memory_space<vmem>>, vector<8x128xf32>
    tpu.vector_store %arg12[%105, %c0_86], %104 {strides = array<i32>} : memref<320x128xf32, #tpu.memory_space<vmem>>, vector<8x128xf32>,
    %c8_i32_87 = arith.constant 8 : i32
    %107 = arith.muli %c0_i32_65, %c8_i32_87 : i32
    %c200_i32 = arith.constant 200 : i32
    %108 = arith.addi %c200_i32, %107 : i32
    %109 = tpu.assume_multiple %108, 8 : i32
    %110 = arith.index_cast %109 : i32 to index
    %c0_88 = arith.constant 0 : index
    %111 = vector.load %arg12[%110, %c0_88] : memref<320x128xf32, #tpu.memory_space<vmem>>, vector<8x128xf32>
    %112 = vector.extract_strided_slice %52 {offsets = [0, 640], sizes = [8, 128], strides = [1, 1]} : vector<8x1024xf32> to vector<8x128xf32>
    %113 = arith.addf %111, %112 : vector<8x128xf32>
    %114 = arith.index_cast %109 : i32 to index
    %c0_89 = arith.constant 0 : index
    %115 = vector.load %arg12[%114, %c0_89] : memref<320x128xf32, #tpu.memory_space<vmem>>, vector<8x128xf32>
    tpu.vector_store %arg12[%114, %c0_89], %113 {strides = array<i32>} : memref<320x128xf32, #tpu.memory_space<vmem>>, vector<8x128xf32>,
    %c8_i32_90 = arith.constant 8 : i32
    %116 = arith.muli %c0_i32_65, %c8_i32_90 : i32
    %c240_i32 = arith.constant 240 : i32
    %117 = arith.addi %c240_i32, %116 : i32
    %118 = tpu.assume_multiple %117, 8 : i32
    %119 = arith.index_cast %118 : i32 to index
    %c0_91 = arith.constant 0 : index
    %120 = vector.load %arg12[%119, %c0_91] : memref<320x128xf32, #tpu.memory_space<vmem>>, vector<8x128xf32>
    %121 = vector.extract_strided_slice %52 {offsets = [0, 768], sizes = [8, 128], strides = [1, 1]} : vector<8x1024xf32> to vector<8x128xf32>
    %122 = arith.addf %120, %121 : vector<8x128xf32>
    %123 = arith.index_cast %118 : i32 to index
    %c0_92 = arith.constant 0 : index
    %124 = vector.load %arg12[%123, %c0_92] : memref<320x128xf32, #tpu.memory_space<vmem>>, vector<8x128xf32>
    tpu.vector_store %arg12[%123, %c0_92], %122 {strides = array<i32>} : memref<320x128xf32, #tpu.memory_space<vmem>>, vector<8x128xf32>,
    %c1_i32 = arith.constant 1 : i32
    %c0_93 = arith.constant 0 : index
    %c0_94 = arith.constant 0 : index
    %125 = vector.load %arg2[%c0_93, %c0_94] : memref<128x1024xf32, #tpu.memory_space<vmem>>, vector<128x1024xf32>
    %cst_95 = arith.constant dense<0.000000e+00> : vector<8x1024xf32>
    %126 = tpu.matmul %59, %125, %cst_95 {dimension_numbers = #tpu.dot_dimension_numbers<[1], [0], [0], [1], [0, 0, 1, 1], [], []>} : vector<8x128xf32>, vector<128x1024xf32>, vector<8x1024xf32> -> vector<8x1024xf32>
    %c8_i32_96 = arith.constant 8 : i32
    %127 = arith.muli %c1_i32, %c8_i32_96 : i32
    %c280_i32_97 = arith.constant 280 : i32
    %128 = arith.addi %c280_i32_97, %127 : i32
    %129 = tpu.assume_multiple %128, 8 : i32
    %130 = arith.index_cast %129 : i32 to index
    %c0_98 = arith.constant 0 : index
    %131 = vector.load %arg12[%130, %c0_98] : memref<320x128xf32, #tpu.memory_space<vmem>>, vector<8x128xf32>
    %132 = vector.extract_strided_slice %126 {offsets = [0, 896], sizes = [8, 128], strides = [1, 1]} : vector<8x1024xf32> to vector<8x128xf32>
    %133 = arith.addf %131, %132 : vector<8x128xf32>
    %134 = arith.index_cast %129 : i32 to index
    %c0_99 = arith.constant 0 : index
    %135 = vector.load %arg12[%134, %c0_99] : memref<320x128xf32, #tpu.memory_space<vmem>>, vector<8x128xf32>
    tpu.vector_store %arg12[%134, %c0_99], %133 {strides = array<i32>} : memref<320x128xf32, #tpu.memory_space<vmem>>, vector<8x128xf32>,
    %c8_i32_100 = arith.constant 8 : i32
    %136 = arith.muli %c1_i32, %c8_i32_100 : i32
    %c0_i32_101 = arith.constant 0 : i32
    %137 = arith.addi %c0_i32_101, %136 : i32
    %138 = tpu.assume_multiple %137, 8 : i32
    %139 = arith.index_cast %138 : i32 to index
    %c0_102 = arith.constant 0 : index
    %140 = vector.load %arg12[%139, %c0_102] : memref<320x128xf32, #tpu.memory_space<vmem>>, vector<8x128xf32>
    %141 = vector.extract_strided_slice %126 {offsets = [0, 0], sizes = [8, 128], strides = [1, 1]} : vector<8x1024xf32> to vector<8x128xf32>
    %142 = arith.addf %140, %141 : vector<8x128xf32>
    %143 = arith.index_cast %138 : i32 to index
    %c0_103 = arith.constant 0 : index
    %144 = vector.load %arg12[%143, %c0_103] : memref<320x128xf32, #tpu.memory_space<vmem>>, vector<8x128xf32>
    tpu.vector_store %arg12[%143, %c0_103], %142 {strides = array<i32>} : memref<320x128xf32, #tpu.memory_space<vmem>>, vector<8x128xf32>,
    %c8_i32_104 = arith.constant 8 : i32
    %145 = arith.muli %c1_i32, %c8_i32_104 : i32
    %c40_i32_105 = arith.constant 40 : i32
    %146 = arith.addi %c40_i32_105, %145 : i32
    %147 = tpu.assume_multiple %146, 8 : i32
    %148 = arith.index_cast %147 : i32 to index
    %c0_106 = arith.constant 0 : index
    %149 = vector.load %arg12[%148, %c0_106] : memref<320x128xf32, #tpu.memory_space<vmem>>, vector<8x128xf32>
    %150 = vector.extract_strided_slice %126 {offsets = [0, 128], sizes = [8, 128], strides = [1, 1]} : vector<8x1024xf32> to vector<8x128xf32>
    %151 = arith.addf %149, %150 : vector<8x128xf32>
    %152 = arith.index_cast %147 : i32 to index
    %c0_107 = arith.constant 0 : index
    %153 = vector.load %arg12[%152, %c0_107] : memref<320x128xf32, #tpu.memory_space<vmem>>, vector<8x128xf32>
    tpu.vector_store %arg12[%152, %c0_107], %151 {strides = array<i32>} : memref<320x128xf32, #tpu.memory_space<vmem>>, vector<8x128xf32>,
    %c8_i32_108 = arith.constant 8 : i32
    %154 = arith.muli %c1_i32, %c8_i32_108 : i32
    %c80_i32_109 = arith.constant 80 : i32
    %155 = arith.addi %c80_i32_109, %154 : i32
    %156 = tpu.assume_multiple %155, 8 : i32
    %157 = arith.index_cast %156 : i32 to index
    %c0_110 = arith.constant 0 : index
    %158 = vector.load %arg12[%157, %c0_110] : memref<320x128xf32, #tpu.memory_space<vmem>>, vector<8x128xf32>
    %159 = vector.extract_strided_slice %126 {offsets = [0, 256], sizes = [8, 128], strides = [1, 1]} : vector<8x1024xf32> to vector<8x128xf32>
    %160 = arith.addf %158, %159 : vector<8x128xf32>
    %161 = arith.index_cast %156 : i32 to index
    %c0_111 = arith.constant 0 : index
    %162 = vector.load %arg12[%161, %c0_111] : memref<320x128xf32, #tpu.memory_space<vmem>>, vector<8x128xf32>
    tpu.vector_store %arg12[%161, %c0_111], %160 {strides = array<i32>} : memref<320x128xf32, #tpu.memory_space<vmem>>, vector<8x128xf32>,
    %c8_i32_112 = arith.constant 8 : i32
    %163 = arith.muli %c1_i32, %c8_i32_112 : i32
    %c120_i32_113 = arith.constant 120 : i32
    %164 = arith.addi %c120_i32_113, %163 : i32
    %165 = tpu.assume_multiple %164, 8 : i32
    %166 = arith.index_cast %165 : i32 to index
    %c0_114 = arith.constant 0 : index
    %167 = vector.load %arg12[%166, %c0_114] : memref<320x128xf32, #tpu.memory_space<vmem>>, vector<8x128xf32>
    %168 = vector.extract_strided_slice %126 {offsets = [0, 384], sizes = [8, 128], strides = [1, 1]} : vector<8x1024xf32> to vector<8x128xf32>
    %169 = arith.addf %167, %168 : vector<8x128xf32>
    %170 = arith.index_cast %165 : i32 to index
    %c0_115 = arith.constant 0 : index
    %171 = vector.load %arg12[%170, %c0_115] : memref<320x128xf32, #tpu.memory_space<vmem>>, vector<8x128xf32>
    tpu.vector_store %arg12[%170, %c0_115], %169 {strides = array<i32>} : memref<320x128xf32, #tpu.memory_space<vmem>>, vector<8x128xf32>,
    %c8_i32_116 = arith.constant 8 : i32
    %172 = arith.muli %c1_i32, %c8_i32_116 : i32
    %c160_i32_117 = arith.constant 160 : i32
    %173 = arith.addi %c160_i32_117, %172 : i32
    %174 = tpu.assume_multiple %173, 8 : i32
    %175 = arith.index_cast %174 : i32 to index
    %c0_118 = arith.constant 0 : index
    %176 = vector.load %arg12[%175, %c0_118] : memref<320x128xf32, #tpu.memory_space<vmem>>, vector<8x128xf32>
    %177 = vector.extract_strided_slice %126 {offsets = [0, 512], sizes = [8, 128], strides = [1, 1]} : vector<8x1024xf32> to vector<8x128xf32>
    %178 = arith.addf %176, %177 : vector<8x128xf32>
    %179 = arith.index_cast %174 : i32 to index
    %c0_119 = arith.constant 0 : index
    %180 = vector.load %arg12[%179, %c0_119] : memref<320x128xf32, #tpu.memory_space<vmem>>, vector<8x128xf32>
    tpu.vector_store %arg12[%179, %c0_119], %178 {strides = array<i32>} : memref<320x128xf32, #tpu.memory_space<vmem>>, vector<8x128xf32>,
    %c8_i32_120 = arith.constant 8 : i32
    %181 = arith.muli %c1_i32, %c8_i32_120 : i32
    %c200_i32_121 = arith.constant 200 : i32
    %182 = arith.addi %c200_i32_121, %181 : i32
    %183 = tpu.assume_multiple %182, 8 : i32
    %184 = arith.index_cast %183 : i32 to index
    %c0_122 = arith.constant 0 : index
    %185 = vector.load %arg12[%184, %c0_122] : memref<320x128xf32, #tpu.memory_space<vmem>>, vector<8x128xf32>
    %186 = vector.extract_strided_slice %126 {offsets = [0, 640], sizes = [8, 128], strides = [1, 1]} : vector<8x1024xf32> to vector<8x128xf32>
    %187 = arith.addf %185, %186 : vector<8x128xf32>
    %188 = arith.index_cast %183 : i32 to index
    %c0_123 = arith.constant 0 : index
    %189 = vector.load %arg12[%188, %c0_123] : memref<320x128xf32, #tpu.memory_space<vmem>>, vector<8x128xf32>
    tpu.vector_store %arg12[%188, %c0_123], %187 {strides = array<i32>} : memref<320x128xf32, #tpu.memory_space<vmem>>, vector<8x128xf32>,
    %c8_i32_124 = arith.constant 8 : i32
    %190 = arith.muli %c1_i32, %c8_i32_124 : i32
    %c240_i32_125 = arith.constant 240 : i32
    %191 = arith.addi %c240_i32_125, %190 : i32
    %192 = tpu.assume_multiple %191, 8 : i32
    %193 = arith.index_cast %192 : i32 to index
    %c0_126 = arith.constant 0 : index
    %194 = vector.load %arg12[%193, %c0_126] : memref<320x128xf32, #tpu.memory_space<vmem>>, vector<8x128xf32>
    %195 = vector.extract_strided_slice %126 {offsets = [0, 768], sizes = [8, 128], strides = [1, 1]} : vector<8x1024xf32> to vector<8x128xf32>
    %196 = arith.addf %194, %195 : vector<8x128xf32>
    %197 = arith.index_cast %192 : i32 to index
    %c0_127 = arith.constant 0 : index
    %198 = vector.load %arg12[%197, %c0_127] : memref<320x128xf32, #tpu.memory_space<vmem>>, vector<8x128xf32>
    tpu.vector_store %arg12[%197, %c0_127], %196 {strides = array<i32>} : memref<320x128xf32, #tpu.memory_space<vmem>>, vector<8x128xf32>,
    %c2_i32 = arith.constant 2 : i32
    %c0_128 = arith.constant 0 : index
    %c0_129 = arith.constant 0 : index
    %199 = vector.load %arg2[%c0_128, %c0_129] : memref<128x1024xf32, #tpu.memory_space<vmem>>, vector<128x1024xf32>
    %cst_130 = arith.constant dense<0.000000e+00> : vector<8x1024xf32>
    %200 = tpu.matmul %133, %199, %cst_130 {dimension_numbers = #tpu.dot_dimension_numbers<[1], [0], [0], [1], [0, 0, 1, 1], [], []>} : vector<8x128xf32>, vector<128x1024xf32>, vector<8x1024xf32> -> vector<8x1024xf32>
    %c8_i32_131 = arith.constant 8 : i32
    %201 = arith.muli %c2_i32, %c8_i32_131 : i32
    %c280_i32_132 = arith.constant 280 : i32
    %202 = arith.addi %c280_i32_132, %201 : i32
    %203 = tpu.assume_multiple %202, 8 : i32
    %204 = arith.index_cast %203 : i32 to index
    %c0_133 = arith.constant 0 : index
    %205 = vector.load %arg12[%204, %c0_133] : memref<320x128xf32, #tpu.memory_space<vmem>>, vector<8x128xf32>
    %206 = vector.extract_strided_slice %200 {offsets = [0, 896], sizes = [8, 128], strides = [1, 1]} : vector<8x1024xf32> to vector<8x128xf32>
    %207 = arith.addf %205, %206 : vector<8x128xf32>
    %208 = arith.index_cast %203 : i32 to index
    %c0_134 = arith.constant 0 : index
    %209 = vector.load %arg12[%208, %c0_134] : memref<320x128xf32, #tpu.memory_space<vmem>>, vector<8x128xf32>
    tpu.vector_store %arg12[%208, %c0_134], %207 {strides = array<i32>} : memref<320x128xf32, #tpu.memory_space<vmem>>, vector<8x128xf32>,
    %c8_i32_135 = arith.constant 8 : i32
    %210 = arith.muli %c2_i32, %c8_i32_135 : i32
    %c0_i32_136 = arith.constant 0 : i32
    %211 = arith.addi %c0_i32_136, %210 : i32
    %212 = tpu.assume_multiple %211, 8 : i32
    %213 = arith.index_cast %212 : i32 to index
    %c0_137 = arith.constant 0 : index
    %214 = vector.load %arg12[%213, %c0_137] : memref<320x128xf32, #tpu.memory_space<vmem>>, vector<8x128xf32>
    %215 = vector.extract_strided_slice %200 {offsets = [0, 0], sizes = [8, 128], strides = [1, 1]} : vector<8x1024xf32> to vector<8x128xf32>
    %216 = arith.addf %214, %215 : vector<8x128xf32>
    %217 = arith.index_cast %212 : i32 to index
    %c0_138 = arith.constant 0 : index
    %218 = vector.load %arg12[%217, %c0_138] : memref<320x128xf32, #tpu.memory_space<vmem>>, vector<8x128xf32>
    tpu.vector_store %arg12[%217, %c0_138], %216 {strides = array<i32>} : memref<320x128xf32, #tpu.memory_space<vmem>>, vector<8x128xf32>,
    %c8_i32_139 = arith.constant 8 : i32
    %219 = arith.muli %c2_i32, %c8_i32_139 : i32
    %c40_i32_140 = arith.constant 40 : i32
    %220 = arith.addi %c40_i32_140, %219 : i32
    %221 = tpu.assume_multiple %220, 8 : i32
    %222 = arith.index_cast %221 : i32 to index
    %c0_141 = arith.constant 0 : index
    %223 = vector.load %arg12[%222, %c0_141] : memref<320x128xf32, #tpu.memory_space<vmem>>, vector<8x128xf32>
    %224 = vector.extract_strided_slice %200 {offsets = [0, 128], sizes = [8, 128], strides = [1, 1]} : vector<8x1024xf32> to vector<8x128xf32>
    %225 = arith.addf %223, %224 : vector<8x128xf32>
    %226 = arith.index_cast %221 : i32 to index
    %c0_142 = arith.constant 0 : index
    %227 = vector.load %arg12[%226, %c0_142] : memref<320x128xf32, #tpu.memory_space<vmem>>, vector<8x128xf32>
    tpu.vector_store %arg12[%226, %c0_142], %225 {strides = array<i32>} : memref<320x128xf32, #tpu.memory_space<vmem>>, vector<8x128xf32>,
    %c8_i32_143 = arith.constant 8 : i32
    %228 = arith.muli %c2_i32, %c8_i32_143 : i32
    %c80_i32_144 = arith.constant 80 : i32
    %229 = arith.addi %c80_i32_144, %228 : i32
    %230 = tpu.assume_multiple %229, 8 : i32
    %231 = arith.index_cast %230 : i32 to index
    %c0_145 = arith.constant 0 : index
    %232 = vector.load %arg12[%231, %c0_145] : memref<320x128xf32, #tpu.memory_space<vmem>>, vector<8x128xf32>
    %233 = vector.extract_strided_slice %200 {offsets = [0, 256], sizes = [8, 128], strides = [1, 1]} : vector<8x1024xf32> to vector<8x128xf32>
    %234 = arith.addf %232, %233 : vector<8x128xf32>
    %235 = arith.index_cast %230 : i32 to index
    %c0_146 = arith.constant 0 : index
    %236 = vector.load %arg12[%235, %c0_146] : memref<320x128xf32, #tpu.memory_space<vmem>>, vector<8x128xf32>
    tpu.vector_store %arg12[%235, %c0_146], %234 {strides = array<i32>} : memref<320x128xf32, #tpu.memory_space<vmem>>, vector<8x128xf32>,
    %c8_i32_147 = arith.constant 8 : i32
    %237 = arith.muli %c2_i32, %c8_i32_147 : i32
    %c120_i32_148 = arith.constant 120 : i32
    %238 = arith.addi %c120_i32_148, %237 : i32
    %239 = tpu.assume_multiple %238, 8 : i32
    %240 = arith.index_cast %239 : i32 to index
    %c0_149 = arith.constant 0 : index
    %241 = vector.load %arg12[%240, %c0_149] : memref<320x128xf32, #tpu.memory_space<vmem>>, vector<8x128xf32>
    %242 = vector.extract_strided_slice %200 {offsets = [0, 384], sizes = [8, 128], strides = [1, 1]} : vector<8x1024xf32> to vector<8x128xf32>
    %243 = arith.addf %241, %242 : vector<8x128xf32>
    %244 = arith.index_cast %239 : i32 to index
    %c0_150 = arith.constant 0 : index
    %245 = vector.load %arg12[%244, %c0_150] : memref<320x128xf32, #tpu.memory_space<vmem>>, vector<8x128xf32>
    tpu.vector_store %arg12[%244, %c0_150], %243 {strides = array<i32>} : memref<320x128xf32, #tpu.memory_space<vmem>>, vector<8x128xf32>,
    %c8_i32_151 = arith.constant 8 : i32
    %246 = arith.muli %c2_i32, %c8_i32_151 : i32
    %c160_i32_152 = arith.constant 160 : i32
    %247 = arith.addi %c160_i32_152, %246 : i32
    %248 = tpu.assume_multiple %247, 8 : i32
    %249 = arith.index_cast %248 : i32 to index
    %c0_153 = arith.constant 0 : index
    %250 = vector.load %arg12[%249, %c0_153] : memref<320x128xf32, #tpu.memory_space<vmem>>, vector<8x128xf32>
    %251 = vector.extract_strided_slice %200 {offsets = [0, 512], sizes = [8, 128], strides = [1, 1]} : vector<8x1024xf32> to vector<8x128xf32>
    %252 = arith.addf %250, %251 : vector<8x128xf32>
    %253 = arith.index_cast %248 : i32 to index
    %c0_154 = arith.constant 0 : index
    %254 = vector.load %arg12[%253, %c0_154] : memref<320x128xf32, #tpu.memory_space<vmem>>, vector<8x128xf32>
    tpu.vector_store %arg12[%253, %c0_154], %252 {strides = array<i32>} : memref<320x128xf32, #tpu.memory_space<vmem>>, vector<8x128xf32>,
    %c8_i32_155 = arith.constant 8 : i32
    %255 = arith.muli %c2_i32, %c8_i32_155 : i32
    %c200_i32_156 = arith.constant 200 : i32
    %256 = arith.addi %c200_i32_156, %255 : i32
    %257 = tpu.assume_multiple %256, 8 : i32
    %258 = arith.index_cast %257 : i32 to index
    %c0_157 = arith.constant 0 : index
    %259 = vector.load %arg12[%258, %c0_157] : memref<320x128xf32, #tpu.memory_space<vmem>>, vector<8x128xf32>
    %260 = vector.extract_strided_slice %200 {offsets = [0, 640], sizes = [8, 128], strides = [1, 1]} : vector<8x1024xf32> to vector<8x128xf32>
    %261 = arith.addf %259, %260 : vector<8x128xf32>
    %262 = arith.index_cast %257 : i32 to index
    %c0_158 = arith.constant 0 : index
    %263 = vector.load %arg12[%262, %c0_158] : memref<320x128xf32, #tpu.memory_space<vmem>>, vector<8x128xf32>
    tpu.vector_store %arg12[%262, %c0_158], %261 {strides = array<i32>} : memref<320x128xf32, #tpu.memory_space<vmem>>, vector<8x128xf32>,
    %c8_i32_159 = arith.constant 8 : i32
    %264 = arith.muli %c2_i32, %c8_i32_159 : i32
    %c240_i32_160 = arith.constant 240 : i32
    %265 = arith.addi %c240_i32_160, %264 : i32
    %266 = tpu.assume_multiple %265, 8 : i32
    %267 = arith.index_cast %266 : i32 to index
    %c0_161 = arith.constant 0 : index
    %268 = vector.load %arg12[%267, %c0_161] : memref<320x128xf32, #tpu.memory_space<vmem>>, vector<8x128xf32>
    %269 = vector.extract_strided_slice %200 {offsets = [0, 768], sizes = [8, 128], strides = [1, 1]} : vector<8x1024xf32> to vector<8x128xf32>
    %270 = arith.addf %268, %269 : vector<8x128xf32>
    %271 = arith.index_cast %266 : i32 to index
    %c0_162 = arith.constant 0 : index
    %272 = vector.load %arg12[%271, %c0_162] : memref<320x128xf32, #tpu.memory_space<vmem>>, vector<8x128xf32>
    tpu.vector_store %arg12[%271, %c0_162], %270 {strides = array<i32>} : memref<320x128xf32, #tpu.memory_space<vmem>>, vector<8x128xf32>,
    %c3_i32 = arith.constant 3 : i32
    %c0_163 = arith.constant 0 : index
    %c0_164 = arith.constant 0 : index
    %273 = vector.load %arg2[%c0_163, %c0_164] : memref<128x1024xf32, #tpu.memory_space<vmem>>, vector<128x1024xf32>
    %cst_165 = arith.constant dense<0.000000e+00> : vector<8x1024xf32>
    %274 = tpu.matmul %207, %273, %cst_165 {dimension_numbers = #tpu.dot_dimension_numbers<[1], [0], [0], [1], [0, 0, 1, 1], [], []>} : vector<8x128xf32>, vector<128x1024xf32>, vector<8x1024xf32> -> vector<8x1024xf32>
    %c8_i32_166 = arith.constant 8 : i32
    %275 = arith.muli %c3_i32, %c8_i32_166 : i32
    %c280_i32_167 = arith.constant 280 : i32
    %276 = arith.addi %c280_i32_167, %275 : i32
    %277 = tpu.assume_multiple %276, 8 : i32
    %278 = arith.index_cast %277 : i32 to index
    %c0_168 = arith.constant 0 : index
    %279 = vector.load %arg12[%278, %c0_168] : memref<320x128xf32, #tpu.memory_space<vmem>>, vector<8x128xf32>
    %280 = vector.extract_strided_slice %274 {offsets = [0, 896], sizes = [8, 128], strides = [1, 1]} : vector<8x1024xf32> to vector<8x128xf32>
    %281 = arith.addf %279, %280 : vector<8x128xf32>
    %282 = arith.index_cast %277 : i32 to index
    %c0_169 = arith.constant 0 : index
    %283 = vector.load %arg12[%282, %c0_169] : memref<320x128xf32, #tpu.memory_space<vmem>>, vector<8x128xf32>
    tpu.vector_store %arg12[%282, %c0_169], %281 {strides = array<i32>} : memref<320x128xf32, #tpu.memory_space<vmem>>, vector<8x128xf32>,
    %c8_i32_170 = arith.constant 8 : i32
    %284 = arith.muli %c3_i32, %c8_i32_170 : i32
    %c0_i32_171 = arith.constant 0 : i32
    %285 = arith.addi %c0_i32_171, %284 : i32
    %286 = tpu.assume_multiple %285, 8 : i32
    %287 = arith.index_cast %286 : i32 to index
    %c0_172 = arith.constant 0 : index
    %288 = vector.load %arg12[%287, %c0_172] : memref<320x128xf32, #tpu.memory_space<vmem>>, vector<8x128xf32>
    %289 = vector.extract_strided_slice %274 {offsets = [0, 0], sizes = [8, 128], strides = [1, 1]} : vector<8x1024xf32> to vector<8x128xf32>
    %290 = arith.addf %288, %289 : vector<8x128xf32>
    %291 = arith.index_cast %286 : i32 to index
    %c0_173 = arith.constant 0 : index
    %292 = vector.load %arg12[%291, %c0_173] : memref<320x128xf32, #tpu.memory_space<vmem>>, vector<8x128xf32>
    tpu.vector_store %arg12[%291, %c0_173], %290 {strides = array<i32>} : memref<320x128xf32, #tpu.memory_space<vmem>>, vector<8x128xf32>,
    %c8_i32_174 = arith.constant 8 : i32
    %293 = arith.muli %c3_i32, %c8_i32_174 : i32
    %c40_i32_175 = arith.constant 40 : i32
    %294 = arith.addi %c40_i32_175, %293 : i32
    %295 = tpu.assume_multiple %294, 8 : i32
    %296 = arith.index_cast %295 : i32 to index
    %c0_176 = arith.constant 0 : index
    %297 = vector.load %arg12[%296, %c0_176] : memref<320x128xf32, #tpu.memory_space<vmem>>, vector<8x128xf32>
    %298 = vector.extract_strided_slice %274 {offsets = [0, 128], sizes = [8, 128], strides = [1, 1]} : vector<8x1024xf32> to vector<8x128xf32>
    %299 = arith.addf %297, %298 : vector<8x128xf32>
    %300 = arith.index_cast %295 : i32 to index
    %c0_177 = arith.constant 0 : index
    %301 = vector.load %arg12[%300, %c0_177] : memref<320x128xf32, #tpu.memory_space<vmem>>, vector<8x128xf32>
    tpu.vector_store %arg12[%300, %c0_177], %299 {strides = array<i32>} : memref<320x128xf32, #tpu.memory_space<vmem>>, vector<8x128xf32>,
    %c8_i32_178 = arith.constant 8 : i32
    %302 = arith.muli %c3_i32, %c8_i32_178 : i32
    %c80_i32_179 = arith.constant 80 : i32
    %303 = arith.addi %c80_i32_179, %302 : i32
    %304 = tpu.assume_multiple %303, 8 : i32
    %305 = arith.index_cast %304 : i32 to index
    %c0_180 = arith.constant 0 : index
    %306 = vector.load %arg12[%305, %c0_180] : memref<320x128xf32, #tpu.memory_space<vmem>>, vector<8x128xf32>
    %307 = vector.extract_strided_slice %274 {offsets = [0, 256], sizes = [8, 128], strides = [1, 1]} : vector<8x1024xf32> to vector<8x128xf32>
    %308 = arith.addf %306, %307 : vector<8x128xf32>
    %309 = arith.index_cast %304 : i32 to index
    %c0_181 = arith.constant 0 : index
    %310 = vector.load %arg12[%309, %c0_181] : memref<320x128xf32, #tpu.memory_space<vmem>>, vector<8x128xf32>
    tpu.vector_store %arg12[%309, %c0_181], %308 {strides = array<i32>} : memref<320x128xf32, #tpu.memory_space<vmem>>, vector<8x128xf32>,
    %c8_i32_182 = arith.constant 8 : i32
    %311 = arith.muli %c3_i32, %c8_i32_182 : i32
    %c120_i32_183 = arith.constant 120 : i32
    %312 = arith.addi %c120_i32_183, %311 : i32
    %313 = tpu.assume_multiple %312, 8 : i32
    %314 = arith.index_cast %313 : i32 to index
    %c0_184 = arith.constant 0 : index
    %315 = vector.load %arg12[%314, %c0_184] : memref<320x128xf32, #tpu.memory_space<vmem>>, vector<8x128xf32>
    %316 = vector.extract_strided_slice %274 {offsets = [0, 384], sizes = [8, 128], strides = [1, 1]} : vector<8x1024xf32> to vector<8x128xf32>
    %317 = arith.addf %315, %316 : vector<8x128xf32>
    %318 = arith.index_cast %313 : i32 to index
    %c0_185 = arith.constant 0 : index
    %319 = vector.load %arg12[%318, %c0_185] : memref<320x128xf32, #tpu.memory_space<vmem>>, vector<8x128xf32>
    tpu.vector_store %arg12[%318, %c0_185], %317 {strides = array<i32>} : memref<320x128xf32, #tpu.memory_space<vmem>>, vector<8x128xf32>,
    %c8_i32_186 = arith.constant 8 : i32
    %320 = arith.muli %c3_i32, %c8_i32_186 : i32
    %c160_i32_187 = arith.constant 160 : i32
    %321 = arith.addi %c160_i32_187, %320 : i32
    %322 = tpu.assume_multiple %321, 8 : i32
    %323 = arith.index_cast %322 : i32 to index
    %c0_188 = arith.constant 0 : index
    %324 = vector.load %arg12[%323, %c0_188] : memref<320x128xf32, #tpu.memory_space<vmem>>, vector<8x128xf32>
    %325 = vector.extract_strided_slice %274 {offsets = [0, 512], sizes = [8, 128], strides = [1, 1]} : vector<8x1024xf32> to vector<8x128xf32>
    %326 = arith.addf %324, %325 : vector<8x128xf32>
    %327 = arith.index_cast %322 : i32 to index
    %c0_189 = arith.constant 0 : index
    %328 = vector.load %arg12[%327, %c0_189] : memref<320x128xf32, #tpu.memory_space<vmem>>, vector<8x128xf32>
    tpu.vector_store %arg12[%327, %c0_189], %326 {strides = array<i32>} : memref<320x128xf32, #tpu.memory_space<vmem>>, vector<8x128xf32>,
    %c8_i32_190 = arith.constant 8 : i32
    %329 = arith.muli %c3_i32, %c8_i32_190 : i32
    %c200_i32_191 = arith.constant 200 : i32
    %330 = arith.addi %c200_i32_191, %329 : i32
    %331 = tpu.assume_multiple %330, 8 : i32
    %332 = arith.index_cast %331 : i32 to index
    %c0_192 = arith.constant 0 : index
    %333 = vector.load %arg12[%332, %c0_192] : memref<320x128xf32, #tpu.memory_space<vmem>>, vector<8x128xf32>
    %334 = vector.extract_strided_slice %274 {offsets = [0, 640], sizes = [8, 128], strides = [1, 1]} : vector<8x1024xf32> to vector<8x128xf32>
    %335 = arith.addf %333, %334 : vector<8x128xf32>
    %336 = arith.index_cast %331 : i32 to index
    %c0_193 = arith.constant 0 : index
    %337 = vector.load %arg12[%336, %c0_193] : memref<320x128xf32, #tpu.memory_space<vmem>>, vector<8x128xf32>
    tpu.vector_store %arg12[%336, %c0_193], %335 {strides = array<i32>} : memref<320x128xf32, #tpu.memory_space<vmem>>, vector<8x128xf32>,
    %c8_i32_194 = arith.constant 8 : i32
    %338 = arith.muli %c3_i32, %c8_i32_194 : i32
    %c240_i32_195 = arith.constant 240 : i32
    %339 = arith.addi %c240_i32_195, %338 : i32
    %340 = tpu.assume_multiple %339, 8 : i32
    %341 = arith.index_cast %340 : i32 to index
    %c0_196 = arith.constant 0 : index
    %342 = vector.load %arg12[%341, %c0_196] : memref<320x128xf32, #tpu.memory_space<vmem>>, vector<8x128xf32>
    %343 = vector.extract_strided_slice %274 {offsets = [0, 768], sizes = [8, 128], strides = [1, 1]} : vector<8x1024xf32> to vector<8x128xf32>
    %344 = arith.addf %342, %343 : vector<8x128xf32>
    %345 = arith.index_cast %340 : i32 to index
    %c0_197 = arith.constant 0 : index
    %346 = vector.load %arg12[%345, %c0_197] : memref<320x128xf32, #tpu.memory_space<vmem>>, vector<8x128xf32>
    tpu.vector_store %arg12[%345, %c0_197], %344 {strides = array<i32>} : memref<320x128xf32, #tpu.memory_space<vmem>>, vector<8x128xf32>,
    %c4_i32 = arith.constant 4 : i32
    %c0_198 = arith.constant 0 : index
    %c0_199 = arith.constant 0 : index
    %347 = vector.load %arg2[%c0_198, %c0_199] : memref<128x1024xf32, #tpu.memory_space<vmem>>, vector<128x1024xf32>
    %cst_200 = arith.constant dense<0.000000e+00> : vector<8x1024xf32>
    %348 = tpu.matmul %281, %347, %cst_200 {dimension_numbers = #tpu.dot_dimension_numbers<[1], [0], [0], [1], [0, 0, 1, 1], [], []>} : vector<8x128xf32>, vector<128x1024xf32>, vector<8x1024xf32> -> vector<8x1024xf32>
    %c8_i32_201 = arith.constant 8 : i32
    %349 = arith.muli %c4_i32, %c8_i32_201 : i32
    %c280_i32_202 = arith.constant 280 : i32
    %350 = arith.addi %c280_i32_202, %349 : i32
    %351 = tpu.assume_multiple %350, 8 : i32
    %352 = arith.index_cast %351 : i32 to index
    %c0_203 = arith.constant 0 : index
    %353 = vector.load %arg12[%352, %c0_203] : memref<320x128xf32, #tpu.memory_space<vmem>>, vector<8x128xf32>
    %354 = vector.extract_strided_slice %348 {offsets = [0, 896], sizes = [8, 128], strides = [1, 1]} : vector<8x1024xf32> to vector<8x128xf32>
    %355 = arith.addf %353, %354 : vector<8x128xf32>
    %356 = arith.index_cast %351 : i32 to index
    %c0_204 = arith.constant 0 : index
    %357 = vector.load %arg12[%356, %c0_204] : memref<320x128xf32, #tpu.memory_space<vmem>>, vector<8x128xf32>
    tpu.vector_store %arg12[%356, %c0_204], %355 {strides = array<i32>} : memref<320x128xf32, #tpu.memory_space<vmem>>, vector<8x128xf32>,
    %c8_i32_205 = arith.constant 8 : i32
    %358 = arith.muli %c4_i32, %c8_i32_205 : i32
    %c0_i32_206 = arith.constant 0 : i32
    %359 = arith.addi %c0_i32_206, %358 : i32
    %360 = tpu.assume_multiple %359, 8 : i32
    %361 = arith.index_cast %360 : i32 to index
    %c0_207 = arith.constant 0 : index
    %362 = vector.load %arg12[%361, %c0_207] : memref<320x128xf32, #tpu.memory_space<vmem>>, vector<8x128xf32>
    %363 = vector.extract_strided_slice %348 {offsets = [0, 0], sizes = [8, 128], strides = [1, 1]} : vector<8x1024xf32> to vector<8x128xf32>
    %364 = arith.addf %362, %363 : vector<8x128xf32>
    %365 = arith.index_cast %360 : i32 to index
    %c0_208 = arith.constant 0 : index
    %366 = vector.load %arg12[%365, %c0_208] : memref<320x128xf32, #tpu.memory_space<vmem>>, vector<8x128xf32>
    tpu.vector_store %arg12[%365, %c0_208], %364 {strides = array<i32>} : memref<320x128xf32, #tpu.memory_space<vmem>>, vector<8x128xf32>,
    %c8_i32_209 = arith.constant 8 : i32
    %367 = arith.muli %c4_i32, %c8_i32_209 : i32
    %c40_i32_210 = arith.constant 40 : i32
    %368 = arith.addi %c40_i32_210, %367 : i32
    %369 = tpu.assume_multiple %368, 8 : i32
    %370 = arith.index_cast %369 : i32 to index
    %c0_211 = arith.constant 0 : index
    %371 = vector.load %arg12[%370, %c0_211] : memref<320x128xf32, #tpu.memory_space<vmem>>, vector<8x128xf32>
    %372 = vector.extract_strided_slice %348 {offsets = [0, 128], sizes = [8, 128], strides = [1, 1]} : vector<8x1024xf32> to vector<8x128xf32>
    %373 = arith.addf %371, %372 : vector<8x128xf32>
    %374 = arith.index_cast %369 : i32 to index
    %c0_212 = arith.constant 0 : index
    %375 = vector.load %arg12[%374, %c0_212] : memref<320x128xf32, #tpu.memory_space<vmem>>, vector<8x128xf32>
    tpu.vector_store %arg12[%374, %c0_212], %373 {strides = array<i32>} : memref<320x128xf32, #tpu.memory_space<vmem>>, vector<8x128xf32>,
    %c8_i32_213 = arith.constant 8 : i32
    %376 = arith.muli %c4_i32, %c8_i32_213 : i32
    %c80_i32_214 = arith.constant 80 : i32
    %377 = arith.addi %c80_i32_214, %376 : i32
    %378 = tpu.assume_multiple %377, 8 : i32
    %379 = arith.index_cast %378 : i32 to index
    %c0_215 = arith.constant 0 : index
    %380 = vector.load %arg12[%379, %c0_215] : memref<320x128xf32, #tpu.memory_space<vmem>>, vector<8x128xf32>
    %381 = vector.extract_strided_slice %348 {offsets = [0, 256], sizes = [8, 128], strides = [1, 1]} : vector<8x1024xf32> to vector<8x128xf32>
    %382 = arith.addf %380, %381 : vector<8x128xf32>
    %383 = arith.index_cast %378 : i32 to index
    %c0_216 = arith.constant 0 : index
    %384 = vector.load %arg12[%383, %c0_216] : memref<320x128xf32, #tpu.memory_space<vmem>>, vector<8x128xf32>
    tpu.vector_store %arg12[%383, %c0_216], %382 {strides = array<i32>} : memref<320x128xf32, #tpu.memory_space<vmem>>, vector<8x128xf32>,
    %c8_i32_217 = arith.constant 8 : i32
    %385 = arith.muli %c4_i32, %c8_i32_217 : i32
    %c120_i32_218 = arith.constant 120 : i32
    %386 = arith.addi %c120_i32_218, %385 : i32
    %387 = tpu.assume_multiple %386, 8 : i32
    %388 = arith.index_cast %387 : i32 to index
    %c0_219 = arith.constant 0 : index
    %389 = vector.load %arg12[%388, %c0_219] : memref<320x128xf32, #tpu.memory_space<vmem>>, vector<8x128xf32>
    %390 = vector.extract_strided_slice %348 {offsets = [0, 384], sizes = [8, 128], strides = [1, 1]} : vector<8x1024xf32> to vector<8x128xf32>
    %391 = arith.addf %389, %390 : vector<8x128xf32>
    %392 = arith.index_cast %387 : i32 to index
    %c0_220 = arith.constant 0 : index
    %393 = vector.load %arg12[%392, %c0_220] : memref<320x128xf32, #tpu.memory_space<vmem>>, vector<8x128xf32>
    tpu.vector_store %arg12[%392, %c0_220], %391 {strides = array<i32>} : memref<320x128xf32, #tpu.memory_space<vmem>>, vector<8x128xf32>,
    %c8_i32_221 = arith.constant 8 : i32
    %394 = arith.muli %c4_i32, %c8_i32_221 : i32
    %c160_i32_222 = arith.constant 160 : i32
    %395 = arith.addi %c160_i32_222, %394 : i32
    %396 = tpu.assume_multiple %395, 8 : i32
    %397 = arith.index_cast %396 : i32 to index
    %c0_223 = arith.constant 0 : index
    %398 = vector.load %arg12[%397, %c0_223] : memref<320x128xf32, #tpu.memory_space<vmem>>, vector<8x128xf32>
    %399 = vector.extract_strided_slice %348 {offsets = [0, 512], sizes = [8, 128], strides = [1, 1]} : vector<8x1024xf32> to vector<8x128xf32>
    %400 = arith.addf %398, %399 : vector<8x128xf32>
    %401 = arith.index_cast %396 : i32 to index
    %c0_224 = arith.constant 0 : index
    %402 = vector.load %arg12[%401, %c0_224] : memref<320x128xf32, #tpu.memory_space<vmem>>, vector<8x128xf32>
    tpu.vector_store %arg12[%401, %c0_224], %400 {strides = array<i32>} : memref<320x128xf32, #tpu.memory_space<vmem>>, vector<8x128xf32>,
    %c8_i32_225 = arith.constant 8 : i32
    %403 = arith.muli %c4_i32, %c8_i32_225 : i32
    %c200_i32_226 = arith.constant 200 : i32
    %404 = arith.addi %c200_i32_226, %403 : i32
    %405 = tpu.assume_multiple %404, 8 : i32
    %406 = arith.index_cast %405 : i32 to index
    %c0_227 = arith.constant 0 : index
    %407 = vector.load %arg12[%406, %c0_227] : memref<320x128xf32, #tpu.memory_space<vmem>>, vector<8x128xf32>
    %408 = vector.extract_strided_slice %348 {offsets = [0, 640], sizes = [8, 128], strides = [1, 1]} : vector<8x1024xf32> to vector<8x128xf32>
    %409 = arith.addf %407, %408 : vector<8x128xf32>
    %410 = arith.index_cast %405 : i32 to index
    %c0_228 = arith.constant 0 : index
    %411 = vector.load %arg12[%410, %c0_228] : memref<320x128xf32, #tpu.memory_space<vmem>>, vector<8x128xf32>
    tpu.vector_store %arg12[%410, %c0_228], %409 {strides = array<i32>} : memref<320x128xf32, #tpu.memory_space<vmem>>, vector<8x128xf32>,
    %c8_i32_229 = arith.constant 8 : i32
    %412 = arith.muli %c4_i32, %c8_i32_229 : i32
    %c240_i32_230 = arith.constant 240 : i32
    %413 = arith.addi %c240_i32_230, %412 : i32
    %414 = tpu.assume_multiple %413, 8 : i32
    %415 = arith.index_cast %414 : i32 to index
    %c0_231 = arith.constant 0 : index
    %416 = vector.load %arg12[%415, %c0_231] : memref<320x128xf32, #tpu.memory_space<vmem>>, vector<8x128xf32>
    %417 = vector.extract_strided_slice %348 {offsets = [0, 768], sizes = [8, 128], strides = [1, 1]} : vector<8x1024xf32> to vector<8x128xf32>
    %418 = arith.addf %416, %417 : vector<8x128xf32>
    %419 = arith.index_cast %414 : i32 to index
    %c0_232 = arith.constant 0 : index
    %420 = vector.load %arg12[%419, %c0_232] : memref<320x128xf32, #tpu.memory_space<vmem>>, vector<8x128xf32>
    tpu.vector_store %arg12[%419, %c0_232], %418 {strides = array<i32>} : memref<320x128xf32, #tpu.memory_space<vmem>>, vector<8x128xf32>,
    %c5_i32 = arith.constant 5 : i32
    %c0_233 = arith.constant 0 : index
    %c0_234 = arith.constant 0 : index
    %c0_235 = arith.constant 0 : index
    %421 = vector.load %arg11[%c0_233, %c0_234, %c0_235] : memref<3x8x128xf32, #tpu.memory_space<vmem>>, vector<1x8x128xf32>
    %422 = vector.shape_cast %421 : vector<1x8x128xf32> to vector<8x128xf32>
    %423 = vector.shape_cast %355 : vector<8x128xf32> to vector<1x8x128xf32>
    tpu.vector_store %arg11[%c0_233, %c0_234, %c0_235], %423 {strides = array<i32>} : memref<3x8x128xf32, #tpu.memory_space<vmem>>, vector<1x8x128xf32>,
    %c0_236 = arith.constant 0 : index
    %c0_237 = arith.constant 0 : index
    %424 = vector.load %arg12[%c0_236, %c0_237] : memref<320x128xf32, #tpu.memory_space<vmem>>, vector<320x128xf32>
    %c0_238 = arith.constant 0 : index
    %c0_239 = arith.constant 0 : index
    %425 = vector.load %arg5[%c0_238, %c0_239] : memref<128x128xf32, #tpu.memory_space<vmem>>, vector<128x128xf32>
    %cst_240 = arith.constant dense<0.000000e+00> : vector<320x128xf32>
    %426 = tpu.matmul %424, %425, %cst_240 {dimension_numbers = #tpu.dot_dimension_numbers<[1], [0], [0], [1], [0, 0, 1, 1], [], []>} : vector<320x128xf32>, vector<128x128xf32>, vector<320x128xf32> -> vector<320x128xf32>
    %c0_241 = arith.constant 0 : index
    %c0_242 = arith.constant 0 : index
    %427 = vector.load %arg13[%c0_241, %c0_242] : memref<320x128xf32, #tpu.memory_space<vmem>>, vector<320x128xf32>
    tpu.vector_store %arg13[%c0_241, %c0_242], %426 {strides = array<i32>} : memref<320x128xf32, #tpu.memory_space<vmem>>, vector<320x128xf32>,
    %c0_243 = arith.constant 0 : index
    %c0_244 = arith.constant 0 : index
    %428 = vector.load %arg13[%c0_243, %c0_244] : memref<320x128xf32, #tpu.memory_space<vmem>>, vector<40x128xf32>
    %c40_245 = arith.constant 40 : index
    %c0_246 = arith.constant 0 : index
    %429 = vector.load %arg13[%c40_245, %c0_246] : memref<320x128xf32, #tpu.memory_space<vmem>>, vector<40x128xf32>
    %c0_247 = arith.constant 0 : index
    %c0_248 = arith.constant 0 : index
    %430 = vector.load %arg4[%c0_247, %c0_248] : memref<128x1024xf32, #tpu.memory_space<vmem>>, vector<128x128xf32>
    %cst_249 = arith.constant dense<0.000000e+00> : vector<40x128xf32>
    %431 = tpu.matmul %428, %430, %cst_249 {dimension_numbers = #tpu.dot_dimension_numbers<[1], [0], [0], [1], [0, 0, 1, 1], [], []>} : vector<40x128xf32>, vector<128x128xf32>, vector<40x128xf32> -> vector<40x128xf32>
    %432 = arith.addf %429, %431 : vector<40x128xf32>
    %c40_250 = arith.constant 40 : index
    %c0_251 = arith.constant 0 : index
    %433 = vector.load %arg13[%c40_250, %c0_251] : memref<320x128xf32, #tpu.memory_space<vmem>>, vector<40x128xf32>
    tpu.vector_store %arg13[%c40_250, %c0_251], %432 {strides = array<i32>} : memref<320x128xf32, #tpu.memory_space<vmem>>, vector<40x128xf32>,
    %c40_252 = arith.constant 40 : index
    %c0_253 = arith.constant 0 : index
    %434 = vector.load %arg13[%c40_252, %c0_253] : memref<320x128xf32, #tpu.memory_space<vmem>>, vector<40x128xf32>
    %c80_254 = arith.constant 80 : index
    %c0_255 = arith.constant 0 : index
    %435 = vector.load %arg13[%c80_254, %c0_255] : memref<320x128xf32, #tpu.memory_space<vmem>>, vector<40x128xf32>
    %c0_256 = arith.constant 0 : index
    %c0_257 = arith.constant 0 : index
    %436 = vector.load %arg4[%c0_256, %c0_257] : memref<128x1024xf32, #tpu.memory_space<vmem>>, vector<128x128xf32>
    %cst_258 = arith.constant dense<0.000000e+00> : vector<40x128xf32>
    %437 = tpu.matmul %434, %436, %cst_258 {dimension_numbers = #tpu.dot_dimension_numbers<[1], [0], [0], [1], [0, 0, 1, 1], [], []>} : vector<40x128xf32>, vector<128x128xf32>, vector<40x128xf32> -> vector<40x128xf32>
    %438 = arith.addf %435, %437 : vector<40x128xf32>
    %c80_259 = arith.constant 80 : index
    %c0_260 = arith.constant 0 : index
    %439 = vector.load %arg13[%c80_259, %c0_260] : memref<320x128xf32, #tpu.memory_space<vmem>>, vector<40x128xf32>
    tpu.vector_store %arg13[%c80_259, %c0_260], %438 {strides = array<i32>} : memref<320x128xf32, #tpu.memory_space<vmem>>, vector<40x128xf32>,
    %c80_261 = arith.constant 80 : index
    %c0_262 = arith.constant 0 : index
    %440 = vector.load %arg13[%c80_261, %c0_262] : memref<320x128xf32, #tpu.memory_space<vmem>>, vector<40x128xf32>
    %c120_263 = arith.constant 120 : index
    %c0_264 = arith.constant 0 : index
    %441 = vector.load %arg13[%c120_263, %c0_264] : memref<320x128xf32, #tpu.memory_space<vmem>>, vector<40x128xf32>
    %c0_265 = arith.constant 0 : index
    %c0_266 = arith.constant 0 : index
    %442 = vector.load %arg4[%c0_265, %c0_266] : memref<128x1024xf32, #tpu.memory_space<vmem>>, vector<128x128xf32>
    %cst_267 = arith.constant dense<0.000000e+00> : vector<40x128xf32>
    %443 = tpu.matmul %440, %442, %cst_267 {dimension_numbers = #tpu.dot_dimension_numbers<[1], [0], [0], [1], [0, 0, 1, 1], [], []>} : vector<40x128xf32>, vector<128x128xf32>, vector<40x128xf32> -> vector<40x128xf32>
    %444 = arith.addf %441, %443 : vector<40x128xf32>
    %c120_268 = arith.constant 120 : index
    %c0_269 = arith.constant 0 : index
    %445 = vector.load %arg13[%c120_268, %c0_269] : memref<320x128xf32, #tpu.memory_space<vmem>>, vector<40x128xf32>
    tpu.vector_store %arg13[%c120_268, %c0_269], %444 {strides = array<i32>} : memref<320x128xf32, #tpu.memory_space<vmem>>, vector<40x128xf32>,
    %c120_270 = arith.constant 120 : index
    %c0_271 = arith.constant 0 : index
    %446 = vector.load %arg13[%c120_270, %c0_271] : memref<320x128xf32, #tpu.memory_space<vmem>>, vector<40x128xf32>
    %c160_272 = arith.constant 160 : index
    %c0_273 = arith.constant 0 : index
    %447 = vector.load %arg13[%c160_272, %c0_273] : memref<320x128xf32, #tpu.memory_space<vmem>>, vector<40x128xf32>
    %c0_274 = arith.constant 0 : index
    %c0_275 = arith.constant 0 : index
    %448 = vector.load %arg4[%c0_274, %c0_275] : memref<128x1024xf32, #tpu.memory_space<vmem>>, vector<128x128xf32>
    %cst_276 = arith.constant dense<0.000000e+00> : vector<40x128xf32>
    %449 = tpu.matmul %446, %448, %cst_276 {dimension_numbers = #tpu.dot_dimension_numbers<[1], [0], [0], [1], [0, 0, 1, 1], [], []>} : vector<40x128xf32>, vector<128x128xf32>, vector<40x128xf32> -> vector<40x128xf32>
    %450 = arith.addf %447, %449 : vector<40x128xf32>
    %c160_277 = arith.constant 160 : index
    %c0_278 = arith.constant 0 : index
    %451 = vector.load %arg13[%c160_277, %c0_278] : memref<320x128xf32, #tpu.memory_space<vmem>>, vector<40x128xf32>
    tpu.vector_store %arg13[%c160_277, %c0_278], %450 {strides = array<i32>} : memref<320x128xf32, #tpu.memory_space<vmem>>, vector<40x128xf32>,
    %c160_279 = arith.constant 160 : index
    %c0_280 = arith.constant 0 : index
    %452 = vector.load %arg13[%c160_279, %c0_280] : memref<320x128xf32, #tpu.memory_space<vmem>>, vector<40x128xf32>
    %c200_281 = arith.constant 200 : index
    %c0_282 = arith.constant 0 : index
    %453 = vector.load %arg13[%c200_281, %c0_282] : memref<320x128xf32, #tpu.memory_space<vmem>>, vector<40x128xf32>
    %c0_283 = arith.constant 0 : index
    %c0_284 = arith.constant 0 : index
    %454 = vector.load %arg4[%c0_283, %c0_284] : memref<128x1024xf32, #tpu.memory_space<vmem>>, vector<128x128xf32>
    %cst_285 = arith.constant dense<0.000000e+00> : vector<40x128xf32>
    %455 = tpu.matmul %452, %454, %cst_285 {dimension_numbers = #tpu.dot_dimension_numbers<[1], [0], [0], [1], [0, 0, 1, 1], [], []>} : vector<40x128xf32>, vector<128x128xf32>, vector<40x128xf32> -> vector<40x128xf32>
    %456 = arith.addf %453, %455 : vector<40x128xf32>
    %c200_286 = arith.constant 200 : index
    %c0_287 = arith.constant 0 : index
    %457 = vector.load %arg13[%c200_286, %c0_287] : memref<320x128xf32, #tpu.memory_space<vmem>>, vector<40x128xf32>
    tpu.vector_store %arg13[%c200_286, %c0_287], %456 {strides = array<i32>} : memref<320x128xf32, #tpu.memory_space<vmem>>, vector<40x128xf32>,
    %c200_288 = arith.constant 200 : index
    %c0_289 = arith.constant 0 : index
    %458 = vector.load %arg13[%c200_288, %c0_289] : memref<320x128xf32, #tpu.memory_space<vmem>>, vector<40x128xf32>
    %c240_290 = arith.constant 240 : index
    %c0_291 = arith.constant 0 : index
    %459 = vector.load %arg13[%c240_290, %c0_291] : memref<320x128xf32, #tpu.memory_space<vmem>>, vector<40x128xf32>
    %c0_292 = arith.constant 0 : index
    %c0_293 = arith.constant 0 : index
    %460 = vector.load %arg4[%c0_292, %c0_293] : memref<128x1024xf32, #tpu.memory_space<vmem>>, vector<128x128xf32>
    %cst_294 = arith.constant dense<0.000000e+00> : vector<40x128xf32>
    %461 = tpu.matmul %458, %460, %cst_294 {dimension_numbers = #tpu.dot_dimension_numbers<[1], [0], [0], [1], [0, 0, 1, 1], [], []>} : vector<40x128xf32>, vector<128x128xf32>, vector<40x128xf32> -> vector<40x128xf32>
    %462 = arith.addf %459, %461 : vector<40x128xf32>
    %c240_295 = arith.constant 240 : index
    %c0_296 = arith.constant 0 : index
    %463 = vector.load %arg13[%c240_295, %c0_296] : memref<320x128xf32, #tpu.memory_space<vmem>>, vector<40x128xf32>
    tpu.vector_store %arg13[%c240_295, %c0_296], %462 {strides = array<i32>} : memref<320x128xf32, #tpu.memory_space<vmem>>, vector<40x128xf32>,
    %c240_297 = arith.constant 240 : index
    %c0_298 = arith.constant 0 : index
    %464 = vector.load %arg13[%c240_297, %c0_298] : memref<320x128xf32, #tpu.memory_space<vmem>>, vector<40x128xf32>
    %c280_299 = arith.constant 280 : index
    %c0_300 = arith.constant 0 : index
    %465 = vector.load %arg13[%c280_299, %c0_300] : memref<320x128xf32, #tpu.memory_space<vmem>>, vector<40x128xf32>
    %c0_301 = arith.constant 0 : index
    %c0_302 = arith.constant 0 : index
    %466 = vector.load %arg4[%c0_301, %c0_302] : memref<128x1024xf32, #tpu.memory_space<vmem>>, vector<128x128xf32>
    %cst_303 = arith.constant dense<0.000000e+00> : vector<40x128xf32>
    %467 = tpu.matmul %464, %466, %cst_303 {dimension_numbers = #tpu.dot_dimension_numbers<[1], [0], [0], [1], [0, 0, 1, 1], [], []>} : vector<40x128xf32>, vector<128x128xf32>, vector<40x128xf32> -> vector<40x128xf32>
    %468 = arith.addf %465, %467 : vector<40x128xf32>
    %c280_304 = arith.constant 280 : index
    %c0_305 = arith.constant 0 : index
    %469 = vector.load %arg13[%c280_304, %c0_305] : memref<320x128xf32, #tpu.memory_space<vmem>>, vector<40x128xf32>
    tpu.vector_store %arg13[%c280_304, %c0_305], %468 {strides = array<i32>} : memref<320x128xf32, #tpu.memory_space<vmem>>, vector<40x128xf32>,
    %c1 = arith.constant 1 : index
    %c0_306 = arith.constant 0 : index
    %c0_307 = arith.constant 0 : index
    %470 = vector.load %arg11[%c1, %c0_306, %c0_307] : memref<3x8x128xf32, #tpu.memory_space<vmem>>, vector<1x8x128xf32>
    %471 = vector.shape_cast %470 : vector<1x8x128xf32> to vector<8x128xf32>
    %c0_i32_308 = arith.constant 0 : i32
    %c0_309 = arith.constant 0 : index
    %c0_310 = arith.constant 0 : index
    %472 = vector.load %arg4[%c0_309, %c0_310] : memref<128x1024xf32, #tpu.memory_space<vmem>>, vector<128x1024xf32>
    %cst_311 = arith.constant dense<0.000000e+00> : vector<8x1024xf32>
    %473 = tpu.matmul %471, %472, %cst_311 {dimension_numbers = #tpu.dot_dimension_numbers<[1], [0], [0], [1], [0, 0, 1, 1], [], []>} : vector<8x128xf32>, vector<128x1024xf32>, vector<8x1024xf32> -> vector<8x1024xf32>
    %c8_i32_312 = arith.constant 8 : i32
    %474 = arith.muli %c0_i32_308, %c8_i32_312 : i32
    %c280_i32_313 = arith.constant 280 : i32
    %475 = arith.addi %c280_i32_313, %474 : i32
    %476 = tpu.assume_multiple %475, 8 : i32
    %477 = arith.index_cast %476 : i32 to index
    %c0_314 = arith.constant 0 : index
    %478 = vector.load %arg13[%477, %c0_314] : memref<320x128xf32, #tpu.memory_space<vmem>>, vector<8x128xf32>
    %479 = vector.extract_strided_slice %473 {offsets = [0, 896], sizes = [8, 128], strides = [1, 1]} : vector<8x1024xf32> to vector<8x128xf32>
    %480 = arith.addf %478, %479 : vector<8x128xf32>
    %481 = arith.index_cast %476 : i32 to index
    %c0_315 = arith.constant 0 : index
    %482 = vector.load %arg13[%481, %c0_315] : memref<320x128xf32, #tpu.memory_space<vmem>>, vector<8x128xf32>
    tpu.vector_store %arg13[%481, %c0_315], %480 {strides = array<i32>} : memref<320x128xf32, #tpu.memory_space<vmem>>, vector<8x128xf32>,
    %c8_i32_316 = arith.constant 8 : i32
    %483 = arith.muli %c0_i32_308, %c8_i32_316 : i32
    %c0_i32_317 = arith.constant 0 : i32
    %484 = arith.addi %c0_i32_317, %483 : i32
    %485 = tpu.assume_multiple %484, 8 : i32
    %486 = arith.index_cast %485 : i32 to index
    %c0_318 = arith.constant 0 : index
    %487 = vector.load %arg13[%486, %c0_318] : memref<320x128xf32, #tpu.memory_space<vmem>>, vector<8x128xf32>
    %488 = vector.extract_strided_slice %473 {offsets = [0, 0], sizes = [8, 128], strides = [1, 1]} : vector<8x1024xf32> to vector<8x128xf32>
    %489 = arith.addf %487, %488 : vector<8x128xf32>
    %490 = arith.index_cast %485 : i32 to index
    %c0_319 = arith.constant 0 : index
    %491 = vector.load %arg13[%490, %c0_319] : memref<320x128xf32, #tpu.memory_space<vmem>>, vector<8x128xf32>
    tpu.vector_store %arg13[%490, %c0_319], %489 {strides = array<i32>} : memref<320x128xf32, #tpu.memory_space<vmem>>, vector<8x128xf32>,
    %c8_i32_320 = arith.constant 8 : i32
    %492 = arith.muli %c0_i32_308, %c8_i32_320 : i32
    %c40_i32_321 = arith.constant 40 : i32
    %493 = arith.addi %c40_i32_321, %492 : i32
    %494 = tpu.assume_multiple %493, 8 : i32
    %495 = arith.index_cast %494 : i32 to index
    %c0_322 = arith.constant 0 : index
    %496 = vector.load %arg13[%495, %c0_322] : memref<320x128xf32, #tpu.memory_space<vmem>>, vector<8x128xf32>
    %497 = vector.extract_strided_slice %473 {offsets = [0, 128], sizes = [8, 128], strides = [1, 1]} : vector<8x1024xf32> to vector<8x128xf32>
    %498 = arith.addf %496, %497 : vector<8x128xf32>
    %499 = arith.index_cast %494 : i32 to index
    %c0_323 = arith.constant 0 : index
    %500 = vector.load %arg13[%499, %c0_323] : memref<320x128xf32, #tpu.memory_space<vmem>>, vector<8x128xf32>
    tpu.vector_store %arg13[%499, %c0_323], %498 {strides = array<i32>} : memref<320x128xf32, #tpu.memory_space<vmem>>, vector<8x128xf32>,
    %c8_i32_324 = arith.constant 8 : i32
    %501 = arith.muli %c0_i32_308, %c8_i32_324 : i32
    %c80_i32_325 = arith.constant 80 : i32
    %502 = arith.addi %c80_i32_325, %501 : i32
    %503 = tpu.assume_multiple %502, 8 : i32
    %504 = arith.index_cast %503 : i32 to index
    %c0_326 = arith.constant 0 : index
    %505 = vector.load %arg13[%504, %c0_326] : memref<320x128xf32, #tpu.memory_space<vmem>>, vector<8x128xf32>
    %506 = vector.extract_strided_slice %473 {offsets = [0, 256], sizes = [8, 128], strides = [1, 1]} : vector<8x1024xf32> to vector<8x128xf32>
    %507 = arith.addf %505, %506 : vector<8x128xf32>
    %508 = arith.index_cast %503 : i32 to index
    %c0_327 = arith.constant 0 : index
    %509 = vector.load %arg13[%508, %c0_327] : memref<320x128xf32, #tpu.memory_space<vmem>>, vector<8x128xf32>
    tpu.vector_store %arg13[%508, %c0_327], %507 {strides = array<i32>} : memref<320x128xf32, #tpu.memory_space<vmem>>, vector<8x128xf32>,
    %c8_i32_328 = arith.constant 8 : i32
    %510 = arith.muli %c0_i32_308, %c8_i32_328 : i32
    %c120_i32_329 = arith.constant 120 : i32
    %511 = arith.addi %c120_i32_329, %510 : i32
    %512 = tpu.assume_multiple %511, 8 : i32
    %513 = arith.index_cast %512 : i32 to index
    %c0_330 = arith.constant 0 : index
    %514 = vector.load %arg13[%513, %c0_330] : memref<320x128xf32, #tpu.memory_space<vmem>>, vector<8x128xf32>
    %515 = vector.extract_strided_slice %473 {offsets = [0, 384], sizes = [8, 128], strides = [1, 1]} : vector<8x1024xf32> to vector<8x128xf32>
    %516 = arith.addf %514, %515 : vector<8x128xf32>
    %517 = arith.index_cast %512 : i32 to index
    %c0_331 = arith.constant 0 : index
    %518 = vector.load %arg13[%517, %c0_331] : memref<320x128xf32, #tpu.memory_space<vmem>>, vector<8x128xf32>
    tpu.vector_store %arg13[%517, %c0_331], %516 {strides = array<i32>} : memref<320x128xf32, #tpu.memory_space<vmem>>, vector<8x128xf32>,
    %c8_i32_332 = arith.constant 8 : i32
    %519 = arith.muli %c0_i32_308, %c8_i32_332 : i32
    %c160_i32_333 = arith.constant 160 : i32
    %520 = arith.addi %c160_i32_333, %519 : i32
    %521 = tpu.assume_multiple %520, 8 : i32
    %522 = arith.index_cast %521 : i32 to index
    %c0_334 = arith.constant 0 : index
    %523 = vector.load %arg13[%522, %c0_334] : memref<320x128xf32, #tpu.memory_space<vmem>>, vector<8x128xf32>
    %524 = vector.extract_strided_slice %473 {offsets = [0, 512], sizes = [8, 128], strides = [1, 1]} : vector<8x1024xf32> to vector<8x128xf32>
    %525 = arith.addf %523, %524 : vector<8x128xf32>
    %526 = arith.index_cast %521 : i32 to index
    %c0_335 = arith.constant 0 : index
    %527 = vector.load %arg13[%526, %c0_335] : memref<320x128xf32, #tpu.memory_space<vmem>>, vector<8x128xf32>
    tpu.vector_store %arg13[%526, %c0_335], %525 {strides = array<i32>} : memref<320x128xf32, #tpu.memory_space<vmem>>, vector<8x128xf32>,
    %c8_i32_336 = arith.constant 8 : i32
    %528 = arith.muli %c0_i32_308, %c8_i32_336 : i32
    %c200_i32_337 = arith.constant 200 : i32
    %529 = arith.addi %c200_i32_337, %528 : i32
    %530 = tpu.assume_multiple %529, 8 : i32
    %531 = arith.index_cast %530 : i32 to index
    %c0_338 = arith.constant 0 : index
    %532 = vector.load %arg13[%531, %c0_338] : memref<320x128xf32, #tpu.memory_space<vmem>>, vector<8x128xf32>
    %533 = vector.extract_strided_slice %473 {offsets = [0, 640], sizes = [8, 128], strides = [1, 1]} : vector<8x1024xf32> to vector<8x128xf32>
    %534 = arith.addf %532, %533 : vector<8x128xf32>
    %535 = arith.index_cast %530 : i32 to index
    %c0_339 = arith.constant 0 : index
    %536 = vector.load %arg13[%535, %c0_339] : memref<320x128xf32, #tpu.memory_space<vmem>>, vector<8x128xf32>
    tpu.vector_store %arg13[%535, %c0_339], %534 {strides = array<i32>} : memref<320x128xf32, #tpu.memory_space<vmem>>, vector<8x128xf32>,
    %c8_i32_340 = arith.constant 8 : i32
    %537 = arith.muli %c0_i32_308, %c8_i32_340 : i32
    %c240_i32_341 = arith.constant 240 : i32
    %538 = arith.addi %c240_i32_341, %537 : i32
    %539 = tpu.assume_multiple %538, 8 : i32
    %540 = arith.index_cast %539 : i32 to index
    %c0_342 = arith.constant 0 : index
    %541 = vector.load %arg13[%540, %c0_342] : memref<320x128xf32, #tpu.memory_space<vmem>>, vector<8x128xf32>
    %542 = vector.extract_strided_slice %473 {offsets = [0, 768], sizes = [8, 128], strides = [1, 1]} : vector<8x1024xf32> to vector<8x128xf32>
    %543 = arith.addf %541, %542 : vector<8x128xf32>
    %544 = arith.index_cast %539 : i32 to index
    %c0_343 = arith.constant 0 : index
    %545 = vector.load %arg13[%544, %c0_343] : memref<320x128xf32, #tpu.memory_space<vmem>>, vector<8x128xf32>
    tpu.vector_store %arg13[%544, %c0_343], %543 {strides = array<i32>} : memref<320x128xf32, #tpu.memory_space<vmem>>, vector<8x128xf32>,
    %c1_i32_344 = arith.constant 1 : i32
    %c0_345 = arith.constant 0 : index
    %c0_346 = arith.constant 0 : index
    %546 = vector.load %arg4[%c0_345, %c0_346] : memref<128x1024xf32, #tpu.memory_space<vmem>>, vector<128x1024xf32>
    %cst_347 = arith.constant dense<0.000000e+00> : vector<8x1024xf32>
    %547 = tpu.matmul %480, %546, %cst_347 {dimension_numbers = #tpu.dot_dimension_numbers<[1], [0], [0], [1], [0, 0, 1, 1], [], []>} : vector<8x128xf32>, vector<128x1024xf32>, vector<8x1024xf32> -> vector<8x1024xf32>
    %c8_i32_348 = arith.constant 8 : i32
    %548 = arith.muli %c1_i32_344, %c8_i32_348 : i32
    %c280_i32_349 = arith.constant 280 : i32
    %549 = arith.addi %c280_i32_349, %548 : i32
    %550 = tpu.assume_multiple %549, 8 : i32
    %551 = arith.index_cast %550 : i32 to index
    %c0_350 = arith.constant 0 : index
    %552 = vector.load %arg13[%551, %c0_350] : memref<320x128xf32, #tpu.memory_space<vmem>>, vector<8x128xf32>
    %553 = vector.extract_strided_slice %547 {offsets = [0, 896], sizes = [8, 128], strides = [1, 1]} : vector<8x1024xf32> to vector<8x128xf32>
    %554 = arith.addf %552, %553 : vector<8x128xf32>
    %555 = arith.index_cast %550 : i32 to index
    %c0_351 = arith.constant 0 : index
    %556 = vector.load %arg13[%555, %c0_351] : memref<320x128xf32, #tpu.memory_space<vmem>>, vector<8x128xf32>
    tpu.vector_store %arg13[%555, %c0_351], %554 {strides = array<i32>} : memref<320x128xf32, #tpu.memory_space<vmem>>, vector<8x128xf32>,
    %c8_i32_352 = arith.constant 8 : i32
    %557 = arith.muli %c1_i32_344, %c8_i32_352 : i32
    %c0_i32_353 = arith.constant 0 : i32
    %558 = arith.addi %c0_i32_353, %557 : i32
    %559 = tpu.assume_multiple %558, 8 : i32
    %560 = arith.index_cast %559 : i32 to index
    %c0_354 = arith.constant 0 : index
    %561 = vector.load %arg13[%560, %c0_354] : memref<320x128xf32, #tpu.memory_space<vmem>>, vector<8x128xf32>
    %562 = vector.extract_strided_slice %547 {offsets = [0, 0], sizes = [8, 128], strides = [1, 1]} : vector<8x1024xf32> to vector<8x128xf32>
    %563 = arith.addf %561, %562 : vector<8x128xf32>
    %564 = arith.index_cast %559 : i32 to index
    %c0_355 = arith.constant 0 : index
    %565 = vector.load %arg13[%564, %c0_355] : memref<320x128xf32, #tpu.memory_space<vmem>>, vector<8x128xf32>
    tpu.vector_store %arg13[%564, %c0_355], %563 {strides = array<i32>} : memref<320x128xf32, #tpu.memory_space<vmem>>, vector<8x128xf32>,
    %c8_i32_356 = arith.constant 8 : i32
    %566 = arith.muli %c1_i32_344, %c8_i32_356 : i32
    %c40_i32_357 = arith.constant 40 : i32
    %567 = arith.addi %c40_i32_357, %566 : i32
    %568 = tpu.assume_multiple %567, 8 : i32
    %569 = arith.index_cast %568 : i32 to index
    %c0_358 = arith.constant 0 : index
    %570 = vector.load %arg13[%569, %c0_358] : memref<320x128xf32, #tpu.memory_space<vmem>>, vector<8x128xf32>
    %571 = vector.extract_strided_slice %547 {offsets = [0, 128], sizes = [8, 128], strides = [1, 1]} : vector<8x1024xf32> to vector<8x128xf32>
    %572 = arith.addf %570, %571 : vector<8x128xf32>
    %573 = arith.index_cast %568 : i32 to index
    %c0_359 = arith.constant 0 : index
    %574 = vector.load %arg13[%573, %c0_359] : memref<320x128xf32, #tpu.memory_space<vmem>>, vector<8x128xf32>
    tpu.vector_store %arg13[%573, %c0_359], %572 {strides = array<i32>} : memref<320x128xf32, #tpu.memory_space<vmem>>, vector<8x128xf32>,
    %c8_i32_360 = arith.constant 8 : i32
    %575 = arith.muli %c1_i32_344, %c8_i32_360 : i32
    %c80_i32_361 = arith.constant 80 : i32
    %576 = arith.addi %c80_i32_361, %575 : i32
    %577 = tpu.assume_multiple %576, 8 : i32
    %578 = arith.index_cast %577 : i32 to index
    %c0_362 = arith.constant 0 : index
    %579 = vector.load %arg13[%578, %c0_362] : memref<320x128xf32, #tpu.memory_space<vmem>>, vector<8x128xf32>
    %580 = vector.extract_strided_slice %547 {offsets = [0, 256], sizes = [8, 128], strides = [1, 1]} : vector<8x1024xf32> to vector<8x128xf32>
    %581 = arith.addf %579, %580 : vector<8x128xf32>
    %582 = arith.index_cast %577 : i32 to index
    %c0_363 = arith.constant 0 : index
    %583 = vector.load %arg13[%582, %c0_363] : memref<320x128xf32, #tpu.memory_space<vmem>>, vector<8x128xf32>
    tpu.vector_store %arg13[%582, %c0_363], %581 {strides = array<i32>} : memref<320x128xf32, #tpu.memory_space<vmem>>, vector<8x128xf32>,
    %c8_i32_364 = arith.constant 8 : i32
    %584 = arith.muli %c1_i32_344, %c8_i32_364 : i32
    %c120_i32_365 = arith.constant 120 : i32
    %585 = arith.addi %c120_i32_365, %584 : i32
    %586 = tpu.assume_multiple %585, 8 : i32
    %587 = arith.index_cast %586 : i32 to index
    %c0_366 = arith.constant 0 : index
    %588 = vector.load %arg13[%587, %c0_366] : memref<320x128xf32, #tpu.memory_space<vmem>>, vector<8x128xf32>
    %589 = vector.extract_strided_slice %547 {offsets = [0, 384], sizes = [8, 128], strides = [1, 1]} : vector<8x1024xf32> to vector<8x128xf32>
    %590 = arith.addf %588, %589 : vector<8x128xf32>
    %591 = arith.index_cast %586 : i32 to index
    %c0_367 = arith.constant 0 : index
    %592 = vector.load %arg13[%591, %c0_367] : memref<320x128xf32, #tpu.memory_space<vmem>>, vector<8x128xf32>
    tpu.vector_store %arg13[%591, %c0_367], %590 {strides = array<i32>} : memref<320x128xf32, #tpu.memory_space<vmem>>, vector<8x128xf32>,
    %c8_i32_368 = arith.constant 8 : i32
    %593 = arith.muli %c1_i32_344, %c8_i32_368 : i32
    %c160_i32_369 = arith.constant 160 : i32
    %594 = arith.addi %c160_i32_369, %593 : i32
    %595 = tpu.assume_multiple %594, 8 : i32
    %596 = arith.index_cast %595 : i32 to index
    %c0_370 = arith.constant 0 : index
    %597 = vector.load %arg13[%596, %c0_370] : memref<320x128xf32, #tpu.memory_space<vmem>>, vector<8x128xf32>
    %598 = vector.extract_strided_slice %547 {offsets = [0, 512], sizes = [8, 128], strides = [1, 1]} : vector<8x1024xf32> to vector<8x128xf32>
    %599 = arith.addf %597, %598 : vector<8x128xf32>
    %600 = arith.index_cast %595 : i32 to index
    %c0_371 = arith.constant 0 : index
    %601 = vector.load %arg13[%600, %c0_371] : memref<320x128xf32, #tpu.memory_space<vmem>>, vector<8x128xf32>
    tpu.vector_store %arg13[%600, %c0_371], %599 {strides = array<i32>} : memref<320x128xf32, #tpu.memory_space<vmem>>, vector<8x128xf32>,
    %c8_i32_372 = arith.constant 8 : i32
    %602 = arith.muli %c1_i32_344, %c8_i32_372 : i32
    %c200_i32_373 = arith.constant 200 : i32
    %603 = arith.addi %c200_i32_373, %602 : i32
    %604 = tpu.assume_multiple %603, 8 : i32
    %605 = arith.index_cast %604 : i32 to index
    %c0_374 = arith.constant 0 : index
    %606 = vector.load %arg13[%605, %c0_374] : memref<320x128xf32, #tpu.memory_space<vmem>>, vector<8x128xf32>
    %607 = vector.extract_strided_slice %547 {offsets = [0, 640], sizes = [8, 128], strides = [1, 1]} : vector<8x1024xf32> to vector<8x128xf32>
    %608 = arith.addf %606, %607 : vector<8x128xf32>
    %609 = arith.index_cast %604 : i32 to index
    %c0_375 = arith.constant 0 : index
    %610 = vector.load %arg13[%609, %c0_375] : memref<320x128xf32, #tpu.memory_space<vmem>>, vector<8x128xf32>
    tpu.vector_store %arg13[%609, %c0_375], %608 {strides = array<i32>} : memref<320x128xf32, #tpu.memory_space<vmem>>, vector<8x128xf32>,
    %c8_i32_376 = arith.constant 8 : i32
    %611 = arith.muli %c1_i32_344, %c8_i32_376 : i32
    %c240_i32_377 = arith.constant 240 : i32
    %612 = arith.addi %c240_i32_377, %611 : i32
    %613 = tpu.assume_multiple %612, 8 : i32
    %614 = arith.index_cast %613 : i32 to index
    %c0_378 = arith.constant 0 : index
    %615 = vector.load %arg13[%614, %c0_378] : memref<320x128xf32, #tpu.memory_space<vmem>>, vector<8x128xf32>
    %616 = vector.extract_strided_slice %547 {offsets = [0, 768], sizes = [8, 128], strides = [1, 1]} : vector<8x1024xf32> to vector<8x128xf32>
    %617 = arith.addf %615, %616 : vector<8x128xf32>
    %618 = arith.index_cast %613 : i32 to index
    %c0_379 = arith.constant 0 : index
    %619 = vector.load %arg13[%618, %c0_379] : memref<320x128xf32, #tpu.memory_space<vmem>>, vector<8x128xf32>
    tpu.vector_store %arg13[%618, %c0_379], %617 {strides = array<i32>} : memref<320x128xf32, #tpu.memory_space<vmem>>, vector<8x128xf32>,
    %c2_i32_380 = arith.constant 2 : i32
    %c0_381 = arith.constant 0 : index
    %c0_382 = arith.constant 0 : index
    %620 = vector.load %arg4[%c0_381, %c0_382] : memref<128x1024xf32, #tpu.memory_space<vmem>>, vector<128x1024xf32>
    %cst_383 = arith.constant dense<0.000000e+00> : vector<8x1024xf32>
    %621 = tpu.matmul %554, %620, %cst_383 {dimension_numbers = #tpu.dot_dimension_numbers<[1], [0], [0], [1], [0, 0, 1, 1], [], []>} : vector<8x128xf32>, vector<128x1024xf32>, vector<8x1024xf32> -> vector<8x1024xf32>
    %c8_i32_384 = arith.constant 8 : i32
    %622 = arith.muli %c2_i32_380, %c8_i32_384 : i32
    %c280_i32_385 = arith.constant 280 : i32
    %623 = arith.addi %c280_i32_385, %622 : i32
    %624 = tpu.assume_multiple %623, 8 : i32
    %625 = arith.index_cast %624 : i32 to index
    %c0_386 = arith.constant 0 : index
    %626 = vector.load %arg13[%625, %c0_386] : memref<320x128xf32, #tpu.memory_space<vmem>>, vector<8x128xf32>
    %627 = vector.extract_strided_slice %621 {offsets = [0, 896], sizes = [8, 128], strides = [1, 1]} : vector<8x1024xf32> to vector<8x128xf32>
    %628 = arith.addf %626, %627 : vector<8x128xf32>
    %629 = arith.index_cast %624 : i32 to index
    %c0_387 = arith.constant 0 : index
    %630 = vector.load %arg13[%629, %c0_387] : memref<320x128xf32, #tpu.memory_space<vmem>>, vector<8x128xf32>
    tpu.vector_store %arg13[%629, %c0_387], %628 {strides = array<i32>} : memref<320x128xf32, #tpu.memory_space<vmem>>, vector<8x128xf32>,
    %c8_i32_388 = arith.constant 8 : i32
    %631 = arith.muli %c2_i32_380, %c8_i32_388 : i32
    %c0_i32_389 = arith.constant 0 : i32
    %632 = arith.addi %c0_i32_389, %631 : i32
    %633 = tpu.assume_multiple %632, 8 : i32
    %634 = arith.index_cast %633 : i32 to index
    %c0_390 = arith.constant 0 : index
    %635 = vector.load %arg13[%634, %c0_390] : memref<320x128xf32, #tpu.memory_space<vmem>>, vector<8x128xf32>
    %636 = vector.extract_strided_slice %621 {offsets = [0, 0], sizes = [8, 128], strides = [1, 1]} : vector<8x1024xf32> to vector<8x128xf32>
    %637 = arith.addf %635, %636 : vector<8x128xf32>
    %638 = arith.index_cast %633 : i32 to index
    %c0_391 = arith.constant 0 : index
    %639 = vector.load %arg13[%638, %c0_391] : memref<320x128xf32, #tpu.memory_space<vmem>>, vector<8x128xf32>
    tpu.vector_store %arg13[%638, %c0_391], %637 {strides = array<i32>} : memref<320x128xf32, #tpu.memory_space<vmem>>, vector<8x128xf32>,
    %c8_i32_392 = arith.constant 8 : i32
    %640 = arith.muli %c2_i32_380, %c8_i32_392 : i32
    %c40_i32_393 = arith.constant 40 : i32
    %641 = arith.addi %c40_i32_393, %640 : i32
    %642 = tpu.assume_multiple %641, 8 : i32
    %643 = arith.index_cast %642 : i32 to index
    %c0_394 = arith.constant 0 : index
    %644 = vector.load %arg13[%643, %c0_394] : memref<320x128xf32, #tpu.memory_space<vmem>>, vector<8x128xf32>
    %645 = vector.extract_strided_slice %621 {offsets = [0, 128], sizes = [8, 128], strides = [1, 1]} : vector<8x1024xf32> to vector<8x128xf32>
    %646 = arith.addf %644, %645 : vector<8x128xf32>
    %647 = arith.index_cast %642 : i32 to index
    %c0_395 = arith.constant 0 : index
    %648 = vector.load %arg13[%647, %c0_395] : memref<320x128xf32, #tpu.memory_space<vmem>>, vector<8x128xf32>
    tpu.vector_store %arg13[%647, %c0_395], %646 {strides = array<i32>} : memref<320x128xf32, #tpu.memory_space<vmem>>, vector<8x128xf32>,
    %c8_i32_396 = arith.constant 8 : i32
    %649 = arith.muli %c2_i32_380, %c8_i32_396 : i32
    %c80_i32_397 = arith.constant 80 : i32
    %650 = arith.addi %c80_i32_397, %649 : i32
    %651 = tpu.assume_multiple %650, 8 : i32
    %652 = arith.index_cast %651 : i32 to index
    %c0_398 = arith.constant 0 : index
    %653 = vector.load %arg13[%652, %c0_398] : memref<320x128xf32, #tpu.memory_space<vmem>>, vector<8x128xf32>
    %654 = vector.extract_strided_slice %621 {offsets = [0, 256], sizes = [8, 128], strides = [1, 1]} : vector<8x1024xf32> to vector<8x128xf32>
    %655 = arith.addf %653, %654 : vector<8x128xf32>
    %656 = arith.index_cast %651 : i32 to index
    %c0_399 = arith.constant 0 : index
    %657 = vector.load %arg13[%656, %c0_399] : memref<320x128xf32, #tpu.memory_space<vmem>>, vector<8x128xf32>
    tpu.vector_store %arg13[%656, %c0_399], %655 {strides = array<i32>} : memref<320x128xf32, #tpu.memory_space<vmem>>, vector<8x128xf32>,
    %c8_i32_400 = arith.constant 8 : i32
    %658 = arith.muli %c2_i32_380, %c8_i32_400 : i32
    %c120_i32_401 = arith.constant 120 : i32
    %659 = arith.addi %c120_i32_401, %658 : i32
    %660 = tpu.assume_multiple %659, 8 : i32
    %661 = arith.index_cast %660 : i32 to index
    %c0_402 = arith.constant 0 : index
    %662 = vector.load %arg13[%661, %c0_402] : memref<320x128xf32, #tpu.memory_space<vmem>>, vector<8x128xf32>
    %663 = vector.extract_strided_slice %621 {offsets = [0, 384], sizes = [8, 128], strides = [1, 1]} : vector<8x1024xf32> to vector<8x128xf32>
    %664 = arith.addf %662, %663 : vector<8x128xf32>
    %665 = arith.index_cast %660 : i32 to index
    %c0_403 = arith.constant 0 : index
    %666 = vector.load %arg13[%665, %c0_403] : memref<320x128xf32, #tpu.memory_space<vmem>>, vector<8x128xf32>
    tpu.vector_store %arg13[%665, %c0_403], %664 {strides = array<i32>} : memref<320x128xf32, #tpu.memory_space<vmem>>, vector<8x128xf32>,
    %c8_i32_404 = arith.constant 8 : i32
    %667 = arith.muli %c2_i32_380, %c8_i32_404 : i32
    %c160_i32_405 = arith.constant 160 : i32
    %668 = arith.addi %c160_i32_405, %667 : i32
    %669 = tpu.assume_multiple %668, 8 : i32
    %670 = arith.index_cast %669 : i32 to index
    %c0_406 = arith.constant 0 : index
    %671 = vector.load %arg13[%670, %c0_406] : memref<320x128xf32, #tpu.memory_space<vmem>>, vector<8x128xf32>
    %672 = vector.extract_strided_slice %621 {offsets = [0, 512], sizes = [8, 128], strides = [1, 1]} : vector<8x1024xf32> to vector<8x128xf32>
    %673 = arith.addf %671, %672 : vector<8x128xf32>
    %674 = arith.index_cast %669 : i32 to index
    %c0_407 = arith.constant 0 : index
    %675 = vector.load %arg13[%674, %c0_407] : memref<320x128xf32, #tpu.memory_space<vmem>>, vector<8x128xf32>
    tpu.vector_store %arg13[%674, %c0_407], %673 {strides = array<i32>} : memref<320x128xf32, #tpu.memory_space<vmem>>, vector<8x128xf32>,
    %c8_i32_408 = arith.constant 8 : i32
    %676 = arith.muli %c2_i32_380, %c8_i32_408 : i32
    %c200_i32_409 = arith.constant 200 : i32
    %677 = arith.addi %c200_i32_409, %676 : i32
    %678 = tpu.assume_multiple %677, 8 : i32
    %679 = arith.index_cast %678 : i32 to index
    %c0_410 = arith.constant 0 : index
    %680 = vector.load %arg13[%679, %c0_410] : memref<320x128xf32, #tpu.memory_space<vmem>>, vector<8x128xf32>
    %681 = vector.extract_strided_slice %621 {offsets = [0, 640], sizes = [8, 128], strides = [1, 1]} : vector<8x1024xf32> to vector<8x128xf32>
    %682 = arith.addf %680, %681 : vector<8x128xf32>
    %683 = arith.index_cast %678 : i32 to index
    %c0_411 = arith.constant 0 : index
    %684 = vector.load %arg13[%683, %c0_411] : memref<320x128xf32, #tpu.memory_space<vmem>>, vector<8x128xf32>
    tpu.vector_store %arg13[%683, %c0_411], %682 {strides = array<i32>} : memref<320x128xf32, #tpu.memory_space<vmem>>, vector<8x128xf32>,
    %c8_i32_412 = arith.constant 8 : i32
    %685 = arith.muli %c2_i32_380, %c8_i32_412 : i32
    %c240_i32_413 = arith.constant 240 : i32
    %686 = arith.addi %c240_i32_413, %685 : i32
    %687 = tpu.assume_multiple %686, 8 : i32
    %688 = arith.index_cast %687 : i32 to index
    %c0_414 = arith.constant 0 : index
    %689 = vector.load %arg13[%688, %c0_414] : memref<320x128xf32, #tpu.memory_space<vmem>>, vector<8x128xf32>
    %690 = vector.extract_strided_slice %621 {offsets = [0, 768], sizes = [8, 128], strides = [1, 1]} : vector<8x1024xf32> to vector<8x128xf32>
    %691 = arith.addf %689, %690 : vector<8x128xf32>
    %692 = arith.index_cast %687 : i32 to index
    %c0_415 = arith.constant 0 : index
    %693 = vector.load %arg13[%692, %c0_415] : memref<320x128xf32, #tpu.memory_space<vmem>>, vector<8x128xf32>
    tpu.vector_store %arg13[%692, %c0_415], %691 {strides = array<i32>} : memref<320x128xf32, #tpu.memory_space<vmem>>, vector<8x128xf32>,
    %c3_i32_416 = arith.constant 3 : i32
    %c0_417 = arith.constant 0 : index
    %c0_418 = arith.constant 0 : index
    %694 = vector.load %arg4[%c0_417, %c0_418] : memref<128x1024xf32, #tpu.memory_space<vmem>>, vector<128x1024xf32>
    %cst_419 = arith.constant dense<0.000000e+00> : vector<8x1024xf32>
    %695 = tpu.matmul %628, %694, %cst_419 {dimension_numbers = #tpu.dot_dimension_numbers<[1], [0], [0], [1], [0, 0, 1, 1], [], []>} : vector<8x128xf32>, vector<128x1024xf32>, vector<8x1024xf32> -> vector<8x1024xf32>
    %c8_i32_420 = arith.constant 8 : i32
    %696 = arith.muli %c3_i32_416, %c8_i32_420 : i32
    %c280_i32_421 = arith.constant 280 : i32
    %697 = arith.addi %c280_i32_421, %696 : i32
    %698 = tpu.assume_multiple %697, 8 : i32
    %699 = arith.index_cast %698 : i32 to index
    %c0_422 = arith.constant 0 : index
    %700 = vector.load %arg13[%699, %c0_422] : memref<320x128xf32, #tpu.memory_space<vmem>>, vector<8x128xf32>
    %701 = vector.extract_strided_slice %695 {offsets = [0, 896], sizes = [8, 128], strides = [1, 1]} : vector<8x1024xf32> to vector<8x128xf32>
    %702 = arith.addf %700, %701 : vector<8x128xf32>
    %703 = arith.index_cast %698 : i32 to index
    %c0_423 = arith.constant 0 : index
    %704 = vector.load %arg13[%703, %c0_423] : memref<320x128xf32, #tpu.memory_space<vmem>>, vector<8x128xf32>
    tpu.vector_store %arg13[%703, %c0_423], %702 {strides = array<i32>} : memref<320x128xf32, #tpu.memory_space<vmem>>, vector<8x128xf32>,
    %c8_i32_424 = arith.constant 8 : i32
    %705 = arith.muli %c3_i32_416, %c8_i32_424 : i32
    %c0_i32_425 = arith.constant 0 : i32
    %706 = arith.addi %c0_i32_425, %705 : i32
    %707 = tpu.assume_multiple %706, 8 : i32
    %708 = arith.index_cast %707 : i32 to index
    %c0_426 = arith.constant 0 : index
    %709 = vector.load %arg13[%708, %c0_426] : memref<320x128xf32, #tpu.memory_space<vmem>>, vector<8x128xf32>
    %710 = vector.extract_strided_slice %695 {offsets = [0, 0], sizes = [8, 128], strides = [1, 1]} : vector<8x1024xf32> to vector<8x128xf32>
    %711 = arith.addf %709, %710 : vector<8x128xf32>
    %712 = arith.index_cast %707 : i32 to index
    %c0_427 = arith.constant 0 : index
    %713 = vector.load %arg13[%712, %c0_427] : memref<320x128xf32, #tpu.memory_space<vmem>>, vector<8x128xf32>
    tpu.vector_store %arg13[%712, %c0_427], %711 {strides = array<i32>} : memref<320x128xf32, #tpu.memory_space<vmem>>, vector<8x128xf32>,
    %c8_i32_428 = arith.constant 8 : i32
    %714 = arith.muli %c3_i32_416, %c8_i32_428 : i32
    %c40_i32_429 = arith.constant 40 : i32
    %715 = arith.addi %c40_i32_429, %714 : i32
    %716 = tpu.assume_multiple %715, 8 : i32
    %717 = arith.index_cast %716 : i32 to index
    %c0_430 = arith.constant 0 : index
    %718 = vector.load %arg13[%717, %c0_430] : memref<320x128xf32, #tpu.memory_space<vmem>>, vector<8x128xf32>
    %719 = vector.extract_strided_slice %695 {offsets = [0, 128], sizes = [8, 128], strides = [1, 1]} : vector<8x1024xf32> to vector<8x128xf32>
    %720 = arith.addf %718, %719 : vector<8x128xf32>
    %721 = arith.index_cast %716 : i32 to index
    %c0_431 = arith.constant 0 : index
    %722 = vector.load %arg13[%721, %c0_431] : memref<320x128xf32, #tpu.memory_space<vmem>>, vector<8x128xf32>
    tpu.vector_store %arg13[%721, %c0_431], %720 {strides = array<i32>} : memref<320x128xf32, #tpu.memory_space<vmem>>, vector<8x128xf32>,
    %c8_i32_432 = arith.constant 8 : i32
    %723 = arith.muli %c3_i32_416, %c8_i32_432 : i32
    %c80_i32_433 = arith.constant 80 : i32
    %724 = arith.addi %c80_i32_433, %723 : i32
    %725 = tpu.assume_multiple %724, 8 : i32
    %726 = arith.index_cast %725 : i32 to index
    %c0_434 = arith.constant 0 : index
    %727 = vector.load %arg13[%726, %c0_434] : memref<320x128xf32, #tpu.memory_space<vmem>>, vector<8x128xf32>
    %728 = vector.extract_strided_slice %695 {offsets = [0, 256], sizes = [8, 128], strides = [1, 1]} : vector<8x1024xf32> to vector<8x128xf32>
    %729 = arith.addf %727, %728 : vector<8x128xf32>
    %730 = arith.index_cast %725 : i32 to index
    %c0_435 = arith.constant 0 : index
    %731 = vector.load %arg13[%730, %c0_435] : memref<320x128xf32, #tpu.memory_space<vmem>>, vector<8x128xf32>
    tpu.vector_store %arg13[%730, %c0_435], %729 {strides = array<i32>} : memref<320x128xf32, #tpu.memory_space<vmem>>, vector<8x128xf32>,
    %c8_i32_436 = arith.constant 8 : i32
    %732 = arith.muli %c3_i32_416, %c8_i32_436 : i32
    %c120_i32_437 = arith.constant 120 : i32
    %733 = arith.addi %c120_i32_437, %732 : i32
    %734 = tpu.assume_multiple %733, 8 : i32
    %735 = arith.index_cast %734 : i32 to index
    %c0_438 = arith.constant 0 : index
    %736 = vector.load %arg13[%735, %c0_438] : memref<320x128xf32, #tpu.memory_space<vmem>>, vector<8x128xf32>
    %737 = vector.extract_strided_slice %695 {offsets = [0, 384], sizes = [8, 128], strides = [1, 1]} : vector<8x1024xf32> to vector<8x128xf32>
    %738 = arith.addf %736, %737 : vector<8x128xf32>
    %739 = arith.index_cast %734 : i32 to index
    %c0_439 = arith.constant 0 : index
    %740 = vector.load %arg13[%739, %c0_439] : memref<320x128xf32, #tpu.memory_space<vmem>>, vector<8x128xf32>
    tpu.vector_store %arg13[%739, %c0_439], %738 {strides = array<i32>} : memref<320x128xf32, #tpu.memory_space<vmem>>, vector<8x128xf32>,
    %c8_i32_440 = arith.constant 8 : i32
    %741 = arith.muli %c3_i32_416, %c8_i32_440 : i32
    %c160_i32_441 = arith.constant 160 : i32
    %742 = arith.addi %c160_i32_441, %741 : i32
    %743 = tpu.assume_multiple %742, 8 : i32
    %744 = arith.index_cast %743 : i32 to index
    %c0_442 = arith.constant 0 : index
    %745 = vector.load %arg13[%744, %c0_442] : memref<320x128xf32, #tpu.memory_space<vmem>>, vector<8x128xf32>
    %746 = vector.extract_strided_slice %695 {offsets = [0, 512], sizes = [8, 128], strides = [1, 1]} : vector<8x1024xf32> to vector<8x128xf32>
    %747 = arith.addf %745, %746 : vector<8x128xf32>
    %748 = arith.index_cast %743 : i32 to index
    %c0_443 = arith.constant 0 : index
    %749 = vector.load %arg13[%748, %c0_443] : memref<320x128xf32, #tpu.memory_space<vmem>>, vector<8x128xf32>
    tpu.vector_store %arg13[%748, %c0_443], %747 {strides = array<i32>} : memref<320x128xf32, #tpu.memory_space<vmem>>, vector<8x128xf32>,
    %c8_i32_444 = arith.constant 8 : i32
    %750 = arith.muli %c3_i32_416, %c8_i32_444 : i32
    %c200_i32_445 = arith.constant 200 : i32
    %751 = arith.addi %c200_i32_445, %750 : i32
    %752 = tpu.assume_multiple %751, 8 : i32
    %753 = arith.index_cast %752 : i32 to index
    %c0_446 = arith.constant 0 : index
    %754 = vector.load %arg13[%753, %c0_446] : memref<320x128xf32, #tpu.memory_space<vmem>>, vector<8x128xf32>
    %755 = vector.extract_strided_slice %695 {offsets = [0, 640], sizes = [8, 128], strides = [1, 1]} : vector<8x1024xf32> to vector<8x128xf32>
    %756 = arith.addf %754, %755 : vector<8x128xf32>
    %757 = arith.index_cast %752 : i32 to index
    %c0_447 = arith.constant 0 : index
    %758 = vector.load %arg13[%757, %c0_447] : memref<320x128xf32, #tpu.memory_space<vmem>>, vector<8x128xf32>
    tpu.vector_store %arg13[%757, %c0_447], %756 {strides = array<i32>} : memref<320x128xf32, #tpu.memory_space<vmem>>, vector<8x128xf32>,
    %c8_i32_448 = arith.constant 8 : i32
    %759 = arith.muli %c3_i32_416, %c8_i32_448 : i32
    %c240_i32_449 = arith.constant 240 : i32
    %760 = arith.addi %c240_i32_449, %759 : i32
    %761 = tpu.assume_multiple %760, 8 : i32
    %762 = arith.index_cast %761 : i32 to index
    %c0_450 = arith.constant 0 : index
    %763 = vector.load %arg13[%762, %c0_450] : memref<320x128xf32, #tpu.memory_space<vmem>>, vector<8x128xf32>
    %764 = vector.extract_strided_slice %695 {offsets = [0, 768], sizes = [8, 128], strides = [1, 1]} : vector<8x1024xf32> to vector<8x128xf32>
    %765 = arith.addf %763, %764 : vector<8x128xf32>
    %766 = arith.index_cast %761 : i32 to index
    %c0_451 = arith.constant 0 : index
    %767 = vector.load %arg13[%766, %c0_451] : memref<320x128xf32, #tpu.memory_space<vmem>>, vector<8x128xf32>
    tpu.vector_store %arg13[%766, %c0_451], %765 {strides = array<i32>} : memref<320x128xf32, #tpu.memory_space<vmem>>, vector<8x128xf32>,
    %c4_i32_452 = arith.constant 4 : i32
    %c0_453 = arith.constant 0 : index
    %c0_454 = arith.constant 0 : index
    %768 = vector.load %arg4[%c0_453, %c0_454] : memref<128x1024xf32, #tpu.memory_space<vmem>>, vector<128x1024xf32>
    %cst_455 = arith.constant dense<0.000000e+00> : vector<8x1024xf32>
    %769 = tpu.matmul %702, %768, %cst_455 {dimension_numbers = #tpu.dot_dimension_numbers<[1], [0], [0], [1], [0, 0, 1, 1], [], []>} : vector<8x128xf32>, vector<128x1024xf32>, vector<8x1024xf32> -> vector<8x1024xf32>
    %c8_i32_456 = arith.constant 8 : i32
    %770 = arith.muli %c4_i32_452, %c8_i32_456 : i32
    %c280_i32_457 = arith.constant 280 : i32
    %771 = arith.addi %c280_i32_457, %770 : i32
    %772 = tpu.assume_multiple %771, 8 : i32
    %773 = arith.index_cast %772 : i32 to index
    %c0_458 = arith.constant 0 : index
    %774 = vector.load %arg13[%773, %c0_458] : memref<320x128xf32, #tpu.memory_space<vmem>>, vector<8x128xf32>
    %775 = vector.extract_strided_slice %769 {offsets = [0, 896], sizes = [8, 128], strides = [1, 1]} : vector<8x1024xf32> to vector<8x128xf32>
    %776 = arith.addf %774, %775 : vector<8x128xf32>
    %777 = arith.index_cast %772 : i32 to index
    %c0_459 = arith.constant 0 : index
    %778 = vector.load %arg13[%777, %c0_459] : memref<320x128xf32, #tpu.memory_space<vmem>>, vector<8x128xf32>
    tpu.vector_store %arg13[%777, %c0_459], %776 {strides = array<i32>} : memref<320x128xf32, #tpu.memory_space<vmem>>, vector<8x128xf32>,
    %c8_i32_460 = arith.constant 8 : i32
    %779 = arith.muli %c4_i32_452, %c8_i32_460 : i32
    %c0_i32_461 = arith.constant 0 : i32
    %780 = arith.addi %c0_i32_461, %779 : i32
    %781 = tpu.assume_multiple %780, 8 : i32
    %782 = arith.index_cast %781 : i32 to index
    %c0_462 = arith.constant 0 : index
    %783 = vector.load %arg13[%782, %c0_462] : memref<320x128xf32, #tpu.memory_space<vmem>>, vector<8x128xf32>
    %784 = vector.extract_strided_slice %769 {offsets = [0, 0], sizes = [8, 128], strides = [1, 1]} : vector<8x1024xf32> to vector<8x128xf32>
    %785 = arith.addf %783, %784 : vector<8x128xf32>
    %786 = arith.index_cast %781 : i32 to index
    %c0_463 = arith.constant 0 : index
    %787 = vector.load %arg13[%786, %c0_463] : memref<320x128xf32, #tpu.memory_space<vmem>>, vector<8x128xf32>
    tpu.vector_store %arg13[%786, %c0_463], %785 {strides = array<i32>} : memref<320x128xf32, #tpu.memory_space<vmem>>, vector<8x128xf32>,
    %c8_i32_464 = arith.constant 8 : i32
    %788 = arith.muli %c4_i32_452, %c8_i32_464 : i32
    %c40_i32_465 = arith.constant 40 : i32
    %789 = arith.addi %c40_i32_465, %788 : i32
    %790 = tpu.assume_multiple %789, 8 : i32
    %791 = arith.index_cast %790 : i32 to index
    %c0_466 = arith.constant 0 : index
    %792 = vector.load %arg13[%791, %c0_466] : memref<320x128xf32, #tpu.memory_space<vmem>>, vector<8x128xf32>
    %793 = vector.extract_strided_slice %769 {offsets = [0, 128], sizes = [8, 128], strides = [1, 1]} : vector<8x1024xf32> to vector<8x128xf32>
    %794 = arith.addf %792, %793 : vector<8x128xf32>
    %795 = arith.index_cast %790 : i32 to index
    %c0_467 = arith.constant 0 : index
    %796 = vector.load %arg13[%795, %c0_467] : memref<320x128xf32, #tpu.memory_space<vmem>>, vector<8x128xf32>
    tpu.vector_store %arg13[%795, %c0_467], %794 {strides = array<i32>} : memref<320x128xf32, #tpu.memory_space<vmem>>, vector<8x128xf32>,
    %c8_i32_468 = arith.constant 8 : i32
    %797 = arith.muli %c4_i32_452, %c8_i32_468 : i32
    %c80_i32_469 = arith.constant 80 : i32
    %798 = arith.addi %c80_i32_469, %797 : i32
    %799 = tpu.assume_multiple %798, 8 : i32
    %800 = arith.index_cast %799 : i32 to index
    %c0_470 = arith.constant 0 : index
    %801 = vector.load %arg13[%800, %c0_470] : memref<320x128xf32, #tpu.memory_space<vmem>>, vector<8x128xf32>
    %802 = vector.extract_strided_slice %769 {offsets = [0, 256], sizes = [8, 128], strides = [1, 1]} : vector<8x1024xf32> to vector<8x128xf32>
    %803 = arith.addf %801, %802 : vector<8x128xf32>
    %804 = arith.index_cast %799 : i32 to index
    %c0_471 = arith.constant 0 : index
    %805 = vector.load %arg13[%804, %c0_471] : memref<320x128xf32, #tpu.memory_space<vmem>>, vector<8x128xf32>
    tpu.vector_store %arg13[%804, %c0_471], %803 {strides = array<i32>} : memref<320x128xf32, #tpu.memory_space<vmem>>, vector<8x128xf32>,
    %c8_i32_472 = arith.constant 8 : i32
    %806 = arith.muli %c4_i32_452, %c8_i32_472 : i32
    %c120_i32_473 = arith.constant 120 : i32
    %807 = arith.addi %c120_i32_473, %806 : i32
    %808 = tpu.assume_multiple %807, 8 : i32
    %809 = arith.index_cast %808 : i32 to index
    %c0_474 = arith.constant 0 : index
    %810 = vector.load %arg13[%809, %c0_474] : memref<320x128xf32, #tpu.memory_space<vmem>>, vector<8x128xf32>
    %811 = vector.extract_strided_slice %769 {offsets = [0, 384], sizes = [8, 128], strides = [1, 1]} : vector<8x1024xf32> to vector<8x128xf32>
    %812 = arith.addf %810, %811 : vector<8x128xf32>
    %813 = arith.index_cast %808 : i32 to index
    %c0_475 = arith.constant 0 : index
    %814 = vector.load %arg13[%813, %c0_475] : memref<320x128xf32, #tpu.memory_space<vmem>>, vector<8x128xf32>
    tpu.vector_store %arg13[%813, %c0_475], %812 {strides = array<i32>} : memref<320x128xf32, #tpu.memory_space<vmem>>, vector<8x128xf32>,
    %c8_i32_476 = arith.constant 8 : i32
    %815 = arith.muli %c4_i32_452, %c8_i32_476 : i32
    %c160_i32_477 = arith.constant 160 : i32
    %816 = arith.addi %c160_i32_477, %815 : i32
    %817 = tpu.assume_multiple %816, 8 : i32
    %818 = arith.index_cast %817 : i32 to index
    %c0_478 = arith.constant 0 : index
    %819 = vector.load %arg13[%818, %c0_478] : memref<320x128xf32, #tpu.memory_space<vmem>>, vector<8x128xf32>
    %820 = vector.extract_strided_slice %769 {offsets = [0, 512], sizes = [8, 128], strides = [1, 1]} : vector<8x1024xf32> to vector<8x128xf32>
    %821 = arith.addf %819, %820 : vector<8x128xf32>
    %822 = arith.index_cast %817 : i32 to index
    %c0_479 = arith.constant 0 : index
    %823 = vector.load %arg13[%822, %c0_479] : memref<320x128xf32, #tpu.memory_space<vmem>>, vector<8x128xf32>
    tpu.vector_store %arg13[%822, %c0_479], %821 {strides = array<i32>} : memref<320x128xf32, #tpu.memory_space<vmem>>, vector<8x128xf32>,
    %c8_i32_480 = arith.constant 8 : i32
    %824 = arith.muli %c4_i32_452, %c8_i32_480 : i32
    %c200_i32_481 = arith.constant 200 : i32
    %825 = arith.addi %c200_i32_481, %824 : i32
    %826 = tpu.assume_multiple %825, 8 : i32
    %827 = arith.index_cast %826 : i32 to index
    %c0_482 = arith.constant 0 : index
    %828 = vector.load %arg13[%827, %c0_482] : memref<320x128xf32, #tpu.memory_space<vmem>>, vector<8x128xf32>
    %829 = vector.extract_strided_slice %769 {offsets = [0, 640], sizes = [8, 128], strides = [1, 1]} : vector<8x1024xf32> to vector<8x128xf32>
    %830 = arith.addf %828, %829 : vector<8x128xf32>
    %831 = arith.index_cast %826 : i32 to index
    %c0_483 = arith.constant 0 : index
    %832 = vector.load %arg13[%831, %c0_483] : memref<320x128xf32, #tpu.memory_space<vmem>>, vector<8x128xf32>
    tpu.vector_store %arg13[%831, %c0_483], %830 {strides = array<i32>} : memref<320x128xf32, #tpu.memory_space<vmem>>, vector<8x128xf32>,
    %c8_i32_484 = arith.constant 8 : i32
    %833 = arith.muli %c4_i32_452, %c8_i32_484 : i32
    %c240_i32_485 = arith.constant 240 : i32
    %834 = arith.addi %c240_i32_485, %833 : i32
    %835 = tpu.assume_multiple %834, 8 : i32
    %836 = arith.index_cast %835 : i32 to index
    %c0_486 = arith.constant 0 : index
    %837 = vector.load %arg13[%836, %c0_486] : memref<320x128xf32, #tpu.memory_space<vmem>>, vector<8x128xf32>
    %838 = vector.extract_strided_slice %769 {offsets = [0, 768], sizes = [8, 128], strides = [1, 1]} : vector<8x1024xf32> to vector<8x128xf32>
    %839 = arith.addf %837, %838 : vector<8x128xf32>
    %840 = arith.index_cast %835 : i32 to index
    %c0_487 = arith.constant 0 : index
    %841 = vector.load %arg13[%840, %c0_487] : memref<320x128xf32, #tpu.memory_space<vmem>>, vector<8x128xf32>
    tpu.vector_store %arg13[%840, %c0_487], %839 {strides = array<i32>} : memref<320x128xf32, #tpu.memory_space<vmem>>, vector<8x128xf32>,
    %c5_i32_488 = arith.constant 5 : i32
    %c1_489 = arith.constant 1 : index
    %c0_490 = arith.constant 0 : index
    %c0_491 = arith.constant 0 : index
    %842 = vector.load %arg11[%c1_489, %c0_490, %c0_491] : memref<3x8x128xf32, #tpu.memory_space<vmem>>, vector<1x8x128xf32>
    %843 = vector.shape_cast %842 : vector<1x8x128xf32> to vector<8x128xf32>
    %844 = vector.shape_cast %776 : vector<8x128xf32> to vector<1x8x128xf32>
    tpu.vector_store %arg11[%c1_489, %c0_490, %c0_491], %844 {strides = array<i32>} : memref<3x8x128xf32, #tpu.memory_space<vmem>>, vector<1x8x128xf32>,
    %c0_492 = arith.constant 0 : index
    %c0_493 = arith.constant 0 : index
    %845 = vector.load %arg13[%c0_492, %c0_493] : memref<320x128xf32, #tpu.memory_space<vmem>>, vector<320x128xf32>
    %c0_494 = arith.constant 0 : index
    %c0_495 = arith.constant 0 : index
    %846 = vector.load %arg7[%c0_494, %c0_495] : memref<128x128xf32, #tpu.memory_space<vmem>>, vector<128x128xf32>
    %cst_496 = arith.constant dense<0.000000e+00> : vector<320x128xf32>
    %847 = tpu.matmul %845, %846, %cst_496 {dimension_numbers = #tpu.dot_dimension_numbers<[1], [0], [0], [1], [0, 0, 1, 1], [], []>} : vector<320x128xf32>, vector<128x128xf32>, vector<320x128xf32> -> vector<320x128xf32>
    %c0_497 = arith.constant 0 : index
    %c0_498 = arith.constant 0 : index
    %848 = vector.load %arg12[%c0_497, %c0_498] : memref<320x128xf32, #tpu.memory_space<vmem>>, vector<320x128xf32>
    tpu.vector_store %arg12[%c0_497, %c0_498], %847 {strides = array<i32>} : memref<320x128xf32, #tpu.memory_space<vmem>>, vector<320x128xf32>,
    %c0_499 = arith.constant 0 : index
    %c0_500 = arith.constant 0 : index
    %849 = vector.load %arg12[%c0_499, %c0_500] : memref<320x128xf32, #tpu.memory_space<vmem>>, vector<40x128xf32>
    %c40_501 = arith.constant 40 : index
    %c0_502 = arith.constant 0 : index
    %850 = vector.load %arg12[%c40_501, %c0_502] : memref<320x128xf32, #tpu.memory_space<vmem>>, vector<40x128xf32>
    %c0_503 = arith.constant 0 : index
    %c0_504 = arith.constant 0 : index
    %851 = vector.load %arg6[%c0_503, %c0_504] : memref<128x1024xf32, #tpu.memory_space<vmem>>, vector<128x128xf32>
    %cst_505 = arith.constant dense<0.000000e+00> : vector<40x128xf32>
    %852 = tpu.matmul %849, %851, %cst_505 {dimension_numbers = #tpu.dot_dimension_numbers<[1], [0], [0], [1], [0, 0, 1, 1], [], []>} : vector<40x128xf32>, vector<128x128xf32>, vector<40x128xf32> -> vector<40x128xf32>
    %853 = arith.addf %850, %852 : vector<40x128xf32>
    %c40_506 = arith.constant 40 : index
    %c0_507 = arith.constant 0 : index
    %854 = vector.load %arg12[%c40_506, %c0_507] : memref<320x128xf32, #tpu.memory_space<vmem>>, vector<40x128xf32>
    tpu.vector_store %arg12[%c40_506, %c0_507], %853 {strides = array<i32>} : memref<320x128xf32, #tpu.memory_space<vmem>>, vector<40x128xf32>,
    %c40_508 = arith.constant 40 : index
    %c0_509 = arith.constant 0 : index
    %855 = vector.load %arg12[%c40_508, %c0_509] : memref<320x128xf32, #tpu.memory_space<vmem>>, vector<40x128xf32>
    %c80_510 = arith.constant 80 : index
    %c0_511 = arith.constant 0 : index
    %856 = vector.load %arg12[%c80_510, %c0_511] : memref<320x128xf32, #tpu.memory_space<vmem>>, vector<40x128xf32>
    %c0_512 = arith.constant 0 : index
    %c0_513 = arith.constant 0 : index
    %857 = vector.load %arg6[%c0_512, %c0_513] : memref<128x1024xf32, #tpu.memory_space<vmem>>, vector<128x128xf32>
    %cst_514 = arith.constant dense<0.000000e+00> : vector<40x128xf32>
    %858 = tpu.matmul %855, %857, %cst_514 {dimension_numbers = #tpu.dot_dimension_numbers<[1], [0], [0], [1], [0, 0, 1, 1], [], []>} : vector<40x128xf32>, vector<128x128xf32>, vector<40x128xf32> -> vector<40x128xf32>
    %859 = arith.addf %856, %858 : vector<40x128xf32>
    %c80_515 = arith.constant 80 : index
    %c0_516 = arith.constant 0 : index
    %860 = vector.load %arg12[%c80_515, %c0_516] : memref<320x128xf32, #tpu.memory_space<vmem>>, vector<40x128xf32>
    tpu.vector_store %arg12[%c80_515, %c0_516], %859 {strides = array<i32>} : memref<320x128xf32, #tpu.memory_space<vmem>>, vector<40x128xf32>,
    %c80_517 = arith.constant 80 : index
    %c0_518 = arith.constant 0 : index
    %861 = vector.load %arg12[%c80_517, %c0_518] : memref<320x128xf32, #tpu.memory_space<vmem>>, vector<40x128xf32>
    %c120_519 = arith.constant 120 : index
    %c0_520 = arith.constant 0 : index
    %862 = vector.load %arg12[%c120_519, %c0_520] : memref<320x128xf32, #tpu.memory_space<vmem>>, vector<40x128xf32>
    %c0_521 = arith.constant 0 : index
    %c0_522 = arith.constant 0 : index
    %863 = vector.load %arg6[%c0_521, %c0_522] : memref<128x1024xf32, #tpu.memory_space<vmem>>, vector<128x128xf32>
    %cst_523 = arith.constant dense<0.000000e+00> : vector<40x128xf32>
    %864 = tpu.matmul %861, %863, %cst_523 {dimension_numbers = #tpu.dot_dimension_numbers<[1], [0], [0], [1], [0, 0, 1, 1], [], []>} : vector<40x128xf32>, vector<128x128xf32>, vector<40x128xf32> -> vector<40x128xf32>
    %865 = arith.addf %862, %864 : vector<40x128xf32>
    %c120_524 = arith.constant 120 : index
    %c0_525 = arith.constant 0 : index
    %866 = vector.load %arg12[%c120_524, %c0_525] : memref<320x128xf32, #tpu.memory_space<vmem>>, vector<40x128xf32>
    tpu.vector_store %arg12[%c120_524, %c0_525], %865 {strides = array<i32>} : memref<320x128xf32, #tpu.memory_space<vmem>>, vector<40x128xf32>,
    %c120_526 = arith.constant 120 : index
    %c0_527 = arith.constant 0 : index
    %867 = vector.load %arg12[%c120_526, %c0_527] : memref<320x128xf32, #tpu.memory_space<vmem>>, vector<40x128xf32>
    %c160_528 = arith.constant 160 : index
    %c0_529 = arith.constant 0 : index
    %868 = vector.load %arg12[%c160_528, %c0_529] : memref<320x128xf32, #tpu.memory_space<vmem>>, vector<40x128xf32>
    %c0_530 = arith.constant 0 : index
    %c0_531 = arith.constant 0 : index
    %869 = vector.load %arg6[%c0_530, %c0_531] : memref<128x1024xf32, #tpu.memory_space<vmem>>, vector<128x128xf32>
    %cst_532 = arith.constant dense<0.000000e+00> : vector<40x128xf32>
    %870 = tpu.matmul %867, %869, %cst_532 {dimension_numbers = #tpu.dot_dimension_numbers<[1], [0], [0], [1], [0, 0, 1, 1], [], []>} : vector<40x128xf32>, vector<128x128xf32>, vector<40x128xf32> -> vector<40x128xf32>
    %871 = arith.addf %868, %870 : vector<40x128xf32>
    %c160_533 = arith.constant 160 : index
    %c0_534 = arith.constant 0 : index
    %872 = vector.load %arg12[%c160_533, %c0_534] : memref<320x128xf32, #tpu.memory_space<vmem>>, vector<40x128xf32>
    tpu.vector_store %arg12[%c160_533, %c0_534], %871 {strides = array<i32>} : memref<320x128xf32, #tpu.memory_space<vmem>>, vector<40x128xf32>,
    %c160_535 = arith.constant 160 : index
    %c0_536 = arith.constant 0 : index
    %873 = vector.load %arg12[%c160_535, %c0_536] : memref<320x128xf32, #tpu.memory_space<vmem>>, vector<40x128xf32>
    %c200_537 = arith.constant 200 : index
    %c0_538 = arith.constant 0 : index
    %874 = vector.load %arg12[%c200_537, %c0_538] : memref<320x128xf32, #tpu.memory_space<vmem>>, vector<40x128xf32>
    %c0_539 = arith.constant 0 : index
    %c0_540 = arith.constant 0 : index
    %875 = vector.load %arg6[%c0_539, %c0_540] : memref<128x1024xf32, #tpu.memory_space<vmem>>, vector<128x128xf32>
    %cst_541 = arith.constant dense<0.000000e+00> : vector<40x128xf32>
    %876 = tpu.matmul %873, %875, %cst_541 {dimension_numbers = #tpu.dot_dimension_numbers<[1], [0], [0], [1], [0, 0, 1, 1], [], []>} : vector<40x128xf32>, vector<128x128xf32>, vector<40x128xf32> -> vector<40x128xf32>
    %877 = arith.addf %874, %876 : vector<40x128xf32>
    %c200_542 = arith.constant 200 : index
    %c0_543 = arith.constant 0 : index
    %878 = vector.load %arg12[%c200_542, %c0_543] : memref<320x128xf32, #tpu.memory_space<vmem>>, vector<40x128xf32>
    tpu.vector_store %arg12[%c200_542, %c0_543], %877 {strides = array<i32>} : memref<320x128xf32, #tpu.memory_space<vmem>>, vector<40x128xf32>,
    %c200_544 = arith.constant 200 : index
    %c0_545 = arith.constant 0 : index
    %879 = vector.load %arg12[%c200_544, %c0_545] : memref<320x128xf32, #tpu.memory_space<vmem>>, vector<40x128xf32>
    %c240_546 = arith.constant 240 : index
    %c0_547 = arith.constant 0 : index
    %880 = vector.load %arg12[%c240_546, %c0_547] : memref<320x128xf32, #tpu.memory_space<vmem>>, vector<40x128xf32>
    %c0_548 = arith.constant 0 : index
    %c0_549 = arith.constant 0 : index
    %881 = vector.load %arg6[%c0_548, %c0_549] : memref<128x1024xf32, #tpu.memory_space<vmem>>, vector<128x128xf32>
    %cst_550 = arith.constant dense<0.000000e+00> : vector<40x128xf32>
    %882 = tpu.matmul %879, %881, %cst_550 {dimension_numbers = #tpu.dot_dimension_numbers<[1], [0], [0], [1], [0, 0, 1, 1], [], []>} : vector<40x128xf32>, vector<128x128xf32>, vector<40x128xf32> -> vector<40x128xf32>
    %883 = arith.addf %880, %882 : vector<40x128xf32>
    %c240_551 = arith.constant 240 : index
    %c0_552 = arith.constant 0 : index
    %884 = vector.load %arg12[%c240_551, %c0_552] : memref<320x128xf32, #tpu.memory_space<vmem>>, vector<40x128xf32>
    tpu.vector_store %arg12[%c240_551, %c0_552], %883 {strides = array<i32>} : memref<320x128xf32, #tpu.memory_space<vmem>>, vector<40x128xf32>,
    %c240_553 = arith.constant 240 : index
    %c0_554 = arith.constant 0 : index
    %885 = vector.load %arg12[%c240_553, %c0_554] : memref<320x128xf32, #tpu.memory_space<vmem>>, vector<40x128xf32>
    %c280_555 = arith.constant 280 : index
    %c0_556 = arith.constant 0 : index
    %886 = vector.load %arg12[%c280_555, %c0_556] : memref<320x128xf32, #tpu.memory_space<vmem>>, vector<40x128xf32>
    %c0_557 = arith.constant 0 : index
    %c0_558 = arith.constant 0 : index
    %887 = vector.load %arg6[%c0_557, %c0_558] : memref<128x1024xf32, #tpu.memory_space<vmem>>, vector<128x128xf32>
    %cst_559 = arith.constant dense<0.000000e+00> : vector<40x128xf32>
    %888 = tpu.matmul %885, %887, %cst_559 {dimension_numbers = #tpu.dot_dimension_numbers<[1], [0], [0], [1], [0, 0, 1, 1], [], []>} : vector<40x128xf32>, vector<128x128xf32>, vector<40x128xf32> -> vector<40x128xf32>
    %889 = arith.addf %886, %888 : vector<40x128xf32>
    %c280_560 = arith.constant 280 : index
    %c0_561 = arith.constant 0 : index
    %890 = vector.load %arg12[%c280_560, %c0_561] : memref<320x128xf32, #tpu.memory_space<vmem>>, vector<40x128xf32>
    tpu.vector_store %arg12[%c280_560, %c0_561], %889 {strides = array<i32>} : memref<320x128xf32, #tpu.memory_space<vmem>>, vector<40x128xf32>,
    %c2 = arith.constant 2 : index
    %c0_562 = arith.constant 0 : index
    %c0_563 = arith.constant 0 : index
    %891 = vector.load %arg11[%c2, %c0_562, %c0_563] : memref<3x8x128xf32, #tpu.memory_space<vmem>>, vector<1x8x128xf32>
    %892 = vector.shape_cast %891 : vector<1x8x128xf32> to vector<8x128xf32>
    %c0_i32_564 = arith.constant 0 : i32
    %c0_565 = arith.constant 0 : index
    %c0_566 = arith.constant 0 : index
    %893 = vector.load %arg6[%c0_565, %c0_566] : memref<128x1024xf32, #tpu.memory_space<vmem>>, vector<128x1024xf32>
    %cst_567 = arith.constant dense<0.000000e+00> : vector<8x1024xf32>
    %894 = tpu.matmul %892, %893, %cst_567 {dimension_numbers = #tpu.dot_dimension_numbers<[1], [0], [0], [1], [0, 0, 1, 1], [], []>} : vector<8x128xf32>, vector<128x1024xf32>, vector<8x1024xf32> -> vector<8x1024xf32>
    %c8_i32_568 = arith.constant 8 : i32
    %895 = arith.muli %c0_i32_564, %c8_i32_568 : i32
    %c280_i32_569 = arith.constant 280 : i32
    %896 = arith.addi %c280_i32_569, %895 : i32
    %897 = tpu.assume_multiple %896, 8 : i32
    %898 = arith.index_cast %897 : i32 to index
    %c0_570 = arith.constant 0 : index
    %899 = vector.load %arg12[%898, %c0_570] : memref<320x128xf32, #tpu.memory_space<vmem>>, vector<8x128xf32>
    %900 = vector.extract_strided_slice %894 {offsets = [0, 896], sizes = [8, 128], strides = [1, 1]} : vector<8x1024xf32> to vector<8x128xf32>
    %901 = arith.addf %899, %900 : vector<8x128xf32>
    %902 = arith.index_cast %897 : i32 to index
    %c0_571 = arith.constant 0 : index
    %903 = vector.load %arg12[%902, %c0_571] : memref<320x128xf32, #tpu.memory_space<vmem>>, vector<8x128xf32>
    tpu.vector_store %arg12[%902, %c0_571], %901 {strides = array<i32>} : memref<320x128xf32, #tpu.memory_space<vmem>>, vector<8x128xf32>,
    %c8_i32_572 = arith.constant 8 : i32
    %904 = arith.muli %c0_i32_564, %c8_i32_572 : i32
    %c0_i32_573 = arith.constant 0 : i32
    %905 = arith.addi %c0_i32_573, %904 : i32
    %906 = tpu.assume_multiple %905, 8 : i32
    %907 = arith.index_cast %906 : i32 to index
    %c0_574 = arith.constant 0 : index
    %908 = vector.load %arg12[%907, %c0_574] : memref<320x128xf32, #tpu.memory_space<vmem>>, vector<8x128xf32>
    %909 = vector.extract_strided_slice %894 {offsets = [0, 0], sizes = [8, 128], strides = [1, 1]} : vector<8x1024xf32> to vector<8x128xf32>
    %910 = arith.addf %908, %909 : vector<8x128xf32>
    %911 = arith.index_cast %906 : i32 to index
    %c0_575 = arith.constant 0 : index
    %912 = vector.load %arg12[%911, %c0_575] : memref<320x128xf32, #tpu.memory_space<vmem>>, vector<8x128xf32>
    tpu.vector_store %arg12[%911, %c0_575], %910 {strides = array<i32>} : memref<320x128xf32, #tpu.memory_space<vmem>>, vector<8x128xf32>,
    %c8_i32_576 = arith.constant 8 : i32
    %913 = arith.muli %c0_i32_564, %c8_i32_576 : i32
    %c40_i32_577 = arith.constant 40 : i32
    %914 = arith.addi %c40_i32_577, %913 : i32
    %915 = tpu.assume_multiple %914, 8 : i32
    %916 = arith.index_cast %915 : i32 to index
    %c0_578 = arith.constant 0 : index
    %917 = vector.load %arg12[%916, %c0_578] : memref<320x128xf32, #tpu.memory_space<vmem>>, vector<8x128xf32>
    %918 = vector.extract_strided_slice %894 {offsets = [0, 128], sizes = [8, 128], strides = [1, 1]} : vector<8x1024xf32> to vector<8x128xf32>
    %919 = arith.addf %917, %918 : vector<8x128xf32>
    %920 = arith.index_cast %915 : i32 to index
    %c0_579 = arith.constant 0 : index
    %921 = vector.load %arg12[%920, %c0_579] : memref<320x128xf32, #tpu.memory_space<vmem>>, vector<8x128xf32>
    tpu.vector_store %arg12[%920, %c0_579], %919 {strides = array<i32>} : memref<320x128xf32, #tpu.memory_space<vmem>>, vector<8x128xf32>,
    %c8_i32_580 = arith.constant 8 : i32
    %922 = arith.muli %c0_i32_564, %c8_i32_580 : i32
    %c80_i32_581 = arith.constant 80 : i32
    %923 = arith.addi %c80_i32_581, %922 : i32
    %924 = tpu.assume_multiple %923, 8 : i32
    %925 = arith.index_cast %924 : i32 to index
    %c0_582 = arith.constant 0 : index
    %926 = vector.load %arg12[%925, %c0_582] : memref<320x128xf32, #tpu.memory_space<vmem>>, vector<8x128xf32>
    %927 = vector.extract_strided_slice %894 {offsets = [0, 256], sizes = [8, 128], strides = [1, 1]} : vector<8x1024xf32> to vector<8x128xf32>
    %928 = arith.addf %926, %927 : vector<8x128xf32>
    %929 = arith.index_cast %924 : i32 to index
    %c0_583 = arith.constant 0 : index
    %930 = vector.load %arg12[%929, %c0_583] : memref<320x128xf32, #tpu.memory_space<vmem>>, vector<8x128xf32>
    tpu.vector_store %arg12[%929, %c0_583], %928 {strides = array<i32>} : memref<320x128xf32, #tpu.memory_space<vmem>>, vector<8x128xf32>,
    %c8_i32_584 = arith.constant 8 : i32
    %931 = arith.muli %c0_i32_564, %c8_i32_584 : i32
    %c120_i32_585 = arith.constant 120 : i32
    %932 = arith.addi %c120_i32_585, %931 : i32
    %933 = tpu.assume_multiple %932, 8 : i32
    %934 = arith.index_cast %933 : i32 to index
    %c0_586 = arith.constant 0 : index
    %935 = vector.load %arg12[%934, %c0_586] : memref<320x128xf32, #tpu.memory_space<vmem>>, vector<8x128xf32>
    %936 = vector.extract_strided_slice %894 {offsets = [0, 384], sizes = [8, 128], strides = [1, 1]} : vector<8x1024xf32> to vector<8x128xf32>
    %937 = arith.addf %935, %936 : vector<8x128xf32>
    %938 = arith.index_cast %933 : i32 to index
    %c0_587 = arith.constant 0 : index
    %939 = vector.load %arg12[%938, %c0_587] : memref<320x128xf32, #tpu.memory_space<vmem>>, vector<8x128xf32>
    tpu.vector_store %arg12[%938, %c0_587], %937 {strides = array<i32>} : memref<320x128xf32, #tpu.memory_space<vmem>>, vector<8x128xf32>,
    %c8_i32_588 = arith.constant 8 : i32
    %940 = arith.muli %c0_i32_564, %c8_i32_588 : i32
    %c160_i32_589 = arith.constant 160 : i32
    %941 = arith.addi %c160_i32_589, %940 : i32
    %942 = tpu.assume_multiple %941, 8 : i32
    %943 = arith.index_cast %942 : i32 to index
    %c0_590 = arith.constant 0 : index
    %944 = vector.load %arg12[%943, %c0_590] : memref<320x128xf32, #tpu.memory_space<vmem>>, vector<8x128xf32>
    %945 = vector.extract_strided_slice %894 {offsets = [0, 512], sizes = [8, 128], strides = [1, 1]} : vector<8x1024xf32> to vector<8x128xf32>
    %946 = arith.addf %944, %945 : vector<8x128xf32>
    %947 = arith.index_cast %942 : i32 to index
    %c0_591 = arith.constant 0 : index
    %948 = vector.load %arg12[%947, %c0_591] : memref<320x128xf32, #tpu.memory_space<vmem>>, vector<8x128xf32>
    tpu.vector_store %arg12[%947, %c0_591], %946 {strides = array<i32>} : memref<320x128xf32, #tpu.memory_space<vmem>>, vector<8x128xf32>,
    %c8_i32_592 = arith.constant 8 : i32
    %949 = arith.muli %c0_i32_564, %c8_i32_592 : i32
    %c200_i32_593 = arith.constant 200 : i32
    %950 = arith.addi %c200_i32_593, %949 : i32
    %951 = tpu.assume_multiple %950, 8 : i32
    %952 = arith.index_cast %951 : i32 to index
    %c0_594 = arith.constant 0 : index
    %953 = vector.load %arg12[%952, %c0_594] : memref<320x128xf32, #tpu.memory_space<vmem>>, vector<8x128xf32>
    %954 = vector.extract_strided_slice %894 {offsets = [0, 640], sizes = [8, 128], strides = [1, 1]} : vector<8x1024xf32> to vector<8x128xf32>
    %955 = arith.addf %953, %954 : vector<8x128xf32>
    %956 = arith.index_cast %951 : i32 to index
    %c0_595 = arith.constant 0 : index
    %957 = vector.load %arg12[%956, %c0_595] : memref<320x128xf32, #tpu.memory_space<vmem>>, vector<8x128xf32>
    tpu.vector_store %arg12[%956, %c0_595], %955 {strides = array<i32>} : memref<320x128xf32, #tpu.memory_space<vmem>>, vector<8x128xf32>,
    %c8_i32_596 = arith.constant 8 : i32
    %958 = arith.muli %c0_i32_564, %c8_i32_596 : i32
    %c240_i32_597 = arith.constant 240 : i32
    %959 = arith.addi %c240_i32_597, %958 : i32
    %960 = tpu.assume_multiple %959, 8 : i32
    %961 = arith.index_cast %960 : i32 to index
    %c0_598 = arith.constant 0 : index
    %962 = vector.load %arg12[%961, %c0_598] : memref<320x128xf32, #tpu.memory_space<vmem>>, vector<8x128xf32>
    %963 = vector.extract_strided_slice %894 {offsets = [0, 768], sizes = [8, 128], strides = [1, 1]} : vector<8x1024xf32> to vector<8x128xf32>
    %964 = arith.addf %962, %963 : vector<8x128xf32>
    %965 = arith.index_cast %960 : i32 to index
    %c0_599 = arith.constant 0 : index
    %966 = vector.load %arg12[%965, %c0_599] : memref<320x128xf32, #tpu.memory_space<vmem>>, vector<8x128xf32>
    tpu.vector_store %arg12[%965, %c0_599], %964 {strides = array<i32>} : memref<320x128xf32, #tpu.memory_space<vmem>>, vector<8x128xf32>,
    %c1_i32_600 = arith.constant 1 : i32
    %c0_601 = arith.constant 0 : index
    %c0_602 = arith.constant 0 : index
    %967 = vector.load %arg6[%c0_601, %c0_602] : memref<128x1024xf32, #tpu.memory_space<vmem>>, vector<128x1024xf32>
    %cst_603 = arith.constant dense<0.000000e+00> : vector<8x1024xf32>
    %968 = tpu.matmul %901, %967, %cst_603 {dimension_numbers = #tpu.dot_dimension_numbers<[1], [0], [0], [1], [0, 0, 1, 1], [], []>} : vector<8x128xf32>, vector<128x1024xf32>, vector<8x1024xf32> -> vector<8x1024xf32>
    %c8_i32_604 = arith.constant 8 : i32
    %969 = arith.muli %c1_i32_600, %c8_i32_604 : i32
    %c280_i32_605 = arith.constant 280 : i32
    %970 = arith.addi %c280_i32_605, %969 : i32
    %971 = tpu.assume_multiple %970, 8 : i32
    %972 = arith.index_cast %971 : i32 to index
    %c0_606 = arith.constant 0 : index
    %973 = vector.load %arg12[%972, %c0_606] : memref<320x128xf32, #tpu.memory_space<vmem>>, vector<8x128xf32>
    %974 = vector.extract_strided_slice %968 {offsets = [0, 896], sizes = [8, 128], strides = [1, 1]} : vector<8x1024xf32> to vector<8x128xf32>
    %975 = arith.addf %973, %974 : vector<8x128xf32>
    %976 = arith.index_cast %971 : i32 to index
    %c0_607 = arith.constant 0 : index
    %977 = vector.load %arg12[%976, %c0_607] : memref<320x128xf32, #tpu.memory_space<vmem>>, vector<8x128xf32>
    tpu.vector_store %arg12[%976, %c0_607], %975 {strides = array<i32>} : memref<320x128xf32, #tpu.memory_space<vmem>>, vector<8x128xf32>,
    %c8_i32_608 = arith.constant 8 : i32
    %978 = arith.muli %c1_i32_600, %c8_i32_608 : i32
    %c0_i32_609 = arith.constant 0 : i32
    %979 = arith.addi %c0_i32_609, %978 : i32
    %980 = tpu.assume_multiple %979, 8 : i32
    %981 = arith.index_cast %980 : i32 to index
    %c0_610 = arith.constant 0 : index
    %982 = vector.load %arg12[%981, %c0_610] : memref<320x128xf32, #tpu.memory_space<vmem>>, vector<8x128xf32>
    %983 = vector.extract_strided_slice %968 {offsets = [0, 0], sizes = [8, 128], strides = [1, 1]} : vector<8x1024xf32> to vector<8x128xf32>
    %984 = arith.addf %982, %983 : vector<8x128xf32>
    %985 = arith.index_cast %980 : i32 to index
    %c0_611 = arith.constant 0 : index
    %986 = vector.load %arg12[%985, %c0_611] : memref<320x128xf32, #tpu.memory_space<vmem>>, vector<8x128xf32>
    tpu.vector_store %arg12[%985, %c0_611], %984 {strides = array<i32>} : memref<320x128xf32, #tpu.memory_space<vmem>>, vector<8x128xf32>,
    %c8_i32_612 = arith.constant 8 : i32
    %987 = arith.muli %c1_i32_600, %c8_i32_612 : i32
    %c40_i32_613 = arith.constant 40 : i32
    %988 = arith.addi %c40_i32_613, %987 : i32
    %989 = tpu.assume_multiple %988, 8 : i32
    %990 = arith.index_cast %989 : i32 to index
    %c0_614 = arith.constant 0 : index
    %991 = vector.load %arg12[%990, %c0_614] : memref<320x128xf32, #tpu.memory_space<vmem>>, vector<8x128xf32>
    %992 = vector.extract_strided_slice %968 {offsets = [0, 128], sizes = [8, 128], strides = [1, 1]} : vector<8x1024xf32> to vector<8x128xf32>
    %993 = arith.addf %991, %992 : vector<8x128xf32>
    %994 = arith.index_cast %989 : i32 to index
    %c0_615 = arith.constant 0 : index
    %995 = vector.load %arg12[%994, %c0_615] : memref<320x128xf32, #tpu.memory_space<vmem>>, vector<8x128xf32>
    tpu.vector_store %arg12[%994, %c0_615], %993 {strides = array<i32>} : memref<320x128xf32, #tpu.memory_space<vmem>>, vector<8x128xf32>,
    %c8_i32_616 = arith.constant 8 : i32
    %996 = arith.muli %c1_i32_600, %c8_i32_616 : i32
    %c80_i32_617 = arith.constant 80 : i32
    %997 = arith.addi %c80_i32_617, %996 : i32
    %998 = tpu.assume_multiple %997, 8 : i32
    %999 = arith.index_cast %998 : i32 to index
    %c0_618 = arith.constant 0 : index
    %1000 = vector.load %arg12[%999, %c0_618] : memref<320x128xf32, #tpu.memory_space<vmem>>, vector<8x128xf32>
    %1001 = vector.extract_strided_slice %968 {offsets = [0, 256], sizes = [8, 128], strides = [1, 1]} : vector<8x1024xf32> to vector<8x128xf32>
    %1002 = arith.addf %1000, %1001 : vector<8x128xf32>
    %1003 = arith.index_cast %998 : i32 to index
    %c0_619 = arith.constant 0 : index
    %1004 = vector.load %arg12[%1003, %c0_619] : memref<320x128xf32, #tpu.memory_space<vmem>>, vector<8x128xf32>
    tpu.vector_store %arg12[%1003, %c0_619], %1002 {strides = array<i32>} : memref<320x128xf32, #tpu.memory_space<vmem>>, vector<8x128xf32>,
    %c8_i32_620 = arith.constant 8 : i32
    %1005 = arith.muli %c1_i32_600, %c8_i32_620 : i32
    %c120_i32_621 = arith.constant 120 : i32
    %1006 = arith.addi %c120_i32_621, %1005 : i32
    %1007 = tpu.assume_multiple %1006, 8 : i32
    %1008 = arith.index_cast %1007 : i32 to index
    %c0_622 = arith.constant 0 : index
    %1009 = vector.load %arg12[%1008, %c0_622] : memref<320x128xf32, #tpu.memory_space<vmem>>, vector<8x128xf32>
    %1010 = vector.extract_strided_slice %968 {offsets = [0, 384], sizes = [8, 128], strides = [1, 1]} : vector<8x1024xf32> to vector<8x128xf32>
    %1011 = arith.addf %1009, %1010 : vector<8x128xf32>
    %1012 = arith.index_cast %1007 : i32 to index
    %c0_623 = arith.constant 0 : index
    %1013 = vector.load %arg12[%1012, %c0_623] : memref<320x128xf32, #tpu.memory_space<vmem>>, vector<8x128xf32>
    tpu.vector_store %arg12[%1012, %c0_623], %1011 {strides = array<i32>} : memref<320x128xf32, #tpu.memory_space<vmem>>, vector<8x128xf32>,
    %c8_i32_624 = arith.constant 8 : i32
    %1014 = arith.muli %c1_i32_600, %c8_i32_624 : i32
    %c160_i32_625 = arith.constant 160 : i32
    %1015 = arith.addi %c160_i32_625, %1014 : i32
    %1016 = tpu.assume_multiple %1015, 8 : i32
    %1017 = arith.index_cast %1016 : i32 to index
    %c0_626 = arith.constant 0 : index
    %1018 = vector.load %arg12[%1017, %c0_626] : memref<320x128xf32, #tpu.memory_space<vmem>>, vector<8x128xf32>
    %1019 = vector.extract_strided_slice %968 {offsets = [0, 512], sizes = [8, 128], strides = [1, 1]} : vector<8x1024xf32> to vector<8x128xf32>
    %1020 = arith.addf %1018, %1019 : vector<8x128xf32>
    %1021 = arith.index_cast %1016 : i32 to index
    %c0_627 = arith.constant 0 : index
    %1022 = vector.load %arg12[%1021, %c0_627] : memref<320x128xf32, #tpu.memory_space<vmem>>, vector<8x128xf32>
    tpu.vector_store %arg12[%1021, %c0_627], %1020 {strides = array<i32>} : memref<320x128xf32, #tpu.memory_space<vmem>>, vector<8x128xf32>,
    %c8_i32_628 = arith.constant 8 : i32
    %1023 = arith.muli %c1_i32_600, %c8_i32_628 : i32
    %c200_i32_629 = arith.constant 200 : i32
    %1024 = arith.addi %c200_i32_629, %1023 : i32
    %1025 = tpu.assume_multiple %1024, 8 : i32
    %1026 = arith.index_cast %1025 : i32 to index
    %c0_630 = arith.constant 0 : index
    %1027 = vector.load %arg12[%1026, %c0_630] : memref<320x128xf32, #tpu.memory_space<vmem>>, vector<8x128xf32>
    %1028 = vector.extract_strided_slice %968 {offsets = [0, 640], sizes = [8, 128], strides = [1, 1]} : vector<8x1024xf32> to vector<8x128xf32>
    %1029 = arith.addf %1027, %1028 : vector<8x128xf32>
    %1030 = arith.index_cast %1025 : i32 to index
    %c0_631 = arith.constant 0 : index
    %1031 = vector.load %arg12[%1030, %c0_631] : memref<320x128xf32, #tpu.memory_space<vmem>>, vector<8x128xf32>
    tpu.vector_store %arg12[%1030, %c0_631], %1029 {strides = array<i32>} : memref<320x128xf32, #tpu.memory_space<vmem>>, vector<8x128xf32>,
    %c8_i32_632 = arith.constant 8 : i32
    %1032 = arith.muli %c1_i32_600, %c8_i32_632 : i32
    %c240_i32_633 = arith.constant 240 : i32
    %1033 = arith.addi %c240_i32_633, %1032 : i32
    %1034 = tpu.assume_multiple %1033, 8 : i32
    %1035 = arith.index_cast %1034 : i32 to index
    %c0_634 = arith.constant 0 : index
    %1036 = vector.load %arg12[%1035, %c0_634] : memref<320x128xf32, #tpu.memory_space<vmem>>, vector<8x128xf32>
    %1037 = vector.extract_strided_slice %968 {offsets = [0, 768], sizes = [8, 128], strides = [1, 1]} : vector<8x1024xf32> to vector<8x128xf32>
    %1038 = arith.addf %1036, %1037 : vector<8x128xf32>
    %1039 = arith.index_cast %1034 : i32 to index
    %c0_635 = arith.constant 0 : index
    %1040 = vector.load %arg12[%1039, %c0_635] : memref<320x128xf32, #tpu.memory_space<vmem>>, vector<8x128xf32>
    tpu.vector_store %arg12[%1039, %c0_635], %1038 {strides = array<i32>} : memref<320x128xf32, #tpu.memory_space<vmem>>, vector<8x128xf32>,
    %c2_i32_636 = arith.constant 2 : i32
    %c0_637 = arith.constant 0 : index
    %c0_638 = arith.constant 0 : index
    %1041 = vector.load %arg6[%c0_637, %c0_638] : memref<128x1024xf32, #tpu.memory_space<vmem>>, vector<128x1024xf32>
    %cst_639 = arith.constant dense<0.000000e+00> : vector<8x1024xf32>
    %1042 = tpu.matmul %975, %1041, %cst_639 {dimension_numbers = #tpu.dot_dimension_numbers<[1], [0], [0], [1], [0, 0, 1, 1], [], []>} : vector<8x128xf32>, vector<128x1024xf32>, vector<8x1024xf32> -> vector<8x1024xf32>
    %c8_i32_640 = arith.constant 8 : i32
    %1043 = arith.muli %c2_i32_636, %c8_i32_640 : i32
    %c280_i32_641 = arith.constant 280 : i32
    %1044 = arith.addi %c280_i32_641, %1043 : i32
    %1045 = tpu.assume_multiple %1044, 8 : i32
    %1046 = arith.index_cast %1045 : i32 to index
    %c0_642 = arith.constant 0 : index
    %1047 = vector.load %arg12[%1046, %c0_642] : memref<320x128xf32, #tpu.memory_space<vmem>>, vector<8x128xf32>
    %1048 = vector.extract_strided_slice %1042 {offsets = [0, 896], sizes = [8, 128], strides = [1, 1]} : vector<8x1024xf32> to vector<8x128xf32>
    %1049 = arith.addf %1047, %1048 : vector<8x128xf32>
    %1050 = arith.index_cast %1045 : i32 to index
    %c0_643 = arith.constant 0 : index
    %1051 = vector.load %arg12[%1050, %c0_643] : memref<320x128xf32, #tpu.memory_space<vmem>>, vector<8x128xf32>
    tpu.vector_store %arg12[%1050, %c0_643], %1049 {strides = array<i32>} : memref<320x128xf32, #tpu.memory_space<vmem>>, vector<8x128xf32>,
    %c8_i32_644 = arith.constant 8 : i32
    %1052 = arith.muli %c2_i32_636, %c8_i32_644 : i32
    %c0_i32_645 = arith.constant 0 : i32
    %1053 = arith.addi %c0_i32_645, %1052 : i32
    %1054 = tpu.assume_multiple %1053, 8 : i32
    %1055 = arith.index_cast %1054 : i32 to index
    %c0_646 = arith.constant 0 : index
    %1056 = vector.load %arg12[%1055, %c0_646] : memref<320x128xf32, #tpu.memory_space<vmem>>, vector<8x128xf32>
    %1057 = vector.extract_strided_slice %1042 {offsets = [0, 0], sizes = [8, 128], strides = [1, 1]} : vector<8x1024xf32> to vector<8x128xf32>
    %1058 = arith.addf %1056, %1057 : vector<8x128xf32>
    %1059 = arith.index_cast %1054 : i32 to index
    %c0_647 = arith.constant 0 : index
    %1060 = vector.load %arg12[%1059, %c0_647] : memref<320x128xf32, #tpu.memory_space<vmem>>, vector<8x128xf32>
    tpu.vector_store %arg12[%1059, %c0_647], %1058 {strides = array<i32>} : memref<320x128xf32, #tpu.memory_space<vmem>>, vector<8x128xf32>,
    %c8_i32_648 = arith.constant 8 : i32
    %1061 = arith.muli %c2_i32_636, %c8_i32_648 : i32
    %c40_i32_649 = arith.constant 40 : i32
    %1062 = arith.addi %c40_i32_649, %1061 : i32
    %1063 = tpu.assume_multiple %1062, 8 : i32
    %1064 = arith.index_cast %1063 : i32 to index
    %c0_650 = arith.constant 0 : index
    %1065 = vector.load %arg12[%1064, %c0_650] : memref<320x128xf32, #tpu.memory_space<vmem>>, vector<8x128xf32>
    %1066 = vector.extract_strided_slice %1042 {offsets = [0, 128], sizes = [8, 128], strides = [1, 1]} : vector<8x1024xf32> to vector<8x128xf32>
    %1067 = arith.addf %1065, %1066 : vector<8x128xf32>
    %1068 = arith.index_cast %1063 : i32 to index
    %c0_651 = arith.constant 0 : index
    %1069 = vector.load %arg12[%1068, %c0_651] : memref<320x128xf32, #tpu.memory_space<vmem>>, vector<8x128xf32>
    tpu.vector_store %arg12[%1068, %c0_651], %1067 {strides = array<i32>} : memref<320x128xf32, #tpu.memory_space<vmem>>, vector<8x128xf32>,
    %c8_i32_652 = arith.constant 8 : i32
    %1070 = arith.muli %c2_i32_636, %c8_i32_652 : i32
    %c80_i32_653 = arith.constant 80 : i32
    %1071 = arith.addi %c80_i32_653, %1070 : i32
    %1072 = tpu.assume_multiple %1071, 8 : i32
    %1073 = arith.index_cast %1072 : i32 to index
    %c0_654 = arith.constant 0 : index
    %1074 = vector.load %arg12[%1073, %c0_654] : memref<320x128xf32, #tpu.memory_space<vmem>>, vector<8x128xf32>
    %1075 = vector.extract_strided_slice %1042 {offsets = [0, 256], sizes = [8, 128], strides = [1, 1]} : vector<8x1024xf32> to vector<8x128xf32>
    %1076 = arith.addf %1074, %1075 : vector<8x128xf32>
    %1077 = arith.index_cast %1072 : i32 to index
    %c0_655 = arith.constant 0 : index
    %1078 = vector.load %arg12[%1077, %c0_655] : memref<320x128xf32, #tpu.memory_space<vmem>>, vector<8x128xf32>
    tpu.vector_store %arg12[%1077, %c0_655], %1076 {strides = array<i32>} : memref<320x128xf32, #tpu.memory_space<vmem>>, vector<8x128xf32>,
    %c8_i32_656 = arith.constant 8 : i32
    %1079 = arith.muli %c2_i32_636, %c8_i32_656 : i32
    %c120_i32_657 = arith.constant 120 : i32
    %1080 = arith.addi %c120_i32_657, %1079 : i32
    %1081 = tpu.assume_multiple %1080, 8 : i32
    %1082 = arith.index_cast %1081 : i32 to index
    %c0_658 = arith.constant 0 : index
    %1083 = vector.load %arg12[%1082, %c0_658] : memref<320x128xf32, #tpu.memory_space<vmem>>, vector<8x128xf32>
    %1084 = vector.extract_strided_slice %1042 {offsets = [0, 384], sizes = [8, 128], strides = [1, 1]} : vector<8x1024xf32> to vector<8x128xf32>
    %1085 = arith.addf %1083, %1084 : vector<8x128xf32>
    %1086 = arith.index_cast %1081 : i32 to index
    %c0_659 = arith.constant 0 : index
    %1087 = vector.load %arg12[%1086, %c0_659] : memref<320x128xf32, #tpu.memory_space<vmem>>, vector<8x128xf32>
    tpu.vector_store %arg12[%1086, %c0_659], %1085 {strides = array<i32>} : memref<320x128xf32, #tpu.memory_space<vmem>>, vector<8x128xf32>,
    %c8_i32_660 = arith.constant 8 : i32
    %1088 = arith.muli %c2_i32_636, %c8_i32_660 : i32
    %c160_i32_661 = arith.constant 160 : i32
    %1089 = arith.addi %c160_i32_661, %1088 : i32
    %1090 = tpu.assume_multiple %1089, 8 : i32
    %1091 = arith.index_cast %1090 : i32 to index
    %c0_662 = arith.constant 0 : index
    %1092 = vector.load %arg12[%1091, %c0_662] : memref<320x128xf32, #tpu.memory_space<vmem>>, vector<8x128xf32>
    %1093 = vector.extract_strided_slice %1042 {offsets = [0, 512], sizes = [8, 128], strides = [1, 1]} : vector<8x1024xf32> to vector<8x128xf32>
    %1094 = arith.addf %1092, %1093 : vector<8x128xf32>
    %1095 = arith.index_cast %1090 : i32 to index
    %c0_663 = arith.constant 0 : index
    %1096 = vector.load %arg12[%1095, %c0_663] : memref<320x128xf32, #tpu.memory_space<vmem>>, vector<8x128xf32>
    tpu.vector_store %arg12[%1095, %c0_663], %1094 {strides = array<i32>} : memref<320x128xf32, #tpu.memory_space<vmem>>, vector<8x128xf32>,
    %c8_i32_664 = arith.constant 8 : i32
    %1097 = arith.muli %c2_i32_636, %c8_i32_664 : i32
    %c200_i32_665 = arith.constant 200 : i32
    %1098 = arith.addi %c200_i32_665, %1097 : i32
    %1099 = tpu.assume_multiple %1098, 8 : i32
    %1100 = arith.index_cast %1099 : i32 to index
    %c0_666 = arith.constant 0 : index
    %1101 = vector.load %arg12[%1100, %c0_666] : memref<320x128xf32, #tpu.memory_space<vmem>>, vector<8x128xf32>
    %1102 = vector.extract_strided_slice %1042 {offsets = [0, 640], sizes = [8, 128], strides = [1, 1]} : vector<8x1024xf32> to vector<8x128xf32>
    %1103 = arith.addf %1101, %1102 : vector<8x128xf32>
    %1104 = arith.index_cast %1099 : i32 to index
    %c0_667 = arith.constant 0 : index
    %1105 = vector.load %arg12[%1104, %c0_667] : memref<320x128xf32, #tpu.memory_space<vmem>>, vector<8x128xf32>
    tpu.vector_store %arg12[%1104, %c0_667], %1103 {strides = array<i32>} : memref<320x128xf32, #tpu.memory_space<vmem>>, vector<8x128xf32>,
    %c8_i32_668 = arith.constant 8 : i32
    %1106 = arith.muli %c2_i32_636, %c8_i32_668 : i32
    %c240_i32_669 = arith.constant 240 : i32
    %1107 = arith.addi %c240_i32_669, %1106 : i32
    %1108 = tpu.assume_multiple %1107, 8 : i32
    %1109 = arith.index_cast %1108 : i32 to index
    %c0_670 = arith.constant 0 : index
    %1110 = vector.load %arg12[%1109, %c0_670] : memref<320x128xf32, #tpu.memory_space<vmem>>, vector<8x128xf32>
    %1111 = vector.extract_strided_slice %1042 {offsets = [0, 768], sizes = [8, 128], strides = [1, 1]} : vector<8x1024xf32> to vector<8x128xf32>
    %1112 = arith.addf %1110, %1111 : vector<8x128xf32>
    %1113 = arith.index_cast %1108 : i32 to index
    %c0_671 = arith.constant 0 : index
    %1114 = vector.load %arg12[%1113, %c0_671] : memref<320x128xf32, #tpu.memory_space<vmem>>, vector<8x128xf32>
    tpu.vector_store %arg12[%1113, %c0_671], %1112 {strides = array<i32>} : memref<320x128xf32, #tpu.memory_space<vmem>>, vector<8x128xf32>,
    %c3_i32_672 = arith.constant 3 : i32
    %c0_673 = arith.constant 0 : index
    %c0_674 = arith.constant 0 : index
    %1115 = vector.load %arg6[%c0_673, %c0_674] : memref<128x1024xf32, #tpu.memory_space<vmem>>, vector<128x1024xf32>
    %cst_675 = arith.constant dense<0.000000e+00> : vector<8x1024xf32>
    %1116 = tpu.matmul %1049, %1115, %cst_675 {dimension_numbers = #tpu.dot_dimension_numbers<[1], [0], [0], [1], [0, 0, 1, 1], [], []>} : vector<8x128xf32>, vector<128x1024xf32>, vector<8x1024xf32> -> vector<8x1024xf32>
    %c8_i32_676 = arith.constant 8 : i32
    %1117 = arith.muli %c3_i32_672, %c8_i32_676 : i32
    %c280_i32_677 = arith.constant 280 : i32
    %1118 = arith.addi %c280_i32_677, %1117 : i32
    %1119 = tpu.assume_multiple %1118, 8 : i32
    %1120 = arith.index_cast %1119 : i32 to index
    %c0_678 = arith.constant 0 : index
    %1121 = vector.load %arg12[%1120, %c0_678] : memref<320x128xf32, #tpu.memory_space<vmem>>, vector<8x128xf32>
    %1122 = vector.extract_strided_slice %1116 {offsets = [0, 896], sizes = [8, 128], strides = [1, 1]} : vector<8x1024xf32> to vector<8x128xf32>
    %1123 = arith.addf %1121, %1122 : vector<8x128xf32>
    %1124 = arith.index_cast %1119 : i32 to index
    %c0_679 = arith.constant 0 : index
    %1125 = vector.load %arg12[%1124, %c0_679] : memref<320x128xf32, #tpu.memory_space<vmem>>, vector<8x128xf32>
    tpu.vector_store %arg12[%1124, %c0_679], %1123 {strides = array<i32>} : memref<320x128xf32, #tpu.memory_space<vmem>>, vector<8x128xf32>,
    %c8_i32_680 = arith.constant 8 : i32
    %1126 = arith.muli %c3_i32_672, %c8_i32_680 : i32
    %c0_i32_681 = arith.constant 0 : i32
    %1127 = arith.addi %c0_i32_681, %1126 : i32
    %1128 = tpu.assume_multiple %1127, 8 : i32
    %1129 = arith.index_cast %1128 : i32 to index
    %c0_682 = arith.constant 0 : index
    %1130 = vector.load %arg12[%1129, %c0_682] : memref<320x128xf32, #tpu.memory_space<vmem>>, vector<8x128xf32>
    %1131 = vector.extract_strided_slice %1116 {offsets = [0, 0], sizes = [8, 128], strides = [1, 1]} : vector<8x1024xf32> to vector<8x128xf32>
    %1132 = arith.addf %1130, %1131 : vector<8x128xf32>
    %1133 = arith.index_cast %1128 : i32 to index
    %c0_683 = arith.constant 0 : index
    %1134 = vector.load %arg12[%1133, %c0_683] : memref<320x128xf32, #tpu.memory_space<vmem>>, vector<8x128xf32>
    tpu.vector_store %arg12[%1133, %c0_683], %1132 {strides = array<i32>} : memref<320x128xf32, #tpu.memory_space<vmem>>, vector<8x128xf32>,
    %c8_i32_684 = arith.constant 8 : i32
    %1135 = arith.muli %c3_i32_672, %c8_i32_684 : i32
    %c40_i32_685 = arith.constant 40 : i32
    %1136 = arith.addi %c40_i32_685, %1135 : i32
    %1137 = tpu.assume_multiple %1136, 8 : i32
    %1138 = arith.index_cast %1137 : i32 to index
    %c0_686 = arith.constant 0 : index
    %1139 = vector.load %arg12[%1138, %c0_686] : memref<320x128xf32, #tpu.memory_space<vmem>>, vector<8x128xf32>
    %1140 = vector.extract_strided_slice %1116 {offsets = [0, 128], sizes = [8, 128], strides = [1, 1]} : vector<8x1024xf32> to vector<8x128xf32>
    %1141 = arith.addf %1139, %1140 : vector<8x128xf32>
    %1142 = arith.index_cast %1137 : i32 to index
    %c0_687 = arith.constant 0 : index
    %1143 = vector.load %arg12[%1142, %c0_687] : memref<320x128xf32, #tpu.memory_space<vmem>>, vector<8x128xf32>
    tpu.vector_store %arg12[%1142, %c0_687], %1141 {strides = array<i32>} : memref<320x128xf32, #tpu.memory_space<vmem>>, vector<8x128xf32>,
    %c8_i32_688 = arith.constant 8 : i32
    %1144 = arith.muli %c3_i32_672, %c8_i32_688 : i32
    %c80_i32_689 = arith.constant 80 : i32
    %1145 = arith.addi %c80_i32_689, %1144 : i32
    %1146 = tpu.assume_multiple %1145, 8 : i32
    %1147 = arith.index_cast %1146 : i32 to index
    %c0_690 = arith.constant 0 : index
    %1148 = vector.load %arg12[%1147, %c0_690] : memref<320x128xf32, #tpu.memory_space<vmem>>, vector<8x128xf32>
    %1149 = vector.extract_strided_slice %1116 {offsets = [0, 256], sizes = [8, 128], strides = [1, 1]} : vector<8x1024xf32> to vector<8x128xf32>
    %1150 = arith.addf %1148, %1149 : vector<8x128xf32>
    %1151 = arith.index_cast %1146 : i32 to index
    %c0_691 = arith.constant 0 : index
    %1152 = vector.load %arg12[%1151, %c0_691] : memref<320x128xf32, #tpu.memory_space<vmem>>, vector<8x128xf32>
    tpu.vector_store %arg12[%1151, %c0_691], %1150 {strides = array<i32>} : memref<320x128xf32, #tpu.memory_space<vmem>>, vector<8x128xf32>,
    %c8_i32_692 = arith.constant 8 : i32
    %1153 = arith.muli %c3_i32_672, %c8_i32_692 : i32
    %c120_i32_693 = arith.constant 120 : i32
    %1154 = arith.addi %c120_i32_693, %1153 : i32
    %1155 = tpu.assume_multiple %1154, 8 : i32
    %1156 = arith.index_cast %1155 : i32 to index
    %c0_694 = arith.constant 0 : index
    %1157 = vector.load %arg12[%1156, %c0_694] : memref<320x128xf32, #tpu.memory_space<vmem>>, vector<8x128xf32>
    %1158 = vector.extract_strided_slice %1116 {offsets = [0, 384], sizes = [8, 128], strides = [1, 1]} : vector<8x1024xf32> to vector<8x128xf32>
    %1159 = arith.addf %1157, %1158 : vector<8x128xf32>
    %1160 = arith.index_cast %1155 : i32 to index
    %c0_695 = arith.constant 0 : index
    %1161 = vector.load %arg12[%1160, %c0_695] : memref<320x128xf32, #tpu.memory_space<vmem>>, vector<8x128xf32>
    tpu.vector_store %arg12[%1160, %c0_695], %1159 {strides = array<i32>} : memref<320x128xf32, #tpu.memory_space<vmem>>, vector<8x128xf32>,
    %c8_i32_696 = arith.constant 8 : i32
    %1162 = arith.muli %c3_i32_672, %c8_i32_696 : i32
    %c160_i32_697 = arith.constant 160 : i32
    %1163 = arith.addi %c160_i32_697, %1162 : i32
    %1164 = tpu.assume_multiple %1163, 8 : i32
    %1165 = arith.index_cast %1164 : i32 to index
    %c0_698 = arith.constant 0 : index
    %1166 = vector.load %arg12[%1165, %c0_698] : memref<320x128xf32, #tpu.memory_space<vmem>>, vector<8x128xf32>
    %1167 = vector.extract_strided_slice %1116 {offsets = [0, 512], sizes = [8, 128], strides = [1, 1]} : vector<8x1024xf32> to vector<8x128xf32>
    %1168 = arith.addf %1166, %1167 : vector<8x128xf32>
    %1169 = arith.index_cast %1164 : i32 to index
    %c0_699 = arith.constant 0 : index
    %1170 = vector.load %arg12[%1169, %c0_699] : memref<320x128xf32, #tpu.memory_space<vmem>>, vector<8x128xf32>
    tpu.vector_store %arg12[%1169, %c0_699], %1168 {strides = array<i32>} : memref<320x128xf32, #tpu.memory_space<vmem>>, vector<8x128xf32>,
    %c8_i32_700 = arith.constant 8 : i32
    %1171 = arith.muli %c3_i32_672, %c8_i32_700 : i32
    %c200_i32_701 = arith.constant 200 : i32
    %1172 = arith.addi %c200_i32_701, %1171 : i32
    %1173 = tpu.assume_multiple %1172, 8 : i32
    %1174 = arith.index_cast %1173 : i32 to index
    %c0_702 = arith.constant 0 : index
    %1175 = vector.load %arg12[%1174, %c0_702] : memref<320x128xf32, #tpu.memory_space<vmem>>, vector<8x128xf32>
    %1176 = vector.extract_strided_slice %1116 {offsets = [0, 640], sizes = [8, 128], strides = [1, 1]} : vector<8x1024xf32> to vector<8x128xf32>
    %1177 = arith.addf %1175, %1176 : vector<8x128xf32>
    %1178 = arith.index_cast %1173 : i32 to index
    %c0_703 = arith.constant 0 : index
    %1179 = vector.load %arg12[%1178, %c0_703] : memref<320x128xf32, #tpu.memory_space<vmem>>, vector<8x128xf32>
    tpu.vector_store %arg12[%1178, %c0_703], %1177 {strides = array<i32>} : memref<320x128xf32, #tpu.memory_space<vmem>>, vector<8x128xf32>,
    %c8_i32_704 = arith.constant 8 : i32
    %1180 = arith.muli %c3_i32_672, %c8_i32_704 : i32
    %c240_i32_705 = arith.constant 240 : i32
    %1181 = arith.addi %c240_i32_705, %1180 : i32
    %1182 = tpu.assume_multiple %1181, 8 : i32
    %1183 = arith.index_cast %1182 : i32 to index
    %c0_706 = arith.constant 0 : index
    %1184 = vector.load %arg12[%1183, %c0_706] : memref<320x128xf32, #tpu.memory_space<vmem>>, vector<8x128xf32>
    %1185 = vector.extract_strided_slice %1116 {offsets = [0, 768], sizes = [8, 128], strides = [1, 1]} : vector<8x1024xf32> to vector<8x128xf32>
    %1186 = arith.addf %1184, %1185 : vector<8x128xf32>
    %1187 = arith.index_cast %1182 : i32 to index
    %c0_707 = arith.constant 0 : index
    %1188 = vector.load %arg12[%1187, %c0_707] : memref<320x128xf32, #tpu.memory_space<vmem>>, vector<8x128xf32>
    tpu.vector_store %arg12[%1187, %c0_707], %1186 {strides = array<i32>} : memref<320x128xf32, #tpu.memory_space<vmem>>, vector<8x128xf32>,
    %c4_i32_708 = arith.constant 4 : i32
    %c0_709 = arith.constant 0 : index
    %c0_710 = arith.constant 0 : index
    %1189 = vector.load %arg6[%c0_709, %c0_710] : memref<128x1024xf32, #tpu.memory_space<vmem>>, vector<128x1024xf32>
    %cst_711 = arith.constant dense<0.000000e+00> : vector<8x1024xf32>
    %1190 = tpu.matmul %1123, %1189, %cst_711 {dimension_numbers = #tpu.dot_dimension_numbers<[1], [0], [0], [1], [0, 0, 1, 1], [], []>} : vector<8x128xf32>, vector<128x1024xf32>, vector<8x1024xf32> -> vector<8x1024xf32>
    %c8_i32_712 = arith.constant 8 : i32
    %1191 = arith.muli %c4_i32_708, %c8_i32_712 : i32
    %c280_i32_713 = arith.constant 280 : i32
    %1192 = arith.addi %c280_i32_713, %1191 : i32
    %1193 = tpu.assume_multiple %1192, 8 : i32
    %1194 = arith.index_cast %1193 : i32 to index
    %c0_714 = arith.constant 0 : index
    %1195 = vector.load %arg12[%1194, %c0_714] : memref<320x128xf32, #tpu.memory_space<vmem>>, vector<8x128xf32>
    %1196 = vector.extract_strided_slice %1190 {offsets = [0, 896], sizes = [8, 128], strides = [1, 1]} : vector<8x1024xf32> to vector<8x128xf32>
    %1197 = arith.addf %1195, %1196 : vector<8x128xf32>
    %1198 = arith.index_cast %1193 : i32 to index
    %c0_715 = arith.constant 0 : index
    %1199 = vector.load %arg12[%1198, %c0_715] : memref<320x128xf32, #tpu.memory_space<vmem>>, vector<8x128xf32>
    tpu.vector_store %arg12[%1198, %c0_715], %1197 {strides = array<i32>} : memref<320x128xf32, #tpu.memory_space<vmem>>, vector<8x128xf32>,
    %c8_i32_716 = arith.constant 8 : i32
    %1200 = arith.muli %c4_i32_708, %c8_i32_716 : i32
    %c0_i32_717 = arith.constant 0 : i32
    %1201 = arith.addi %c0_i32_717, %1200 : i32
    %1202 = tpu.assume_multiple %1201, 8 : i32
    %1203 = arith.index_cast %1202 : i32 to index
    %c0_718 = arith.constant 0 : index
    %1204 = vector.load %arg12[%1203, %c0_718] : memref<320x128xf32, #tpu.memory_space<vmem>>, vector<8x128xf32>
    %1205 = vector.extract_strided_slice %1190 {offsets = [0, 0], sizes = [8, 128], strides = [1, 1]} : vector<8x1024xf32> to vector<8x128xf32>
    %1206 = arith.addf %1204, %1205 : vector<8x128xf32>
    %1207 = arith.index_cast %1202 : i32 to index
    %c0_719 = arith.constant 0 : index
    %1208 = vector.load %arg12[%1207, %c0_719] : memref<320x128xf32, #tpu.memory_space<vmem>>, vector<8x128xf32>
    tpu.vector_store %arg12[%1207, %c0_719], %1206 {strides = array<i32>} : memref<320x128xf32, #tpu.memory_space<vmem>>, vector<8x128xf32>,
    %c8_i32_720 = arith.constant 8 : i32
    %1209 = arith.muli %c4_i32_708, %c8_i32_720 : i32
    %c40_i32_721 = arith.constant 40 : i32
    %1210 = arith.addi %c40_i32_721, %1209 : i32
    %1211 = tpu.assume_multiple %1210, 8 : i32
    %1212 = arith.index_cast %1211 : i32 to index
    %c0_722 = arith.constant 0 : index
    %1213 = vector.load %arg12[%1212, %c0_722] : memref<320x128xf32, #tpu.memory_space<vmem>>, vector<8x128xf32>
    %1214 = vector.extract_strided_slice %1190 {offsets = [0, 128], sizes = [8, 128], strides = [1, 1]} : vector<8x1024xf32> to vector<8x128xf32>
    %1215 = arith.addf %1213, %1214 : vector<8x128xf32>
    %1216 = arith.index_cast %1211 : i32 to index
    %c0_723 = arith.constant 0 : index
    %1217 = vector.load %arg12[%1216, %c0_723] : memref<320x128xf32, #tpu.memory_space<vmem>>, vector<8x128xf32>
    tpu.vector_store %arg12[%1216, %c0_723], %1215 {strides = array<i32>} : memref<320x128xf32, #tpu.memory_space<vmem>>, vector<8x128xf32>,
    %c8_i32_724 = arith.constant 8 : i32
    %1218 = arith.muli %c4_i32_708, %c8_i32_724 : i32
    %c80_i32_725 = arith.constant 80 : i32
    %1219 = arith.addi %c80_i32_725, %1218 : i32
    %1220 = tpu.assume_multiple %1219, 8 : i32
    %1221 = arith.index_cast %1220 : i32 to index
    %c0_726 = arith.constant 0 : index
    %1222 = vector.load %arg12[%1221, %c0_726] : memref<320x128xf32, #tpu.memory_space<vmem>>, vector<8x128xf32>
    %1223 = vector.extract_strided_slice %1190 {offsets = [0, 256], sizes = [8, 128], strides = [1, 1]} : vector<8x1024xf32> to vector<8x128xf32>
    %1224 = arith.addf %1222, %1223 : vector<8x128xf32>
    %1225 = arith.index_cast %1220 : i32 to index
    %c0_727 = arith.constant 0 : index
    %1226 = vector.load %arg12[%1225, %c0_727] : memref<320x128xf32, #tpu.memory_space<vmem>>, vector<8x128xf32>
    tpu.vector_store %arg12[%1225, %c0_727], %1224 {strides = array<i32>} : memref<320x128xf32, #tpu.memory_space<vmem>>, vector<8x128xf32>,
    %c8_i32_728 = arith.constant 8 : i32
    %1227 = arith.muli %c4_i32_708, %c8_i32_728 : i32
    %c120_i32_729 = arith.constant 120 : i32
    %1228 = arith.addi %c120_i32_729, %1227 : i32
    %1229 = tpu.assume_multiple %1228, 8 : i32
    %1230 = arith.index_cast %1229 : i32 to index
    %c0_730 = arith.constant 0 : index
    %1231 = vector.load %arg12[%1230, %c0_730] : memref<320x128xf32, #tpu.memory_space<vmem>>, vector<8x128xf32>
    %1232 = vector.extract_strided_slice %1190 {offsets = [0, 384], sizes = [8, 128], strides = [1, 1]} : vector<8x1024xf32> to vector<8x128xf32>
    %1233 = arith.addf %1231, %1232 : vector<8x128xf32>
    %1234 = arith.index_cast %1229 : i32 to index
    %c0_731 = arith.constant 0 : index
    %1235 = vector.load %arg12[%1234, %c0_731] : memref<320x128xf32, #tpu.memory_space<vmem>>, vector<8x128xf32>
    tpu.vector_store %arg12[%1234, %c0_731], %1233 {strides = array<i32>} : memref<320x128xf32, #tpu.memory_space<vmem>>, vector<8x128xf32>,
    %c8_i32_732 = arith.constant 8 : i32
    %1236 = arith.muli %c4_i32_708, %c8_i32_732 : i32
    %c160_i32_733 = arith.constant 160 : i32
    %1237 = arith.addi %c160_i32_733, %1236 : i32
    %1238 = tpu.assume_multiple %1237, 8 : i32
    %1239 = arith.index_cast %1238 : i32 to index
    %c0_734 = arith.constant 0 : index
    %1240 = vector.load %arg12[%1239, %c0_734] : memref<320x128xf32, #tpu.memory_space<vmem>>, vector<8x128xf32>
    %1241 = vector.extract_strided_slice %1190 {offsets = [0, 512], sizes = [8, 128], strides = [1, 1]} : vector<8x1024xf32> to vector<8x128xf32>
    %1242 = arith.addf %1240, %1241 : vector<8x128xf32>
    %1243 = arith.index_cast %1238 : i32 to index
    %c0_735 = arith.constant 0 : index
    %1244 = vector.load %arg12[%1243, %c0_735] : memref<320x128xf32, #tpu.memory_space<vmem>>, vector<8x128xf32>
    tpu.vector_store %arg12[%1243, %c0_735], %1242 {strides = array<i32>} : memref<320x128xf32, #tpu.memory_space<vmem>>, vector<8x128xf32>,
    %c8_i32_736 = arith.constant 8 : i32
    %1245 = arith.muli %c4_i32_708, %c8_i32_736 : i32
    %c200_i32_737 = arith.constant 200 : i32
    %1246 = arith.addi %c200_i32_737, %1245 : i32
    %1247 = tpu.assume_multiple %1246, 8 : i32
    %1248 = arith.index_cast %1247 : i32 to index
    %c0_738 = arith.constant 0 : index
    %1249 = vector.load %arg12[%1248, %c0_738] : memref<320x128xf32, #tpu.memory_space<vmem>>, vector<8x128xf32>
    %1250 = vector.extract_strided_slice %1190 {offsets = [0, 640], sizes = [8, 128], strides = [1, 1]} : vector<8x1024xf32> to vector<8x128xf32>
    %1251 = arith.addf %1249, %1250 : vector<8x128xf32>
    %1252 = arith.index_cast %1247 : i32 to index
    %c0_739 = arith.constant 0 : index
    %1253 = vector.load %arg12[%1252, %c0_739] : memref<320x128xf32, #tpu.memory_space<vmem>>, vector<8x128xf32>
    tpu.vector_store %arg12[%1252, %c0_739], %1251 {strides = array<i32>} : memref<320x128xf32, #tpu.memory_space<vmem>>, vector<8x128xf32>,
    %c8_i32_740 = arith.constant 8 : i32
    %1254 = arith.muli %c4_i32_708, %c8_i32_740 : i32
    %c240_i32_741 = arith.constant 240 : i32
    %1255 = arith.addi %c240_i32_741, %1254 : i32
    %1256 = tpu.assume_multiple %1255, 8 : i32
    %1257 = arith.index_cast %1256 : i32 to index
    %c0_742 = arith.constant 0 : index
    %1258 = vector.load %arg12[%1257, %c0_742] : memref<320x128xf32, #tpu.memory_space<vmem>>, vector<8x128xf32>
    %1259 = vector.extract_strided_slice %1190 {offsets = [0, 768], sizes = [8, 128], strides = [1, 1]} : vector<8x1024xf32> to vector<8x128xf32>
    %1260 = arith.addf %1258, %1259 : vector<8x128xf32>
    %1261 = arith.index_cast %1256 : i32 to index
    %c0_743 = arith.constant 0 : index
    %1262 = vector.load %arg12[%1261, %c0_743] : memref<320x128xf32, #tpu.memory_space<vmem>>, vector<8x128xf32>
    tpu.vector_store %arg12[%1261, %c0_743], %1260 {strides = array<i32>} : memref<320x128xf32, #tpu.memory_space<vmem>>, vector<8x128xf32>,
    %c5_i32_744 = arith.constant 5 : i32
    %c2_745 = arith.constant 2 : index
    %c0_746 = arith.constant 0 : index
    %c0_747 = arith.constant 0 : index
    %1263 = vector.load %arg11[%c2_745, %c0_746, %c0_747] : memref<3x8x128xf32, #tpu.memory_space<vmem>>, vector<1x8x128xf32>
    %1264 = vector.shape_cast %1263 : vector<1x8x128xf32> to vector<8x128xf32>
    %1265 = vector.shape_cast %1197 : vector<8x128xf32> to vector<1x8x128xf32>
    tpu.vector_store %arg11[%c2_745, %c0_746, %c0_747], %1265 {strides = array<i32>} : memref<3x8x128xf32, #tpu.memory_space<vmem>>, vector<1x8x128xf32>,
    %c0_748 = arith.constant 0 : index
    %c0_749 = arith.constant 0 : index
    %1266 = vector.load %arg12[%c0_748, %c0_749] : memref<320x128xf32, #tpu.memory_space<vmem>>, vector<320x128xf32>
    %c0_750 = arith.constant 0 : index
    %c0_751 = arith.constant 0 : index
    %1267 = vector.load %arg8[%c0_750, %c0_751] : memref<128x128xf32, #tpu.memory_space<vmem>>, vector<128x128xf32>
    %cst_752 = arith.constant dense<0.000000e+00> : vector<320x128xf32>
    %1268 = tpu.matmul %1266, %1267, %cst_752 {dimension_numbers = #tpu.dot_dimension_numbers<[1], [0], [0], [1], [0, 0, 1, 1], [], []>} : vector<320x128xf32>, vector<128x128xf32>, vector<320x128xf32> -> vector<320x128xf32>
    %c0_753 = arith.constant 0 : index
    %c0_754 = arith.constant 0 : index
    %1269 = vector.load %arg13[%c0_753, %c0_754] : memref<320x128xf32, #tpu.memory_space<vmem>>, vector<320x128xf32>
    %c0_755 = arith.constant 0 : index
    %c0_756 = arith.constant 0 : index
    %1270 = vector.load %arg9[%c0_755, %c0_756] : memref<128x128xf32, #tpu.memory_space<vmem>>, vector<128x128xf32>
    %cst_757 = arith.constant dense<0.000000e+00> : vector<320x128xf32>
    %1271 = tpu.matmul %1269, %1270, %cst_757 {dimension_numbers = #tpu.dot_dimension_numbers<[1], [0], [0], [1], [0, 0, 1, 1], [], []>} : vector<320x128xf32>, vector<128x128xf32>, vector<320x128xf32> -> vector<320x128xf32>
    %1272 = arith.addf %1268, %1271 : vector<320x128xf32>
    %c0_758 = arith.constant 0 : index
    %c0_759 = arith.constant 0 : index
    %1273 = vector.load %arg10[%c0_758, %c0_759] : memref<320x128xf32, #tpu.memory_space<vmem>>, vector<320x128xf32>
    tpu.vector_store %arg10[%c0_758, %c0_759], %1272 {strides = array<i32>} : memref<320x128xf32, #tpu.memory_space<vmem>>, vector<320x128xf32>,
    return
  }
  func.func @transform_0(%arg0: i32) -> (i32, i32) {
    %c0_i32 = arith.constant 0 : i32
    %c0_i32_0 = arith.constant 0 : i32
    return %arg0, %c0_i32 : i32, i32
  }
  func.func @transform_1(%arg0: i32) -> (i32, i32) {
    %c0_i32 = arith.constant 0 : i32
    %c0_i32_0 = arith.constant 0 : i32
    %c0_i32_1 = arith.constant 0 : i32
    return %c0_i32, %c0_i32_0 : i32, i32
  }
  func.func @transform_2(%arg0: i32) -> (i32, i32) {
    %c0_i32 = arith.constant 0 : i32
    %c0_i32_0 = arith.constant 0 : i32
    %c0_i32_1 = arith.constant 0 : i32
    return %c0_i32, %c0_i32_0 : i32, i32
  }
  func.func @transform_3(%arg0: i32) -> (i32, i32) {
    %c0_i32 = arith.constant 0 : i32
    %c0_i32_0 = arith.constant 0 : i32
    %c0_i32_1 = arith.constant 0 : i32
    return %c0_i32, %c0_i32_0 : i32, i32
  }
  func.func @transform_4(%arg0: i32) -> (i32, i32) {
    %c0_i32 = arith.constant 0 : i32
    %c0_i32_0 = arith.constant 0 : i32
    %c0_i32_1 = arith.constant 0 : i32
    return %c0_i32, %c0_i32_0 : i32, i32
  }
  func.func @transform_5(%arg0: i32) -> (i32, i32) {
    %c0_i32 = arith.constant 0 : i32
    %c0_i32_0 = arith.constant 0 : i32
    %c0_i32_1 = arith.constant 0 : i32
    return %c0_i32, %c0_i32_0 : i32, i32
  }
  func.func @transform_6(%arg0: i32) -> (i32, i32) {
    %c0_i32 = arith.constant 0 : i32
    %c0_i32_0 = arith.constant 0 : i32
    %c0_i32_1 = arith.constant 0 : i32
    return %c0_i32, %c0_i32_0 : i32, i32
  }
  func.func @transform_7(%arg0: i32) -> (i32, i32) {
    %c0_i32 = arith.constant 0 : i32
    %c0_i32_0 = arith.constant 0 : i32
    %c0_i32_1 = arith.constant 0 : i32
    return %c0_i32, %c0_i32_0 : i32, i32
  }
  func.func @transform_8(%arg0: i32) -> (i32, i32) {
    %c0_i32 = arith.constant 0 : i32
    %c0_i32_0 = arith.constant 0 : i32
    %c0_i32_1 = arith.constant 0 : i32
    return %c0_i32, %c0_i32_0 : i32, i32
  }
  func.func @transform_9(%arg0: i32) -> (i32, i32) {
    %c0_i32 = arith.constant 0 : i32
    %c0_i32_0 = arith.constant 0 : i32
    return %arg0, %c0_i32 : i32, i32
  }
}

</mosaic_0001>

<llo_original>
// kernel: _deep_smm_forward_impl.1
$region0: #{_deep_smm_forward_impl.1}
  #allocation0 [shape = 'u32[]', space=smem, size = 0x4, offset = 0x4, fixed_abs, tag = 'smem constant byte address 0x4 - core index']
  #allocation1 [shape = 'u32[72,128]{1,0:T(1,128)}', space=vmem, size = 0x9000, scoped, tag = 'internal scratch']
  #allocation2 [shape = 'f32[3,8,128]{2,1,0:T(8,128)}', space=vmem, size = 0x3000, scoped, tag = 'scratch operand']
  #allocation3 [shape = 'f32[320,128]{1,0:T(8,128)}', space=vmem, size = 0x28000, scoped, tag = 'scratch operand']
  #allocation4 [shape = 'f32[320,128]{1,0:T(8,128)}', space=vmem, size = 0x28000, scoped, tag = 'scratch operand']
  %s0 = inlined_call_operand.vmem [shape: f32[320,4], index: 0, kind: input, shape index: {}]
  %s1 = inlined_call_operand.vmem [shape: f32[128,1024], index: 1, kind: input, shape index: {}]
  %s2 = inlined_call_operand.vmem [shape: f32[4,128], index: 2, kind: input, shape index: {}]
  %s3 = inlined_call_operand.vmem [shape: f32[128,1024], index: 3, kind: input, shape index: {}]
  %s4 = inlined_call_operand.vmem [shape: f32[128,128], index: 4, kind: input, shape index: {}]
  %s5 = inlined_call_operand.vmem [shape: f32[128,1024], index: 5, kind: input, shape index: {}]
  %s6 = inlined_call_operand.vmem [shape: f32[128,128], index: 6, kind: input, shape index: {}]
  %s7 = inlined_call_operand.vmem [shape: f32[128,128], index: 7, kind: input, shape index: {}]
  %s8 = inlined_call_operand.vmem [shape: f32[128,128], index: 8, kind: input, shape index: {}]
  %s9 = inlined_call_operand.vmem [shape: f32[320,128], index: 9, kind: output, shape index: {}]
  %s10 = sld [smem:[#allocation0]]
  $region50: #{_deep_smm_forward_impl.1} parent=0
    _
  %s12 = ssub.s32 1, %s10
  %s13 = scalar_select 0, %s12, %s10
  // Predicated region
  $region2: #{_deep_smm_forward_impl.1} parent=0 // pred_check
    _
  $region3: #{_deep_smm_forward_impl.1} parent=0 // pred_check_branch
    %15 = sbr.rel (0) target = $region5
  $region4: #{_deep_smm_forward_impl.1} parent=0 // pred_region
    _
  $region5: #{_deep_smm_forward_impl.1} parent=0 // pred_fallthru
    _
  // Predicated region
  $region6: #{_deep_smm_forward_impl.1} parent=0 // pred_check
    _
  $region7: #{_deep_smm_forward_impl.1} parent=0 // pred_check_branch
    %17 = sbr.rel (0) target = $region9
  $region8: #{_deep_smm_forward_impl.1} parent=0 // pred_region
    _
  $region9: #{_deep_smm_forward_impl.1} parent=0 // pred_fallthru
    _
  // Predicated region
  $region10: #{_deep_smm_forward_impl.1} parent=0 // pred_check
    _
  $region11: #{_deep_smm_forward_impl.1} parent=0 // pred_check_branch
    %19 = sbr.rel (0) target = $region13
  $region12: #{_deep_smm_forward_impl.1} parent=0 // pred_region
    _
  $region13: #{_deep_smm_forward_impl.1} parent=0 // pred_fallthru
    _
  // Predicated region
  $region14: #{_deep_smm_forward_impl.1} parent=0 // pred_check
    _
  $region15: #{_deep_smm_forward_impl.1} parent=0 // pred_check_branch
    %21 = sbr.rel (0) target = $region17
  $region16: #{_deep_smm_forward_impl.1} parent=0 // pred_region
    _
  $region17: #{_deep_smm_forward_impl.1} parent=0 // pred_fallthru
    _
  // Predicated region
  $region18: #{_deep_smm_forward_impl.1} parent=0 // pred_check
    _
  $region19: #{_deep_smm_forward_impl.1} parent=0 // pred_check_branch
    %23 = sbr.rel (0) target = $region21
  $region20: #{_deep_smm_forward_impl.1} parent=0 // pred_region
    _
  $region21: #{_deep_smm_forward_impl.1} parent=0 // pred_fallthru
    _
  // Predicated region
  $region22: #{_deep_smm_forward_impl.1} parent=0 // pred_check
    _
  $region23: #{_deep_smm_forward_impl.1} parent=0 // pred_check_branch
    %25 = sbr.rel (0) target = $region25
  $region24: #{_deep_smm_forward_impl.1} parent=0 // pred_region
    _
  $region25: #{_deep_smm_forward_impl.1} parent=0 // pred_fallthru
    _
  // Predicated region
  $region26: #{_deep_smm_forward_impl.1} parent=0 // pred_check
    _
  $region27: #{_deep_smm_forward_impl.1} parent=0 // pred_check_branch
    %27 = sbr.rel (0) target = $region29
  $region28: #{_deep_smm_forward_impl.1} parent=0 // pred_region
    _
  $region29: #{_deep_smm_forward_impl.1} parent=0 // pred_fallthru
    _
  // Predicated region
  $region30: #{_deep_smm_forward_impl.1} parent=0 // pred_check
    _
  $region31: #{_deep_smm_forward_impl.1} parent=0 // pred_check_branch
    %29 = sbr.rel (0) target = $region33
  $region32: #{_deep_smm_forward_impl.1} parent=0 // pred_region
    _
  $region33: #{_deep_smm_forward_impl.1} parent=0 // pred_fallthru
    _
  // Predicated region
  $region34: #{_deep_smm_forward_impl.1} parent=0 // pred_check
    _
  $region35: #{_deep_smm_forward_impl.1} parent=0 // pred_check_branch
    %31 = sbr.rel (0) target = $region37
  $region36: #{_deep_smm_forward_impl.1} parent=0 // pred_region
    _
  $region37: #{_deep_smm_forward_impl.1} parent=0 // pred_fallthru
    _
  %p32 = scmp.eq.s32.totalorder 0, 0
  // Predicated region
  $region38: #{_deep_smm_forward_impl.1} parent=0 // pred_check
    %p33 = pneg %p32
  $region39: #{_deep_smm_forward_impl.1} parent=0 // pred_check_branch
    %35 = sbr.rel (%p33) target = $region41
  $region40: #{_deep_smm_forward_impl.1} parent=0 // pred_region
    %36 = vst [vmem:[#allocation2] sm:$0xff] 0.0
    %37 = vst [vmem:[#allocation2 + $0x8] sm:$0xff] 0.0
    %38 = vst [vmem:[#allocation2 + $0x10] sm:$0xff] 0.0
  $region41: #{_deep_smm_forward_impl.1} parent=0 // pred_fallthru
    _
  %v39 = vld [vmem:[%s0] sm:$0xff]
  %v40 = vld [vmem:[%s0 + $0x8] sm:$0xff]
  %v41 = vld [vmem:[%s0 + $0x10] sm:$0xff]
  %v42 = vld [vmem:[%s0 + $0x18] sm:$0xff]
  %v43 = vld [vmem:[%s0 + $0x20] sm:$0xff]
  %v44 = vld [vmem:[%s0 + $0x28] sm:$0xff]
  %v45 = vld [vmem:[%s0 + $0x30] sm:$0xff]
  %v46 = vld [vmem:[%s0 + $0x38] sm:$0xff]
  %v47 = vld [vmem:[%s0 + $0x40] sm:$0xff]
  %v48 = vld [vmem:[%s0 + $0x48] sm:$0xff]
  %v49 = vld [vmem:[%s0 + $0x50] sm:$0xff]
  %v50 = vld [vmem:[%s0 + $0x58] sm:$0xff]
  %v51 = vld [vmem:[%s0 + $0x60] sm:$0xff]
  %v52 = vld [vmem:[%s0 + $0x68] sm:$0xff]
  %v53 = vld [vmem:[%s0 + $0x70] sm:$0xff]
  %v54 = vld [vmem:[%s0 + $0x78] sm:$0xff]
  %v55 = vld [vmem:[%s0 + $0x80] sm:$0xff]
  %v56 = vld [vmem:[%s0 + $0x88] sm:$0xff]
  %v57 = vld [vmem:[%s0 + $0x90] sm:$0xff]
  %v58 = vld [vmem:[%s0 + $0x98] sm:$0xff]
  %v59 = vld [vmem:[%s0 + $0xa0] sm:$0xff]
  %v60 = vld [vmem:[%s0 + $0xa8] sm:$0xff]
  %v61 = vld [vmem:[%s0 + $0xb0] sm:$0xff]
  %v62 = vld [vmem:[%s0 + $0xb8] sm:$0xff]
  %v63 = vld [vmem:[%s0 + $0xc0] sm:$0xff]
  %v64 = vld [vmem:[%s0 + $0xc8] sm:$0xff]
  %v65 = vld [vmem:[%s0 + $0xd0] sm:$0xff]
  %v66 = vld [vmem:[%s0 + $0xd8] sm:$0xff]
  %v67 = vld [vmem:[%s0 + $0xe0] sm:$0xff]
  %v68 = vld [vmem:[%s0 + $0xe8] sm:$0xff]
  %v69 = vld [vmem:[%s0 + $0xf0] sm:$0xff]
  %v70 = vld [vmem:[%s0 + $0xf8] sm:$0xff]
  %v71 = vld [vmem:[%s0 + $0x100] sm:$0xff]
  %v72 = vld [vmem:[%s0 + $0x108] sm:$0xff]
  %v73 = vld [vmem:[%s0 + $0x110] sm:$0xff]
  %v74 = vld [vmem:[%s0 + $0x118] sm:$0xff]
  %v75 = vld [vmem:[%s0 + $0x120] sm:$0xff]
  %v76 = vld [vmem:[%s0 + $0x128] sm:$0xff]
  %v77 = vld [vmem:[%s0 + $0x130] sm:$0xff]
  %v78 = vld [vmem:[%s0 + $0x138] sm:$0xff]
  %v79 = vld [vmem:[%s2] sm:$0xf]
  %vm80 = vcmask 31744
  %v82 = vsel %vm80, %v39, 0
  %v85 = vsel %vm80, %v40, 0
  %v88 = vsel %vm80, %v41, 0
  %v91 = vsel %vm80, %v42, 0
  %v94 = vsel %vm80, %v43, 0
  %v97 = vsel %vm80, %v44, 0
  %v100 = vsel %vm80, %v45, 0
  %v103 = vsel %vm80, %v46, 0
  %v106 = vsel %vm80, %v47, 0
  %v109 = vsel %vm80, %v48, 0
  %v112 = vsel %vm80, %v49, 0
  %v115 = vsel %vm80, %v50, 0
  %v118 = vsel %vm80, %v51, 0
  %v121 = vsel %vm80, %v52, 0
  %v124 = vsel %vm80, %v53, 0
  %v127 = vsel %vm80, %v54, 0
  %v130 = vsel %vm80, %v55, 0
  %v133 = vsel %vm80, %v56, 0
  %v136 = vsel %vm80, %v57, 0
  %v139 = vsel %vm80, %v58, 0
  %v142 = vsel %vm80, %v59, 0
  %v145 = vsel %vm80, %v60, 0
  %v148 = vsel %vm80, %v61, 0
  %v151 = vsel %vm80, %v62, 0
  %v154 = vsel %vm80, %v63, 0
  %v157 = vsel %vm80, %v64, 0
  %v160 = vsel %vm80, %v65, 0
  %v163 = vsel %vm80, %v66, 0
  %v166 = vsel %vm80, %v67, 0
  %v169 = vsel %vm80, %v68, 0
  %v172 = vsel %vm80, %v69, 0
  %v175 = vsel %vm80, %v70, 0
  %v178 = vsel %vm80, %v71, 0
  %v181 = vsel %vm80, %v72, 0
  %v184 = vsel %vm80, %v73, 0
  %v187 = vsel %vm80, %v74, 0
  %v190 = vsel %vm80, %v75, 0
  %v193 = vsel %vm80, %v76, 0
  %v196 = vsel %vm80, %v77, 0
  %v199 = vsel %vm80, %v78, 0
  %vm201 = vcmask 1043456
  %v203 = vsel %vm201, %v79, 0
  %205 = vmatpush.msra.mxu0 0.0
  %206 = vmatpush.msra.mxu0 0.0
  %207 = vmatpush.msra.mxu0 0.0
  %208 = vmatpush.msra.mxu0 0.0
  %209 = vmatpush.msra.mxu0 0.0
  %210 = vmatpush.msra.mxu0 0.0
  %211 = vmatpush.msra.mxu0 0.0
  %212 = vmatpush.msra.mxu0 0.0
  %213 = vmatpush.msra.mxu0 0.0
  %214 = vmatpush.msra.mxu0 0.0
  %215 = vmatpush.msra.mxu0 0.0
  %216 = vmatpush.msra.mxu0 0.0
  %217 = vmatpush.msra.mxu0 0.0
  %218 = vmatpush.msra.mxu0 0.0
  %219 = vmatpush.msra.mxu0 0.0
  %220 = vmatpush.msra.mxu0 %v203
  %221 = vmatmul.f32.gmra.mxu0 %v82
  %v222 = vpop.f32.mrf.mxu0
  %v223 = vadd.f32 0.0, %v222
  %224 = vmatmul.f32.gmra.mxu0 %v85
  %v225 = vpop.f32.mrf.mxu0
  %v226 = vadd.f32 0.0, %v225
  %227 = vmatmul.f32.gmra.mxu0 %v88
  %v228 = vpop.f32.mrf.mxu0
  %v229 = vadd.f32 0.0, %v228
  %230 = vmatmul.f32.gmra.mxu0 %v91
  %v231 = vpop.f32.mrf.mxu0
  %v232 = vadd.f32 0.0, %v231
  %233 = vmatmul.f32.gmra.mxu0 %v94
  %v234 = vpop.f32.mrf.mxu0
  %v235 = vadd.f32 0.0, %v234
  %236 = vmatmul.f32.gmra.mxu0 %v97
  %v237 = vpop.f32.mrf.mxu0
  %v238 = vadd.f32 0.0, %v237
  %239 = vmatmul.f32.gmra.mxu0 %v100
  %v240 = vpop.f32.mrf.mxu0
  %v241 = vadd.f32 0.0, %v240
  %242 = vmatmul.f32.gmra.mxu0 %v103
  %v243 = vpop.f32.mrf.mxu0
  %v244 = vadd.f32 0.0, %v243
  %245 = vmatmul.f32.gmra.mxu0 %v106
  %v246 = vpop.f32.mrf.mxu0
  %v247 = vadd.f32 0.0, %v246
  %248 = vmatmul.f32.gmra.mxu0 %v109
  %v249 = vpop.f32.mrf.mxu0
  %v250 = vadd.f32 0.0, %v249
  %251 = vmatmul.f32.gmra.mxu0 %v112
  %v252 = vpop.f32.mrf.mxu0
  %v253 = vadd.f32 0.0, %v252
  %254 = vmatmul.f32.gmra.mxu0 %v115
  %v255 = vpop.f32.mrf.mxu0
  %v256 = vadd.f32 0.0, %v255
  %257 = vmatmul.f32.gmra.mxu0 %v118
  %v258 = vpop.f32.mrf.mxu0
  %v259 = vadd.f32 0.0, %v258
  %260 = vmatmul.f32.gmra.mxu0 %v121
  %v261 = vpop.f32.mrf.mxu0
  %v262 = vadd.f32 0.0, %v261
  %263 = vmatmul.f32.gmra.mxu0 %v124
  %v264 = vpop.f32.mrf.mxu0
  %v265 = vadd.f32 0.0, %v264
  %266 = vmatmul.f32.gmra.mxu0 %v127
  %v267 = vpop.f32.mrf.mxu0
  %v268 = vadd.f32 0.0, %v267
  %269 = vmatmul.f32.gmra.mxu0 %v130
  %v270 = vpop.f32.mrf.mxu0
  %v271 = vadd.f32 0.0, %v270
  %272 = vmatmul.f32.gmra.mxu0 %v133
  %v273 = vpop.f32.mrf.mxu0
  %v274 = vadd.f32 0.0, %v273
  %275 = vmatmul.f32.gmra.mxu0 %v136
  %v276 = vpop.f32.mrf.mxu0
  %v277 = vadd.f32 0.0, %v276
  %278 = vmatmul.f32.gmra.mxu0 %v139
  %v279 = vpop.f32.mrf.mxu0
  %v280 = vadd.f32 0.0, %v279
  %281 = vmatmul.f32.gmra.mxu0 %v142
  %v282 = vpop.f32.mrf.mxu0
  %v283 = vadd.f32 0.0, %v282
  %284 = vmatmul.f32.gmra.mxu0 %v145
  %v285 = vpop.f32.mrf.mxu0
  %v286 = vadd.f32 0.0, %v285
  %287 = vmatmul.f32.gmra.mxu0 %v148
  %v288 = vpop.f32.mrf.mxu0
  %v289 = vadd.f32 0.0, %v288
  %290 = vmatmul.f32.gmra.mxu0 %v151
  %v291 = vpop.f32.mrf.mxu0
  %v292 = vadd.f32 0.0, %v291
  %293 = vmatmul.f32.gmra.mxu0 %v154
  %v294 = vpop.f32.mrf.mxu0
  %v295 = vadd.f32 0.0, %v294
  %296 = vmatmul.f32.gmra.mxu0 %v157
  %v297 = vpop.f32.mrf.mxu0
  %v298 = vadd.f32 0.0, %v297
  %299 = vmatmul.f32.gmra.mxu0 %v160
  %v300 = vpop.f32.mrf.mxu0
  %v301 = vadd.f32 0.0, %v300
  %302 = vmatmul.f32.gmra.mxu0 %v163
  %v303 = vpop.f32.mrf.mxu0
  %v304 = vadd.f32 0.0, %v303
  %305 = vmatmul.f32.gmra.mxu0 %v166
  %v306 = vpop.f32.mrf.mxu0
  %v307 = vadd.f32 0.0, %v306
  %308 = vmatmul.f32.gmra.mxu0 %v169
  %v309 = vpop.f32.mrf.mxu0
  %v310 = vadd.f32 0.0, %v309
  %311 = vmatmul.f32.gmra.mxu0 %v172
  %v312 = vpop.f32.mrf.mxu0
  %v313 = vadd.f32 0.0, %v312
  %314 = vmatmul.f32.gmra.mxu0 %v175
  %v315 = vpop.f32.mrf.mxu0
  %v316 = vadd.f32 0.0, %v315
  %317 = vmatmul.f32.gmra.mxu0 %v178
  %v318 = vpop.f32.mrf.mxu0
  %v319 = vadd.f32 0.0, %v318
  %320 = vmatmul.f32.gmra.mxu0 %v181
  %v321 = vpop.f32.mrf.mxu0
  %v322 = vadd.f32 0.0, %v321
  %323 = vmatmul.f32.gmra.mxu0 %v184
  %v324 = vpop.f32.mrf.mxu0
  %v325 = vadd.f32 0.0, %v324
  %326 = vmatmul.f32.gmra.mxu0 %v187
  %v327 = vpop.f32.mrf.mxu0
  %v328 = vadd.f32 0.0, %v327
  %329 = vmatmul.f32.gmra.mxu0 %v190
  %v330 = vpop.f32.mrf.mxu0
  %v331 = vadd.f32 0.0, %v330
  %332 = vmatmul.f32.gmra.mxu0 %v193
  %v333 = vpop.f32.mrf.mxu0
  %v334 = vadd.f32 0.0, %v333
  %335 = vmatmul.f32.gmra.mxu0 %v196
  %v336 = vpop.f32.mrf.mxu0
  %v337 = vadd.f32 0.0, %v336
  %338 = vmatmul.f32.gmra.mxu0 %v199
  %v339 = vpop.f32.mrf.mxu0
  %v340 = vadd.f32 0.0, %v339
  %341 = vdwg.mxu0
  %342 = vst [vmem:[#allocation3] sm:$0xff] %v223
  %343 = vst [vmem:[#allocation3 + $0x8] sm:$0xff] %v226
  %344 = vst [vmem:[#allocation3 + $0x10] sm:$0xff] %v229
  %345 = vst [vmem:[#allocation3 + $0x18] sm:$0xff] %v232
  %346 = vst [vmem:[#allocation3 + $0x20] sm:$0xff] %v235
  %347 = vst [vmem:[#allocation3 + $0x28] sm:$0xff] %v238
  %348 = vst [vmem:[#allocation3 + $0x30] sm:$0xff] %v241
  %349 = vst [vmem:[#allocation3 + $0x38] sm:$0xff] %v244
  %350 = vst [vmem:[#allocation3 + $0x40] sm:$0xff] %v247
  %351 = vst [vmem:[#allocation3 + $0x48] sm:$0xff] %v250
  %352 = vst [vmem:[#allocation3 + $0x50] sm:$0xff] %v253
  %353 = vst [vmem:[#allocation3 + $0x58] sm:$0xff] %v256
  %354 = vst [vmem:[#allocation3 + $0x60] sm:$0xff] %v259
  %355 = vst [vmem:[#allocation3 + $0x68] sm:$0xff] %v262
  %356 = vst [vmem:[#allocation3 + $0x70] sm:$0xff] %v265
  %357 = vst [vmem:[#allocation3 + $0x78] sm:$0xff] %v268
  %358 = vst [vmem:[#allocation3 + $0x80] sm:$0xff] %v271
  %359 = vst [vmem:[#allocation3 + $0x88] sm:$0xff] %v274
  %360 = vst [vmem:[#allocation3 + $0x90] sm:$0xff] %v277
  %361 = vst [vmem:[#allocation3 + $0x98] sm:$0xff] %v280
  %362 = vst [vmem:[#allocation3 + $0xa0] sm:$0xff] %v283
  %363 = vst [vmem:[#allocation3 + $0xa8] sm:$0xff] %v286
  %364 = vst [vmem:[#allocation3 + $0xb0] sm:$0xff] %v289
  %365 = vst [vmem:[#allocation3 + $0xb8] sm:$0xff] %v292
  %366 = vst [vmem:[#allocation3 + $0xc0] sm:$0xff] %v295
  %367 = vst [vmem:[#allocation3 + $0xc8] sm:$0xff] %v298
  %368 = vst [vmem:[#allocation3 + $0xd0] sm:$0xff] %v301
  %369 = vst [vmem:[#allocation3 + $0xd8] sm:$0xff] %v304
  %370 = vst [vmem:[#allocation3 + $0xe0] sm:$0xff] %v307
  %371 = vst [vmem:[#allocation3 + $0xe8] sm:$0xff] %v310
  %372 = vst [vmem:[#allocation3 + $0xf0] sm:$0xff] %v313
  %373 = vst [vmem:[#allocation3 + $0xf8] sm:$0xff] %v316
  %374 = vst [vmem:[#allocation3 + $0x100] sm:$0xff] %v319
  %375 = vst [vmem:[#allocation3 + $0x108] sm:$0xff] %v322
  %376 = vst [vmem:[#allocation3 + $0x110] sm:$0xff] %v325
  %377 = vst [vmem:[#allocation3 + $0x118] sm:$0xff] %v328
  %378 = vst [vmem:[#allocation3 + $0x120] sm:$0xff] %v331
  %379 = vst [vmem:[#allocation3 + $0x128] sm:$0xff] %v334
  %380 = vst [vmem:[#allocation3 + $0x130] sm:$0xff] %v337
  %381 = vst [vmem:[#allocation3 + $0x138] sm:$0xff] %v340
  %v382 = vld [vmem:[#allocation3] sm:$0xff]
  %v383 = vld [vmem:[#allocation3 + $0x8] sm:$0xff]
  %v384 = vld [vmem:[#allocation3 + $0x10] sm:$0xff]
  %v385 = vld [vmem:[#allocation3 + $0x18] sm:$0xff]
  %v386 = vld [vmem:[#allocation3 + $0x20] sm:$0xff]
  %v387 = vld [vmem:[#allocation3 + $0x28] sm:$0xff]
  %v388 = vld [vmem:[#allocation3 + $0x30] sm:$0xff]
  %v389 = vld [vmem:[#allocation3 + $0x38] sm:$0xff]
  %v390 = vld [vmem:[#allocation3 + $0x40] sm:$0xff]
  %v391 = vld [vmem:[#allocation3 + $0x48] sm:$0xff]
  %v392 = vld [vmem:[%s1] sm:$0xff]
  %v393 = vld [vmem:[%s1 + $0x40] sm:$0xff]
  %v394 = vld [vmem:[%s1 + $0x80] sm:$0xff]
  %v395 = vld [vmem:[%s1 + $0xc0] sm:$0xff]
  %v396 = vld [vmem:[%s1 + $0x100] sm:$0xff]
  %v397 = vld [vmem:[%s1 + $0x140] sm:$0xff]
  %v398 = vld [vmem:[%s1 + $0x180] sm:$0xff]
  %v399 = vld [vmem:[%s1 + $0x1c0] sm:$0xff]
  %v400 = vld [vmem:[%s1 + $0x200] sm:$0xff]
  %v401 = vld [vmem:[%s1 + $0x240] sm:$0xff]
  %v402 = vld [vmem:[%s1 + $0x280] sm:$0xff]
  %v403 = vld [vmem:[%s1 + $0x2c0] sm:$0xff]
  %v404 = vld [vmem:[%s1 + $0x300] sm:$0xff]
  %v405 = vld [vmem:[%s1 + $0x340] sm:$0xff]
  %v406 = vld [vmem:[%s1 + $0x380] sm:$0xff]
  %v407 = vld [vmem:[%s1 + $0x3c0] sm:$0xff]
  %408 = vmatpush.msra.mxu0 %v407
  %409 = vmatpush.msra.mxu0 %v406
  %410 = vmatpush.msra.mxu0 %v405
  %411 = vmatpush.msra.mxu0 %v404
  %412 = vmatpush.msra.mxu0 %v403
  %413 = vmatpush.msra.mxu0 %v402
  %414 = vmatpush.msra.mxu0 %v401
  %415 = vmatpush.msra.mxu0 %v400
  %416 = vmatpush.msra.mxu0 %v399
  %417 = vmatpush.msra.mxu0 %v398
  %418 = vmatpush.msra.mxu0 %v397
  %419 = vmatpush.msra.mxu0 %v396
  %420 = vmatpush.msra.mxu0 %v395
  %421 = vmatpush.msra.mxu0 %v394
  %422 = vmatpush.msra.mxu0 %v393
  %423 = vmatpush.msra.mxu0 %v392
  %424 = vmatmul.f32.gmra.mxu0 %v382
  %v425 = vpop.f32.mrf.mxu0
  %v426 = vadd.f32 0.0, %v425
  %427 = vmatmul.f32.gmra.mxu0 %v383
  %v428 = vpop.f32.mrf.mxu0
  %v429 = vadd.f32 0.0, %v428
  %430 = vmatmul.f32.gmra.mxu0 %v384
  %v431 = vpop.f32.mrf.mxu0
  %v432 = vadd.f32 0.0, %v431
  %433 = vmatmul.f32.gmra.mxu0 %v385
  %v434 = vpop.f32.mrf.mxu0
  %v435 = vadd.f32 0.0, %v434
  %436 = vmatmul.f32.gmra.mxu0 %v386
  %v437 = vpop.f32.mrf.mxu0
  %v438 = vadd.f32 0.0, %v437
  %439 = vdwg.mxu0
  %v440 = vadd.f32 %v387, %v426
  %v441 = vadd.f32 %v388, %v429
  %v442 = vadd.f32 %v389, %v432
  %v443 = vadd.f32 %v390, %v435
  %v444 = vadd.f32 %v391, %v438
  %445 = vst [vmem:[#allocation3 + $0x28] sm:$0xff] %v440
  %446 = vst [vmem:[#allocation3 + $0x30] sm:$0xff] %v441
  %447 = vst [vmem:[#allocation3 + $0x38] sm:$0xff] %v442
  %448 = vst [vmem:[#allocation3 + $0x40] sm:$0xff] %v443
  %449 = vst [vmem:[#allocation3 + $0x48] sm:$0xff] %v444
  %v450 = vld [vmem:[#allocation3 + $0x28] sm:$0xff]
  %v451 = vld [vmem:[#allocation3 + $0x30] sm:$0xff]
  %v452 = vld [vmem:[#allocation3 + $0x38] sm:$0xff]
  %v453 = vld [vmem:[#allocation3 + $0x40] sm:$0xff]
  %v454 = vld [vmem:[#allocation3 + $0x48] sm:$0xff]
  %v455 = vld [vmem:[#allocation3 + $0x50] sm:$0xff]
  %v456 = vld [vmem:[#allocation3 + $0x58] sm:$0xff]
  %v457 = vld [vmem:[#allocation3 + $0x60] sm:$0xff]
  %v458 = vld [vmem:[#allocation3 + $0x68] sm:$0xff]
  %v459 = vld [vmem:[#allocation3 + $0x70] sm:$0xff]
  %v460 = vld [vmem:[%s1] sm:$0xff]
  %v461 = vld [vmem:[%s1 + $0x40] sm:$0xff]
  %v462 = vld [vmem:[%s1 + $0x80] sm:$0xff]
  %v463 = vld [vmem:[%s1 + $0xc0] sm:$0xff]
  %v464 = vld [vmem:[%s1 + $0x100] sm:$0xff]
  %v465 = vld [vmem:[%s1 + $0x140] sm:$0xff]
  %v466 = vld [vmem:[%s1 + $0x180] sm:$0xff]
  %v467 = vld [vmem:[%s1 + $0x1c0] sm:$0xff]
  %v468 = vld [vmem:[%s1 + $0x200] sm:$0xff]
  %v469 = vld [vmem:[%s1 + $0x240] sm:$0xff]
  %v470 = vld [vmem:[%s1 + $0x280] sm:$0xff]
  %v471 = vld [vmem:[%s1 + $0x2c0] sm:$0xff]
  %v472 = vld [vmem:[%s1 + $0x300] sm:$0xff]
  %v473 = vld [vmem:[%s1 + $0x340] sm:$0xff]
  %v474 = vld [vmem:[%s1 + $0x380] sm:$0xff]
  %v475 = vld [vmem:[%s1 + $0x3c0] sm:$0xff]
  %476 = vmatpush.msra.mxu0 %v475
  %477 = vmatpush.msra.mxu0 %v474
  %478 = vmatpush.msra.mxu0 %v473
  %479 = vmatpush.msra.mxu0 %v472
  %480 = vmatpush.msra.mxu0 %v471
  %481 = vmatpush.msra.mxu0 %v470
  %482 = vmatpush.msra.mxu0 %v469
  %483 = vmatpush.msra.mxu0 %v468
  %484 = vmatpush.msra.mxu0 %v467
  %485 = vmatpush.msra.mxu0 %v466
  %486 = vmatpush.msra.mxu0 %v465
  %487 = vmatpush.msra.mxu0 %v464
  %488 = vmatpush.msra.mxu0 %v463
  %489 = vmatpush.msra.mxu0 %v462
  %490 = vmatpush.msra.mxu0 %v461
  %491 = vmatpush.msra.mxu0 %v460
  %492 = vmatmul.f32.gmra.mxu0 %v450
  %v493 = vpop.f32.mrf.mxu0
  %v494 = vadd.f32 0.0, %v493
  %495 = vmatmul.f32.gmra.mxu0 %v451
  %v496 = vpop.f32.mrf.mxu0
  %v497 = vadd.f32 0.0, %v496
  %498 = vmatmul.f32.gmra.mxu0 %v452
  %v499 = vpop.f32.mrf.mxu0
  %v500 = vadd.f32 0.0, %v499
  %501 = vmatmul.f32.gmra.mxu0 %v453
  %v502 = vpop.f32.mrf.mxu0
  %v503 = vadd.f32 0.0, %v502
  %504 = vmatmul.f32.gmra.mxu0 %v454
  %v505 = vpop.f32.mrf.mxu0
  %v506 = vadd.f32 0.0, %v505
  %507 = vdwg.mxu0
  %v508 = vadd.f32 %v455, %v494
  %v509 = vadd.f32 %v456, %v497
  %v510 = vadd.f32 %v457, %v500
  %v511 = vadd.f32 %v458, %v503
  %v512 = vadd.f32 %v459, %v506
  %513 = vst [vmem:[#allocation3 + $0x50] sm:$0xff] %v508
  %514 = vst [vmem:[#allocation3 + $0x58] sm:$0xff] %v509
  %515 = vst [vmem:[#allocation3 + $0x60] sm:$0xff] %v510
  %516 = vst [vmem:[#allocation3 + $0x68] sm:$0xff] %v511
  %517 = vst [vmem:[#allocation3 + $0x70] sm:$0xff] %v512
  %v518 = vld [vmem:[#allocation3 + $0x50] sm:$0xff]
  %v519 = vld [vmem:[#allocation3 + $0x58] sm:$0xff]
  %v520 = vld [vmem:[#allocation3 + $0x60] sm:$0xff]
  %v521 = vld [vmem:[#allocation3 + $0x68] sm:$0xff]
  %v522 = vld [vmem:[#allocation3 + $0x70] sm:$0xff]
  %v523 = vld [vmem:[#allocation3 + $0x78] sm:$0xff]
  %v524 = vld [vmem:[#allocation3 + $0x80] sm:$0xff]
  %v525 = vld [vmem:[#allocation3 + $0x88] sm:$0xff]
  %v526 = vld [vmem:[#allocation3 + $0x90] sm:$0xff]
  %v527 = vld [vmem:[#allocation3 + $0x98] sm:$0xff]
  %v528 = vld [vmem:[%s1] sm:$0xff]
  %v529 = vld [vmem:[%s1 + $0x40] sm:$0xff]
  %v530 = vld [vmem:[%s1 + $0x80] sm:$0xff]
  %v531 = vld [vmem:[%s1 + $0xc0] sm:$0xff]
  %v532 = vld [vmem:[%s1 + $0x100] sm:$0xff]
  %v533 = vld [vmem:[%s1 + $0x140] sm:$0xff]
  %v534 = vld [vmem:[%s1 + $0x180] sm:$0xff]
  %v535 = vld [vmem:[%s1 + $0x1c0] sm:$0xff]
  %v536 = vld [vmem:[%s1 + $0x200] sm:$0xff]
  %v537 = vld [vmem:[%s1 + $0x240] sm:$0xff]
  %v538 = vld [vmem:[%s1 + $0x280] sm:$0xff]
  %v539 = vld [vmem:[%s1 + $0x2c0] sm:$0xff]
  %v540 = vld [vmem:[%s1 + $0x300] sm:$0xff]
  %v541 = vld [vmem:[%s1 + $0x340] sm:$0xff]
  %v542 = vld [vmem:[%s1 + $0x380] sm:$0xff]
  %v543 = vld [vmem:[%s1 + $0x3c0] sm:$0xff]
  %544 = vmatpush.msra.mxu0 %v543
  %545 = vmatpush.msra.mxu0 %v542
  %546 = vmatpush.msra.mxu0 %v541
  %547 = vmatpush.msra.mxu0 %v540
  %548 = vmatpush.msra.mxu0 %v539
  %549 = vmatpush.msra.mxu0 %v538
  %550 = vmatpush.msra.mxu0 %v537
  %551 = vmatpush.msra.mxu0 %v536
  %552 = vmatpush.msra.mxu0 %v535
  %553 = vmatpush.msra.mxu0 %v534
  %554 = vmatpush.msra.mxu0 %v533
  %555 = vmatpush.msra.mxu0 %v532
  %556 = vmatpush.msra.mxu0 %v531
  %557 = vmatpush.msra.mxu0 %v530
  %558 = vmatpush.msra.mxu0 %v529
  %559 = vmatpush.msra.mxu0 %v528
  %560 = vmatmul.f32.gmra.mxu0 %v518
  %v561 = vpop.f32.mrf.mxu0
  %v562 = vadd.f32 0.0, %v561
  %563 = vmatmul.f32.gmra.mxu0 %v519
  %v564 = vpop.f32.mrf.mxu0
  %v565 = vadd.f32 0.0, %v564
  %566 = vmatmul.f32.gmra.mxu0 %v520
  %v567 = vpop.f32.mrf.mxu0
  %v568 = vadd.f32 0.0, %v567
  %569 = vmatmul.f32.gmra.mxu0 %v521
  %v570 = vpop.f32.mrf.mxu0
  %v571 = vadd.f32 0.0, %v570
  %572 = vmatmul.f32.gmra.mxu0 %v522
  %v573 = vpop.f32.mrf.mxu0
  %v574 = vadd.f32 0.0, %v573
  %575 = vdwg.mxu0
  %v576 = vadd.f32 %v523, %v562
  %v577 = vadd.f32 %v524, %v565
  %v578 = vadd.f32 %v525, %v568
  %v579 = vadd.f32 %v526, %v571
  %v580 = vadd.f32 %v527, %v574
  %581 = vst [vmem:[#allocation3 + $0x78] sm:$0xff] %v576
  %582 = vst [vmem:[#allocation3 + $0x80] sm:$0xff] %v577
  %583 = vst [vmem:[#allocation3 + $0x88] sm:$0xff] %v578
  %584 = vst [vmem:[#allocation3 + $0x90] sm:$0xff] %v579
  %585 = vst [vmem:[#allocation3 + $0x98] sm:$0xff] %v580
  %v586 = vld [vmem:[#allocation3 + $0x78] sm:$0xff]
  %v587 = vld [vmem:[#allocation3 + $0x80] sm:$0xff]
  %v588 = vld [vmem:[#allocation3 + $0x88] sm:$0xff]
  %v589 = vld [vmem:[#allocation3 + $0x90] sm:$0xff]
  %v590 = vld [vmem:[#allocation3 + $0x98] sm:$0xff]
  %v591 = vld [vmem:[#allocation3 + $0xa0] sm:$0xff]
  %v592 = vld [vmem:[#allocation3 + $0xa8] sm:$0xff]
  %v593 = vld [vmem:[#allocation3 + $0xb0] sm:$0xff]
  %v594 = vld [vmem:[#allocation3 + $0xb8] sm:$0xff]
  %v595 = vld [vmem:[#allocation3 + $0xc0] sm:$0xff]
  %v596 = vld [vmem:[%s1] sm:$0xff]
  %v597 = vld [vmem:[%s1 + $0x40] sm:$0xff]
  %v598 = vld [vmem:[%s1 + $0x80] sm:$0xff]
  %v599 = vld [vmem:[%s1 + $0xc0] sm:$0xff]
  %v600 = vld [vmem:[%s1 + $0x100] sm:$0xff]
  %v601 = vld [vmem:[%s1 + $0x140] sm:$0xff]
  %v602 = vld [vmem:[%s1 + $0x180] sm:$0xff]
  %v603 = vld [vmem:[%s1 + $0x1c0] sm:$0xff]
  %v604 = vld [vmem:[%s1 + $0x200] sm:$0xff]
  %v605 = vld [vmem:[%s1 + $0x240] sm:$0xff]
  %v606 = vld [vmem:[%s1 + $0x280] sm:$0xff]
  %v607 = vld [vmem:[%s1 + $0x2c0] sm:$0xff]
  %v608 = vld [vmem:[%s1 + $0x300] sm:$0xff]
  %v609 = vld [vmem:[%s1 + $0x340] sm:$0xff]
  %v610 = vld [vmem:[%s1 + $0x380] sm:$0xff]
  %v611 = vld [vmem:[%s1 + $0x3c0] sm:$0xff]
  %612 = vmatpush.msra.mxu0 %v611
  %613 = vmatpush.msra.mxu0 %v610
  %614 = vmatpush.msra.mxu0 %v609
  %615 = vmatpush.msra.mxu0 %v608
  %616 = vmatpush.msra.mxu0 %v607
  %617 = vmatpush.msra.mxu0 %v606
  %618 = vmatpush.msra.mxu0 %v605
  %619 = vmatpush.msra.mxu0 %v604
  %620 = vmatpush.msra.mxu0 %v603
  %621 = vmatpush.msra.mxu0 %v602
  %622 = vmatpush.msra.mxu0 %v601
  %623 = vmatpush.msra.mxu0 %v600
  %624 = vmatpush.msra.mxu0 %v599
  %625 = vmatpush.msra.mxu0 %v598
  %626 = vmatpush.msra.mxu0 %v597
  %627 = vmatpush.msra.mxu0 %v596
  %628 = vmatmul.f32.gmra.mxu0 %v586
  %v629 = vpop.f32.mrf.mxu0
  %v630 = vadd.f32 0.0, %v629
  %631 = vmatmul.f32.gmra.mxu0 %v587
  %v632 = vpop.f32.mrf.mxu0
  %v633 = vadd.f32 0.0, %v632
  %634 = vmatmul.f32.gmra.mxu0 %v588
  %v635 = vpop.f32.mrf.mxu0
  %v636 = vadd.f32 0.0, %v635
  %637 = vmatmul.f32.gmra.mxu0 %v589
  %v638 = vpop.f32.mrf.mxu0
  %v639 = vadd.f32 0.0, %v638
  %640 = vmatmul.f32.gmra.mxu0 %v590
  %v641 = vpop.f32.mrf.mxu0
  %v642 = vadd.f32 0.0, %v641
  %643 = vdwg.mxu0
  %v644 = vadd.f32 %v591, %v630
  %v645 = vadd.f32 %v592, %v633
  %v646 = vadd.f32 %v593, %v636
  %v647 = vadd.f32 %v594, %v639
  %v648 = vadd.f32 %v595, %v642
  %649 = vst [vmem:[#allocation3 + $0xa0] sm:$0xff] %v644
  %650 = vst [vmem:[#allocation3 + $0xa8] sm:$0xff] %v645
  %651 = vst [vmem:[#allocation3 + $0xb0] sm:$0xff] %v646
  %652 = vst [vmem:[#allocation3 + $0xb8] sm:$0xff] %v647
  %653 = vst [vmem:[#allocation3 + $0xc0] sm:$0xff] %v648
  %v654 = vld [vmem:[#allocation3 + $0xa0] sm:$0xff]
  %v655 = vld [vmem:[#allocation3 + $0xa8] sm:$0xff]
  %v656 = vld [vmem:[#allocation3 + $0xb0] sm:$0xff]
  %v657 = vld [vmem:[#allocation3 + $0xb8] sm:$0xff]
  %v658 = vld [vmem:[#allocation3 + $0xc0] sm:$0xff]
  %v659 = vld [vmem:[#allocation3 + $0xc8] sm:$0xff]
  %v660 = vld [vmem:[#allocation3 + $0xd0] sm:$0xff]
  %v661 = vld [vmem:[#allocation3 + $0xd8] sm:$0xff]
  %v662 = vld [vmem:[#allocation3 + $0xe0] sm:$0xff]
  %v663 = vld [vmem:[#allocation3 + $0xe8] sm:$0xff]
  %v664 = vld [vmem:[%s1] sm:$0xff]
  %v665 = vld [vmem:[%s1 + $0x40] sm:$0xff]
  %v666 = vld [vmem:[%s1 + $0x80] sm:$0xff]
  %v667 = vld [vmem:[%s1 + $0xc0] sm:$0xff]
  %v668 = vld [vmem:[%s1 + $0x100] sm:$0xff]
  %v669 = vld [vmem:[%s1 + $0x140] sm:$0xff]
  %v670 = vld [vmem:[%s1 + $0x180] sm:$0xff]
  %v671 = vld [vmem:[%s1 + $0x1c0] sm:$0xff]
  %v672 = vld [vmem:[%s1 + $0x200] sm:$0xff]
  %v673 = vld [vmem:[%s1 + $0x240] sm:$0xff]
  %v674 = vld [vmem:[%s1 + $0x280] sm:$0xff]
  %v675 = vld [vmem:[%s1 + $0x2c0] sm:$0xff]
  %v676 = vld [vmem:[%s1 + $0x300] sm:$0xff]
  %v677 = vld [vmem:[%s1 + $0x340] sm:$0xff]
  %v678 = vld [vmem:[%s1 + $0x380] sm:$0xff]
  %v679 = vld [vmem:[%s1 + $0x3c0] sm:$0xff]
  %680 = vmatpush.msra.mxu0 %v679
  %681 = vmatpush.msra.mxu0 %v678
  %682 = vmatpush.msra.mxu0 %v677
  %683 = vmatpush.msra.mxu0 %v676
  %684 = vmatpush.msra.mxu0 %v675
  %685 = vmatpush.msra.mxu0 %v674
  %686 = vmatpush.msra.mxu0 %v673
  %687 = vmatpush.msra.mxu0 %v672
  %688 = vmatpush.msra.mxu0 %v671
  %689 = vmatpush.msra.mxu0 %v670
  %690 = vmatpush.msra.mxu0 %v669
  %691 = vmatpush.msra.mxu0 %v668
  %692 = vmatpush.msra.mxu0 %v667
  %693 = vmatpush.msra.mxu0 %v666
  %694 = vmatpush.msra.mxu0 %v665
  %695 = vmatpush.msra.mxu0 %v664
  %696 = vmatmul.f32.gmra.mxu0 %v654
  %v697 = vpop.f32.mrf.mxu0
  %v698 = vadd.f32 0.0, %v697
  %699 = vmatmul.f32.gmra.mxu0 %v655
  %v700 = vpop.f32.mrf.mxu0
  %v701 = vadd.f32 0.0, %v700
  %702 = vmatmul.f32.gmra.mxu0 %v656
  %v703 = vpop.f32.mrf.mxu0
  %v704 = vadd.f32 0.0, %v703
  %705 = vmatmul.f32.gmra.mxu0 %v657
  %v706 = vpop.f32.mrf.mxu0
  %v707 = vadd.f32 0.0, %v706
  %708 = vmatmul.f32.gmra.mxu0 %v658
  %v709 = vpop.f32.mrf.mxu0
  %v710 = vadd.f32 0.0, %v709
  %711 = vdwg.mxu0
  %v712 = vadd.f32 %v659, %v698
  %v713 = vadd.f32 %v660, %v701
  %v714 = vadd.f32 %v661, %v704
  %v715 = vadd.f32 %v662, %v707
  %v716 = vadd.f32 %v663, %v710
  %717 = vst [vmem:[#allocation3 + $0xc8] sm:$0xff] %v712
  %718 = vst [vmem:[#allocation3 + $0xd0] sm:$0xff] %v713
  %719 = vst [vmem:[#allocation3 + $0xd8] sm:$0xff] %v714
  %720 = vst [vmem:[#allocation3 + $0xe0] sm:$0xff] %v715
  %721 = vst [vmem:[#allocation3 + $0xe8] sm:$0xff] %v716
  %v722 = vld [vmem:[#allocation3 + $0xc8] sm:$0xff]
  %v723 = vld [vmem:[#allocation3 + $0xd0] sm:$0xff]
  %v724 = vld [vmem:[#allocation3 + $0xd8] sm:$0xff]
  %v725 = vld [vmem:[#allocation3 + $0xe0] sm:$0xff]
  %v726 = vld [vmem:[#allocation3 + $0xe8] sm:$0xff]
  %v727 = vld [vmem:[#allocation3 + $0xf0] sm:$0xff]
  %v728 = vld [vmem:[#allocation3 + $0xf8] sm:$0xff]
  %v729 = vld [vmem:[#allocation3 + $0x100] sm:$0xff]
  %v730 = vld [vmem:[#allocation3 + $0x108] sm:$0xff]
  %v731 = vld [vmem:[#allocation3 + $0x110] sm:$0xff]
  %v732 = vld [vmem:[%s1] sm:$0xff]
  %v733 = vld [vmem:[%s1 + $0x40] sm:$0xff]
  %v734 = vld [vmem:[%s1 + $0x80] sm:$0xff]
  %v735 = vld [vmem:[%s1 + $0xc0] sm:$0xff]
  %v736 = vld [vmem:[%s1 + $0x100] sm:$0xff]
  %v737 = vld [vmem:[%s1 + $0x140] sm:$0xff]
  %v738 = vld [vmem:[%s1 + $0x180] sm:$0xff]
  %v739 = vld [vmem:[%s1 + $0x1c0] sm:$0xff]
  %v740 = vld [vmem:[%s1 + $0x200] sm:$0xff]
  %v741 = vld [vmem:[%s1 + $0x240] sm:$0xff]
  %v742 = vld [vmem:[%s1 + $0x280] sm:$0xff]
  %v743 = vld [vmem:[%s1 + $0x2c0] sm:$0xff]
  %v744 = vld [vmem:[%s1 + $0x300] sm:$0xff]
  %v745 = vld [vmem:[%s1 + $0x340] sm:$0xff]
  %v746 = vld [vmem:[%s1 + $0x380] sm:$0xff]
  %v747 = vld [vmem:[%s1 + $0x3c0] sm:$0xff]
  %748 = vmatpush.msra.mxu0 %v747
  %749 = vmatpush.msra.mxu0 %v746
  %750 = vmatpush.msra.mxu0 %v745
  %751 = vmatpush.msra.mxu0 %v744
  %752 = vmatpush.msra.mxu0 %v743
  %753 = vmatpush.msra.mxu0 %v742
  %754 = vmatpush.msra.mxu0 %v741
  %755 = vmatpush.msra.mxu0 %v740
  %756 = vmatpush.msra.mxu0 %v739
  %757 = vmatpush.msra.mxu0 %v738
  %758 = vmatpush.msra.mxu0 %v737
  %759 = vmatpush.msra.mxu0 %v736
  %760 = vmatpush.msra.mxu0 %v735
  %761 = vmatpush.msra.mxu0 %v734
  %762 = vmatpush.msra.mxu0 %v733
  %763 = vmatpush.msra.mxu0 %v732
  %764 = vmatmul.f32.gmra.mxu0 %v722
  %v765 = vpop.f32.mrf.mxu0
  %v766 = vadd.f32 0.0, %v765
  %767 = vmatmul.f32.gmra.mxu0 %v723
  %v768 = vpop.f32.mrf.mxu0
  %v769 = vadd.f32 0.0, %v768
  %770 = vmatmul.f32.gmra.mxu0 %v724
  %v771 = vpop.f32.mrf.mxu0
  %v772 = vadd.f32 0.0, %v771
  %773 = vmatmul.f32.gmra.mxu0 %v725
  %v774 = vpop.f32.mrf.mxu0
  %v775 = vadd.f32 0.0, %v774
  %776 = vmatmul.f32.gmra.mxu0 %v726
  %v777 = vpop.f32.mrf.mxu0
  %v778 = vadd.f32 0.0, %v777
  %779 = vdwg.mxu0
  %v780 = vadd.f32 %v727, %v766
  %v781 = vadd.f32 %v728, %v769
  %v782 = vadd.f32 %v729, %v772
  %v783 = vadd.f32 %v730, %v775
  %v784 = vadd.f32 %v731, %v778
  %785 = vst [vmem:[#allocation3 + $0xf0] sm:$0xff] %v780
  %786 = vst [vmem:[#allocation3 + $0xf8] sm:$0xff] %v781
  %787 = vst [vmem:[#allocation3 + $0x100] sm:$0xff] %v782
  %788 = vst [vmem:[#allocation3 + $0x108] sm:$0xff] %v783
  %789 = vst [vmem:[#allocation3 + $0x110] sm:$0xff] %v784
  %v790 = vld [vmem:[#allocation3 + $0xf0] sm:$0xff]
  %v791 = vld [vmem:[#allocation3 + $0xf8] sm:$0xff]
  %v792 = vld [vmem:[#allocation3 + $0x100] sm:$0xff]
  %v793 = vld [vmem:[#allocation3 + $0x108] sm:$0xff]
  %v794 = vld [vmem:[#allocation3 + $0x110] sm:$0xff]
  %v795 = vld [vmem:[#allocation3 + $0x118] sm:$0xff]
  %v796 = vld [vmem:[#allocation3 + $0x120] sm:$0xff]
  %v797 = vld [vmem:[#allocation3 + $0x128] sm:$0xff]
  %v798 = vld [vmem:[#allocation3 + $0x130] sm:$0xff]
  %v799 = vld [vmem:[#allocation3 + $0x138] sm:$0xff]
  %v800 = vld [vmem:[%s1] sm:$0xff]
  %v801 = vld [vmem:[%s1 + $0x40] sm:$0xff]
  %v802 = vld [vmem:[%s1 + $0x80] sm:$0xff]
  %v803 = vld [vmem:[%s1 + $0xc0] sm:$0xff]
  %v804 = vld [vmem:[%s1 + $0x100] sm:$0xff]
  %v805 = vld [vmem:[%s1 + $0x140] sm:$0xff]
  %v806 = vld [vmem:[%s1 + $0x180] sm:$0xff]
  %v807 = vld [vmem:[%s1 + $0x1c0] sm:$0xff]
  %v808 = vld [vmem:[%s1 + $0x200] sm:$0xff]
  %v809 = vld [vmem:[%s1 + $0x240] sm:$0xff]
  %v810 = vld [vmem:[%s1 + $0x280] sm:$0xff]
  %v811 = vld [vmem:[%s1 + $0x2c0] sm:$0xff]
  %v812 = vld [vmem:[%s1 + $0x300] sm:$0xff]
  %v813 = vld [vmem:[%s1 + $0x340] sm:$0xff]
  %v814 = vld [vmem:[%s1 + $0x380] sm:$0xff]
  %v815 = vld [vmem:[%s1 + $0x3c0] sm:$0xff]
  %816 = vmatpush.msra.mxu0 %v815
  %817 = vmatpush.msra.mxu0 %v814
  %818 = vmatpush.msra.mxu0 %v813
  %819 = vmatpush.msra.mxu0 %v812
  %820 = vmatpush.msra.mxu0 %v811
  %821 = vmatpush.msra.mxu0 %v810
  %822 = vmatpush.msra.mxu0 %v809
  %823 = vmatpush.msra.mxu0 %v808
  %824 = vmatpush.msra.mxu0 %v807
  %825 = vmatpush.msra.mxu0 %v806
  %826 = vmatpush.msra.mxu0 %v805
  %827 = vmatpush.msra.mxu0 %v804
  %828 = vmatpush.msra.mxu0 %v803
  %829 = vmatpush.msra.mxu0 %v802
  %830 = vmatpush.msra.mxu0 %v801
  %831 = vmatpush.msra.mxu0 %v800
  %832 = vmatmul.f32.gmra.mxu0 %v790
  %v833 = vpop.f32.mrf.mxu0
  %v834 = vadd.f32 0.0, %v833
  %835 = vmatmul.f32.gmra.mxu0 %v791
  %v836 = vpop.f32.mrf.mxu0
  %v837 = vadd.f32 0.0, %v836
  %838 = vmatmul.f32.gmra.mxu0 %v792
  %v839 = vpop.f32.mrf.mxu0
  %v840 = vadd.f32 0.0, %v839
  %841 = vmatmul.f32.gmra.mxu0 %v793
  %v842 = vpop.f32.mrf.mxu0
  %v843 = vadd.f32 0.0, %v842
  %844 = vmatmul.f32.gmra.mxu0 %v794
  %v845 = vpop.f32.mrf.mxu0
  %v846 = vadd.f32 0.0, %v845
  %847 = vdwg.mxu0
  %v848 = vadd.f32 %v795, %v834
  %v849 = vadd.f32 %v796, %v837
  %v850 = vadd.f32 %v797, %v840
  %v851 = vadd.f32 %v798, %v843
  %v852 = vadd.f32 %v799, %v846
  %853 = vst [vmem:[#allocation3 + $0x118] sm:$0xff] %v848
  %854 = vst [vmem:[#allocation3 + $0x120] sm:$0xff] %v849
  %855 = vst [vmem:[#allocation3 + $0x128] sm:$0xff] %v850
  %856 = vst [vmem:[#allocation3 + $0x130] sm:$0xff] %v851
  %857 = vst [vmem:[#allocation3 + $0x138] sm:$0xff] %v852
  %v858 = vld [vmem:[#allocation2] sm:$0xff]
  %v859 = vld [vmem:[%s1] sm:$0xff]
  %v860 = vld [vmem:[%s1 + $0x8] sm:$0xff]
  %v861 = vld [vmem:[%s1 + $0x10] sm:$0xff]
  %v862 = vld [vmem:[%s1 + $0x18] sm:$0xff]
  %v863 = vld [vmem:[%s1 + $0x20] sm:$0xff]
  %v864 = vld [vmem:[%s1 + $0x28] sm:$0xff]
  %v865 = vld [vmem:[%s1 + $0x30] sm:$0xff]
  %v866 = vld [vmem:[%s1 + $0x38] sm:$0xff]
  %v867 = vld [vmem:[%s1 + $0x40] sm:$0xff]
  %v868 = vld [vmem:[%s1 + $0x48] sm:$0xff]
  %v869 = vld [vmem:[%s1 + $0x50] sm:$0xff]
  %v870 = vld [vmem:[%s1 + $0x58] sm:$0xff]
  %v871 = vld [vmem:[%s1 + $0x60] sm:$0xff]
  %v872 = vld [vmem:[%s1 + $0x68] sm:$0xff]
  %v873 = vld [vmem:[%s1 + $0x70] sm:$0xff]
  %v874 = vld [vmem:[%s1 + $0x78] sm:$0xff]
  %v875 = vld [vmem:[%s1 + $0x80] sm:$0xff]
  %v876 = vld [vmem:[%s1 + $0x88] sm:$0xff]
  %v877 = vld [vmem:[%s1 + $0x90] sm:$0xff]
  %v878 = vld [vmem:[%s1 + $0x98] sm:$0xff]
  %v879 = vld [vmem:[%s1 + $0xa0] sm:$0xff]
  %v880 = vld [vmem:[%s1 + $0xa8] sm:$0xff]
  %v881 = vld [vmem:[%s1 + $0xb0] sm:$0xff]
  %v882 = vld [vmem:[%s1 + $0xb8] sm:$0xff]
  %v883 = vld [vmem:[%s1 + $0xc0] sm:$0xff]
  %v884 = vld [vmem:[%s1 + $0xc8] sm:$0xff]
  %v885 = vld [vmem:[%s1 + $0xd0] sm:$0xff]
  %v886 = vld [vmem:[%s1 + $0xd8] sm:$0xff]
  %v887 = vld [vmem:[%s1 + $0xe0] sm:$0xff]
  %v888 = vld [vmem:[%s1 + $0xe8] sm:$0xff]
  %v889 = vld [vmem:[%s1 + $0xf0] sm:$0xff]
  %v890 = vld [vmem:[%s1 + $0xf8] sm:$0xff]
  %v891 = vld [vmem:[%s1 + $0x100] sm:$0xff]
  %v892 = vld [vmem:[%s1 + $0x108] sm:$0xff]
  %v893 = vld [vmem:[%s1 + $0x110] sm:$0xff]
  %v894 = vld [vmem:[%s1 + $0x118] sm:$0xff]
  %v895 = vld [vmem:[%s1 + $0x120] sm:$0xff]
  %v896 = vld [vmem:[%s1 + $0x128] sm:$0xff]
  %v897 = vld [vmem:[%s1 + $0x130] sm:$0xff]
  %v898 = vld [vmem:[%s1 + $0x138] sm:$0xff]
  %v899 = vld [vmem:[%s1 + $0x140] sm:$0xff]
  %v900 = vld [vmem:[%s1 + $0x148] sm:$0xff]
  %v901 = vld [vmem:[%s1 + $0x150] sm:$0xff]
  %v902 = vld [vmem:[%s1 + $0x158] sm:$0xff]
  %v903 = vld [vmem:[%s1 + $0x160] sm:$0xff]
  %v904 = vld [vmem:[%s1 + $0x168] sm:$0xff]
  %v905 = vld [vmem:[%s1 + $0x170] sm:$0xff]
  %v906 = vld [vmem:[%s1 + $0x178] sm:$0xff]
  %v907 = vld [vmem:[%s1 + $0x180] sm:$0xff]
  %v908 = vld [vmem:[%s1 + $0x188] sm:$0xff]
  %v909 = vld [vmem:[%s1 + $0x190] sm:$0xff]
  %v910 = vld [vmem:[%s1 + $0x198] sm:$0xff]
  %v911 = vld [vmem:[%s1 + $0x1a0] sm:$0xff]
  %v912 = vld [vmem:[%s1 + $0x1a8] sm:$0xff]
  %v913 = vld [vmem:[%s1 + $0x1b0] sm:$0xff]
  %v914 = vld [vmem:[%s1 + $0x1b8] sm:$0xff]
  %v915 = vld [vmem:[%s1 + $0x1c0] sm:$0xff]
  %v916 = vld [vmem:[%s1 + $0x1c8] sm:$0xff]
  %v917 = vld [vmem:[%s1 + $0x1d0] sm:$0xff]
  %v918 = vld [vmem:[%s1 + $0x1d8] sm:$0xff]
  %v919 = vld [vmem:[%s1 + $0x1e0] sm:$0xff]
  %v920 = vld [vmem:[%s1 + $0x1e8] sm:$0xff]
  %v921 = vld [vmem:[%s1 + $0x1f0] sm:$0xff]
  %v922 = vld [vmem:[%s1 + $0x1f8] sm:$0xff]
  %v923 = vld [vmem:[%s1 + $0x200] sm:$0xff]
  %v924 = vld [vmem:[%s1 + $0x208] sm:$0xff]
  %v925 = vld [vmem:[%s1 + $0x210] sm:$0xff]
  %v926 = vld [vmem:[%s1 + $0x218] sm:$0xff]
  %v927 = vld [vmem:[%s1 + $0x220] sm:$0xff]
  %v928 = vld [vmem:[%s1 + $0x228] sm:$0xff]
  %v929 = vld [vmem:[%s1 + $0x230] sm:$0xff]
  %v930 = vld [vmem:[%s1 + $0x238] sm:$0xff]
  %v931 = vld [vmem:[%s1 + $0x240] sm:$0xff]
  %v932 = vld [vmem:[%s1 + $0x248] sm:$0xff]
  %v933 = vld [vmem:[%s1 + $0x250] sm:$0xff]
  %v934 = vld [vmem:[%s1 + $0x258] sm:$0xff]
  %v935 = vld [vmem:[%s1 + $0x260] sm:$0xff]
  %v936 = vld [vmem:[%s1 + $0x268] sm:$0xff]
  %v937 = vld [vmem:[%s1 + $0x270] sm:$0xff]
  %v938 = vld [vmem:[%s1 + $0x278] sm:$0xff]
  %v939 = vld [vmem:[%s1 + $0x280] sm:$0xff]
  %v940 = vld [vmem:[%s1 + $0x288] sm:$0xff]
  %v941 = vld [vmem:[%s1 + $0x290] sm:$0xff]
  %v942 = vld [vmem:[%s1 + $0x298] sm:$0xff]
  %v943 = vld [vmem:[%s1 + $0x2a0] sm:$0xff]
  %v944 = vld [vmem:[%s1 + $0x2a8] sm:$0xff]
  %v945 = vld [vmem:[%s1 + $0x2b0] sm:$0xff]
  %v946 = vld [vmem:[%s1 + $0x2b8] sm:$0xff]
  %v947 = vld [vmem:[%s1 + $0x2c0] sm:$0xff]
  %v948 = vld [vmem:[%s1 + $0x2c8] sm:$0xff]
  %v949 = vld [vmem:[%s1 + $0x2d0] sm:$0xff]
  %v950 = vld [vmem:[%s1 + $0x2d8] sm:$0xff]
  %v951 = vld [vmem:[%s1 + $0x2e0] sm:$0xff]
  %v952 = vld [vmem:[%s1 + $0x2e8] sm:$0xff]
  %v953 = vld [vmem:[%s1 + $0x2f0] sm:$0xff]
  %v954 = vld [vmem:[%s1 + $0x2f8] sm:$0xff]
  %v955 = vld [vmem:[%s1 + $0x300] sm:$0xff]
  %v956 = vld [vmem:[%s1 + $0x308] sm:$0xff]
  %v957 = vld [vmem:[%s1 + $0x310] sm:$0xff]
  %v958 = vld [vmem:[%s1 + $0x318] sm:$0xff]
  %v959 = vld [vmem:[%s1 + $0x320] sm:$0xff]
  %v960 = vld [vmem:[%s1 + $0x328] sm:$0xff]
  %v961 = vld [vmem:[%s1 + $0x330] sm:$0xff]
  %v962 = vld [vmem:[%s1 + $0x338] sm:$0xff]
  %v963 = vld [vmem:[%s1 + $0x340] sm:$0xff]
  %v964 = vld [vmem:[%s1 + $0x348] sm:$0xff]
  %v965 = vld [vmem:[%s1 + $0x350] sm:$0xff]
  %v966 = vld [vmem:[%s1 + $0x358] sm:$0xff]
  %v967 = vld [vmem:[%s1 + $0x360] sm:$0xff]
  %v968 = vld [vmem:[%s1 + $0x368] sm:$0xff]
  %v969 = vld [vmem:[%s1 + $0x370] sm:$0xff]
  %v970 = vld [vmem:[%s1 + $0x378] sm:$0xff]
  %v971 = vld [vmem:[%s1 + $0x380] sm:$0xff]
  %v972 = vld [vmem:[%s1 + $0x388] sm:$0xff]
  %v973 = vld [vmem:[%s1 + $0x390] sm:$0xff]
  %v974 = vld [vmem:[%s1 + $0x398] sm:$0xff]
  %v975 = vld [vmem:[%s1 + $0x3a0] sm:$0xff]
  %v976 = vld [vmem:[%s1 + $0x3a8] sm:$0xff]
  %v977 = vld [vmem:[%s1 + $0x3b0] sm:$0xff]
  %v978 = vld [vmem:[%s1 + $0x3b8] sm:$0xff]
  %v979 = vld [vmem:[%s1 + $0x3c0] sm:$0xff]
  %v980 = vld [vmem:[%s1 + $0x3c8] sm:$0xff]
  %v981 = vld [vmem:[%s1 + $0x3d0] sm:$0xff]
  %v982 = vld [vmem:[%s1 + $0x3d8] sm:$0xff]
  %v983 = vld [vmem:[%s1 + $0x3e0] sm:$0xff]
  %v984 = vld [vmem:[%s1 + $0x3e8] sm:$0xff]
  %v985 = vld [vmem:[%s1 + $0x3f0] sm:$0xff]
  %v986 = vld [vmem:[%s1 + $0x3f8] sm:$0xff]
  %987 = vmatpush.msra.mxu0 %v979
  %988 = vmatpush.msra.mxu0 %v971
  %989 = vmatpush.msra.mxu0 %v963
  %990 = vmatpush.msra.mxu0 %v955
  %991 = vmatpush.msra.mxu0 %v947
  %992 = vmatpush.msra.mxu0 %v939
  %993 = vmatpush.msra.mxu0 %v931
  %994 = vmatpush.msra.mxu0 %v923
  %995 = vmatpush.msra.mxu0 %v915
  %996 = vmatpush.msra.mxu0 %v907
  %997 = vmatpush.msra.mxu0 %v899
  %998 = vmatpush.msra.mxu0 %v891
  %999 = vmatpush.msra.mxu0 %v883
  %1000 = vmatpush.msra.mxu0 %v875
  %1001 = vmatpush.msra.mxu0 %v867
  %1002 = vmatpush.msra.mxu0 %v859
  %1003 = vmatmul.f32.gmra.mxu0 %v858
  %v1004 = vpop.f32.mrf.mxu0
  %v1005 = vadd.f32 0.0, %v1004
  %1006 = vdwg.mxu0
  %1007 = vmatpush.msra.mxu0 %v980
  %1008 = vmatpush.msra.mxu0 %v972
  %1009 = vmatpush.msra.mxu0 %v964
  %1010 = vmatpush.msra.mxu0 %v956
  %1011 = vmatpush.msra.mxu0 %v948
  %1012 = vmatpush.msra.mxu0 %v940
  %1013 = vmatpush.msra.mxu0 %v932
  %1014 = vmatpush.msra.mxu0 %v924
  %1015 = vmatpush.msra.mxu0 %v916
  %1016 = vmatpush.msra.mxu0 %v908
  %1017 = vmatpush.msra.mxu0 %v900
  %1018 = vmatpush.msra.mxu0 %v892
  %1019 = vmatpush.msra.mxu0 %v884
  %1020 = vmatpush.msra.mxu0 %v876
  %1021 = vmatpush.msra.mxu0 %v868
  %1022 = vmatpush.msra.mxu0 %v860
  %1023 = vmatmul.f32.gmra.mxu0 %v858
  %v1024 = vpop.f32.mrf.mxu0
  %v1025 = vadd.f32 0.0, %v1024
  %1026 = vdwg.mxu0
  %1027 = vmatpush.msra.mxu0 %v981
  %1028 = vmatpush.msra.mxu0 %v973
  %1029 = vmatpush.msra.mxu0 %v965
  %1030 = vmatpush.msra.mxu0 %v957
  %1031 = vmatpush.msra.mxu0 %v949
  %1032 = vmatpush.msra.mxu0 %v941
  %1033 = vmatpush.msra.mxu0 %v933
  %1034 = vmatpush.msra.mxu0 %v925
  %1035 = vmatpush.msra.mxu0 %v917
  %1036 = vmatpush.msra.mxu0 %v909
  %1037 = vmatpush.msra.mxu0 %v901
  %1038 = vmatpush.msra.mxu0 %v893
  %1039 = vmatpush.msra.mxu0 %v885
  %1040 = vmatpush.msra.mxu0 %v877
  %1041 = vmatpush.msra.mxu0 %v869
  %1042 = vmatpush.msra.mxu0 %v861
  %1043 = vmatmul.f32.gmra.mxu0 %v858
  %v1044 = vpop.f32.mrf.mxu0
  %v1045 = vadd.f32 0.0, %v1044
  %1046 = vdwg.mxu0
  %1047 = vmatpush.msra.mxu0 %v982
  %1048 = vmatpush.msra.mxu0 %v974
  %1049 = vmatpush.msra.mxu0 %v966
  %1050 = vmatpush.msra.mxu0 %v958
  %1051 = vmatpush.msra.mxu0 %v950
  %1052 = vmatpush.msra.mxu0 %v942
  %1053 = vmatpush.msra.mxu0 %v934
  %1054 = vmatpush.msra.mxu0 %v926
  %1055 = vmatpush.msra.mxu0 %v918
  %1056 = vmatpush.msra.mxu0 %v910
  %1057 = vmatpush.msra.mxu0 %v902
  %1058 = vmatpush.msra.mxu0 %v894
  %1059 = vmatpush.msra.mxu0 %v886
  %1060 = vmatpush.msra.mxu0 %v878
  %1061 = vmatpush.msra.mxu0 %v870
  %1062 = vmatpush.msra.mxu0 %v862
  %1063 = vmatmul.f32.gmra.mxu0 %v858
  %v1064 = vpop.f32.mrf.mxu0
  %v1065 = vadd.f32 0.0, %v1064
  %1066 = vdwg.mxu0
  %1067 = vmatpush.msra.mxu0 %v983
  %1068 = vmatpush.msra.mxu0 %v975
  %1069 = vmatpush.msra.mxu0 %v967
  %1070 = vmatpush.msra.mxu0 %v959
  %1071 = vmatpush.msra.mxu0 %v951
  %1072 = vmatpush.msra.mxu0 %v943
  %1073 = vmatpush.msra.mxu0 %v935
  %1074 = vmatpush.msra.mxu0 %v927
  %1075 = vmatpush.msra.mxu0 %v919
  %1076 = vmatpush.msra.mxu0 %v911
  %1077 = vmatpush.msra.mxu0 %v903
  %1078 = vmatpush.msra.mxu0 %v895
  %1079 = vmatpush.msra.mxu0 %v887
  %1080 = vmatpush.msra.mxu0 %v879
  %1081 = vmatpush.msra.mxu0 %v871
  %1082 = vmatpush.msra.mxu0 %v863
  %1083 = vmatmul.f32.gmra.mxu0 %v858
  %v1084 = vpop.f32.mrf.mxu0
  %v1085 = vadd.f32 0.0, %v1084
  %1086 = vdwg.mxu0
  %1087 = vmatpush.msra.mxu0 %v984
  %1088 = vmatpush.msra.mxu0 %v976
  %1089 = vmatpush.msra.mxu0 %v968
  %1090 = vmatpush.msra.mxu0 %v960
  %1091 = vmatpush.msra.mxu0 %v952
  %1092 = vmatpush.msra.mxu0 %v944
  %1093 = vmatpush.msra.mxu0 %v936
  %1094 = vmatpush.msra.mxu0 %v928
  %1095 = vmatpush.msra.mxu0 %v920
  %1096 = vmatpush.msra.mxu0 %v912
  %1097 = vmatpush.msra.mxu0 %v904
  %1098 = vmatpush.msra.mxu0 %v896
  %1099 = vmatpush.msra.mxu0 %v888
  %1100 = vmatpush.msra.mxu0 %v880
  %1101 = vmatpush.msra.mxu0 %v872
  %1102 = vmatpush.msra.mxu0 %v864
  %1103 = vmatmul.f32.gmra.mxu0 %v858
  %v1104 = vpop.f32.mrf.mxu0
  %v1105 = vadd.f32 0.0, %v1104
  %1106 = vdwg.mxu0
  %1107 = vmatpush.msra.mxu0 %v985
  %1108 = vmatpush.msra.mxu0 %v977
  %1109 = vmatpush.msra.mxu0 %v969
  %1110 = vmatpush.msra.mxu0 %v961
  %1111 = vmatpush.msra.mxu0 %v953
  %1112 = vmatpush.msra.mxu0 %v945
  %1113 = vmatpush.msra.mxu0 %v937
  %1114 = vmatpush.msra.mxu0 %v929
  %1115 = vmatpush.msra.mxu0 %v921
  %1116 = vmatpush.msra.mxu0 %v913
  %1117 = vmatpush.msra.mxu0 %v905
  %1118 = vmatpush.msra.mxu0 %v897
  %1119 = vmatpush.msra.mxu0 %v889
  %1120 = vmatpush.msra.mxu0 %v881
  %1121 = vmatpush.msra.mxu0 %v873
  %1122 = vmatpush.msra.mxu0 %v865
  %1123 = vmatmul.f32.gmra.mxu0 %v858
  %v1124 = vpop.f32.mrf.mxu0
  %v1125 = vadd.f32 0.0, %v1124
  %1126 = vdwg.mxu0
  %1127 = vmatpush.msra.mxu0 %v986
  %1128 = vmatpush.msra.mxu0 %v978
  %1129 = vmatpush.msra.mxu0 %v970
  %1130 = vmatpush.msra.mxu0 %v962
  %1131 = vmatpush.msra.mxu0 %v954
  %1132 = vmatpush.msra.mxu0 %v946
  %1133 = vmatpush.msra.mxu0 %v938
  %1134 = vmatpush.msra.mxu0 %v930
  %1135 = vmatpush.msra.mxu0 %v922
  %1136 = vmatpush.msra.mxu0 %v914
  %1137 = vmatpush.msra.mxu0 %v906
  %1138 = vmatpush.msra.mxu0 %v898
  %1139 = vmatpush.msra.mxu0 %v890
  %1140 = vmatpush.msra.mxu0 %v882
  %1141 = vmatpush.msra.mxu0 %v874
  %1142 = vmatpush.msra.mxu0 %v866
  %1143 = vmatmul.f32.gmra.mxu0 %v858
  %v1144 = vpop.f32.mrf.mxu0
  %v1145 = vadd.f32 0.0, %v1144
  %1146 = vdwg.mxu0
  %s1147 = scalar_lea.vmem [#allocation3], 280
  %v1148 = vld [vmem:[%s1147] sm:$0xff]
  %v1149 = vadd.f32 %v1148, %v1145
  %1150 = vst [vmem:[%s1147] sm:$0xff] %v1149
  %v1151 = vld [vmem:[#allocation3] sm:$0xff]
  %v1152 = vadd.f32 %v1151, %v1005
  %1153 = vst [vmem:[#allocation3] sm:$0xff] %v1152
  %s1154 = scalar_lea.vmem [#allocation3], 40
  %v1155 = vld [vmem:[%s1154] sm:$0xff]
  %v1156 = vadd.f32 %v1155, %v1025
  %1157 = vst [vmem:[%s1154] sm:$0xff] %v1156
  %s1158 = scalar_lea.vmem [#allocation3], 80
  %v1159 = vld [vmem:[%s1158] sm:$0xff]
  %v1160 = vadd.f32 %v1159, %v1045
  %1161 = vst [vmem:[%s1158] sm:$0xff] %v1160
  %s1162 = scalar_lea.vmem [#allocation3], 120
  %v1163 = vld [vmem:[%s1162] sm:$0xff]
  %v1164 = vadd.f32 %v1163, %v1065
  %1165 = vst [vmem:[%s1162] sm:$0xff] %v1164
  %s1166 = scalar_lea.vmem [#allocation3], 160
  %v1167 = vld [vmem:[%s1166] sm:$0xff]
  %v1168 = vadd.f32 %v1167, %v1085
  %1169 = vst [vmem:[%s1166] sm:$0xff] %v1168
  %s1170 = scalar_lea.vmem [#allocation3], 200
  %v1171 = vld [vmem:[%s1170] sm:$0xff]
  %v1172 = vadd.f32 %v1171, %v1105
  %1173 = vst [vmem:[%s1170] sm:$0xff] %v1172
  %s1174 = scalar_lea.vmem [#allocation3], 240
  %v1175 = vld [vmem:[%s1174] sm:$0xff]
  %v1176 = vadd.f32 %v1175, %v1125
  %1177 = vst [vmem:[%s1174] sm:$0xff] %v1176
  %v1178 = vld [vmem:[%s1] sm:$0xff]
  %v1179 = vld [vmem:[%s1 + $0x8] sm:$0xff]
  %v1180 = vld [vmem:[%s1 + $0x10] sm:$0xff]
  %v1181 = vld [vmem:[%s1 + $0x18] sm:$0xff]
  %v1182 = vld [vmem:[%s1 + $0x20] sm:$0xff]
  %v1183 = vld [vmem:[%s1 + $0x28] sm:$0xff]
  %v1184 = vld [vmem:[%s1 + $0x30] sm:$0xff]
  %v1185 = vld [vmem:[%s1 + $0x38] sm:$0xff]
  %v1186 = vld [vmem:[%s1 + $0x40] sm:$0xff]
  %v1187 = vld [vmem:[%s1 + $0x48] sm:$0xff]
  %v1188 = vld [vmem:[%s1 + $0x50] sm:$0xff]
  %v1189 = vld [vmem:[%s1 + $0x58] sm:$0xff]
  %v1190 = vld [vmem:[%s1 + $0x60] sm:$0xff]
  %v1191 = vld [vmem:[%s1 + $0x68] sm:$0xff]
  %v1192 = vld [vmem:[%s1 + $0x70] sm:$0xff]
  %v1193 = vld [vmem:[%s1 + $0x78] sm:$0xff]
  %v1194 = vld [vmem:[%s1 + $0x80] sm:$0xff]
  %v1195 = vld [vmem:[%s1 + $0x88] sm:$0xff]
  %v1196 = vld [vmem:[%s1 + $0x90] sm:$0xff]
  %v1197 = vld [vmem:[%s1 + $0x98] sm:$0xff]
  %v1198 = vld [vmem:[%s1 + $0xa0] sm:$0xff]
  %v1199 = vld [vmem:[%s1 + $0xa8] sm:$0xff]
  %v1200 = vld [vmem:[%s1 + $0xb0] sm:$0xff]
  %v1201 = vld [vmem:[%s1 + $0xb8] sm:$0xff]
  %v1202 = vld [vmem:[%s1 + $0xc0] sm:$0xff]
  %v1203 = vld [vmem:[%s1 + $0xc8] sm:$0xff]
  %v1204 = vld [vmem:[%s1 + $0xd0] sm:$0xff]
  %v1205 = vld [vmem:[%s1 + $0xd8] sm:$0xff]
  %v1206 = vld [vmem:[%s1 + $0xe0] sm:$0xff]
  %v1207 = vld [vmem:[%s1 + $0xe8] sm:$0xff]
  %v1208 = vld [vmem:[%s1 + $0xf0] sm:$0xff]
  %v1209 = vld [vmem:[%s1 + $0xf8] sm:$0xff]
  %v1210 = vld [vmem:[%s1 + $0x100] sm:$0xff]
  %v1211 = vld [vmem:[%s1 + $0x108] sm:$0xff]
  %v1212 = vld [vmem:[%s1 + $0x110] sm:$0xff]
  %v1213 = vld [vmem:[%s1 + $0x118] sm:$0xff]
  %v1214 = vld [vmem:[%s1 + $0x120] sm:$0xff]
  %v1215 = vld [vmem:[%s1 + $0x128] sm:$0xff]
  %v1216 = vld [vmem:[%s1 + $0x130] sm:$0xff]
  %v1217 = vld [vmem:[%s1 + $0x138] sm:$0xff]
  %v1218 = vld [vmem:[%s1 + $0x140] sm:$0xff]
  %v1219 = vld [vmem:[%s1 + $0x148] sm:$0xff]
  %v1220 = vld [vmem:[%s1 + $0x150] sm:$0xff]
  %v1221 = vld [vmem:[%s1 + $0x158] sm:$0xff]
  %v1222 = vld [vmem:[%s1 + $0x160] sm:$0xff]
  %v1223 = vld [vmem:[%s1 + $0x168] sm:$0xff]
  %v1224 = vld [vmem:[%s1 + $0x170] sm:$0xff]
  %v1225 = vld [vmem:[%s1 + $0x178] sm:$0xff]
  %v1226 = vld [vmem:[%s1 + $0x180] sm:$0xff]
  %v1227 = vld [vmem:[%s1 + $0x188] sm:$0xff]
  %v1228 = vld [vmem:[%s1 + $0x190] sm:$0xff]
  %v1229 = vld [vmem:[%s1 + $0x198] sm:$0xff]
  %v1230 = vld [vmem:[%s1 + $0x1a0] sm:$0xff]
  %v1231 = vld [vmem:[%s1 + $0x1a8] sm:$0xff]
  %v1232 = vld [vmem:[%s1 + $0x1b0] sm:$0xff]
  %v1233 = vld [vmem:[%s1 + $0x1b8] sm:$0xff]
  %v1234 = vld [vmem:[%s1 + $0x1c0] sm:$0xff]
  %v1235 = vld [vmem:[%s1 + $0x1c8] sm:$0xff]
  %v1236 = vld [vmem:[%s1 + $0x1d0] sm:$0xff]
  %v1237 = vld [vmem:[%s1 + $0x1d8] sm:$0xff]
  %v1238 = vld [vmem:[%s1 + $0x1e0] sm:$0xff]
  %v1239 = vld [vmem:[%s1 + $0x1e8] sm:$0xff]
  %v1240 = vld [vmem:[%s1 + $0x1f0] sm:$0xff]
  %v1241 = vld [vmem:[%s1 + $0x1f8] sm:$0xff]
  %v1242 = vld [vmem:[%s1 + $0x200] sm:$0xff]
  %v1243 = vld [vmem:[%s1 + $0x208] sm:$0xff]
  %v1244 = vld [vmem:[%s1 + $0x210] sm:$0xff]
  %v1245 = vld [vmem:[%s1 + $0x218] sm:$0xff]
  %v1246 = vld [vmem:[%s1 + $0x220] sm:$0xff]
  %v1247 = vld [vmem:[%s1 + $0x228] sm:$0xff]
  %v1248 = vld [vmem:[%s1 + $0x230] sm:$0xff]
  %v1249 = vld [vmem:[%s1 + $0x238] sm:$0xff]
  %v1250 = vld [vmem:[%s1 + $0x240] sm:$0xff]
  %v1251 = vld [vmem:[%s1 + $0x248] sm:$0xff]
  %v1252 = vld [vmem:[%s1 + $0x250] sm:$0xff]
  %v1253 = vld [vmem:[%s1 + $0x258] sm:$0xff]
  %v1254 = vld [vmem:[%s1 + $0x260] sm:$0xff]
  %v1255 = vld [vmem:[%s1 + $0x268] sm:$0xff]
  %v1256 = vld [vmem:[%s1 + $0x270] sm:$0xff]
  %v1257 = vld [vmem:[%s1 + $0x278] sm:$0xff]
  %v1258 = vld [vmem:[%s1 + $0x280] sm:$0xff]
  %v1259 = vld [vmem:[%s1 + $0x288] sm:$0xff]
  %v1260 = vld [vmem:[%s1 + $0x290] sm:$0xff]
  %v1261 = vld [vmem:[%s1 + $0x298] sm:$0xff]
  %v1262 = vld [vmem:[%s1 + $0x2a0] sm:$0xff]
  %v1263 = vld [vmem:[%s1 + $0x2a8] sm:$0xff]
  %v1264 = vld [vmem:[%s1 + $0x2b0] sm:$0xff]
  %v1265 = vld [vmem:[%s1 + $0x2b8] sm:$0xff]
  %v1266 = vld [vmem:[%s1 + $0x2c0] sm:$0xff]
  %v1267 = vld [vmem:[%s1 + $0x2c8] sm:$0xff]
  %v1268 = vld [vmem:[%s1 + $0x2d0] sm:$0xff]
  %v1269 = vld [vmem:[%s1 + $0x2d8] sm:$0xff]
  %v1270 = vld [vmem:[%s1 + $0x2e0] sm:$0xff]
  %v1271 = vld [vmem:[%s1 + $0x2e8] sm:$0xff]
  %v1272 = vld [vmem:[%s1 + $0x2f0] sm:$0xff]
  %v1273 = vld [vmem:[%s1 + $0x2f8] sm:$0xff]
  %v1274 = vld [vmem:[%s1 + $0x300] sm:$0xff]
  %v1275 = vld [vmem:[%s1 + $0x308] sm:$0xff]
  %v1276 = vld [vmem:[%s1 + $0x310] sm:$0xff]
  %v1277 = vld [vmem:[%s1 + $0x318] sm:$0xff]
  %v1278 = vld [vmem:[%s1 + $0x320] sm:$0xff]
  %v1279 = vld [vmem:[%s1 + $0x328] sm:$0xff]
  %v1280 = vld [vmem:[%s1 + $0x330] sm:$0xff]
  %v1281 = vld [vmem:[%s1 + $0x338] sm:$0xff]
  %v1282 = vld [vmem:[%s1 + $0x340] sm:$0xff]
  %v1283 = vld [vmem:[%s1 + $0x348] sm:$0xff]
  %v1284 = vld [vmem:[%s1 + $0x350] sm:$0xff]
  %v1285 = vld [vmem:[%s1 + $0x358] sm:$0xff]
  %v1286 = vld [vmem:[%s1 + $0x360] sm:$0xff]
  %v1287 = vld [vmem:[%s1 + $0x368] sm:$0xff]
  %v1288 = vld [vmem:[%s1 + $0x370] sm:$0xff]
  %v1289 = vld [vmem:[%s1 + $0x378] sm:$0xff]
  %v1290 = vld [vmem:[%s1 + $0x380] sm:$0xff]
  %v1291 = vld [vmem:[%s1 + $0x388] sm:$0xff]
  %v1292 = vld [vmem:[%s1 + $0x390] sm:$0xff]
  %v1293 = vld [vmem:[%s1 + $0x398] sm:$0xff]
  %v1294 = vld [vmem:[%s1 + $0x3a0] sm:$0xff]
  %v1295 = vld [vmem:[%s1 + $0x3a8] sm:$0xff]
  %v1296 = vld [vmem:[%s1 + $0x3b0] sm:$0xff]
  %v1297 = vld [vmem:[%s1 + $0x3b8] sm:$0xff]
  %v1298 = vld [vmem:[%s1 + $0x3c0] sm:$0xff]
  %v1299 = vld [vmem:[%s1 + $0x3c8] sm:$0xff]
  %v1300 = vld [vmem:[%s1 + $0x3d0] sm:$0xff]
  %v1301 = vld [vmem:[%s1 + $0x3d8] sm:$0xff]
  %v1302 = vld [vmem:[%s1 + $0x3e0] sm:$0xff]
  %v1303 = vld [vmem:[%s1 + $0x3e8] sm:$0xff]
  %v1304 = vld [vmem:[%s1 + $0x3f0] sm:$0xff]
  %v1305 = vld [vmem:[%s1 + $0x3f8] sm:$0xff]
  %1306 = vmatpush.msra.mxu0 %v1298
  %1307 = vmatpush.msra.mxu0 %v1290
  %1308 = vmatpush.msra.mxu0 %v1282
  %1309 = vmatpush.msra.mxu0 %v1274
  %1310 = vmatpush.msra.mxu0 %v1266
  %1311 = vmatpush.msra.mxu0 %v1258
  %1312 = vmatpush.msra.mxu0 %v1250
  %1313 = vmatpush.msra.mxu0 %v1242
  %1314 = vmatpush.msra.mxu0 %v1234
  %1315 = vmatpush.msra.mxu0 %v1226
  %1316 = vmatpush.msra.mxu0 %v1218
  %1317 = vmatpush.msra.mxu0 %v1210
  %1318 = vmatpush.msra.mxu0 %v1202
  %1319 = vmatpush.msra.mxu0 %v1194
  %1320 = vmatpush.msra.mxu0 %v1186
  %1321 = vmatpush.msra.mxu0 %v1178
  %1322 = vmatmul.f32.gmra.mxu0 %v1149
  %v1323 = vpop.f32.mrf.mxu0
  %v1324 = vadd.f32 0.0, %v1323
  %1325 = vdwg.mxu0
  %1326 = vmatpush.msra.mxu0 %v1299
  %1327 = vmatpush.msra.mxu0 %v1291
  %1328 = vmatpush.msra.mxu0 %v1283
  %1329 = vmatpush.msra.mxu0 %v1275
  %1330 = vmatpush.msra.mxu0 %v1267
  %1331 = vmatpush.msra.mxu0 %v1259
  %1332 = vmatpush.msra.mxu0 %v1251
  %1333 = vmatpush.msra.mxu0 %v1243
  %1334 = vmatpush.msra.mxu0 %v1235
  %1335 = vmatpush.msra.mxu0 %v1227
  %1336 = vmatpush.msra.mxu0 %v1219
  %1337 = vmatpush.msra.mxu0 %v1211
  %1338 = vmatpush.msra.mxu0 %v1203
  %1339 = vmatpush.msra.mxu0 %v1195
  %1340 = vmatpush.msra.mxu0 %v1187
  %1341 = vmatpush.msra.mxu0 %v1179
  %1342 = vmatmul.f32.gmra.mxu0 %v1149
  %v1343 = vpop.f32.mrf.mxu0
  %v1344 = vadd.f32 0.0, %v1343
  %1345 = vdwg.mxu0
  %1346 = vmatpush.msra.mxu0 %v1300
  %1347 = vmatpush.msra.mxu0 %v1292
  %1348 = vmatpush.msra.mxu0 %v1284
  %1349 = vmatpush.msra.mxu0 %v1276
  %1350 = vmatpush.msra.mxu0 %v1268
  %1351 = vmatpush.msra.mxu0 %v1260
  %1352 = vmatpush.msra.mxu0 %v1252
  %1353 = vmatpush.msra.mxu0 %v1244
  %1354 = vmatpush.msra.mxu0 %v1236
  %1355 = vmatpush.msra.mxu0 %v1228
  %1356 = vmatpush.msra.mxu0 %v1220
  %1357 = vmatpush.msra.mxu0 %v1212
  %1358 = vmatpush.msra.mxu0 %v1204
  %1359 = vmatpush.msra.mxu0 %v1196
  %1360 = vmatpush.msra.mxu0 %v1188
  %1361 = vmatpush.msra.mxu0 %v1180
  %1362 = vmatmul.f32.gmra.mxu0 %v1149
  %v1363 = vpop.f32.mrf.mxu0
  %v1364 = vadd.f32 0.0, %v1363
  %1365 = vdwg.mxu0
  %1366 = vmatpush.msra.mxu0 %v1301
  %1367 = vmatpush.msra.mxu0 %v1293
  %1368 = vmatpush.msra.mxu0 %v1285
  %1369 = vmatpush.msra.mxu0 %v1277
  %1370 = vmatpush.msra.mxu0 %v1269
  %1371 = vmatpush.msra.mxu0 %v1261
  %1372 = vmatpush.msra.mxu0 %v1253
  %1373 = vmatpush.msra.mxu0 %v1245
  %1374 = vmatpush.msra.mxu0 %v1237
  %1375 = vmatpush.msra.mxu0 %v1229
  %1376 = vmatpush.msra.mxu0 %v1221
  %1377 = vmatpush.msra.mxu0 %v1213
  %1378 = vmatpush.msra.mxu0 %v1205
  %1379 = vmatpush.msra.mxu0 %v1197
  %1380 = vmatpush.msra.mxu0 %v1189
  %1381 = vmatpush.msra.mxu0 %v1181
  %1382 = vmatmul.f32.gmra.mxu0 %v1149
  %v1383 = vpop.f32.mrf.mxu0
  %v1384 = vadd.f32 0.0, %v1383
  %1385 = vdwg.mxu0
  %1386 = vmatpush.msra.mxu0 %v1302
  %1387 = vmatpush.msra.mxu0 %v1294
  %1388 = vmatpush.msra.mxu0 %v1286
  %1389 = vmatpush.msra.mxu0 %v1278
  %1390 = vmatpush.msra.mxu0 %v1270
  %1391 = vmatpush.msra.mxu0 %v1262
  %1392 = vmatpush.msra.mxu0 %v1254
  %1393 = vmatpush.msra.mxu0 %v1246
  %1394 = vmatpush.msra.mxu0 %v1238
  %1395 = vmatpush.msra.mxu0 %v1230
  %1396 = vmatpush.msra.mxu0 %v1222
  %1397 = vmatpush.msra.mxu0 %v1214
  %1398 = vmatpush.msra.mxu0 %v1206
  %1399 = vmatpush.msra.mxu0 %v1198
  %1400 = vmatpush.msra.mxu0 %v1190
  %1401 = vmatpush.msra.mxu0 %v1182
  %1402 = vmatmul.f32.gmra.mxu0 %v1149
  %v1403 = vpop.f32.mrf.mxu0
  %v1404 = vadd.f32 0.0, %v1403
  %1405 = vdwg.mxu0
  %1406 = vmatpush.msra.mxu0 %v1303
  %1407 = vmatpush.msra.mxu0 %v1295
  %1408 = vmatpush.msra.mxu0 %v1287
  %1409 = vmatpush.msra.mxu0 %v1279
  %1410 = vmatpush.msra.mxu0 %v1271
  %1411 = vmatpush.msra.mxu0 %v1263
  %1412 = vmatpush.msra.mxu0 %v1255
  %1413 = vmatpush.msra.mxu0 %v1247
  %1414 = vmatpush.msra.mxu0 %v1239
  %1415 = vmatpush.msra.mxu0 %v1231
  %1416 = vmatpush.msra.mxu0 %v1223
  %1417 = vmatpush.msra.mxu0 %v1215
  %1418 = vmatpush.msra.mxu0 %v1207
  %1419 = vmatpush.msra.mxu0 %v1199
  %1420 = vmatpush.msra.mxu0 %v1191
  %1421 = vmatpush.msra.mxu0 %v1183
  %1422 = vmatmul.f32.gmra.mxu0 %v1149
  %v1423 = vpop.f32.mrf.mxu0
  %v1424 = vadd.f32 0.0, %v1423
  %1425 = vdwg.mxu0
  %1426 = vmatpush.msra.mxu0 %v1304
  %1427 = vmatpush.msra.mxu0 %v1296
  %1428 = vmatpush.msra.mxu0 %v1288
  %1429 = vmatpush.msra.mxu0 %v1280
  %1430 = vmatpush.msra.mxu0 %v1272
  %1431 = vmatpush.msra.mxu0 %v1264
  %1432 = vmatpush.msra.mxu0 %v1256
  %1433 = vmatpush.msra.mxu0 %v1248
  %1434 = vmatpush.msra.mxu0 %v1240
  %1435 = vmatpush.msra.mxu0 %v1232
  %1436 = vmatpush.msra.mxu0 %v1224
  %1437 = vmatpush.msra.mxu0 %v1216
  %1438 = vmatpush.msra.mxu0 %v1208
  %1439 = vmatpush.msra.mxu0 %v1200
  %1440 = vmatpush.msra.mxu0 %v1192
  %1441 = vmatpush.msra.mxu0 %v1184
  %1442 = vmatmul.f32.gmra.mxu0 %v1149
  %v1443 = vpop.f32.mrf.mxu0
  %v1444 = vadd.f32 0.0, %v1443
  %1445 = vdwg.mxu0
  %1446 = vmatpush.msra.mxu0 %v1305
  %1447 = vmatpush.msra.mxu0 %v1297
  %1448 = vmatpush.msra.mxu0 %v1289
  %1449 = vmatpush.msra.mxu0 %v1281
  %1450 = vmatpush.msra.mxu0 %v1273
  %1451 = vmatpush.msra.mxu0 %v1265
  %1452 = vmatpush.msra.mxu0 %v1257
  %1453 = vmatpush.msra.mxu0 %v1249
  %1454 = vmatpush.msra.mxu0 %v1241
  %1455 = vmatpush.msra.mxu0 %v1233
  %1456 = vmatpush.msra.mxu0 %v1225
  %1457 = vmatpush.msra.mxu0 %v1217
  %1458 = vmatpush.msra.mxu0 %v1209
  %1459 = vmatpush.msra.mxu0 %v1201
  %1460 = vmatpush.msra.mxu0 %v1193
  %1461 = vmatpush.msra.mxu0 %v1185
  %1462 = vmatmul.f32.gmra.mxu0 %v1149
  %v1463 = vpop.f32.mrf.mxu0
  %v1464 = vadd.f32 0.0, %v1463
  %1465 = vdwg.mxu0
  %s1466 = scalar_lea.vmem [#allocation3], 288
  %v1467 = vld [vmem:[%s1466] sm:$0xff]
  %v1468 = vadd.f32 %v1467, %v1464
  %1469 = vst [vmem:[%s1466] sm:$0xff] %v1468
  %s1470 = scalar_lea.vmem [#allocation3], 8
  %v1471 = vld [vmem:[%s1470] sm:$0xff]
  %v1472 = vadd.f32 %v1471, %v1324
  %1473 = vst [vmem:[%s1470] sm:$0xff] %v1472
  %s1474 = scalar_lea.vmem [#allocation3], 48
  %v1475 = vld [vmem:[%s1474] sm:$0xff]
  %v1476 = vadd.f32 %v1475, %v1344
  %1477 = vst [vmem:[%s1474] sm:$0xff] %v1476
  %s1478 = scalar_lea.vmem [#allocation3], 88
  %v1479 = vld [vmem:[%s1478] sm:$0xff]
  %v1480 = vadd.f32 %v1479, %v1364
  %1481 = vst [vmem:[%s1478] sm:$0xff] %v1480
  %s1482 = scalar_lea.vmem [#allocation3], 128
  %v1483 = vld [vmem:[%s1482] sm:$0xff]
  %v1484 = vadd.f32 %v1483, %v1384
  %1485 = vst [vmem:[%s1482] sm:$0xff] %v1484
  %s1486 = scalar_lea.vmem [#allocation3], 168
  %v1487 = vld [vmem:[%s1486] sm:$0xff]
  %v1488 = vadd.f32 %v1487, %v1404
  %1489 = vst [vmem:[%s1486] sm:$0xff] %v1488
  %s1490 = scalar_lea.vmem [#allocation3], 208
  %v1491 = vld [vmem:[%s1490] sm:$0xff]
  %v1492 = vadd.f32 %v1491, %v1424
  %1493 = vst [vmem:[%s1490] sm:$0xff] %v1492
  %s1494 = scalar_lea.vmem [#allocation3], 248
  %v1495 = vld [vmem:[%s1494] sm:$0xff]
  %v1496 = vadd.f32 %v1495, %v1444
  %1497 = vst [vmem:[%s1494] sm:$0xff] %v1496
  %v1498 = vld [vmem:[%s1] sm:$0xff]
  %v1499 = vld [vmem:[%s1 + $0x8] sm:$0xff]
  %v1500 = vld [vmem:[%s1 + $0x10] sm:$0xff]
  %v1501 = vld [vmem:[%s1 + $0x18] sm:$0xff]
  %v1502 = vld [vmem:[%s1 + $0x20] sm:$0xff]
  %v1503 = vld [vmem:[%s1 + $0x28] sm:$0xff]
  %v1504 = vld [vmem:[%s1 + $0x30] sm:$0xff]
  %v1505 = vld [vmem:[%s1 + $0x38] sm:$0xff]
  %v1506 = vld [vmem:[%s1 + $0x40] sm:$0xff]
  %v1507 = vld [vmem:[%s1 + $0x48] sm:$0xff]
  %v1508 = vld [vmem:[%s1 + $0x50] sm:$0xff]
  %v1509 = vld [vmem:[%s1 + $0x58] sm:$0xff]
  %v1510 = vld [vmem:[%s1 + $0x60] sm:$0xff]
  %v1511 = vld [vmem:[%s1 + $0x68] sm:$0xff]
  %v1512 = vld [vmem:[%s1 + $0x70] sm:$0xff]
  %v1513 = vld [vmem:[%s1 + $0x78] sm:$0xff]
  %v1514 = vld [vmem:[%s1 + $0x80] sm:$0xff]
  %v1515 = vld [vmem:[%s1 + $0x88] sm:$0xff]
  %v1516 = vld [vmem:[%s1 + $0x90] sm:$0xff]
  %v1517 = vld [vmem:[%s1 + $0x98] sm:$0xff]
  %v1518 = vld [vmem:[%s1 + $0xa0] sm:$0xff]
  %v1519 = vld [vmem:[%s1 + $0xa8] sm:$0xff]
  %v1520 = vld [vmem:[%s1 + $0xb0] sm:$0xff]
  %v1521 = vld [vmem:[%s1 + $0xb8] sm:$0xff]
  %v1522 = vld [vmem:[%s1 + $0xc0] sm:$0xff]
  %v1523 = vld [vmem:[%s1 + $0xc8] sm:$0xff]
  %v1524 = vld [vmem:[%s1 + $0xd0] sm:$0xff]
  %v1525 = vld [vmem:[%s1 + $0xd8] sm:$0xff]
  %v1526 = vld [vmem:[%s1 + $0xe0] sm:$0xff]
  %v1527 = vld [vmem:[%s1 + $0xe8] sm:$0xff]
  %v1528 = vld [vmem:[%s1 + $0xf0] sm:$0xff]
  %v1529 = vld [vmem:[%s1 + $0xf8] sm:$0xff]
  %v1530 = vld [vmem:[%s1 + $0x100] sm:$0xff]
  %v1531 = vld [vmem:[%s1 + $0x108] sm:$0xff]
  %v1532 = vld [vmem:[%s1 + $0x110] sm:$0xff]
  %v1533 = vld [vmem:[%s1 + $0x118] sm:$0xff]
  %v1534 = vld [vmem:[%s1 + $0x120] sm:$0xff]
  %v1535 = vld [vmem:[%s1 + $0x128] sm:$0xff]
  %v1536 = vld [vmem:[%s1 + $0x130] sm:$0xff]
  %v1537 = vld [vmem:[%s1 + $0x138] sm:$0xff]
  %v1538 = vld [vmem:[%s1 + $0x140] sm:$0xff]
  %v1539 = vld [vmem:[%s1 + $0x148] sm:$0xff]
  %v1540 = vld [vmem:[%s1 + $0x150] sm:$0xff]
  %v1541 = vld [vmem:[%s1 + $0x158] sm:$0xff]
  %v1542 = vld [vmem:[%s1 + $0x160] sm:$0xff]
  %v1543 = vld [vmem:[%s1 + $0x168] sm:$0xff]
  %v1544 = vld [vmem:[%s1 + $0x170] sm:$0xff]
  %v1545 = vld [vmem:[%s1 + $0x178] sm:$0xff]
  %v1546 = vld [vmem:[%s1 + $0x180] sm:$0xff]
  %v1547 = vld [vmem:[%s1 + $0x188] sm:$0xff]
  %v1548 = vld [vmem:[%s1 + $0x190] sm:$0xff]
  %v1549 = vld [vmem:[%s1 + $0x198] sm:$0xff]
  %v1550 = vld [vmem:[%s1 + $0x1a0] sm:$0xff]
  %v1551 = vld [vmem:[%s1 + $0x1a8] sm:$0xff]
  %v1552 = vld [vmem:[%s1 + $0x1b0] sm:$0xff]
  %v1553 = vld [vmem:[%s1 + $0x1b8] sm:$0xff]
  %v1554 = vld [vmem:[%s1 + $0x1c0] sm:$0xff]
  %v1555 = vld [vmem:[%s1 + $0x1c8] sm:$0xff]
  %v1556 = vld [vmem:[%s1 + $0x1d0] sm:$0xff]
  %v1557 = vld [vmem:[%s1 + $0x1d8] sm:$0xff]
  %v1558 = vld [vmem:[%s1 + $0x1e0] sm:$0xff]
  %v1559 = vld [vmem:[%s1 + $0x1e8] sm:$0xff]
  %v1560 = vld [vmem:[%s1 + $0x1f0] sm:$0xff]
  %v1561 = vld [vmem:[%s1 + $0x1f8] sm:$0xff]
  %v1562 = vld [vmem:[%s1 + $0x200] sm:$0xff]
  %v1563 = vld [vmem:[%s1 + $0x208] sm:$0xff]
  %v1564 = vld [vmem:[%s1 + $0x210] sm:$0xff]
  %v1565 = vld [vmem:[%s1 + $0x218] sm:$0xff]
  %v1566 = vld [vmem:[%s1 + $0x220] sm:$0xff]
  %v1567 = vld [vmem:[%s1 + $0x228] sm:$0xff]
  %v1568 = vld [vmem:[%s1 + $0x230] sm:$0xff]
  %v1569 = vld [vmem:[%s1 + $0x238] sm:$0xff]
  %v1570 = vld [vmem:[%s1 + $0x240] sm:$0xff]
  %v1571 = vld [vmem:[%s1 + $0x248] sm:$0xff]
  %v1572 = vld [vmem:[%s1 + $0x250] sm:$0xff]
  %v1573 = vld [vmem:[%s1 + $0x258] sm:$0xff]
  %v1574 = vld [vmem:[%s1 + $0x260] sm:$0xff]
  %v1575 = vld [vmem:[%s1 + $0x268] sm:$0xff]
  %v1576 = vld [vmem:[%s1 + $0x270] sm:$0xff]
  %v1577 = vld [vmem:[%s1 + $0x278] sm:$0xff]
  %v1578 = vld [vmem:[%s1 + $0x280] sm:$0xff]
  %v1579 = vld [vmem:[%s1 + $0x288] sm:$0xff]
  %v1580 = vld [vmem:[%s1 + $0x290] sm:$0xff]
  %v1581 = vld [vmem:[%s1 + $0x298] sm:$0xff]
  %v1582 = vld [vmem:[%s1 + $0x2a0] sm:$0xff]
  %v1583 = vld [vmem:[%s1 + $0x2a8] sm:$0xff]
  %v1584 = vld [vmem:[%s1 + $0x2b0] sm:$0xff]
  %v1585 = vld [vmem:[%s1 + $0x2b8] sm:$0xff]
  %v1586 = vld [vmem:[%s1 + $0x2c0] sm:$0xff]
  %v1587 = vld [vmem:[%s1 + $0x2c8] sm:$0xff]
  %v1588 = vld [vmem:[%s1 + $0x2d0] sm:$0xff]
  %v1589 = vld [vmem:[%s1 + $0x2d8] sm:$0xff]
  %v1590 = vld [vmem:[%s1 + $0x2e0] sm:$0xff]
  %v1591 = vld [vmem:[%s1 + $0x2e8] sm:$0xff]
  %v1592 = vld [vmem:[%s1 + $0x2f0] sm:$0xff]
  %v1593 = vld [vmem:[%s1 + $0x2f8] sm:$0xff]
  %v1594 = vld [vmem:[%s1 + $0x300] sm:$0xff]
  %v1595 = vld [vmem:[%s1 + $0x308] sm:$0xff]
  %v1596 = vld [vmem:[%s1 + $0x310] sm:$0xff]
  %v1597 = vld [vmem:[%s1 + $0x318] sm:$0xff]
  %v1598 = vld [vmem:[%s1 + $0x320] sm:$0xff]
  %v1599 = vld [vmem:[%s1 + $0x328] sm:$0xff]
  %v1600 = vld [vmem:[%s1 + $0x330] sm:$0xff]
  %v1601 = vld [vmem:[%s1 + $0x338] sm:$0xff]
  %v1602 = vld [vmem:[%s1 + $0x340] sm:$0xff]
  %v1603 = vld [vmem:[%s1 + $0x348] sm:$0xff]
  %v1604 = vld [vmem:[%s1 + $0x350] sm:$0xff]
  %v1605 = vld [vmem:[%s1 + $0x358] sm:$0xff]
  %v1606 = vld [vmem:[%s1 + $0x360] sm:$0xff]
  %v1607 = vld [vmem:[%s1 + $0x368] sm:$0xff]
  %v1608 = vld [vmem:[%s1 + $0x370] sm:$0xff]
  %v1609 = vld [vmem:[%s1 + $0x378] sm:$0xff]
  %v1610 = vld [vmem:[%s1 + $0x380] sm:$0xff]
  %v1611 = vld [vmem:[%s1 + $0x388] sm:$0xff]
  %v1612 = vld [vmem:[%s1 + $0x390] sm:$0xff]
  %v1613 = vld [vmem:[%s1 + $0x398] sm:$0xff]
  %v1614 = vld [vmem:[%s1 + $0x3a0] sm:$0xff]
  %v1615 = vld [vmem:[%s1 + $0x3a8] sm:$0xff]
  %v1616 = vld [vmem:[%s1 + $0x3b0] sm:$0xff]
  %v1617 = vld [vmem:[%s1 + $0x3b8] sm:$0xff]
  %v1618 = vld [vmem:[%s1 + $0x3c0] sm:$0xff]
  %v1619 = vld [vmem:[%s1 + $0x3c8] sm:$0xff]
  %v1620 = vld [vmem:[%s1 + $0x3d0] sm:$0xff]
  %v1621 = vld [vmem:[%s1 + $0x3d8] sm:$0xff]
  %v1622 = vld [vmem:[%s1 + $0x3e0] sm:$0xff]
  %v1623 = vld [vmem:[%s1 + $0x3e8] sm:$0xff]
  %v1624 = vld [vmem:[%s1 + $0x3f0] sm:$0xff]
  %v1625 = vld [vmem:[%s1 + $0x3f8] sm:$0xff]
  %1626 = vmatpush.msra.mxu0 %v1618
  %1627 = vmatpush.msra.mxu0 %v1610
  %1628 = vmatpush.msra.mxu0 %v1602
  %1629 = vmatpush.msra.mxu0 %v1594
  %1630 = vmatpush.msra.mxu0 %v1586
  %1631 = vmatpush.msra.mxu0 %v1578
  %1632 = vmatpush.msra.mxu0 %v1570
  %1633 = vmatpush.msra.mxu0 %v1562
  %1634 = vmatpush.msra.mxu0 %v1554
  %1635 = vmatpush.msra.mxu0 %v1546
  %1636 = vmatpush.msra.mxu0 %v1538
  %1637 = vmatpush.msra.mxu0 %v1530
  %1638 = vmatpush.msra.mxu0 %v1522
  %1639 = vmatpush.msra.mxu0 %v1514
  %1640 = vmatpush.msra.mxu0 %v1506
  %1641 = vmatpush.msra.mxu0 %v1498
  %1642 = vmatmul.f32.gmra.mxu0 %v1468
  %v1643 = vpop.f32.mrf.mxu0
  %v1644 = vadd.f32 0.0, %v1643
  %1645 = vdwg.mxu0
  %1646 = vmatpush.msra.mxu0 %v1619
  %1647 = vmatpush.msra.mxu0 %v1611
  %1648 = vmatpush.msra.mxu0 %v1603
  %1649 = vmatpush.msra.mxu0 %v1595
  %1650 = vmatpush.msra.mxu0 %v1587
  %1651 = vmatpush.msra.mxu0 %v1579
  %1652 = vmatpush.msra.mxu0 %v1571
  %1653 = vmatpush.msra.mxu0 %v1563
  %1654 = vmatpush.msra.mxu0 %v1555
  %1655 = vmatpush.msra.mxu0 %v1547
  %1656 = vmatpush.msra.mxu0 %v1539
  %1657 = vmatpush.msra.mxu0 %v1531
  %1658 = vmatpush.msra.mxu0 %v1523
  %1659 = vmatpush.msra.mxu0 %v1515
  %1660 = vmatpush.msra.mxu0 %v1507
  %1661 = vmatpush.msra.mxu0 %v1499
  %1662 = vmatmul.f32.gmra.mxu0 %v1468
  %v1663 = vpop.f32.mrf.mxu0
  %v1664 = vadd.f32 0.0, %v1663
  %1665 = vdwg.mxu0
  %1666 = vmatpush.msra.mxu0 %v1620
  %1667 = vmatpush.msra.mxu0 %v1612
  %1668 = vmatpush.msra.mxu0 %v1604
  %1669 = vmatpush.msra.mxu0 %v1596
  %1670 = vmatpush.msra.mxu0 %v1588
  %1671 = vmatpush.msra.mxu0 %v1580
  %1672 = vmatpush.msra.mxu0 %v1572
  %1673 = vmatpush.msra.mxu0 %v1564
  %1674 = vmatpush.msra.mxu0 %v1556
  %1675 = vmatpush.msra.mxu0 %v1548
  %1676 = vmatpush.msra.mxu0 %v1540
  %1677 = vmatpush.msra.mxu0 %v1532
  %1678 = vmatpush.msra.mxu0 %v1524
  %1679 = vmatpush.msra.mxu0 %v1516
  %1680 = vmatpush.msra.mxu0 %v1508
  %1681 = vmatpush.msra.mxu0 %v1500
  %1682 = vmatmul.f32.gmra.mxu0 %v1468
  %v1683 = vpop.f32.mrf.mxu0
  %v1684 = vadd.f32 0.0, %v1683
  %1685 = vdwg.mxu0
  %1686 = vmatpush.msra.mxu0 %v1621
  %1687 = vmatpush.msra.mxu0 %v1613
  %1688 = vmatpush.msra.mxu0 %v1605
  %1689 = vmatpush.msra.mxu0 %v1597
  %1690 = vmatpush.msra.mxu0 %v1589
  %1691 = vmatpush.msra.mxu0 %v1581
  %1692 = vmatpush.msra.mxu0 %v1573
  %1693 = vmatpush.msra.mxu0 %v1565
  %1694 = vmatpush.msra.mxu0 %v1557
  %1695 = vmatpush.msra.mxu0 %v1549
  %1696 = vmatpush.msra.mxu0 %v1541
  %1697 = vmatpush.msra.mxu0 %v1533
  %1698 = vmatpush.msra.mxu0 %v1525
  %1699 = vmatpush.msra.mxu0 %v1517
  %1700 = vmatpush.msra.mxu0 %v1509
  %1701 = vmatpush.msra.mxu0 %v1501
  %1702 = vmatmul.f32.gmra.mxu0 %v1468
  %v1703 = vpop.f32.mrf.mxu0
  %v1704 = vadd.f32 0.0, %v1703
  %1705 = vdwg.mxu0
  %1706 = vmatpush.msra.mxu0 %v1622
  %1707 = vmatpush.msra.mxu0 %v1614
  %1708 = vmatpush.msra.mxu0 %v1606
  %1709 = vmatpush.msra.mxu0 %v1598
  %1710 = vmatpush.msra.mxu0 %v1590
  %1711 = vmatpush.msra.mxu0 %v1582
  %1712 = vmatpush.msra.mxu0 %v1574
  %1713 = vmatpush.msra.mxu0 %v1566
  %1714 = vmatpush.msra.mxu0 %v1558
  %1715 = vmatpush.msra.mxu0 %v1550
  %1716 = vmatpush.msra.mxu0 %v1542
  %1717 = vmatpush.msra.mxu0 %v1534
  %1718 = vmatpush.msra.mxu0 %v1526
  %1719 = vmatpush.msra.mxu0 %v1518
  %1720 = vmatpush.msra.mxu0 %v1510
  %1721 = vmatpush.msra.mxu0 %v1502
  %1722 = vmatmul.f32.gmra.mxu0 %v1468
  %v1723 = vpop.f32.mrf.mxu0
  %v1724 = vadd.f32 0.0, %v1723
  %1725 = vdwg.mxu0
  %1726 = vmatpush.msra.mxu0 %v1623
  %1727 = vmatpush.msra.mxu0 %v1615
  %1728 = vmatpush.msra.mxu0 %v1607
  %1729 = vmatpush.msra.mxu0 %v1599
  %1730 = vmatpush.msra.mxu0 %v1591
  %1731 = vmatpush.msra.mxu0 %v1583
  %1732 = vmatpush.msra.mxu0 %v1575
  %1733 = vmatpush.msra.mxu0 %v1567
  %1734 = vmatpush.msra.mxu0 %v1559
  %1735 = vmatpush.msra.mxu0 %v1551
  %1736 = vmatpush.msra.mxu0 %v1543
  %1737 = vmatpush.msra.mxu0 %v1535
  %1738 = vmatpush.msra.mxu0 %v1527
  %1739 = vmatpush.msra.mxu0 %v1519
  %1740 = vmatpush.msra.mxu0 %v1511
  %1741 = vmatpush.msra.mxu0 %v1503
  %1742 = vmatmul.f32.gmra.mxu0 %v1468
  %v1743 = vpop.f32.mrf.mxu0
  %v1744 = vadd.f32 0.0, %v1743
  %1745 = vdwg.mxu0
  %1746 = vmatpush.msra.mxu0 %v1624
  %1747 = vmatpush.msra.mxu0 %v1616
  %1748 = vmatpush.msra.mxu0 %v1608
  %1749 = vmatpush.msra.mxu0 %v1600
  %1750 = vmatpush.msra.mxu0 %v1592
  %1751 = vmatpush.msra.mxu0 %v1584
  %1752 = vmatpush.msra.mxu0 %v1576
  %1753 = vmatpush.msra.mxu0 %v1568
  %1754 = vmatpush.msra.mxu0 %v1560
  %1755 = vmatpush.msra.mxu0 %v1552
  %1756 = vmatpush.msra.mxu0 %v1544
  %1757 = vmatpush.msra.mxu0 %v1536
  %1758 = vmatpush.msra.mxu0 %v1528
  %1759 = vmatpush.msra.mxu0 %v1520
  %1760 = vmatpush.msra.mxu0 %v1512
  %1761 = vmatpush.msra.mxu0 %v1504
  %1762 = vmatmul.f32.gmra.mxu0 %v1468
  %v1763 = vpop.f32.mrf.mxu0
  %v1764 = vadd.f32 0.0, %v1763
  %1765 = vdwg.mxu0
  %1766 = vmatpush.msra.mxu0 %v1625
  %1767 = vmatpush.msra.mxu0 %v1617
  %1768 = vmatpush.msra.mxu0 %v1609
  %1769 = vmatpush.msra.mxu0 %v1601
  %1770 = vmatpush.msra.mxu0 %v1593
  %1771 = vmatpush.msra.mxu0 %v1585
  %1772 = vmatpush.msra.mxu0 %v1577
  %1773 = vmatpush.msra.mxu0 %v1569
  %1774 = vmatpush.msra.mxu0 %v1561
  %1775 = vmatpush.msra.mxu0 %v1553
  %1776 = vmatpush.msra.mxu0 %v1545
  %1777 = vmatpush.msra.mxu0 %v1537
  %1778 = vmatpush.msra.mxu0 %v1529
  %1779 = vmatpush.msra.mxu0 %v1521
  %1780 = vmatpush.msra.mxu0 %v1513
  %1781 = vmatpush.msra.mxu0 %v1505
  %1782 = vmatmul.f32.gmra.mxu0 %v1468
  %v1783 = vpop.f32.mrf.mxu0
  %v1784 = vadd.f32 0.0, %v1783
  %1785 = vdwg.mxu0
  %s1786 = scalar_lea.vmem [#allocation3], 296
  %v1787 = vld [vmem:[%s1786] sm:$0xff]
  %v1788 = vadd.f32 %v1787, %v1784
  %1789 = vst [vmem:[%s1786] sm:$0xff] %v1788
  %s1790 = scalar_lea.vmem [#allocation3], 16
  %v1791 = vld [vmem:[%s1790] sm:$0xff]
  %v1792 = vadd.f32 %v1791, %v1644
  %1793 = vst [vmem:[%s1790] sm:$0xff] %v1792
  %s1794 = scalar_lea.vmem [#allocation3], 56
  %v1795 = vld [vmem:[%s1794] sm:$0xff]
  %v1796 = vadd.f32 %v1795, %v1664
  %1797 = vst [vmem:[%s1794] sm:$0xff] %v1796
  %s1798 = scalar_lea.vmem [#allocation3], 96
  %v1799 = vld [vmem:[%s1798] sm:$0xff]
  %v1800 = vadd.f32 %v1799, %v1684
  %1801 = vst [vmem:[%s1798] sm:$0xff] %v1800
  %s1802 = scalar_lea.vmem [#allocation3], 136
  %v1803 = vld [vmem:[%s1802] sm:$0xff]
  %v1804 = vadd.f32 %v1803, %v1704
  %1805 = vst [vmem:[%s1802] sm:$0xff] %v1804
  %s1806 = scalar_lea.vmem [#allocation3], 176
  %v1807 = vld [vmem:[%s1806] sm:$0xff]
  %v1808 = vadd.f32 %v1807, %v1724
  %1809 = vst [vmem:[%s1806] sm:$0xff] %v1808
  %s1810 = scalar_lea.vmem [#allocation3], 216
  %v1811 = vld [vmem:[%s1810] sm:$0xff]
  %v1812 = vadd.f32 %v1811, %v1744
  %1813 = vst [vmem:[%s1810] sm:$0xff] %v1812
  %s1814 = scalar_lea.vmem [#allocation3], 256
  %v1815 = vld [vmem:[%s1814] sm:$0xff]
  %v1816 = vadd.f32 %v1815, %v1764
  %1817 = vst [vmem:[%s1814] sm:$0xff] %v1816
  %v1818 = vld [vmem:[%s1] sm:$0xff]
  %v1819 = vld [vmem:[%s1 + $0x8] sm:$0xff]
  %v1820 = vld [vmem:[%s1 + $0x10] sm:$0xff]
  %v1821 = vld [vmem:[%s1 + $0x18] sm:$0xff]
  %v1822 = vld [vmem:[%s1 + $0x20] sm:$0xff]
  %v1823 = vld [vmem:[%s1 + $0x28] sm:$0xff]
  %v1824 = vld [vmem:[%s1 + $0x30] sm:$0xff]
  %v1825 = vld [vmem:[%s1 + $0x38] sm:$0xff]
  %v1826 = vld [vmem:[%s1 + $0x40] sm:$0xff]
  %v1827 = vld [vmem:[%s1 + $0x48] sm:$0xff]
  %v1828 = vld [vmem:[%s1 + $0x50] sm:$0xff]
  %v1829 = vld [vmem:[%s1 + $0x58] sm:$0xff]
  %v1830 = vld [vmem:[%s1 + $0x60] sm:$0xff]
  %v1831 = vld [vmem:[%s1 + $0x68] sm:$0xff]
  %v1832 = vld [vmem:[%s1 + $0x70] sm:$0xff]
  %v1833 = vld [vmem:[%s1 + $0x78] sm:$0xff]
  %v1834 = vld [vmem:[%s1 + $0x80] sm:$0xff]
  %v1835 = vld [vmem:[%s1 + $0x88] sm:$0xff]
  %v1836 = vld [vmem:[%s1 + $0x90] sm:$0xff]
  %v1837 = vld [vmem:[%s1 + $0x98] sm:$0xff]
  %v1838 = vld [vmem:[%s1 + $0xa0] sm:$0xff]
  %v1839 = vld [vmem:[%s1 + $0xa8] sm:$0xff]
  %v1840 = vld [vmem:[%s1 + $0xb0] sm:$0xff]
  %v1841 = vld [vmem:[%s1 + $0xb8] sm:$0xff]
  %v1842 = vld [vmem:[%s1 + $0xc0] sm:$0xff]
  %v1843 = vld [vmem:[%s1 + $0xc8] sm:$0xff]
  %v1844 = vld [vmem:[%s1 + $0xd0] sm:$0xff]
  %v1845 = vld [vmem:[%s1 + $0xd8] sm:$0xff]
  %v1846 = vld [vmem:[%s1 + $0xe0] sm:$0xff]
  %v1847 = vld [vmem:[%s1 + $0xe8] sm:$0xff]
  %v1848 = vld [vmem:[%s1 + $0xf0] sm:$0xff]
  %v1849 = vld [vmem:[%s1 + $0xf8] sm:$0xff]
  %v1850 = vld [vmem:[%s1 + $0x100] sm:$0xff]
  %v1851 = vld [vmem:[%s1 + $0x108] sm:$0xff]
  %v1852 = vld [vmem:[%s1 + $0x110] sm:$0xff]
  %v1853 = vld [vmem:[%s1 + $0x118] sm:$0xff]
  %v1854 = vld [vmem:[%s1 + $0x120] sm:$0xff]
  %v1855 = vld [vmem:[%s1 + $0x128] sm:$0xff]
  %v1856 = vld [vmem:[%s1 + $0x130] sm:$0xff]
  %v1857 = vld [vmem:[%s1 + $0x138] sm:$0xff]
  %v1858 = vld [vmem:[%s1 + $0x140] sm:$0xff]
  %v1859 = vld [vmem:[%s1 + $0x148] sm:$0xff]
  %v1860 = vld [vmem:[%s1 + $0x150] sm:$0xff]
  %v1861 = vld [vmem:[%s1 + $0x158] sm:$0xff]
  %v1862 = vld [vmem:[%s1 + $0x160] sm:$0xff]
  %v1863 = vld [vmem:[%s1 + $0x168] sm:$0xff]
  %v1864 = vld [vmem:[%s1 + $0x170] sm:$0xff]
  %v1865 = vld [vmem:[%s1 + $0x178] sm:$0xff]
  %v1866 = vld [vmem:[%s1 + $0x180] sm:$0xff]
  %v1867 = vld [vmem:[%s1 + $0x188] sm:$0xff]
  %v1868 = vld [vmem:[%s1 + $0x190] sm:$0xff]
  %v1869 = vld [vmem:[%s1 + $0x198] sm:$0xff]
  %v1870 = vld [vmem:[%s1 + $0x1a0] sm:$0xff]
  %v1871 = vld [vmem:[%s1 + $0x1a8] sm:$0xff]
  %v1872 = vld [vmem:[%s1 + $0x1b0] sm:$0xff]
  %v1873 = vld [vmem:[%s1 + $0x1b8] sm:$0xff]
  %v1874 = vld [vmem:[%s1 + $0x1c0] sm:$0xff]
  %v1875 = vld [vmem:[%s1 + $0x1c8] sm:$0xff]
  %v1876 = vld [vmem:[%s1 + $0x1d0] sm:$0xff]
  %v1877 = vld [vmem:[%s1 + $0x1d8] sm:$0xff]
  %v1878 = vld [vmem:[%s1 + $0x1e0] sm:$0xff]
  %v1879 = vld [vmem:[%s1 + $0x1e8] sm:$0xff]
  %v1880 = vld [vmem:[%s1 + $0x1f0] sm:$0xff]
  %v1881 = vld [vmem:[%s1 + $0x1f8] sm:$0xff]
  %v1882 = vld [vmem:[%s1 + $0x200] sm:$0xff]
  %v1883 = vld [vmem:[%s1 + $0x208] sm:$0xff]
  %v1884 = vld [vmem:[%s1 + $0x210] sm:$0xff]
  %v1885 = vld [vmem:[%s1 + $0x218] sm:$0xff]
  %v1886 = vld [vmem:[%s1 + $0x220] sm:$0xff]
  %v1887 = vld [vmem:[%s1 + $0x228] sm:$0xff]
  %v1888 = vld [vmem:[%s1 + $0x230] sm:$0xff]
  %v1889 = vld [vmem:[%s1 + $0x238] sm:$0xff]
  %v1890 = vld [vmem:[%s1 + $0x240] sm:$0xff]
  %v1891 = vld [vmem:[%s1 + $0x248] sm:$0xff]
  %v1892 = vld [vmem:[%s1 + $0x250] sm:$0xff]
  %v1893 = vld [vmem:[%s1 + $0x258] sm:$0xff]
  %v1894 = vld [vmem:[%s1 + $0x260] sm:$0xff]
  %v1895 = vld [vmem:[%s1 + $0x268] sm:$0xff]
  %v1896 = vld [vmem:[%s1 + $0x270] sm:$0xff]
  %v1897 = vld [vmem:[%s1 + $0x278] sm:$0xff]
  %v1898 = vld [vmem:[%s1 + $0x280] sm:$0xff]
  %v1899 = vld [vmem:[%s1 + $0x288] sm:$0xff]
  %v1900 = vld [vmem:[%s1 + $0x290] sm:$0xff]
  %v1901 = vld [vmem:[%s1 + $0x298] sm:$0xff]
  %v1902 = vld [vmem:[%s1 + $0x2a0] sm:$0xff]
  %v1903 = vld [vmem:[%s1 + $0x2a8] sm:$0xff]
  %v1904 = vld [vmem:[%s1 + $0x2b0] sm:$0xff]
  %v1905 = vld [vmem:[%s1 + $0x2b8] sm:$0xff]
  %v1906 = vld [vmem:[%s1 + $0x2c0] sm:$0xff]
  %v1907 = vld [vmem:[%s1 + $0x2c8] sm:$0xff]
  %v1908 = vld [vmem:[%s1 + $0x2d0] sm:$0xff]
  %v1909 = vld [vmem:[%s1 + $0x2d8] sm:$0xff]
  %v1910 = vld [vmem:[%s1 + $0x2e0] sm:$0xff]
  %v1911 = vld [vmem:[%s1 + $0x2e8] sm:$0xff]
  %v1912 = vld [vmem:[%s1 + $0x2f0] sm:$0xff]
  %v1913 = vld [vmem:[%s1 + $0x2f8] sm:$0xff]
  %v1914 = vld [vmem:[%s1 + $0x300] sm:$0xff]
  %v1915 = vld [vmem:[%s1 + $0x308] sm:$0xff]
  %v1916 = vld [vmem:[%s1 + $0x310] sm:$0xff]
  %v1917 = vld [vmem:[%s1 + $0x318] sm:$0xff]
  %v1918 = vld [vmem:[%s1 + $0x320] sm:$0xff]
  %v1919 = vld [vmem:[%s1 + $0x328] sm:$0xff]
  %v1920 = vld [vmem:[%s1 + $0x330] sm:$0xff]
  %v1921 = vld [vmem:[%s1 + $0x338] sm:$0xff]
  %v1922 = vld [vmem:[%s1 + $0x340] sm:$0xff]
  %v1923 = vld [vmem:[%s1 + $0x348] sm:$0xff]
  %v1924 = vld [vmem:[%s1 + $0x350] sm:$0xff]
  %v1925 = vld [vmem:[%s1 + $0x358] sm:$0xff]
  %v1926 = vld [vmem:[%s1 + $0x360] sm:$0xff]
  %v1927 = vld [vmem:[%s1 + $0x368] sm:$0xff]
  %v1928 = vld [vmem:[%s1 + $0x370] sm:$0xff]
  %v1929 = vld [vmem:[%s1 + $0x378] sm:$0xff]
  %v1930 = vld [vmem:[%s1 + $0x380] sm:$0xff]
  %v1931 = vld [vmem:[%s1 + $0x388] sm:$0xff]
  %v1932 = vld [vmem:[%s1 + $0x390] sm:$0xff]
  %v1933 = vld [vmem:[%s1 + $0x398] sm:$0xff]
  %v1934 = vld [vmem:[%s1 + $0x3a0] sm:$0xff]
  %v1935 = vld [vmem:[%s1 + $0x3a8] sm:$0xff]
  %v1936 = vld [vmem:[%s1 + $0x3b0] sm:$0xff]
  %v1937 = vld [vmem:[%s1 + $0x3b8] sm:$0xff]
  %v1938 = vld [vmem:[%s1 + $0x3c0] sm:$0xff]
  %v1939 = vld [vmem:[%s1 + $0x3c8] sm:$0xff]
  %v1940 = vld [vmem:[%s1 + $0x3d0] sm:$0xff]
  %v1941 = vld [vmem:[%s1 + $0x3d8] sm:$0xff]
  %v1942 = vld [vmem:[%s1 + $0x3e0] sm:$0xff]
  %v1943 = vld [vmem:[%s1 + $0x3e8] sm:$0xff]
  %v1944 = vld [vmem:[%s1 + $0x3f0] sm:$0xff]
  %v1945 = vld [vmem:[%s1 + $0x3f8] sm:$0xff]
  %1946 = vmatpush.msra.mxu0 %v1938
  %1947 = vmatpush.msra.mxu0 %v1930
  %1948 = vmatpush.msra.mxu0 %v1922
  %1949 = vmatpush.msra.mxu0 %v1914
  %1950 = vmatpush.msra.mxu0 %v1906
  %1951 = vmatpush.msra.mxu0 %v1898
  %1952 = vmatpush.msra.mxu0 %v1890
  %1953 = vmatpush.msra.mxu0 %v1882
  %1954 = vmatpush.msra.mxu0 %v1874
  %1955 = vmatpush.msra.mxu0 %v1866
  %1956 = vmatpush.msra.mxu0 %v1858
  %1957 = vmatpush.msra.mxu0 %v1850
  %1958 = vmatpush.msra.mxu0 %v1842
  %1959 = vmatpush.msra.mxu0 %v1834
  %1960 = vmatpush.msra.mxu0 %v1826
  %1961 = vmatpush.msra.mxu0 %v1818
  %1962 = vmatmul.f32.gmra.mxu0 %v1788
  %v1963 = vpop.f32.mrf.mxu0
  %v1964 = vadd.f32 0.0, %v1963
  %1965 = vdwg.mxu0
  %1966 = vmatpush.msra.mxu0 %v1939
  %1967 = vmatpush.msra.mxu0 %v1931
  %1968 = vmatpush.msra.mxu0 %v1923
  %1969 = vmatpush.msra.mxu0 %v1915
  %1970 = vmatpush.msra.mxu0 %v1907
  %1971 = vmatpush.msra.mxu0 %v1899
  %1972 = vmatpush.msra.mxu0 %v1891
  %1973 = vmatpush.msra.mxu0 %v1883
  %1974 = vmatpush.msra.mxu0 %v1875
  %1975 = vmatpush.msra.mxu0 %v1867
  %1976 = vmatpush.msra.mxu0 %v1859
  %1977 = vmatpush.msra.mxu0 %v1851
  %1978 = vmatpush.msra.mxu0 %v1843
  %1979 = vmatpush.msra.mxu0 %v1835
  %1980 = vmatpush.msra.mxu0 %v1827
  %1981 = vmatpush.msra.mxu0 %v1819
  %1982 = vmatmul.f32.gmra.mxu0 %v1788
  %v1983 = vpop.f32.mrf.mxu0
  %v1984 = vadd.f32 0.0, %v1983
  %1985 = vdwg.mxu0
  %1986 = vmatpush.msra.mxu0 %v1940
  %1987 = vmatpush.msra.mxu0 %v1932
  %1988 = vmatpush.msra.mxu0 %v1924
  %1989 = vmatpush.msra.mxu0 %v1916
  %1990 = vmatpush.msra.mxu0 %v1908
  %1991 = vmatpush.msra.mxu0 %v1900
  %1992 = vmatpush.msra.mxu0 %v1892
  %1993 = vmatpush.msra.mxu0 %v1884
  %1994 = vmatpush.msra.mxu0 %v1876
  %1995 = vmatpush.msra.mxu0 %v1868
  %1996 = vmatpush.msra.mxu0 %v1860
  %1997 = vmatpush.msra.mxu0 %v1852
  %1998 = vmatpush.msra.mxu0 %v1844
  %1999 = vmatpush.msra.mxu0 %v1836
  %2000 = vmatpush.msra.mxu0 %v1828
  %2001 = vmatpush.msra.mxu0 %v1820
  %2002 = vmatmul.f32.gmra.mxu0 %v1788
  %v2003 = vpop.f32.mrf.mxu0
  %v2004 = vadd.f32 0.0, %v2003
  %2005 = vdwg.mxu0
  %2006 = vmatpush.msra.mxu0 %v1941
  %2007 = vmatpush.msra.mxu0 %v1933
  %2008 = vmatpush.msra.mxu0 %v1925
  %2009 = vmatpush.msra.mxu0 %v1917
  %2010 = vmatpush.msra.mxu0 %v1909
  %2011 = vmatpush.msra.mxu0 %v1901
  %2012 = vmatpush.msra.mxu0 %v1893
  %2013 = vmatpush.msra.mxu0 %v1885
  %2014 = vmatpush.msra.mxu0 %v1877
  %2015 = vmatpush.msra.mxu0 %v1869
  %2016 = vmatpush.msra.mxu0 %v1861
  %2017 = vmatpush.msra.mxu0 %v1853
  %2018 = vmatpush.msra.mxu0 %v1845
  %2019 = vmatpush.msra.mxu0 %v1837
  %2020 = vmatpush.msra.mxu0 %v1829
  %2021 = vmatpush.msra.mxu0 %v1821
  %2022 = vmatmul.f32.gmra.mxu0 %v1788
  %v2023 = vpop.f32.mrf.mxu0
  %v2024 = vadd.f32 0.0, %v2023
  %2025 = vdwg.mxu0
  %2026 = vmatpush.msra.mxu0 %v1942
  %2027 = vmatpush.msra.mxu0 %v1934
  %2028 = vmatpush.msra.mxu0 %v1926
  %2029 = vmatpush.msra.mxu0 %v1918
  %2030 = vmatpush.msra.mxu0 %v1910
  %2031 = vmatpush.msra.mxu0 %v1902
  %2032 = vmatpush.msra.mxu0 %v1894
  %2033 = vmatpush.msra.mxu0 %v1886
  %2034 = vmatpush.msra.mxu0 %v1878
  %2035 = vmatpush.msra.mxu0 %v1870
  %2036 = vmatpush.msra.mxu0 %v1862
  %2037 = vmatpush.msra.mxu0 %v1854
  %2038 = vmatpush.msra.mxu0 %v1846
  %2039 = vmatpush.msra.mxu0 %v1838
  %2040 = vmatpush.msra.mxu0 %v1830
  %2041 = vmatpush.msra.mxu0 %v1822
  %2042 = vmatmul.f32.gmra.mxu0 %v1788
  %v2043 = vpop.f32.mrf.mxu0
  %v2044 = vadd.f32 0.0, %v2043
  %2045 = vdwg.mxu0
  %2046 = vmatpush.msra.mxu0 %v1943
  %2047 = vmatpush.msra.mxu0 %v1935
  %2048 = vmatpush.msra.mxu0 %v1927
  %2049 = vmatpush.msra.mxu0 %v1919
  %2050 = vmatpush.msra.mxu0 %v1911
  %2051 = vmatpush.msra.mxu0 %v1903
  %2052 = vmatpush.msra.mxu0 %v1895
  %2053 = vmatpush.msra.mxu0 %v1887
  %2054 = vmatpush.msra.mxu0 %v1879
  %2055 = vmatpush.msra.mxu0 %v1871
  %2056 = vmatpush.msra.mxu0 %v1863
  %2057 = vmatpush.msra.mxu0 %v1855
  %2058 = vmatpush.msra.mxu0 %v1847
  %2059 = vmatpush.msra.mxu0 %v1839
  %2060 = vmatpush.msra.mxu0 %v1831
  %2061 = vmatpush.msra.mxu0 %v1823
  %2062 = vmatmul.f32.gmra.mxu0 %v1788
  %v2063 = vpop.f32.mrf.mxu0
  %v2064 = vadd.f32 0.0, %v2063
  %2065 = vdwg.mxu0
  %2066 = vmatpush.msra.mxu0 %v1944
  %2067 = vmatpush.msra.mxu0 %v1936
  %2068 = vmatpush.msra.mxu0 %v1928
  %2069 = vmatpush.msra.mxu0 %v1920
  %2070 = vmatpush.msra.mxu0 %v1912
  %2071 = vmatpush.msra.mxu0 %v1904
  %2072 = vmatpush.msra.mxu0 %v1896
  %2073 = vmatpush.msra.mxu0 %v1888
  %2074 = vmatpush.msra.mxu0 %v1880
  %2075 = vmatpush.msra.mxu0 %v1872
  %2076 = vmatpush.msra.mxu0 %v1864
  %2077 = vmatpush.msra.mxu0 %v1856
  %2078 = vmatpush.msra.mxu0 %v1848
  %2079 = vmatpush.msra.mxu0 %v1840
  %2080 = vmatpush.msra.mxu0 %v1832
  %2081 = vmatpush.msra.mxu0 %v1824
  %2082 = vmatmul.f32.gmra.mxu0 %v1788
  %v2083 = vpop.f32.mrf.mxu0
  %v2084 = vadd.f32 0.0, %v2083
  %2085 = vdwg.mxu0
  %2086 = vmatpush.msra.mxu0 %v1945
  %2087 = vmatpush.msra.mxu0 %v1937
  %2088 = vmatpush.msra.mxu0 %v1929
  %2089 = vmatpush.msra.mxu0 %v1921
  %2090 = vmatpush.msra.mxu0 %v1913
  %2091 = vmatpush.msra.mxu0 %v1905
  %2092 = vmatpush.msra.mxu0 %v1897
  %2093 = vmatpush.msra.mxu0 %v1889
  %2094 = vmatpush.msra.mxu0 %v1881
  %2095 = vmatpush.msra.mxu0 %v1873
  %2096 = vmatpush.msra.mxu0 %v1865
  %2097 = vmatpush.msra.mxu0 %v1857
  %2098 = vmatpush.msra.mxu0 %v1849
  %2099 = vmatpush.msra.mxu0 %v1841
  %2100 = vmatpush.msra.mxu0 %v1833
  %2101 = vmatpush.msra.mxu0 %v1825
  %2102 = vmatmul.f32.gmra.mxu0 %v1788
  %v2103 = vpop.f32.mrf.mxu0
  %v2104 = vadd.f32 0.0, %v2103
  %2105 = vdwg.mxu0
  %s2106 = scalar_lea.vmem [#allocation3], 304
  %v2107 = vld [vmem:[%s2106] sm:$0xff]
  %v2108 = vadd.f32 %v2107, %v2104
  %2109 = vst [vmem:[%s2106] sm:$0xff] %v2108
  %s2110 = scalar_lea.vmem [#allocation3], 24
  %v2111 = vld [vmem:[%s2110] sm:$0xff]
  %v2112 = vadd.f32 %v2111, %v1964
  %2113 = vst [vmem:[%s2110] sm:$0xff] %v2112
  %s2114 = scalar_lea.vmem [#allocation3], 64
  %v2115 = vld [vmem:[%s2114] sm:$0xff]
  %v2116 = vadd.f32 %v2115, %v1984
  %2117 = vst [vmem:[%s2114] sm:$0xff] %v2116
  %s2118 = scalar_lea.vmem [#allocation3], 104
  %v2119 = vld [vmem:[%s2118] sm:$0xff]
  %v2120 = vadd.f32 %v2119, %v2004
  %2121 = vst [vmem:[%s2118] sm:$0xff] %v2120
  %s2122 = scalar_lea.vmem [#allocation3], 144
  %v2123 = vld [vmem:[%s2122] sm:$0xff]
  %v2124 = vadd.f32 %v2123, %v2024
  %2125 = vst [vmem:[%s2122] sm:$0xff] %v2124
  %s2126 = scalar_lea.vmem [#allocation3], 184
  %v2127 = vld [vmem:[%s2126] sm:$0xff]
  %v2128 = vadd.f32 %v2127, %v2044
  %2129 = vst [vmem:[%s2126] sm:$0xff] %v2128
  %s2130 = scalar_lea.vmem [#allocation3], 224
  %v2131 = vld [vmem:[%s2130] sm:$0xff]
  %v2132 = vadd.f32 %v2131, %v2064
  %2133 = vst [vmem:[%s2130] sm:$0xff] %v2132
  %s2134 = scalar_lea.vmem [#allocation3], 264
  %v2135 = vld [vmem:[%s2134] sm:$0xff]
  %v2136 = vadd.f32 %v2135, %v2084
  %2137 = vst [vmem:[%s2134] sm:$0xff] %v2136
  %v2138 = vld [vmem:[%s1] sm:$0xff]
  %v2139 = vld [vmem:[%s1 + $0x8] sm:$0xff]
  %v2140 = vld [vmem:[%s1 + $0x10] sm:$0xff]
  %v2141 = vld [vmem:[%s1 + $0x18] sm:$0xff]
  %v2142 = vld [vmem:[%s1 + $0x20] sm:$0xff]
  %v2143 = vld [vmem:[%s1 + $0x28] sm:$0xff]
  %v2144 = vld [vmem:[%s1 + $0x30] sm:$0xff]
  %v2145 = vld [vmem:[%s1 + $0x38] sm:$0xff]
  %v2146 = vld [vmem:[%s1 + $0x40] sm:$0xff]
  %v2147 = vld [vmem:[%s1 + $0x48] sm:$0xff]
  %v2148 = vld [vmem:[%s1 + $0x50] sm:$0xff]
  %v2149 = vld [vmem:[%s1 + $0x58] sm:$0xff]
  %v2150 = vld [vmem:[%s1 + $0x60] sm:$0xff]
  %v2151 = vld [vmem:[%s1 + $0x68] sm:$0xff]
  %v2152 = vld [vmem:[%s1 + $0x70] sm:$0xff]
  %v2153 = vld [vmem:[%s1 + $0x78] sm:$0xff]
  %v2154 = vld [vmem:[%s1 + $0x80] sm:$0xff]
  %v2155 = vld [vmem:[%s1 + $0x88] sm:$0xff]
  %v2156 = vld [vmem:[%s1 + $0x90] sm:$0xff]
  %v2157 = vld [vmem:[%s1 + $0x98] sm:$0xff]
  %v2158 = vld [vmem:[%s1 + $0xa0] sm:$0xff]
  %v2159 = vld [vmem:[%s1 + $0xa8] sm:$0xff]
  %v2160 = vld [vmem:[%s1 + $0xb0] sm:$0xff]
  %v2161 = vld [vmem:[%s1 + $0xb8] sm:$0xff]
  %v2162 = vld [vmem:[%s1 + $0xc0] sm:$0xff]
  %v2163 = vld [vmem:[%s1 + $0xc8] sm:$0xff]
  %v2164 = vld [vmem:[%s1 + $0xd0] sm:$0xff]
  %v2165 = vld [vmem:[%s1 + $0xd8] sm:$0xff]
  %v2166 = vld [vmem:[%s1 + $0xe0] sm:$0xff]
  %v2167 = vld [vmem:[%s1 + $0xe8] sm:$0xff]
  %v2168 = vld [vmem:[%s1 + $0xf0] sm:$0xff]
  %v2169 = vld [vmem:[%s1 + $0xf8] sm:$0xff]
  %v2170 = vld [vmem:[%s1 + $0x100] sm:$0xff]
  %v2171 = vld [vmem:[%s1 + $0x108] sm:$0xff]
  %v2172 = vld [vmem:[%s1 + $0x110] sm:$0xff]
  %v2173 = vld [vmem:[%s1 + $0x118] sm:$0xff]
  %v2174 = vld [vmem:[%s1 + $0x120] sm:$0xff]
  %v2175 = vld [vmem:[%s1 + $0x128] sm:$0xff]
  %v2176 = vld [vmem:[%s1 + $0x130] sm:$0xff]
  %v2177 = vld [vmem:[%s1 + $0x138] sm:$0xff]
  %v2178 = vld [vmem:[%s1 + $0x140] sm:$0xff]
  %v2179 = vld [vmem:[%s1 + $0x148] sm:$0xff]
  %v2180 = vld [vmem:[%s1 + $0x150] sm:$0xff]
  %v2181 = vld [vmem:[%s1 + $0x158] sm:$0xff]
  %v2182 = vld [vmem:[%s1 + $0x160] sm:$0xff]
  %v2183 = vld [vmem:[%s1 + $0x168] sm:$0xff]
  %v2184 = vld [vmem:[%s1 + $0x170] sm:$0xff]
  %v2185 = vld [vmem:[%s1 + $0x178] sm:$0xff]
  %v2186 = vld [vmem:[%s1 + $0x180] sm:$0xff]
  %v2187 = vld [vmem:[%s1 + $0x188] sm:$0xff]
  %v2188 = vld [vmem:[%s1 + $0x190] sm:$0xff]
  %v2189 = vld [vmem:[%s1 + $0x198] sm:$0xff]
  %v2190 = vld [vmem:[%s1 + $0x1a0] sm:$0xff]
  %v2191 = vld [vmem:[%s1 + $0x1a8] sm:$0xff]
  %v2192 = vld [vmem:[%s1 + $0x1b0] sm:$0xff]
  %v2193 = vld [vmem:[%s1 + $0x1b8] sm:$0xff]
  %v2194 = vld [vmem:[%s1 + $0x1c0] sm:$0xff]
  %v2195 = vld [vmem:[%s1 + $0x1c8] sm:$0xff]
  %v2196 = vld [vmem:[%s1 + $0x1d0] sm:$0xff]
  %v2197 = vld [vmem:[%s1 + $0x1d8] sm:$0xff]
  %v2198 = vld [vmem:[%s1 + $0x1e0] sm:$0xff]
  %v2199 = vld [vmem:[%s1 + $0x1e8] sm:$0xff]
  %v2200 = vld [vmem:[%s1 + $0x1f0] sm:$0xff]
  %v2201 = vld [vmem:[%s1 + $0x1f8] sm:$0xff]
  %v2202 = vld [vmem:[%s1 + $0x200] sm:$0xff]
  %v2203 = vld [vmem:[%s1 + $0x208] sm:$0xff]
  %v2204 = vld [vmem:[%s1 + $0x210] sm:$0xff]
  %v2205 = vld [vmem:[%s1 + $0x218] sm:$0xff]
  %v2206 = vld [vmem:[%s1 + $0x220] sm:$0xff]
  %v2207 = vld [vmem:[%s1 + $0x228] sm:$0xff]
  %v2208 = vld [vmem:[%s1 + $0x230] sm:$0xff]
  %v2209 = vld [vmem:[%s1 + $0x238] sm:$0xff]
  %v2210 = vld [vmem:[%s1 + $0x240] sm:$0xff]
  %v2211 = vld [vmem:[%s1 + $0x248] sm:$0xff]
  %v2212 = vld [vmem:[%s1 + $0x250] sm:$0xff]
  %v2213 = vld [vmem:[%s1 + $0x258] sm:$0xff]
  %v2214 = vld [vmem:[%s1 + $0x260] sm:$0xff]
  %v2215 = vld [vmem:[%s1 + $0x268] sm:$0xff]
  %v2216 = vld [vmem:[%s1 + $0x270] sm:$0xff]
  %v2217 = vld [vmem:[%s1 + $0x278] sm:$0xff]
  %v2218 = vld [vmem:[%s1 + $0x280] sm:$0xff]
  %v2219 = vld [vmem:[%s1 + $0x288] sm:$0xff]
  %v2220 = vld [vmem:[%s1 + $0x290] sm:$0xff]
  %v2221 = vld [vmem:[%s1 + $0x298] sm:$0xff]
  %v2222 = vld [vmem:[%s1 + $0x2a0] sm:$0xff]
  %v2223 = vld [vmem:[%s1 + $0x2a8] sm:$0xff]
  %v2224 = vld [vmem:[%s1 + $0x2b0] sm:$0xff]
  %v2225 = vld [vmem:[%s1 + $0x2b8] sm:$0xff]
  %v2226 = vld [vmem:[%s1 + $0x2c0] sm:$0xff]
  %v2227 = vld [vmem:[%s1 + $0x2c8] sm:$0xff]
  %v2228 = vld [vmem:[%s1 + $0x2d0] sm:$0xff]
  %v2229 = vld [vmem:[%s1 + $0x2d8] sm:$0xff]
  %v2230 = vld [vmem:[%s1 + $0x2e0] sm:$0xff]
  %v2231 = vld [vmem:[%s1 + $0x2e8] sm:$0xff]
  %v2232 = vld [vmem:[%s1 + $0x2f0] sm:$0xff]
  %v2233 = vld [vmem:[%s1 + $0x2f8] sm:$0xff]
  %v2234 = vld [vmem:[%s1 + $0x300] sm:$0xff]
  %v2235 = vld [vmem:[%s1 + $0x308] sm:$0xff]
  %v2236 = vld [vmem:[%s1 + $0x310] sm:$0xff]
  %v2237 = vld [vmem:[%s1 + $0x318] sm:$0xff]
  %v2238 = vld [vmem:[%s1 + $0x320] sm:$0xff]
  %v2239 = vld [vmem:[%s1 + $0x328] sm:$0xff]
  %v2240 = vld [vmem:[%s1 + $0x330] sm:$0xff]
  %v2241 = vld [vmem:[%s1 + $0x338] sm:$0xff]
  %v2242 = vld [vmem:[%s1 + $0x340] sm:$0xff]
  %v2243 = vld [vmem:[%s1 + $0x348] sm:$0xff]
  %v2244 = vld [vmem:[%s1 + $0x350] sm:$0xff]
  %v2245 = vld [vmem:[%s1 + $0x358] sm:$0xff]
  %v2246 = vld [vmem:[%s1 + $0x360] sm:$0xff]
  %v2247 = vld [vmem:[%s1 + $0x368] sm:$0xff]
  %v2248 = vld [vmem:[%s1 + $0x370] sm:$0xff]
  %v2249 = vld [vmem:[%s1 + $0x378] sm:$0xff]
  %v2250 = vld [vmem:[%s1 + $0x380] sm:$0xff]
  %v2251 = vld [vmem:[%s1 + $0x388] sm:$0xff]
  %v2252 = vld [vmem:[%s1 + $0x390] sm:$0xff]
  %v2253 = vld [vmem:[%s1 + $0x398] sm:$0xff]
  %v2254 = vld [vmem:[%s1 + $0x3a0] sm:$0xff]
  %v2255 = vld [vmem:[%s1 + $0x3a8] sm:$0xff]
  %v2256 = vld [vmem:[%s1 + $0x3b0] sm:$0xff]
  %v2257 = vld [vmem:[%s1 + $0x3b8] sm:$0xff]
  %v2258 = vld [vmem:[%s1 + $0x3c0] sm:$0xff]
  %v2259 = vld [vmem:[%s1 + $0x3c8] sm:$0xff]
  %v2260 = vld [vmem:[%s1 + $0x3d0] sm:$0xff]
  %v2261 = vld [vmem:[%s1 + $0x3d8] sm:$0xff]
  %v2262 = vld [vmem:[%s1 + $0x3e0] sm:$0xff]
  %v2263 = vld [vmem:[%s1 + $0x3e8] sm:$0xff]
  %v2264 = vld [vmem:[%s1 + $0x3f0] sm:$0xff]
  %v2265 = vld [vmem:[%s1 + $0x3f8] sm:$0xff]
  %2266 = vmatpush.msra.mxu0 %v2258
  %2267 = vmatpush.msra.mxu0 %v2250
  %2268 = vmatpush.msra.mxu0 %v2242
  %2269 = vmatpush.msra.mxu0 %v2234
  %2270 = vmatpush.msra.mxu0 %v2226
  %2271 = vmatpush.msra.mxu0 %v2218
  %2272 = vmatpush.msra.mxu0 %v2210
  %2273 = vmatpush.msra.mxu0 %v2202
  %2274 = vmatpush.msra.mxu0 %v2194
  %2275 = vmatpush.msra.mxu0 %v2186
  %2276 = vmatpush.msra.mxu0 %v2178
  %2277 = vmatpush.msra.mxu0 %v2170
  %2278 = vmatpush.msra.mxu0 %v2162
  %2279 = vmatpush.msra.mxu0 %v2154
  %2280 = vmatpush.msra.mxu0 %v2146
  %2281 = vmatpush.msra.mxu0 %v2138
  %2282 = vmatmul.f32.gmra.mxu0 %v2108
  %v2283 = vpop.f32.mrf.mxu0
  %v2284 = vadd.f32 0.0, %v2283
  %2285 = vdwg.mxu0
  %2286 = vmatpush.msra.mxu0 %v2259
  %2287 = vmatpush.msra.mxu0 %v2251
  %2288 = vmatpush.msra.mxu0 %v2243
  %2289 = vmatpush.msra.mxu0 %v2235
  %2290 = vmatpush.msra.mxu0 %v2227
  %2291 = vmatpush.msra.mxu0 %v2219
  %2292 = vmatpush.msra.mxu0 %v2211
  %2293 = vmatpush.msra.mxu0 %v2203
  %2294 = vmatpush.msra.mxu0 %v2195
  %2295 = vmatpush.msra.mxu0 %v2187
  %2296 = vmatpush.msra.mxu0 %v2179
  %2297 = vmatpush.msra.mxu0 %v2171
  %2298 = vmatpush.msra.mxu0 %v2163
  %2299 = vmatpush.msra.mxu0 %v2155
  %2300 = vmatpush.msra.mxu0 %v2147
  %2301 = vmatpush.msra.mxu0 %v2139
  %2302 = vmatmul.f32.gmra.mxu0 %v2108
  %v2303 = vpop.f32.mrf.mxu0
  %v2304 = vadd.f32 0.0, %v2303
  %2305 = vdwg.mxu0
  %2306 = vmatpush.msra.mxu0 %v2260
  %2307 = vmatpush.msra.mxu0 %v2252
  %2308 = vmatpush.msra.mxu0 %v2244
  %2309 = vmatpush.msra.mxu0 %v2236
  %2310 = vmatpush.msra.mxu0 %v2228
  %2311 = vmatpush.msra.mxu0 %v2220
  %2312 = vmatpush.msra.mxu0 %v2212
  %2313 = vmatpush.msra.mxu0 %v2204
  %2314 = vmatpush.msra.mxu0 %v2196
  %2315 = vmatpush.msra.mxu0 %v2188
  %2316 = vmatpush.msra.mxu0 %v2180
  %2317 = vmatpush.msra.mxu0 %v2172
  %2318 = vmatpush.msra.mxu0 %v2164
  %2319 = vmatpush.msra.mxu0 %v2156
  %2320 = vmatpush.msra.mxu0 %v2148
  %2321 = vmatpush.msra.mxu0 %v2140
  %2322 = vmatmul.f32.gmra.mxu0 %v2108
  %v2323 = vpop.f32.mrf.mxu0
  %v2324 = vadd.f32 0.0, %v2323
  %2325 = vdwg.mxu0
  %2326 = vmatpush.msra.mxu0 %v2261
  %2327 = vmatpush.msra.mxu0 %v2253
  %2328 = vmatpush.msra.mxu0 %v2245
  %2329 = vmatpush.msra.mxu0 %v2237
  %2330 = vmatpush.msra.mxu0 %v2229
  %2331 = vmatpush.msra.mxu0 %v2221
  %2332 = vmatpush.msra.mxu0 %v2213
  %2333 = vmatpush.msra.mxu0 %v2205
  %2334 = vmatpush.msra.mxu0 %v2197
  %2335 = vmatpush.msra.mxu0 %v2189
  %2336 = vmatpush.msra.mxu0 %v2181
  %2337 = vmatpush.msra.mxu0 %v2173
  %2338 = vmatpush.msra.mxu0 %v2165
  %2339 = vmatpush.msra.mxu0 %v2157
  %2340 = vmatpush.msra.mxu0 %v2149
  %2341 = vmatpush.msra.mxu0 %v2141
  %2342 = vmatmul.f32.gmra.mxu0 %v2108
  %v2343 = vpop.f32.mrf.mxu0
  %v2344 = vadd.f32 0.0, %v2343
  %2345 = vdwg.mxu0
  %2346 = vmatpush.msra.mxu0 %v2262
  %2347 = vmatpush.msra.mxu0 %v2254
  %2348 = vmatpush.msra.mxu0 %v2246
  %2349 = vmatpush.msra.mxu0 %v2238
  %2350 = vmatpush.msra.mxu0 %v2230
  %2351 = vmatpush.msra.mxu0 %v2222
  %2352 = vmatpush.msra.mxu0 %v2214
  %2353 = vmatpush.msra.mxu0 %v2206
  %2354 = vmatpush.msra.mxu0 %v2198
  %2355 = vmatpush.msra.mxu0 %v2190
  %2356 = vmatpush.msra.mxu0 %v2182
  %2357 = vmatpush.msra.mxu0 %v2174
  %2358 = vmatpush.msra.mxu0 %v2166
  %2359 = vmatpush.msra.mxu0 %v2158
  %2360 = vmatpush.msra.mxu0 %v2150
  %2361 = vmatpush.msra.mxu0 %v2142
  %2362 = vmatmul.f32.gmra.mxu0 %v2108
  %v2363 = vpop.f32.mrf.mxu0
  %v2364 = vadd.f32 0.0, %v2363
  %2365 = vdwg.mxu0
  %2366 = vmatpush.msra.mxu0 %v2263
  %2367 = vmatpush.msra.mxu0 %v2255
  %2368 = vmatpush.msra.mxu0 %v2247
  %2369 = vmatpush.msra.mxu0 %v2239
  %2370 = vmatpush.msra.mxu0 %v2231
  %2371 = vmatpush.msra.mxu0 %v2223
  %2372 = vmatpush.msra.mxu0 %v2215
  %2373 = vmatpush.msra.mxu0 %v2207
  %2374 = vmatpush.msra.mxu0 %v2199
  %2375 = vmatpush.msra.mxu0 %v2191
  %2376 = vmatpush.msra.mxu0 %v2183
  %2377 = vmatpush.msra.mxu0 %v2175
  %2378 = vmatpush.msra.mxu0 %v2167
  %2379 = vmatpush.msra.mxu0 %v2159
  %2380 = vmatpush.msra.mxu0 %v2151
  %2381 = vmatpush.msra.mxu0 %v2143
  %2382 = vmatmul.f32.gmra.mxu0 %v2108
  %v2383 = vpop.f32.mrf.mxu0
  %v2384 = vadd.f32 0.0, %v2383
  %2385 = vdwg.mxu0
  %2386 = vmatpush.msra.mxu0 %v2264
  %2387 = vmatpush.msra.mxu0 %v2256
  %2388 = vmatpush.msra.mxu0 %v2248
  %2389 = vmatpush.msra.mxu0 %v2240
  %2390 = vmatpush.msra.mxu0 %v2232
  %2391 = vmatpush.msra.mxu0 %v2224
  %2392 = vmatpush.msra.mxu0 %v2216
  %2393 = vmatpush.msra.mxu0 %v2208
  %2394 = vmatpush.msra.mxu0 %v2200
  %2395 = vmatpush.msra.mxu0 %v2192
  %2396 = vmatpush.msra.mxu0 %v2184
  %2397 = vmatpush.msra.mxu0 %v2176
  %2398 = vmatpush.msra.mxu0 %v2168
  %2399 = vmatpush.msra.mxu0 %v2160
  %2400 = vmatpush.msra.mxu0 %v2152
  %2401 = vmatpush.msra.mxu0 %v2144
  %2402 = vmatmul.f32.gmra.mxu0 %v2108
  %v2403 = vpop.f32.mrf.mxu0
  %v2404 = vadd.f32 0.0, %v2403
  %2405 = vdwg.mxu0
  %2406 = vmatpush.msra.mxu0 %v2265
  %2407 = vmatpush.msra.mxu0 %v2257
  %2408 = vmatpush.msra.mxu0 %v2249
  %2409 = vmatpush.msra.mxu0 %v2241
  %2410 = vmatpush.msra.mxu0 %v2233
  %2411 = vmatpush.msra.mxu0 %v2225
  %2412 = vmatpush.msra.mxu0 %v2217
  %2413 = vmatpush.msra.mxu0 %v2209
  %2414 = vmatpush.msra.mxu0 %v2201
  %2415 = vmatpush.msra.mxu0 %v2193
  %2416 = vmatpush.msra.mxu0 %v2185
  %2417 = vmatpush.msra.mxu0 %v2177
  %2418 = vmatpush.msra.mxu0 %v2169
  %2419 = vmatpush.msra.mxu0 %v2161
  %2420 = vmatpush.msra.mxu0 %v2153
  %2421 = vmatpush.msra.mxu0 %v2145
  %2422 = vmatmul.f32.gmra.mxu0 %v2108
  %v2423 = vpop.f32.mrf.mxu0
  %v2424 = vadd.f32 0.0, %v2423
  %2425 = vdwg.mxu0
  %s2426 = scalar_lea.vmem [#allocation3], 312
  %v2427 = vld [vmem:[%s2426] sm:$0xff]
  %v2428 = vadd.f32 %v2427, %v2424
  %2429 = vst [vmem:[%s2426] sm:$0xff] %v2428
  %s2430 = scalar_lea.vmem [#allocation3], 32
  %v2431 = vld [vmem:[%s2430] sm:$0xff]
  %v2432 = vadd.f32 %v2431, %v2284
  %2433 = vst [vmem:[%s2430] sm:$0xff] %v2432
  %s2434 = scalar_lea.vmem [#allocation3], 72
  %v2435 = vld [vmem:[%s2434] sm:$0xff]
  %v2436 = vadd.f32 %v2435, %v2304
  %2437 = vst [vmem:[%s2434] sm:$0xff] %v2436
  %s2438 = scalar_lea.vmem [#allocation3], 112
  %v2439 = vld [vmem:[%s2438] sm:$0xff]
  %v2440 = vadd.f32 %v2439, %v2324
  %2441 = vst [vmem:[%s2438] sm:$0xff] %v2440
  %s2442 = scalar_lea.vmem [#allocation3], 152
  %v2443 = vld [vmem:[%s2442] sm:$0xff]
  %v2444 = vadd.f32 %v2443, %v2344
  %2445 = vst [vmem:[%s2442] sm:$0xff] %v2444
  %s2446 = scalar_lea.vmem [#allocation3], 192
  %v2447 = vld [vmem:[%s2446] sm:$0xff]
  %v2448 = vadd.f32 %v2447, %v2364
  %2449 = vst [vmem:[%s2446] sm:$0xff] %v2448
  %s2450 = scalar_lea.vmem [#allocation3], 232
  %v2451 = vld [vmem:[%s2450] sm:$0xff]
  %v2452 = vadd.f32 %v2451, %v2384
  %2453 = vst [vmem:[%s2450] sm:$0xff] %v2452
  %s2454 = scalar_lea.vmem [#allocation3], 272
  %v2455 = vld [vmem:[%s2454] sm:$0xff]
  %v2456 = vadd.f32 %v2455, %v2404
  %2457 = vst [vmem:[%s2454] sm:$0xff] %v2456
  %2458 = vst [vmem:[#allocation2] sm:$0xff] %v2428
  %v2459 = vld [vmem:[#allocation3] sm:$0xff]
  %v2460 = vld [vmem:[#allocation3 + $0x8] sm:$0xff]
  %v2461 = vld [vmem:[#allocation3 + $0x10] sm:$0xff]
  %v2462 = vld [vmem:[#allocation3 + $0x18] sm:$0xff]
  %v2463 = vld [vmem:[#allocation3 + $0x20] sm:$0xff]
  %v2464 = vld [vmem:[#allocation3 + $0x28] sm:$0xff]
  %v2465 = vld [vmem:[#allocation3 + $0x30] sm:$0xff]
  %v2466 = vld [vmem:[#allocation3 + $0x38] sm:$0xff]
  %v2467 = vld [vmem:[#allocation3 + $0x40] sm:$0xff]
  %v2468 = vld [vmem:[#allocation3 + $0x48] sm:$0xff]
  %v2469 = vld [vmem:[#allocation3 + $0x50] sm:$0xff]
  %v2470 = vld [vmem:[#allocation3 + $0x58] sm:$0xff]
  %v2471 = vld [vmem:[#allocation3 + $0x60] sm:$0xff]
  %v2472 = vld [vmem:[#allocation3 + $0x68] sm:$0xff]
  %v2473 = vld [vmem:[#allocation3 + $0x70] sm:$0xff]
  %v2474 = vld [vmem:[#allocation3 + $0x78] sm:$0xff]
  %v2475 = vld [vmem:[#allocation3 + $0x80] sm:$0xff]
  %v2476 = vld [vmem:[#allocation3 + $0x88] sm:$0xff]
  %v2477 = vld [vmem:[#allocation3 + $0x90] sm:$0xff]
  %v2478 = vld [vmem:[#allocation3 + $0x98] sm:$0xff]
  %v2479 = vld [vmem:[#allocation3 + $0xa0] sm:$0xff]
  %v2480 = vld [vmem:[#allocation3 + $0xa8] sm:$0xff]
  %v2481 = vld [vmem:[#allocation3 + $0xb0] sm:$0xff]
  %v2482 = vld [vmem:[#allocation3 + $0xb8] sm:$0xff]
  %v2483 = vld [vmem:[#allocation3 + $0xc0] sm:$0xff]
  %v2484 = vld [vmem:[#allocation3 + $0xc8] sm:$0xff]
  %v2485 = vld [vmem:[#allocation3 + $0xd0] sm:$0xff]
  %v2486 = vld [vmem:[#allocation3 + $0xd8] sm:$0xff]
  %v2487 = vld [vmem:[#allocation3 + $0xe0] sm:$0xff]
  %v2488 = vld [vmem:[#allocation3 + $0xe8] sm:$0xff]
  %v2489 = vld [vmem:[#allocation3 + $0xf0] sm:$0xff]
  %v2490 = vld [vmem:[#allocation3 + $0xf8] sm:$0xff]
  %v2491 = vld [vmem:[#allocation3 + $0x100] sm:$0xff]
  %v2492 = vld [vmem:[#allocation3 + $0x108] sm:$0xff]
  %v2493 = vld [vmem:[#allocation3 + $0x110] sm:$0xff]
  %v2494 = vld [vmem:[#allocation3 + $0x118] sm:$0xff]
  %v2495 = vld [vmem:[#allocation3 + $0x120] sm:$0xff]
  %v2496 = vld [vmem:[#allocation3 + $0x128] sm:$0xff]
  %v2497 = vld [vmem:[#allocation3 + $0x130] sm:$0xff]
  %v2498 = vld [vmem:[#allocation3 + $0x138] sm:$0xff]
  %v2499 = vld [vmem:[%s4] sm:$0xff]
  %v2500 = vld [vmem:[%s4 + $0x8] sm:$0xff]
  %v2501 = vld [vmem:[%s4 + $0x10] sm:$0xff]
  %v2502 = vld [vmem:[%s4 + $0x18] sm:$0xff]
  %v2503 = vld [vmem:[%s4 + $0x20] sm:$0xff]
  %v2504 = vld [vmem:[%s4 + $0x28] sm:$0xff]
  %v2505 = vld [vmem:[%s4 + $0x30] sm:$0xff]
  %v2506 = vld [vmem:[%s4 + $0x38] sm:$0xff]
  %v2507 = vld [vmem:[%s4 + $0x40] sm:$0xff]
  %v2508 = vld [vmem:[%s4 + $0x48] sm:$0xff]
  %v2509 = vld [vmem:[%s4 + $0x50] sm:$0xff]
  %v2510 = vld [vmem:[%s4 + $0x58] sm:$0xff]
  %v2511 = vld [vmem:[%s4 + $0x60] sm:$0xff]
  %v2512 = vld [vmem:[%s4 + $0x68] sm:$0xff]
  %v2513 = vld [vmem:[%s4 + $0x70] sm:$0xff]
  %v2514 = vld [vmem:[%s4 + $0x78] sm:$0xff]
  %2515 = vmatpush.msra.mxu0 %v2514
  %2516 = vmatpush.msra.mxu0 %v2513
  %2517 = vmatpush.msra.mxu0 %v2512
  %2518 = vmatpush.msra.mxu0 %v2511
  %2519 = vmatpush.msra.mxu0 %v2510
  %2520 = vmatpush.msra.mxu0 %v2509
  %2521 = vmatpush.msra.mxu0 %v2508
  %2522 = vmatpush.msra.mxu0 %v2507
  %2523 = vmatpush.msra.mxu0 %v2506
  %2524 = vmatpush.msra.mxu0 %v2505
  %2525 = vmatpush.msra.mxu0 %v2504
  %2526 = vmatpush.msra.mxu0 %v2503
  %2527 = vmatpush.msra.mxu0 %v2502
  %2528 = vmatpush.msra.mxu0 %v2501
  %2529 = vmatpush.msra.mxu0 %v2500
  %2530 = vmatpush.msra.mxu0 %v2499
  %2531 = vmatmul.f32.gmra.mxu0 %v2459
  %v2532 = vpop.f32.mrf.mxu0
  %v2533 = vadd.f32 0.0, %v2532
  %2534 = vmatmul.f32.gmra.mxu0 %v2460
  %v2535 = vpop.f32.mrf.mxu0
  %v2536 = vadd.f32 0.0, %v2535
  %2537 = vmatmul.f32.gmra.mxu0 %v2461
  %v2538 = vpop.f32.mrf.mxu0
  %v2539 = vadd.f32 0.0, %v2538
  %2540 = vmatmul.f32.gmra.mxu0 %v2462
  %v2541 = vpop.f32.mrf.mxu0
  %v2542 = vadd.f32 0.0, %v2541
  %2543 = vmatmul.f32.gmra.mxu0 %v2463
  %v2544 = vpop.f32.mrf.mxu0
  %v2545 = vadd.f32 0.0, %v2544
  %2546 = vmatmul.f32.gmra.mxu0 %v2464
  %v2547 = vpop.f32.mrf.mxu0
  %v2548 = vadd.f32 0.0, %v2547
  %2549 = vmatmul.f32.gmra.mxu0 %v2465
  %v2550 = vpop.f32.mrf.mxu0
  %v2551 = vadd.f32 0.0, %v2550
  %2552 = vmatmul.f32.gmra.mxu0 %v2466
  %v2553 = vpop.f32.mrf.mxu0
  %v2554 = vadd.f32 0.0, %v2553
  %2555 = vmatmul.f32.gmra.mxu0 %v2467
  %v2556 = vpop.f32.mrf.mxu0
  %v2557 = vadd.f32 0.0, %v2556
  %2558 = vmatmul.f32.gmra.mxu0 %v2468
  %v2559 = vpop.f32.mrf.mxu0
  %v2560 = vadd.f32 0.0, %v2559
  %2561 = vmatmul.f32.gmra.mxu0 %v2469
  %v2562 = vpop.f32.mrf.mxu0
  %v2563 = vadd.f32 0.0, %v2562
  %2564 = vmatmul.f32.gmra.mxu0 %v2470
  %v2565 = vpop.f32.mrf.mxu0
  %v2566 = vadd.f32 0.0, %v2565
  %2567 = vmatmul.f32.gmra.mxu0 %v2471
  %v2568 = vpop.f32.mrf.mxu0
  %v2569 = vadd.f32 0.0, %v2568
  %2570 = vmatmul.f32.gmra.mxu0 %v2472
  %v2571 = vpop.f32.mrf.mxu0
  %v2572 = vadd.f32 0.0, %v2571
  %2573 = vmatmul.f32.gmra.mxu0 %v2473
  %v2574 = vpop.f32.mrf.mxu0
  %v2575 = vadd.f32 0.0, %v2574
  %2576 = vmatmul.f32.gmra.mxu0 %v2474
  %v2577 = vpop.f32.mrf.mxu0
  %v2578 = vadd.f32 0.0, %v2577
  %2579 = vmatmul.f32.gmra.mxu0 %v2475
  %v2580 = vpop.f32.mrf.mxu0
  %v2581 = vadd.f32 0.0, %v2580
  %2582 = vmatmul.f32.gmra.mxu0 %v2476
  %v2583 = vpop.f32.mrf.mxu0
  %v2584 = vadd.f32 0.0, %v2583
  %2585 = vmatmul.f32.gmra.mxu0 %v2477
  %v2586 = vpop.f32.mrf.mxu0
  %v2587 = vadd.f32 0.0, %v2586
  %2588 = vmatmul.f32.gmra.mxu0 %v2478
  %v2589 = vpop.f32.mrf.mxu0
  %v2590 = vadd.f32 0.0, %v2589
  %2591 = vmatmul.f32.gmra.mxu0 %v2479
  %v2592 = vpop.f32.mrf.mxu0
  %v2593 = vadd.f32 0.0, %v2592
  %2594 = vmatmul.f32.gmra.mxu0 %v2480
  %v2595 = vpop.f32.mrf.mxu0
  %v2596 = vadd.f32 0.0, %v2595
  %2597 = vmatmul.f32.gmra.mxu0 %v2481
  %v2598 = vpop.f32.mrf.mxu0
  %v2599 = vadd.f32 0.0, %v2598
  %2600 = vmatmul.f32.gmra.mxu0 %v2482
  %v2601 = vpop.f32.mrf.mxu0
  %v2602 = vadd.f32 0.0, %v2601
  %2603 = vmatmul.f32.gmra.mxu0 %v2483
  %v2604 = vpop.f32.mrf.mxu0
  %v2605 = vadd.f32 0.0, %v2604
  %2606 = vmatmul.f32.gmra.mxu0 %v2484
  %v2607 = vpop.f32.mrf.mxu0
  %v2608 = vadd.f32 0.0, %v2607
  %2609 = vmatmul.f32.gmra.mxu0 %v2485
  %v2610 = vpop.f32.mrf.mxu0
  %v2611 = vadd.f32 0.0, %v2610
  %2612 = vmatmul.f32.gmra.mxu0 %v2486
  %v2613 = vpop.f32.mrf.mxu0
  %v2614 = vadd.f32 0.0, %v2613
  %2615 = vmatmul.f32.gmra.mxu0 %v2487
  %v2616 = vpop.f32.mrf.mxu0
  %v2617 = vadd.f32 0.0, %v2616
  %2618 = vmatmul.f32.gmra.mxu0 %v2488
  %v2619 = vpop.f32.mrf.mxu0
  %v2620 = vadd.f32 0.0, %v2619
  %2621 = vmatmul.f32.gmra.mxu0 %v2489
  %v2622 = vpop.f32.mrf.mxu0
  %v2623 = vadd.f32 0.0, %v2622
  %2624 = vmatmul.f32.gmra.mxu0 %v2490
  %v2625 = vpop.f32.mrf.mxu0
  %v2626 = vadd.f32 0.0, %v2625
  %2627 = vmatmul.f32.gmra.mxu0 %v2491
  %v2628 = vpop.f32.mrf.mxu0
  %v2629 = vadd.f32 0.0, %v2628
  %2630 = vmatmul.f32.gmra.mxu0 %v2492
  %v2631 = vpop.f32.mrf.mxu0
  %v2632 = vadd.f32 0.0, %v2631
  %2633 = vmatmul.f32.gmra.mxu0 %v2493
  %v2634 = vpop.f32.mrf.mxu0
  %v2635 = vadd.f32 0.0, %v2634
  %2636 = vmatmul.f32.gmra.mxu0 %v2494
  %v2637 = vpop.f32.mrf.mxu0
  %v2638 = vadd.f32 0.0, %v2637
  %2639 = vmatmul.f32.gmra.mxu0 %v2495
  %v2640 = vpop.f32.mrf.mxu0
  %v2641 = vadd.f32 0.0, %v2640
  %2642 = vmatmul.f32.gmra.mxu0 %v2496
  %v2643 = vpop.f32.mrf.mxu0
  %v2644 = vadd.f32 0.0, %v2643
  %2645 = vmatmul.f32.gmra.mxu0 %v2497
  %v2646 = vpop.f32.mrf.mxu0
  %v2647 = vadd.f32 0.0, %v2646
  %2648 = vmatmul.f32.gmra.mxu0 %v2498
  %v2649 = vpop.f32.mrf.mxu0
  %v2650 = vadd.f32 0.0, %v2649
  %2651 = vdwg.mxu0
  %2652 = vst [vmem:[#allocation4] sm:$0xff] %v2533
  %2653 = vst [vmem:[#allocation4 + $0x8] sm:$0xff] %v2536
  %2654 = vst [vmem:[#allocation4 + $0x10] sm:$0xff] %v2539
  %2655 = vst [vmem:[#allocation4 + $0x18] sm:$0xff] %v2542
  %2656 = vst [vmem:[#allocation4 + $0x20] sm:$0xff] %v2545
  %2657 = vst [vmem:[#allocation4 + $0x28] sm:$0xff] %v2548
  %2658 = vst [vmem:[#allocation4 + $0x30] sm:$0xff] %v2551
  %2659 = vst [vmem:[#allocation4 + $0x38] sm:$0xff] %v2554
  %2660 = vst [vmem:[#allocation4 + $0x40] sm:$0xff] %v2557
  %2661 = vst [vmem:[#allocation4 + $0x48] sm:$0xff] %v2560
  %2662 = vst [vmem:[#allocation4 + $0x50] sm:$0xff] %v2563
  %2663 = vst [vmem:[#allocation4 + $0x58] sm:$0xff] %v2566
  %2664 = vst [vmem:[#allocation4 + $0x60] sm:$0xff] %v2569
  %2665 = vst [vmem:[#allocation4 + $0x68] sm:$0xff] %v2572
  %2666 = vst [vmem:[#allocation4 + $0x70] sm:$0xff] %v2575
  %2667 = vst [vmem:[#allocation4 + $0x78] sm:$0xff] %v2578
  %2668 = vst [vmem:[#allocation4 + $0x80] sm:$0xff] %v2581
  %2669 = vst [vmem:[#allocation4 + $0x88] sm:$0xff] %v2584
  %2670 = vst [vmem:[#allocation4 + $0x90] sm:$0xff] %v2587
  %2671 = vst [vmem:[#allocation4 + $0x98] sm:$0xff] %v2590
  %2672 = vst [vmem:[#allocation4 + $0xa0] sm:$0xff] %v2593
  %2673 = vst [vmem:[#allocation4 + $0xa8] sm:$0xff] %v2596
  %2674 = vst [vmem:[#allocation4 + $0xb0] sm:$0xff] %v2599
  %2675 = vst [vmem:[#allocation4 + $0xb8] sm:$0xff] %v2602
  %2676 = vst [vmem:[#allocation4 + $0xc0] sm:$0xff] %v2605
  %2677 = vst [vmem:[#allocation4 + $0xc8] sm:$0xff] %v2608
  %2678 = vst [vmem:[#allocation4 + $0xd0] sm:$0xff] %v2611
  %2679 = vst [vmem:[#allocation4 + $0xd8] sm:$0xff] %v2614
  %2680 = vst [vmem:[#allocation4 + $0xe0] sm:$0xff] %v2617
  %2681 = vst [vmem:[#allocation4 + $0xe8] sm:$0xff] %v2620
  %2682 = vst [vmem:[#allocation4 + $0xf0] sm:$0xff] %v2623
  %2683 = vst [vmem:[#allocation4 + $0xf8] sm:$0xff] %v2626
  %2684 = vst [vmem:[#allocation4 + $0x100] sm:$0xff] %v2629
  %2685 = vst [vmem:[#allocation4 + $0x108] sm:$0xff] %v2632
  %2686 = vst [vmem:[#allocation4 + $0x110] sm:$0xff] %v2635
  %2687 = vst [vmem:[#allocation4 + $0x118] sm:$0xff] %v2638
  %2688 = vst [vmem:[#allocation4 + $0x120] sm:$0xff] %v2641
  %2689 = vst [vmem:[#allocation4 + $0x128] sm:$0xff] %v2644
  %2690 = vst [vmem:[#allocation4 + $0x130] sm:$0xff] %v2647
  %2691 = vst [vmem:[#allocation4 + $0x138] sm:$0xff] %v2650
  %v2692 = vld [vmem:[#allocation4] sm:$0xff]
  %v2693 = vld [vmem:[#allocation4 + $0x8] sm:$0xff]
  %v2694 = vld [vmem:[#allocation4 + $0x10] sm:$0xff]
  %v2695 = vld [vmem:[#allocation4 + $0x18] sm:$0xff]
  %v2696 = vld [vmem:[#allocation4 + $0x20] sm:$0xff]
  %v2697 = vld [vmem:[#allocation4 + $0x28] sm:$0xff]
  %v2698 = vld [vmem:[#allocation4 + $0x30] sm:$0xff]
  %v2699 = vld [vmem:[#allocation4 + $0x38] sm:$0xff]
  %v2700 = vld [vmem:[#allocation4 + $0x40] sm:$0xff]
  %v2701 = vld [vmem:[#allocation4 + $0x48] sm:$0xff]
  %v2702 = vld [vmem:[%s3] sm:$0xff]
  %v2703 = vld [vmem:[%s3 + $0x40] sm:$0xff]
  %v2704 = vld [vmem:[%s3 + $0x80] sm:$0xff]
  %v2705 = vld [vmem:[%s3 + $0xc0] sm:$0xff]
  %v2706 = vld [vmem:[%s3 + $0x100] sm:$0xff]
  %v2707 = vld [vmem:[%s3 + $0x140] sm:$0xff]
  %v2708 = vld [vmem:[%s3 + $0x180] sm:$0xff]
  %v2709 = vld [vmem:[%s3 + $0x1c0] sm:$0xff]
  %v2710 = vld [vmem:[%s3 + $0x200] sm:$0xff]
  %v2711 = vld [vmem:[%s3 + $0x240] sm:$0xff]
  %v2712 = vld [vmem:[%s3 + $0x280] sm:$0xff]
  %v2713 = vld [vmem:[%s3 + $0x2c0] sm:$0xff]
  %v2714 = vld [vmem:[%s3 + $0x300] sm:$0xff]
  %v2715 = vld [vmem:[%s3 + $0x340] sm:$0xff]
  %v2716 = vld [vmem:[%s3 + $0x380] sm:$0xff]
  %v2717 = vld [vmem:[%s3 + $0x3c0] sm:$0xff]
  %2718 = vmatpush.msra.mxu0 %v2717
  %2719 = vmatpush.msra.mxu0 %v2716
  %2720 = vmatpush.msra.mxu0 %v2715
  %2721 = vmatpush.msra.mxu0 %v2714
  %2722 = vmatpush.msra.mxu0 %v2713
  %2723 = vmatpush.msra.mxu0 %v2712
  %2724 = vmatpush.msra.mxu0 %v2711
  %2725 = vmatpush.msra.mxu0 %v2710
  %2726 = vmatpush.msra.mxu0 %v2709
  %2727 = vmatpush.msra.mxu0 %v2708
  %2728 = vmatpush.msra.mxu0 %v2707
  %2729 = vmatpush.msra.mxu0 %v2706
  %2730 = vmatpush.msra.mxu0 %v2705
  %2731 = vmatpush.msra.mxu0 %v2704
  %2732 = vmatpush.msra.mxu0 %v2703
  %2733 = vmatpush.msra.mxu0 %v2702
  %2734 = vmatmul.f32.gmra.mxu0 %v2692
  %v2735 = vpop.f32.mrf.mxu0
  %v2736 = vadd.f32 0.0, %v2735
  %2737 = vmatmul.f32.gmra.mxu0 %v2693
  %v2738 = vpop.f32.mrf.mxu0
  %v2739 = vadd.f32 0.0, %v2738
  %2740 = vmatmul.f32.gmra.mxu0 %v2694
  %v2741 = vpop.f32.mrf.mxu0
  %v2742 = vadd.f32 0.0, %v2741
  %2743 = vmatmul.f32.gmra.mxu0 %v2695
  %v2744 = vpop.f32.mrf.mxu0
  %v2745 = vadd.f32 0.0, %v2744
  %2746 = vmatmul.f32.gmra.mxu0 %v2696
  %v2747 = vpop.f32.mrf.mxu0
  %v2748 = vadd.f32 0.0, %v2747
  %2749 = vdwg.mxu0
  %v2750 = vadd.f32 %v2697, %v2736
  %v2751 = vadd.f32 %v2698, %v2739
  %v2752 = vadd.f32 %v2699, %v2742
  %v2753 = vadd.f32 %v2700, %v2745
  %v2754 = vadd.f32 %v2701, %v2748
  %2755 = vst [vmem:[#allocation4 + $0x28] sm:$0xff] %v2750
  %2756 = vst [vmem:[#allocation4 + $0x30] sm:$0xff] %v2751
  %2757 = vst [vmem:[#allocation4 + $0x38] sm:$0xff] %v2752
  %2758 = vst [vmem:[#allocation4 + $0x40] sm:$0xff] %v2753
  %2759 = vst [vmem:[#allocation4 + $0x48] sm:$0xff] %v2754
  %v2760 = vld [vmem:[#allocation4 + $0x28] sm:$0xff]
  %v2761 = vld [vmem:[#allocation4 + $0x30] sm:$0xff]
  %v2762 = vld [vmem:[#allocation4 + $0x38] sm:$0xff]
  %v2763 = vld [vmem:[#allocation4 + $0x40] sm:$0xff]
  %v2764 = vld [vmem:[#allocation4 + $0x48] sm:$0xff]
  %v2765 = vld [vmem:[#allocation4 + $0x50] sm:$0xff]
  %v2766 = vld [vmem:[#allocation4 + $0x58] sm:$0xff]
  %v2767 = vld [vmem:[#allocation4 + $0x60] sm:$0xff]
  %v2768 = vld [vmem:[#allocation4 + $0x68] sm:$0xff]
  %v2769 = vld [vmem:[#allocation4 + $0x70] sm:$0xff]
  %v2770 = vld [vmem:[%s3] sm:$0xff]
  %v2771 = vld [vmem:[%s3 + $0x40] sm:$0xff]
  %v2772 = vld [vmem:[%s3 + $0x80] sm:$0xff]
  %v2773 = vld [vmem:[%s3 + $0xc0] sm:$0xff]
  %v2774 = vld [vmem:[%s3 + $0x100] sm:$0xff]
  %v2775 = vld [vmem:[%s3 + $0x140] sm:$0xff]
  %v2776 = vld [vmem:[%s3 + $0x180] sm:$0xff]
  %v2777 = vld [vmem:[%s3 + $0x1c0] sm:$0xff]
  %v2778 = vld [vmem:[%s3 + $0x200] sm:$0xff]
  %v2779 = vld [vmem:[%s3 + $0x240] sm:$0xff]
  %v2780 = vld [vmem:[%s3 + $0x280] sm:$0xff]
  %v2781 = vld [vmem:[%s3 + $0x2c0] sm:$0xff]
  %v2782 = vld [vmem:[%s3 + $0x300] sm:$0xff]
  %v2783 = vld [vmem:[%s3 + $0x340] sm:$0xff]
  %v2784 = vld [vmem:[%s3 + $0x380] sm:$0xff]
  %v2785 = vld [vmem:[%s3 + $0x3c0] sm:$0xff]
  %2786 = vmatpush.msra.mxu0 %v2785
  %2787 = vmatpush.msra.mxu0 %v2784
  %2788 = vmatpush.msra.mxu0 %v2783
  %2789 = vmatpush.msra.mxu0 %v2782
  %2790 = vmatpush.msra.mxu0 %v2781
  %2791 = vmatpush.msra.mxu0 %v2780
  %2792 = vmatpush.msra.mxu0 %v2779
  %2793 = vmatpush.msra.mxu0 %v2778
  %2794 = vmatpush.msra.mxu0 %v2777
  %2795 = vmatpush.msra.mxu0 %v2776
  %2796 = vmatpush.msra.mxu0 %v2775
  %2797 = vmatpush.msra.mxu0 %v2774
  %2798 = vmatpush.msra.mxu0 %v2773
  %2799 = vmatpush.msra.mxu0 %v2772
  %2800 = vmatpush.msra.mxu0 %v2771
  %2801 = vmatpush.msra.mxu0 %v2770
  %2802 = vmatmul.f32.gmra.mxu0 %v2760
  %v2803 = vpop.f32.mrf.mxu0
  %v2804 = vadd.f32 0.0, %v2803
  %2805 = vmatmul.f32.gmra.mxu0 %v2761
  %v2806 = vpop.f32.mrf.mxu0
  %v2807 = vadd.f32 0.0, %v2806
  %2808 = vmatmul.f32.gmra.mxu0 %v2762
  %v2809 = vpop.f32.mrf.mxu0
  %v2810 = vadd.f32 0.0, %v2809
  %2811 = vmatmul.f32.gmra.mxu0 %v2763
  %v2812 = vpop.f32.mrf.mxu0
  %v2813 = vadd.f32 0.0, %v2812
  %2814 = vmatmul.f32.gmra.mxu0 %v2764
  %v2815 = vpop.f32.mrf.mxu0
  %v2816 = vadd.f32 0.0, %v2815
  %2817 = vdwg.mxu0
  %v2818 = vadd.f32 %v2765, %v2804
  %v2819 = vadd.f32 %v2766, %v2807
  %v2820 = vadd.f32 %v2767, %v2810
  %v2821 = vadd.f32 %v2768, %v2813
  %v2822 = vadd.f32 %v2769, %v2816
  %2823 = vst [vmem:[#allocation4 + $0x50] sm:$0xff] %v2818
  %2824 = vst [vmem:[#allocation4 + $0x58] sm:$0xff] %v2819
  %2825 = vst [vmem:[#allocation4 + $0x60] sm:$0xff] %v2820
  %2826 = vst [vmem:[#allocation4 + $0x68] sm:$0xff] %v2821
  %2827 = vst [vmem:[#allocation4 + $0x70] sm:$0xff] %v2822
  %v2828 = vld [vmem:[#allocation4 + $0x50] sm:$0xff]
  %v2829 = vld [vmem:[#allocation4 + $0x58] sm:$0xff]
  %v2830 = vld [vmem:[#allocation4 + $0x60] sm:$0xff]
  %v2831 = vld [vmem:[#allocation4 + $0x68] sm:$0xff]
  %v2832 = vld [vmem:[#allocation4 + $0x70] sm:$0xff]
  %v2833 = vld [vmem:[#allocation4 + $0x78] sm:$0xff]
  %v2834 = vld [vmem:[#allocation4 + $0x80] sm:$0xff]
  %v2835 = vld [vmem:[#allocation4 + $0x88] sm:$0xff]
  %v2836 = vld [vmem:[#allocation4 + $0x90] sm:$0xff]
  %v2837 = vld [vmem:[#allocation4 + $0x98] sm:$0xff]
  %v2838 = vld [vmem:[%s3] sm:$0xff]
  %v2839 = vld [vmem:[%s3 + $0x40] sm:$0xff]
  %v2840 = vld [vmem:[%s3 + $0x80] sm:$0xff]
  %v2841 = vld [vmem:[%s3 + $0xc0] sm:$0xff]
  %v2842 = vld [vmem:[%s3 + $0x100] sm:$0xff]
  %v2843 = vld [vmem:[%s3 + $0x140] sm:$0xff]
  %v2844 = vld [vmem:[%s3 + $0x180] sm:$0xff]
  %v2845 = vld [vmem:[%s3 + $0x1c0] sm:$0xff]
  %v2846 = vld [vmem:[%s3 + $0x200] sm:$0xff]
  %v2847 = vld [vmem:[%s3 + $0x240] sm:$0xff]
  %v2848 = vld [vmem:[%s3 + $0x280] sm:$0xff]
  %v2849 = vld [vmem:[%s3 + $0x2c0] sm:$0xff]
  %v2850 = vld [vmem:[%s3 + $0x300] sm:$0xff]
  %v2851 = vld [vmem:[%s3 + $0x340] sm:$0xff]
  %v2852 = vld [vmem:[%s3 + $0x380] sm:$0xff]
  %v2853 = vld [vmem:[%s3 + $0x3c0] sm:$0xff]
  %2854 = vmatpush.msra.mxu0 %v2853
  %2855 = vmatpush.msra.mxu0 %v2852
  %2856 = vmatpush.msra.mxu0 %v2851
  %2857 = vmatpush.msra.mxu0 %v2850
  %2858 = vmatpush.msra.mxu0 %v2849
  %2859 = vmatpush.msra.mxu0 %v2848
  %2860 = vmatpush.msra.mxu0 %v2847
  %2861 = vmatpush.msra.mxu0 %v2846
  %2862 = vmatpush.msra.mxu0 %v2845
  %2863 = vmatpush.msra.mxu0 %v2844
  %2864 = vmatpush.msra.mxu0 %v2843
  %2865 = vmatpush.msra.mxu0 %v2842
  %2866 = vmatpush.msra.mxu0 %v2841
  %2867 = vmatpush.msra.mxu0 %v2840
  %2868 = vmatpush.msra.mxu0 %v2839
  %2869 = vmatpush.msra.mxu0 %v2838
  %2870 = vmatmul.f32.gmra.mxu0 %v2828
  %v2871 = vpop.f32.mrf.mxu0
  %v2872 = vadd.f32 0.0, %v2871
  %2873 = vmatmul.f32.gmra.mxu0 %v2829
  %v2874 = vpop.f32.mrf.mxu0
  %v2875 = vadd.f32 0.0, %v2874
  %2876 = vmatmul.f32.gmra.mxu0 %v2830
  %v2877 = vpop.f32.mrf.mxu0
  %v2878 = vadd.f32 0.0, %v2877
  %2879 = vmatmul.f32.gmra.mxu0 %v2831
  %v2880 = vpop.f32.mrf.mxu0
  %v2881 = vadd.f32 0.0, %v2880
  %2882 = vmatmul.f32.gmra.mxu0 %v2832
  %v2883 = vpop.f32.mrf.mxu0
  %v2884 = vadd.f32 0.0, %v2883
  %2885 = vdwg.mxu0
  %v2886 = vadd.f32 %v2833, %v2872
  %v2887 = vadd.f32 %v2834, %v2875
  %v2888 = vadd.f32 %v2835, %v2878
  %v2889 = vadd.f32 %v2836, %v2881
  %v2890 = vadd.f32 %v2837, %v2884
  %2891 = vst [vmem:[#allocation4 + $0x78] sm:$0xff] %v2886
  %2892 = vst [vmem:[#allocation4 + $0x80] sm:$0xff] %v2887
  %2893 = vst [vmem:[#allocation4 + $0x88] sm:$0xff] %v2888
  %2894 = vst [vmem:[#allocation4 + $0x90] sm:$0xff] %v2889
  %2895 = vst [vmem:[#allocation4 + $0x98] sm:$0xff] %v2890
  %v2896 = vld [vmem:[#allocation4 + $0x78] sm:$0xff]
  %v2897 = vld [vmem:[#allocation4 + $0x80] sm:$0xff]
  %v2898 = vld [vmem:[#allocation4 + $0x88] sm:$0xff]
  %v2899 = vld [vmem:[#allocation4 + $0x90] sm:$0xff]
  %v2900 = vld [vmem:[#allocation4 + $0x98] sm:$0xff]
  %v2901 = vld [vmem:[#allocation4 + $0xa0] sm:$0xff]
  %v2902 = vld [vmem:[#allocation4 + $0xa8] sm:$0xff]
  %v2903 = vld [vmem:[#allocation4 + $0xb0] sm:$0xff]
  %v2904 = vld [vmem:[#allocation4 + $0xb8] sm:$0xff]
  %v2905 = vld [vmem:[#allocation4 + $0xc0] sm:$0xff]
  %v2906 = vld [vmem:[%s3] sm:$0xff]
  %v2907 = vld [vmem:[%s3 + $0x40] sm:$0xff]
  %v2908 = vld [vmem:[%s3 + $0x80] sm:$0xff]
  %v2909 = vld [vmem:[%s3 + $0xc0] sm:$0xff]
  %v2910 = vld [vmem:[%s3 + $0x100] sm:$0xff]
  %v2911 = vld [vmem:[%s3 + $0x140] sm:$0xff]
  %v2912 = vld [vmem:[%s3 + $0x180] sm:$0xff]
  %v2913 = vld [vmem:[%s3 + $0x1c0] sm:$0xff]
  %v2914 = vld [vmem:[%s3 + $0x200] sm:$0xff]
  %v2915 = vld [vmem:[%s3 + $0x240] sm:$0xff]
  %v2916 = vld [vmem:[%s3 + $0x280] sm:$0xff]
  %v2917 = vld [vmem:[%s3 + $0x2c0] sm:$0xff]
  %v2918 = vld [vmem:[%s3 + $0x300] sm:$0xff]
  %v2919 = vld [vmem:[%s3 + $0x340] sm:$0xff]
  %v2920 = vld [vmem:[%s3 + $0x380] sm:$0xff]
  %v2921 = vld [vmem:[%s3 + $0x3c0] sm:$0xff]
  %2922 = vmatpush.msra.mxu0 %v2921
  %2923 = vmatpush.msra.mxu0 %v2920
  %2924 = vmatpush.msra.mxu0 %v2919
  %2925 = vmatpush.msra.mxu0 %v2918
  %2926 = vmatpush.msra.mxu0 %v2917
  %2927 = vmatpush.msra.mxu0 %v2916
  %2928 = vmatpush.msra.mxu0 %v2915
  %2929 = vmatpush.msra.mxu0 %v2914
  %2930 = vmatpush.msra.mxu0 %v2913
  %2931 = vmatpush.msra.mxu0 %v2912
  %2932 = vmatpush.msra.mxu0 %v2911
  %2933 = vmatpush.msra.mxu0 %v2910
  %2934 = vmatpush.msra.mxu0 %v2909
  %2935 = vmatpush.msra.mxu0 %v2908
  %2936 = vmatpush.msra.mxu0 %v2907
  %2937 = vmatpush.msra.mxu0 %v2906
  %2938 = vmatmul.f32.gmra.mxu0 %v2896
  %v2939 = vpop.f32.mrf.mxu0
  %v2940 = vadd.f32 0.0, %v2939
  %2941 = vmatmul.f32.gmra.mxu0 %v2897
  %v2942 = vpop.f32.mrf.mxu0
  %v2943 = vadd.f32 0.0, %v2942
  %2944 = vmatmul.f32.gmra.mxu0 %v2898
  %v2945 = vpop.f32.mrf.mxu0
  %v2946 = vadd.f32 0.0, %v2945
  %2947 = vmatmul.f32.gmra.mxu0 %v2899
  %v2948 = vpop.f32.mrf.mxu0
  %v2949 = vadd.f32 0.0, %v2948
  %2950 = vmatmul.f32.gmra.mxu0 %v2900
  %v2951 = vpop.f32.mrf.mxu0
  %v2952 = vadd.f32 0.0, %v2951
  %2953 = vdwg.mxu0
  %v2954 = vadd.f32 %v2901, %v2940
  %v2955 = vadd.f32 %v2902, %v2943
  %v2956 = vadd.f32 %v2903, %v2946
  %v2957 = vadd.f32 %v2904, %v2949
  %v2958 = vadd.f32 %v2905, %v2952
  %2959 = vst [vmem:[#allocation4 + $0xa0] sm:$0xff] %v2954
  %2960 = vst [vmem:[#allocation4 + $0xa8] sm:$0xff] %v2955
  %2961 = vst [vmem:[#allocation4 + $0xb0] sm:$0xff] %v2956
  %2962 = vst [vmem:[#allocation4 + $0xb8] sm:$0xff] %v2957
  %2963 = vst [vmem:[#allocation4 + $0xc0] sm:$0xff] %v2958
  %v2964 = vld [vmem:[#allocation4 + $0xa0] sm:$0xff]
  %v2965 = vld [vmem:[#allocation4 + $0xa8] sm:$0xff]
  %v2966 = vld [vmem:[#allocation4 + $0xb0] sm:$0xff]
  %v2967 = vld [vmem:[#allocation4 + $0xb8] sm:$0xff]
  %v2968 = vld [vmem:[#allocation4 + $0xc0] sm:$0xff]
  %v2969 = vld [vmem:[#allocation4 + $0xc8] sm:$0xff]
  %v2970 = vld [vmem:[#allocation4 + $0xd0] sm:$0xff]
  %v2971 = vld [vmem:[#allocation4 + $0xd8] sm:$0xff]
  %v2972 = vld [vmem:[#allocation4 + $0xe0] sm:$0xff]
  %v2973 = vld [vmem:[#allocation4 + $0xe8] sm:$0xff]
  %v2974 = vld [vmem:[%s3] sm:$0xff]
  %v2975 = vld [vmem:[%s3 + $0x40] sm:$0xff]
  %v2976 = vld [vmem:[%s3 + $0x80] sm:$0xff]
  %v2977 = vld [vmem:[%s3 + $0xc0] sm:$0xff]
  %v2978 = vld [vmem:[%s3 + $0x100] sm:$0xff]
  %v2979 = vld [vmem:[%s3 + $0x140] sm:$0xff]
  %v2980 = vld [vmem:[%s3 + $0x180] sm:$0xff]
  %v2981 = vld [vmem:[%s3 + $0x1c0] sm:$0xff]
  %v2982 = vld [vmem:[%s3 + $0x200] sm:$0xff]
  %v2983 = vld [vmem:[%s3 + $0x240] sm:$0xff]
  %v2984 = vld [vmem:[%s3 + $0x280] sm:$0xff]
  %v2985 = vld [vmem:[%s3 + $0x2c0] sm:$0xff]
  %v2986 = vld [vmem:[%s3 + $0x300] sm:$0xff]
  %v2987 = vld [vmem:[%s3 + $0x340] sm:$0xff]
  %v2988 = vld [vmem:[%s3 + $0x380] sm:$0xff]
  %v2989 = vld [vmem:[%s3 + $0x3c0] sm:$0xff]
  %2990 = vmatpush.msra.mxu0 %v2989
  %2991 = vmatpush.msra.mxu0 %v2988
  %2992 = vmatpush.msra.mxu0 %v2987
  %2993 = vmatpush.msra.mxu0 %v2986
  %2994 = vmatpush.msra.mxu0 %v2985
  %2995 = vmatpush.msra.mxu0 %v2984
  %2996 = vmatpush.msra.mxu0 %v2983
  %2997 = vmatpush.msra.mxu0 %v2982
  %2998 = vmatpush.msra.mxu0 %v2981
  %2999 = vmatpush.msra.mxu0 %v2980
  %3000 = vmatpush.msra.mxu0 %v2979
  %3001 = vmatpush.msra.mxu0 %v2978
  %3002 = vmatpush.msra.mxu0 %v2977
  %3003 = vmatpush.msra.mxu0 %v2976
  %3004 = vmatpush.msra.mxu0 %v2975
  %3005 = vmatpush.msra.mxu0 %v2974
  %3006 = vmatmul.f32.gmra.mxu0 %v2964
  %v3007 = vpop.f32.mrf.mxu0
  %v3008 = vadd.f32 0.0, %v3007
  %3009 = vmatmul.f32.gmra.mxu0 %v2965
  %v3010 = vpop.f32.mrf.mxu0
  %v3011 = vadd.f32 0.0, %v3010
  %3012 = vmatmul.f32.gmra.mxu0 %v2966
  %v3013 = vpop.f32.mrf.mxu0
  %v3014 = vadd.f32 0.0, %v3013
  %3015 = vmatmul.f32.gmra.mxu0 %v2967
  %v3016 = vpop.f32.mrf.mxu0
  %v3017 = vadd.f32 0.0, %v3016
  %3018 = vmatmul.f32.gmra.mxu0 %v2968
  %v3019 = vpop.f32.mrf.mxu0
  %v3020 = vadd.f32 0.0, %v3019
  %3021 = vdwg.mxu0
  %v3022 = vadd.f32 %v2969, %v3008
  %v3023 = vadd.f32 %v2970, %v3011
  %v3024 = vadd.f32 %v2971, %v3014
  %v3025 = vadd.f32 %v2972, %v3017
  %v3026 = vadd.f32 %v2973, %v3020
  %3027 = vst [vmem:[#allocation4 + $0xc8] sm:$0xff] %v3022
  %3028 = vst [vmem:[#allocation4 + $0xd0] sm:$0xff] %v3023
  %3029 = vst [vmem:[#allocation4 + $0xd8] sm:$0xff] %v3024
  %3030 = vst [vmem:[#allocation4 + $0xe0] sm:$0xff] %v3025
  %3031 = vst [vmem:[#allocation4 + $0xe8] sm:$0xff] %v3026
  %v3032 = vld [vmem:[#allocation4 + $0xc8] sm:$0xff]
  %v3033 = vld [vmem:[#allocation4 + $0xd0] sm:$0xff]
  %v3034 = vld [vmem:[#allocation4 + $0xd8] sm:$0xff]
  %v3035 = vld [vmem:[#allocation4 + $0xe0] sm:$0xff]
  %v3036 = vld [vmem:[#allocation4 + $0xe8] sm:$0xff]
  %v3037 = vld [vmem:[#allocation4 + $0xf0] sm:$0xff]
  %v3038 = vld [vmem:[#allocation4 + $0xf8] sm:$0xff]
  %v3039 = vld [vmem:[#allocation4 + $0x100] sm:$0xff]
  %v3040 = vld [vmem:[#allocation4 + $0x108] sm:$0xff]
  %v3041 = vld [vmem:[#allocation4 + $0x110] sm:$0xff]
  %v3042 = vld [vmem:[%s3] sm:$0xff]
  %v3043 = vld [vmem:[%s3 + $0x40] sm:$0xff]
  %v3044 = vld [vmem:[%s3 + $0x80] sm:$0xff]
  %v3045 = vld [vmem:[%s3 + $0xc0] sm:$0xff]
  %v3046 = vld [vmem:[%s3 + $0x100] sm:$0xff]
  %v3047 = vld [vmem:[%s3 + $0x140] sm:$0xff]
  %v3048 = vld [vmem:[%s3 + $0x180] sm:$0xff]
  %v3049 = vld [vmem:[%s3 + $0x1c0] sm:$0xff]
  %v3050 = vld [vmem:[%s3 + $0x200] sm:$0xff]
  %v3051 = vld [vmem:[%s3 + $0x240] sm:$0xff]
  %v3052 = vld [vmem:[%s3 + $0x280] sm:$0xff]
  %v3053 = vld [vmem:[%s3 + $0x2c0] sm:$0xff]
  %v3054 = vld [vmem:[%s3 + $0x300] sm:$0xff]
  %v3055 = vld [vmem:[%s3 + $0x340] sm:$0xff]
  %v3056 = vld [vmem:[%s3 + $0x380] sm:$0xff]
  %v3057 = vld [vmem:[%s3 + $0x3c0] sm:$0xff]
  %3058 = vmatpush.msra.mxu0 %v3057
  %3059 = vmatpush.msra.mxu0 %v3056
  %3060 = vmatpush.msra.mxu0 %v3055
  %3061 = vmatpush.msra.mxu0 %v3054
  %3062 = vmatpush.msra.mxu0 %v3053
  %3063 = vmatpush.msra.mxu0 %v3052
  %3064 = vmatpush.msra.mxu0 %v3051
  %3065 = vmatpush.msra.mxu0 %v3050
  %3066 = vmatpush.msra.mxu0 %v3049
  %3067 = vmatpush.msra.mxu0 %v3048
  %3068 = vmatpush.msra.mxu0 %v3047
  %3069 = vmatpush.msra.mxu0 %v3046
  %3070 = vmatpush.msra.mxu0 %v3045
  %3071 = vmatpush.msra.mxu0 %v3044
  %3072 = vmatpush.msra.mxu0 %v3043
  %3073 = vmatpush.msra.mxu0 %v3042
  %3074 = vmatmul.f32.gmra.mxu0 %v3032
  %v3075 = vpop.f32.mrf.mxu0
  %v3076 = vadd.f32 0.0, %v3075
  %3077 = vmatmul.f32.gmra.mxu0 %v3033
  %v3078 = vpop.f32.mrf.mxu0
  %v3079 = vadd.f32 0.0, %v3078
  %3080 = vmatmul.f32.gmra.mxu0 %v3034
  %v3081 = vpop.f32.mrf.mxu0
  %v3082 = vadd.f32 0.0, %v3081
  %3083 = vmatmul.f32.gmra.mxu0 %v3035
  %v3084 = vpop.f32.mrf.mxu0
  %v3085 = vadd.f32 0.0, %v3084
  %3086 = vmatmul.f32.gmra.mxu0 %v3036
  %v3087 = vpop.f32.mrf.mxu0
  %v3088 = vadd.f32 0.0, %v3087
  %3089 = vdwg.mxu0
  %v3090 = vadd.f32 %v3037, %v3076
  %v3091 = vadd.f32 %v3038, %v3079
  %v3092 = vadd.f32 %v3039, %v3082
  %v3093 = vadd.f32 %v3040, %v3085
  %v3094 = vadd.f32 %v3041, %v3088
  %3095 = vst [vmem:[#allocation4 + $0xf0] sm:$0xff] %v3090
  %3096 = vst [vmem:[#allocation4 + $0xf8] sm:$0xff] %v3091
  %3097 = vst [vmem:[#allocation4 + $0x100] sm:$0xff] %v3092
  %3098 = vst [vmem:[#allocation4 + $0x108] sm:$0xff] %v3093
  %3099 = vst [vmem:[#allocation4 + $0x110] sm:$0xff] %v3094
  %v3100 = vld [vmem:[#allocation4 + $0xf0] sm:$0xff]
  %v3101 = vld [vmem:[#allocation4 + $0xf8] sm:$0xff]
  %v3102 = vld [vmem:[#allocation4 + $0x100] sm:$0xff]
  %v3103 = vld [vmem:[#allocation4 + $0x108] sm:$0xff]
  %v3104 = vld [vmem:[#allocation4 + $0x110] sm:$0xff]
  %v3105 = vld [vmem:[#allocation4 + $0x118] sm:$0xff]
  %v3106 = vld [vmem:[#allocation4 + $0x120] sm:$0xff]
  %v3107 = vld [vmem:[#allocation4 + $0x128] sm:$0xff]
  %v3108 = vld [vmem:[#allocation4 + $0x130] sm:$0xff]
  %v3109 = vld [vmem:[#allocation4 + $0x138] sm:$0xff]
  %v3110 = vld [vmem:[%s3] sm:$0xff]
  %v3111 = vld [vmem:[%s3 + $0x40] sm:$0xff]
  %v3112 = vld [vmem:[%s3 + $0x80] sm:$0xff]
  %v3113 = vld [vmem:[%s3 + $0xc0] sm:$0xff]
  %v3114 = vld [vmem:[%s3 + $0x100] sm:$0xff]
  %v3115 = vld [vmem:[%s3 + $0x140] sm:$0xff]
  %v3116 = vld [vmem:[%s3 + $0x180] sm:$0xff]
  %v3117 = vld [vmem:[%s3 + $0x1c0] sm:$0xff]
  %v3118 = vld [vmem:[%s3 + $0x200] sm:$0xff]
  %v3119 = vld [vmem:[%s3 + $0x240] sm:$0xff]
  %v3120 = vld [vmem:[%s3 + $0x280] sm:$0xff]
  %v3121 = vld [vmem:[%s3 + $0x2c0] sm:$0xff]
  %v3122 = vld [vmem:[%s3 + $0x300] sm:$0xff]
  %v3123 = vld [vmem:[%s3 + $0x340] sm:$0xff]
  %v3124 = vld [vmem:[%s3 + $0x380] sm:$0xff]
  %v3125 = vld [vmem:[%s3 + $0x3c0] sm:$0xff]
  %3126 = vmatpush.msra.mxu0 %v3125
  %3127 = vmatpush.msra.mxu0 %v3124
  %3128 = vmatpush.msra.mxu0 %v3123
  %3129 = vmatpush.msra.mxu0 %v3122
  %3130 = vmatpush.msra.mxu0 %v3121
  %3131 = vmatpush.msra.mxu0 %v3120
  %3132 = vmatpush.msra.mxu0 %v3119
  %3133 = vmatpush.msra.mxu0 %v3118
  %3134 = vmatpush.msra.mxu0 %v3117
  %3135 = vmatpush.msra.mxu0 %v3116
  %3136 = vmatpush.msra.mxu0 %v3115
  %3137 = vmatpush.msra.mxu0 %v3114
  %3138 = vmatpush.msra.mxu0 %v3113
  %3139 = vmatpush.msra.mxu0 %v3112
  %3140 = vmatpush.msra.mxu0 %v3111
  %3141 = vmatpush.msra.mxu0 %v3110
  %3142 = vmatmul.f32.gmra.mxu0 %v3100
  %v3143 = vpop.f32.mrf.mxu0
  %v3144 = vadd.f32 0.0, %v3143
  %3145 = vmatmul.f32.gmra.mxu0 %v3101
  %v3146 = vpop.f32.mrf.mxu0
  %v3147 = vadd.f32 0.0, %v3146
  %3148 = vmatmul.f32.gmra.mxu0 %v3102
  %v3149 = vpop.f32.mrf.mxu0
  %v3150 = vadd.f32 0.0, %v3149
  %3151 = vmatmul.f32.gmra.mxu0 %v3103
  %v3152 = vpop.f32.mrf.mxu0
  %v3153 = vadd.f32 0.0, %v3152
  %3154 = vmatmul.f32.gmra.mxu0 %v3104
  %v3155 = vpop.f32.mrf.mxu0
  %v3156 = vadd.f32 0.0, %v3155
  %3157 = vdwg.mxu0
  %v3158 = vadd.f32 %v3105, %v3144
  %v3159 = vadd.f32 %v3106, %v3147
  %v3160 = vadd.f32 %v3107, %v3150
  %v3161 = vadd.f32 %v3108, %v3153
  %v3162 = vadd.f32 %v3109, %v3156
  %3163 = vst [vmem:[#allocation4 + $0x118] sm:$0xff] %v3158
  %3164 = vst [vmem:[#allocation4 + $0x120] sm:$0xff] %v3159
  %3165 = vst [vmem:[#allocation4 + $0x128] sm:$0xff] %v3160
  %3166 = vst [vmem:[#allocation4 + $0x130] sm:$0xff] %v3161
  %3167 = vst [vmem:[#allocation4 + $0x138] sm:$0xff] %v3162
  %s3168 = scalar_lea.vmem [#allocation2], 8
  %v3169 = vld [vmem:[%s3168] sm:$0xff]
  %v3170 = vld [vmem:[%s3] sm:$0xff]
  %v3171 = vld [vmem:[%s3 + $0x8] sm:$0xff]
  %v3172 = vld [vmem:[%s3 + $0x10] sm:$0xff]
  %v3173 = vld [vmem:[%s3 + $0x18] sm:$0xff]
  %v3174 = vld [vmem:[%s3 + $0x20] sm:$0xff]
  %v3175 = vld [vmem:[%s3 + $0x28] sm:$0xff]
  %v3176 = vld [vmem:[%s3 + $0x30] sm:$0xff]
  %v3177 = vld [vmem:[%s3 + $0x38] sm:$0xff]
  %v3178 = vld [vmem:[%s3 + $0x40] sm:$0xff]
  %v3179 = vld [vmem:[%s3 + $0x48] sm:$0xff]
  %v3180 = vld [vmem:[%s3 + $0x50] sm:$0xff]
  %v3181 = vld [vmem:[%s3 + $0x58] sm:$0xff]
  %v3182 = vld [vmem:[%s3 + $0x60] sm:$0xff]
  %v3183 = vld [vmem:[%s3 + $0x68] sm:$0xff]
  %v3184 = vld [vmem:[%s3 + $0x70] sm:$0xff]
  %v3185 = vld [vmem:[%s3 + $0x78] sm:$0xff]
  %v3186 = vld [vmem:[%s3 + $0x80] sm:$0xff]
  %v3187 = vld [vmem:[%s3 + $0x88] sm:$0xff]
  %v3188 = vld [vmem:[%s3 + $0x90] sm:$0xff]
  %v3189 = vld [vmem:[%s3 + $0x98] sm:$0xff]
  %v3190 = vld [vmem:[%s3 + $0xa0] sm:$0xff]
  %v3191 = vld [vmem:[%s3 + $0xa8] sm:$0xff]
  %v3192 = vld [vmem:[%s3 + $0xb0] sm:$0xff]
  %v3193 = vld [vmem:[%s3 + $0xb8] sm:$0xff]
  %v3194 = vld [vmem:[%s3 + $0xc0] sm:$0xff]
  %v3195 = vld [vmem:[%s3 + $0xc8] sm:$0xff]
  %v3196 = vld [vmem:[%s3 + $0xd0] sm:$0xff]
  %v3197 = vld [vmem:[%s3 + $0xd8] sm:$0xff]
  %v3198 = vld [vmem:[%s3 + $0xe0] sm:$0xff]
  %v3199 = vld [vmem:[%s3 + $0xe8] sm:$0xff]
  %v3200 = vld [vmem:[%s3 + $0xf0] sm:$0xff]
  %v3201 = vld [vmem:[%s3 + $0xf8] sm:$0xff]
  %v3202 = vld [vmem:[%s3 + $0x100] sm:$0xff]
  %v3203 = vld [vmem:[%s3 + $0x108] sm:$0xff]
  %v3204 = vld [vmem:[%s3 + $0x110] sm:$0xff]
  %v3205 = vld [vmem:[%s3 + $0x118] sm:$0xff]
  %v3206 = vld [vmem:[%s3 + $0x120] sm:$0xff]
  %v3207 = vld [vmem:[%s3 + $0x128] sm:$0xff]
  %v3208 = vld [vmem:[%s3 + $0x130] sm:$0xff]
  %v3209 = vld [vmem:[%s3 + $0x138] sm:$0xff]
  %v3210 = vld [vmem:[%s3 + $0x140] sm:$0xff]
  %v3211 = vld [vmem:[%s3 + $0x148] sm:$0xff]
  %v3212 = vld [vmem:[%s3 + $0x150] sm:$0xff]
  %v3213 = vld [vmem:[%s3 + $0x158] sm:$0xff]
  %v3214 = vld [vmem:[%s3 + $0x160] sm:$0xff]
  %v3215 = vld [vmem:[%s3 + $0x168] sm:$0xff]
  %v3216 = vld [vmem:[%s3 + $0x170] sm:$0xff]
  %v3217 = vld [vmem:[%s3 + $0x178] sm:$0xff]
  %v3218 = vld [vmem:[%s3 + $0x180] sm:$0xff]
  %v3219 = vld [vmem:[%s3 + $0x188] sm:$0xff]
  %v3220 = vld [vmem:[%s3 + $0x190] sm:$0xff]
  %v3221 = vld [vmem:[%s3 + $0x198] sm:$0xff]
  %v3222 = vld [vmem:[%s3 + $0x1a0] sm:$0xff]
  %v3223 = vld [vmem:[%s3 + $0x1a8] sm:$0xff]
  %v3224 = vld [vmem:[%s3 + $0x1b0] sm:$0xff]
  %v3225 = vld [vmem:[%s3 + $0x1b8] sm:$0xff]
  %v3226 = vld [vmem:[%s3 + $0x1c0] sm:$0xff]
  %v3227 = vld [vmem:[%s3 + $0x1c8] sm:$0xff]
  %v3228 = vld [vmem:[%s3 + $0x1d0] sm:$0xff]
  %v3229 = vld [vmem:[%s3 + $0x1d8] sm:$0xff]
  %v3230 = vld [vmem:[%s3 + $0x1e0] sm:$0xff]
  %v3231 = vld [vmem:[%s3 + $0x1e8] sm:$0xff]
  %v3232 = vld [vmem:[%s3 + $0x1f0] sm:$0xff]
  %v3233 = vld [vmem:[%s3 + $0x1f8] sm:$0xff]
  %v3234 = vld [vmem:[%s3 + $0x200] sm:$0xff]
  %v3235 = vld [vmem:[%s3 + $0x208] sm:$0xff]
  %v3236 = vld [vmem:[%s3 + $0x210] sm:$0xff]
  %v3237 = vld [vmem:[%s3 + $0x218] sm:$0xff]
  %v3238 = vld [vmem:[%s3 + $0x220] sm:$0xff]
  %v3239 = vld [vmem:[%s3 + $0x228] sm:$0xff]
  %v3240 = vld [vmem:[%s3 + $0x230] sm:$0xff]
  %v3241 = vld [vmem:[%s3 + $0x238] sm:$0xff]
  %v3242 = vld [vmem:[%s3 + $0x240] sm:$0xff]
  %v3243 = vld [vmem:[%s3 + $0x248] sm:$0xff]
  %v3244 = vld [vmem:[%s3 + $0x250] sm:$0xff]
  %v3245 = vld [vmem:[%s3 + $0x258] sm:$0xff]
  %v3246 = vld [vmem:[%s3 + $0x260] sm:$0xff]
  %v3247 = vld [vmem:[%s3 + $0x268] sm:$0xff]
  %v3248 = vld [vmem:[%s3 + $0x270] sm:$0xff]
  %v3249 = vld [vmem:[%s3 + $0x278] sm:$0xff]
  %v3250 = vld [vmem:[%s3 + $0x280] sm:$0xff]
  %v3251 = vld [vmem:[%s3 + $0x288] sm:$0xff]
  %v3252 = vld [vmem:[%s3 + $0x290] sm:$0xff]
  %v3253 = vld [vmem:[%s3 + $0x298] sm:$0xff]
  %v3254 = vld [vmem:[%s3 + $0x2a0] sm:$0xff]
  %v3255 = vld [vmem:[%s3 + $0x2a8] sm:$0xff]
  %v3256 = vld [vmem:[%s3 + $0x2b0] sm:$0xff]
  %v3257 = vld [vmem:[%s3 + $0x2b8] sm:$0xff]
  %v3258 = vld [vmem:[%s3 + $0x2c0] sm:$0xff]
  %v3259 = vld [vmem:[%s3 + $0x2c8] sm:$0xff]
  %v3260 = vld [vmem:[%s3 + $0x2d0] sm:$0xff]
  %v3261 = vld [vmem:[%s3 + $0x2d8] sm:$0xff]
  %v3262 = vld [vmem:[%s3 + $0x2e0] sm:$0xff]
  %v3263 = vld [vmem:[%s3 + $0x2e8] sm:$0xff]
  %v3264 = vld [vmem:[%s3 + $0x2f0] sm:$0xff]
  %v3265 = vld [vmem:[%s3 + $0x2f8] sm:$0xff]
  %v3266 = vld [vmem:[%s3 + $0x300] sm:$0xff]
  %v3267 = vld [vmem:[%s3 + $0x308] sm:$0xff]
  %v3268 = vld [vmem:[%s3 + $0x310] sm:$0xff]
  %v3269 = vld [vmem:[%s3 + $0x318] sm:$0xff]
  %v3270 = vld [vmem:[%s3 + $0x320] sm:$0xff]
  %v3271 = vld [vmem:[%s3 + $0x328] sm:$0xff]
  %v3272 = vld [vmem:[%s3 + $0x330] sm:$0xff]
  %v3273 = vld [vmem:[%s3 + $0x338] sm:$0xff]
  %v3274 = vld [vmem:[%s3 + $0x340] sm:$0xff]
  %v3275 = vld [vmem:[%s3 + $0x348] sm:$0xff]
  %v3276 = vld [vmem:[%s3 + $0x350] sm:$0xff]
  %v3277 = vld [vmem:[%s3 + $0x358] sm:$0xff]
  %v3278 = vld [vmem:[%s3 + $0x360] sm:$0xff]
  %v3279 = vld [vmem:[%s3 + $0x368] sm:$0xff]
  %v3280 = vld [vmem:[%s3 + $0x370] sm:$0xff]
  %v3281 = vld [vmem:[%s3 + $0x378] sm:$0xff]
  %v3282 = vld [vmem:[%s3 + $0x380] sm:$0xff]
  %v3283 = vld [vmem:[%s3 + $0x388] sm:$0xff]
  %v3284 = vld [vmem:[%s3 + $0x390] sm:$0xff]
  %v3285 = vld [vmem:[%s3 + $0x398] sm:$0xff]
  %v3286 = vld [vmem:[%s3 + $0x3a0] sm:$0xff]
  %v3287 = vld [vmem:[%s3 + $0x3a8] sm:$0xff]
  %v3288 = vld [vmem:[%s3 + $0x3b0] sm:$0xff]
  %v3289 = vld [vmem:[%s3 + $0x3b8] sm:$0xff]
  %v3290 = vld [vmem:[%s3 + $0x3c0] sm:$0xff]
  %v3291 = vld [vmem:[%s3 + $0x3c8] sm:$0xff]
  %v3292 = vld [vmem:[%s3 + $0x3d0] sm:$0xff]
  %v3293 = vld [vmem:[%s3 + $0x3d8] sm:$0xff]
  %v3294 = vld [vmem:[%s3 + $0x3e0] sm:$0xff]
  %v3295 = vld [vmem:[%s3 + $0x3e8] sm:$0xff]
  %v3296 = vld [vmem:[%s3 + $0x3f0] sm:$0xff]
  %v3297 = vld [vmem:[%s3 + $0x3f8] sm:$0xff]
  %3298 = vmatpush.msra.mxu0 %v3290
  %3299 = vmatpush.msra.mxu0 %v3282
  %3300 = vmatpush.msra.mxu0 %v3274
  %3301 = vmatpush.msra.mxu0 %v3266
  %3302 = vmatpush.msra.mxu0 %v3258
  %3303 = vmatpush.msra.mxu0 %v3250
  %3304 = vmatpush.msra.mxu0 %v3242
  %3305 = vmatpush.msra.mxu0 %v3234
  %3306 = vmatpush.msra.mxu0 %v3226
  %3307 = vmatpush.msra.mxu0 %v3218
  %3308 = vmatpush.msra.mxu0 %v3210
  %3309 = vmatpush.msra.mxu0 %v3202
  %3310 = vmatpush.msra.mxu0 %v3194
  %3311 = vmatpush.msra.mxu0 %v3186
  %3312 = vmatpush.msra.mxu0 %v3178
  %3313 = vmatpush.msra.mxu0 %v3170
  %3314 = vmatmul.f32.gmra.mxu0 %v3169
  %v3315 = vpop.f32.mrf.mxu0
  %v3316 = vadd.f32 0.0, %v3315
  %3317 = vdwg.mxu0
  %3318 = vmatpush.msra.mxu0 %v3291
  %3319 = vmatpush.msra.mxu0 %v3283
  %3320 = vmatpush.msra.mxu0 %v3275
  %3321 = vmatpush.msra.mxu0 %v3267
  %3322 = vmatpush.msra.mxu0 %v3259
  %3323 = vmatpush.msra.mxu0 %v3251
  %3324 = vmatpush.msra.mxu0 %v3243
  %3325 = vmatpush.msra.mxu0 %v3235
  %3326 = vmatpush.msra.mxu0 %v3227
  %3327 = vmatpush.msra.mxu0 %v3219
  %3328 = vmatpush.msra.mxu0 %v3211
  %3329 = vmatpush.msra.mxu0 %v3203
  %3330 = vmatpush.msra.mxu0 %v3195
  %3331 = vmatpush.msra.mxu0 %v3187
  %3332 = vmatpush.msra.mxu0 %v3179
  %3333 = vmatpush.msra.mxu0 %v3171
  %3334 = vmatmul.f32.gmra.mxu0 %v3169
  %v3335 = vpop.f32.mrf.mxu0
  %v3336 = vadd.f32 0.0, %v3335
  %3337 = vdwg.mxu0
  %3338 = vmatpush.msra.mxu0 %v3292
  %3339 = vmatpush.msra.mxu0 %v3284
  %3340 = vmatpush.msra.mxu0 %v3276
  %3341 = vmatpush.msra.mxu0 %v3268
  %3342 = vmatpush.msra.mxu0 %v3260
  %3343 = vmatpush.msra.mxu0 %v3252
  %3344 = vmatpush.msra.mxu0 %v3244
  %3345 = vmatpush.msra.mxu0 %v3236
  %3346 = vmatpush.msra.mxu0 %v3228
  %3347 = vmatpush.msra.mxu0 %v3220
  %3348 = vmatpush.msra.mxu0 %v3212
  %3349 = vmatpush.msra.mxu0 %v3204
  %3350 = vmatpush.msra.mxu0 %v3196
  %3351 = vmatpush.msra.mxu0 %v3188
  %3352 = vmatpush.msra.mxu0 %v3180
  %3353 = vmatpush.msra.mxu0 %v3172
  %3354 = vmatmul.f32.gmra.mxu0 %v3169
  %v3355 = vpop.f32.mrf.mxu0
  %v3356 = vadd.f32 0.0, %v3355
  %3357 = vdwg.mxu0
  %3358 = vmatpush.msra.mxu0 %v3293
  %3359 = vmatpush.msra.mxu0 %v3285
  %3360 = vmatpush.msra.mxu0 %v3277
  %3361 = vmatpush.msra.mxu0 %v3269
  %3362 = vmatpush.msra.mxu0 %v3261
  %3363 = vmatpush.msra.mxu0 %v3253
  %3364 = vmatpush.msra.mxu0 %v3245
  %3365 = vmatpush.msra.mxu0 %v3237
  %3366 = vmatpush.msra.mxu0 %v3229
  %3367 = vmatpush.msra.mxu0 %v3221
  %3368 = vmatpush.msra.mxu0 %v3213
  %3369 = vmatpush.msra.mxu0 %v3205
  %3370 = vmatpush.msra.mxu0 %v3197
  %3371 = vmatpush.msra.mxu0 %v3189
  %3372 = vmatpush.msra.mxu0 %v3181
  %3373 = vmatpush.msra.mxu0 %v3173
  %3374 = vmatmul.f32.gmra.mxu0 %v3169
  %v3375 = vpop.f32.mrf.mxu0
  %v3376 = vadd.f32 0.0, %v3375
  %3377 = vdwg.mxu0
  %3378 = vmatpush.msra.mxu0 %v3294
  %3379 = vmatpush.msra.mxu0 %v3286
  %3380 = vmatpush.msra.mxu0 %v3278
  %3381 = vmatpush.msra.mxu0 %v3270
  %3382 = vmatpush.msra.mxu0 %v3262
  %3383 = vmatpush.msra.mxu0 %v3254
  %3384 = vmatpush.msra.mxu0 %v3246
  %3385 = vmatpush.msra.mxu0 %v3238
  %3386 = vmatpush.msra.mxu0 %v3230
  %3387 = vmatpush.msra.mxu0 %v3222
  %3388 = vmatpush.msra.mxu0 %v3214
  %3389 = vmatpush.msra.mxu0 %v3206
  %3390 = vmatpush.msra.mxu0 %v3198
  %3391 = vmatpush.msra.mxu0 %v3190
  %3392 = vmatpush.msra.mxu0 %v3182
  %3393 = vmatpush.msra.mxu0 %v3174
  %3394 = vmatmul.f32.gmra.mxu0 %v3169
  %v3395 = vpop.f32.mrf.mxu0
  %v3396 = vadd.f32 0.0, %v3395
  %3397 = vdwg.mxu0
  %3398 = vmatpush.msra.mxu0 %v3295
  %3399 = vmatpush.msra.mxu0 %v3287
  %3400 = vmatpush.msra.mxu0 %v3279
  %3401 = vmatpush.msra.mxu0 %v3271
  %3402 = vmatpush.msra.mxu0 %v3263
  %3403 = vmatpush.msra.mxu0 %v3255
  %3404 = vmatpush.msra.mxu0 %v3247
  %3405 = vmatpush.msra.mxu0 %v3239
  %3406 = vmatpush.msra.mxu0 %v3231
  %3407 = vmatpush.msra.mxu0 %v3223
  %3408 = vmatpush.msra.mxu0 %v3215
  %3409 = vmatpush.msra.mxu0 %v3207
  %3410 = vmatpush.msra.mxu0 %v3199
  %3411 = vmatpush.msra.mxu0 %v3191
  %3412 = vmatpush.msra.mxu0 %v3183
  %3413 = vmatpush.msra.mxu0 %v3175
  %3414 = vmatmul.f32.gmra.mxu0 %v3169
  %v3415 = vpop.f32.mrf.mxu0
  %v3416 = vadd.f32 0.0, %v3415
  %3417 = vdwg.mxu0
  %3418 = vmatpush.msra.mxu0 %v3296
  %3419 = vmatpush.msra.mxu0 %v3288
  %3420 = vmatpush.msra.mxu0 %v3280
  %3421 = vmatpush.msra.mxu0 %v3272
  %3422 = vmatpush.msra.mxu0 %v3264
  %3423 = vmatpush.msra.mxu0 %v3256
  %3424 = vmatpush.msra.mxu0 %v3248
  %3425 = vmatpush.msra.mxu0 %v3240
  %3426 = vmatpush.msra.mxu0 %v3232
  %3427 = vmatpush.msra.mxu0 %v3224
  %3428 = vmatpush.msra.mxu0 %v3216
  %3429 = vmatpush.msra.mxu0 %v3208
  %3430 = vmatpush.msra.mxu0 %v3200
  %3431 = vmatpush.msra.mxu0 %v3192
  %3432 = vmatpush.msra.mxu0 %v3184
  %3433 = vmatpush.msra.mxu0 %v3176
  %3434 = vmatmul.f32.gmra.mxu0 %v3169
  %v3435 = vpop.f32.mrf.mxu0
  %v3436 = vadd.f32 0.0, %v3435
  %3437 = vdwg.mxu0
  %3438 = vmatpush.msra.mxu0 %v3297
  %3439 = vmatpush.msra.mxu0 %v3289
  %3440 = vmatpush.msra.mxu0 %v3281
  %3441 = vmatpush.msra.mxu0 %v3273
  %3442 = vmatpush.msra.mxu0 %v3265
  %3443 = vmatpush.msra.mxu0 %v3257
  %3444 = vmatpush.msra.mxu0 %v3249
  %3445 = vmatpush.msra.mxu0 %v3241
  %3446 = vmatpush.msra.mxu0 %v3233
  %3447 = vmatpush.msra.mxu0 %v3225
  %3448 = vmatpush.msra.mxu0 %v3217
  %3449 = vmatpush.msra.mxu0 %v3209
  %3450 = vmatpush.msra.mxu0 %v3201
  %3451 = vmatpush.msra.mxu0 %v3193
  %3452 = vmatpush.msra.mxu0 %v3185
  %3453 = vmatpush.msra.mxu0 %v3177
  %3454 = vmatmul.f32.gmra.mxu0 %v3169
  %v3455 = vpop.f32.mrf.mxu0
  %v3456 = vadd.f32 0.0, %v3455
  %3457 = vdwg.mxu0
  %s3458 = scalar_lea.vmem [#allocation4], 280
  %v3459 = vld [vmem:[%s3458] sm:$0xff]
  %v3460 = vadd.f32 %v3459, %v3456
  %3461 = vst [vmem:[%s3458] sm:$0xff] %v3460
  %v3462 = vld [vmem:[#allocation4] sm:$0xff]
  %v3463 = vadd.f32 %v3462, %v3316
  %3464 = vst [vmem:[#allocation4] sm:$0xff] %v3463
  %s3465 = scalar_lea.vmem [#allocation4], 40
  %v3466 = vld [vmem:[%s3465] sm:$0xff]
  %v3467 = vadd.f32 %v3466, %v3336
  %3468 = vst [vmem:[%s3465] sm:$0xff] %v3467
  %s3469 = scalar_lea.vmem [#allocation4], 80
  %v3470 = vld [vmem:[%s3469] sm:$0xff]
  %v3471 = vadd.f32 %v3470, %v3356
  %3472 = vst [vmem:[%s3469] sm:$0xff] %v3471
  %s3473 = scalar_lea.vmem [#allocation4], 120
  %v3474 = vld [vmem:[%s3473] sm:$0xff]
  %v3475 = vadd.f32 %v3474, %v3376
  %3476 = vst [vmem:[%s3473] sm:$0xff] %v3475
  %s3477 = scalar_lea.vmem [#allocation4], 160
  %v3478 = vld [vmem:[%s3477] sm:$0xff]
  %v3479 = vadd.f32 %v3478, %v3396
  %3480 = vst [vmem:[%s3477] sm:$0xff] %v3479
  %s3481 = scalar_lea.vmem [#allocation4], 200
  %v3482 = vld [vmem:[%s3481] sm:$0xff]
  %v3483 = vadd.f32 %v3482, %v3416
  %3484 = vst [vmem:[%s3481] sm:$0xff] %v3483
  %s3485 = scalar_lea.vmem [#allocation4], 240
  %v3486 = vld [vmem:[%s3485] sm:$0xff]
  %v3487 = vadd.f32 %v3486, %v3436
  %3488 = vst [vmem:[%s3485] sm:$0xff] %v3487
  %v3489 = vld [vmem:[%s3] sm:$0xff]
  %v3490 = vld [vmem:[%s3 + $0x8] sm:$0xff]
  %v3491 = vld [vmem:[%s3 + $0x10] sm:$0xff]
  %v3492 = vld [vmem:[%s3 + $0x18] sm:$0xff]
  %v3493 = vld [vmem:[%s3 + $0x20] sm:$0xff]
  %v3494 = vld [vmem:[%s3 + $0x28] sm:$0xff]
  %v3495 = vld [vmem:[%s3 + $0x30] sm:$0xff]
  %v3496 = vld [vmem:[%s3 + $0x38] sm:$0xff]
  %v3497 = vld [vmem:[%s3 + $0x40] sm:$0xff]
  %v3498 = vld [vmem:[%s3 + $0x48] sm:$0xff]
  %v3499 = vld [vmem:[%s3 + $0x50] sm:$0xff]
  %v3500 = vld [vmem:[%s3 + $0x58] sm:$0xff]
  %v3501 = vld [vmem:[%s3 + $0x60] sm:$0xff]
  %v3502 = vld [vmem:[%s3 + $0x68] sm:$0xff]
  %v3503 = vld [vmem:[%s3 + $0x70] sm:$0xff]
  %v3504 = vld [vmem:[%s3 + $0x78] sm:$0xff]
  %v3505 = vld [vmem:[%s3 + $0x80] sm:$0xff]
  %v3506 = vld [vmem:[%s3 + $0x88] sm:$0xff]
  %v3507 = vld [vmem:[%s3 + $0x90] sm:$0xff]
  %v3508 = vld [vmem:[%s3 + $0x98] sm:$0xff]
  %v3509 = vld [vmem:[%s3 + $0xa0] sm:$0xff]
  %v3510 = vld [vmem:[%s3 + $0xa8] sm:$0xff]
  %v3511 = vld [vmem:[%s3 + $0xb0] sm:$0xff]
  %v3512 = vld [vmem:[%s3 + $0xb8] sm:$0xff]
  %v3513 = vld [vmem:[%s3 + $0xc0] sm:$0xff]
  %v3514 = vld [vmem:[%s3 + $0xc8] sm:$0xff]
  %v3515 = vld [vmem:[%s3 + $0xd0] sm:$0xff]
  %v3516 = vld [vmem:[%s3 + $0xd8] sm:$0xff]
  %v3517 = vld [vmem:[%s3 + $0xe0] sm:$0xff]
  %v3518 = vld [vmem:[%s3 + $0xe8] sm:$0xff]
  %v3519 = vld [vmem:[%s3 + $0xf0] sm:$0xff]
  %v3520 = vld [vmem:[%s3 + $0xf8] sm:$0xff]
  %v3521 = vld [vmem:[%s3 + $0x100] sm:$0xff]
  %v3522 = vld [vmem:[%s3 + $0x108] sm:$0xff]
  %v3523 = vld [vmem:[%s3 + $0x110] sm:$0xff]
  %v3524 = vld [vmem:[%s3 + $0x118] sm:$0xff]
  %v3525 = vld [vmem:[%s3 + $0x120] sm:$0xff]
  %v3526 = vld [vmem:[%s3 + $0x128] sm:$0xff]
  %v3527 = vld [vmem:[%s3 + $0x130] sm:$0xff]
  %v3528 = vld [vmem:[%s3 + $0x138] sm:$0xff]
  %v3529 = vld [vmem:[%s3 + $0x140] sm:$0xff]
  %v3530 = vld [vmem:[%s3 + $0x148] sm:$0xff]
  %v3531 = vld [vmem:[%s3 + $0x150] sm:$0xff]
  %v3532 = vld [vmem:[%s3 + $0x158] sm:$0xff]
  %v3533 = vld [vmem:[%s3 + $0x160] sm:$0xff]
  %v3534 = vld [vmem:[%s3 + $0x168] sm:$0xff]
  %v3535 = vld [vmem:[%s3 + $0x170] sm:$0xff]
  %v3536 = vld [vmem:[%s3 + $0x178] sm:$0xff]
  %v3537 = vld [vmem:[%s3 + $0x180] sm:$0xff]
  %v3538 = vld [vmem:[%s3 + $0x188] sm:$0xff]
  %v3539 = vld [vmem:[%s3 + $0x190] sm:$0xff]
  %v3540 = vld [vmem:[%s3 + $0x198] sm:$0xff]
  %v3541 = vld [vmem:[%s3 + $0x1a0] sm:$0xff]
  %v3542 = vld [vmem:[%s3 + $0x1a8] sm:$0xff]
  %v3543 = vld [vmem:[%s3 + $0x1b0] sm:$0xff]
  %v3544 = vld [vmem:[%s3 + $0x1b8] sm:$0xff]
  %v3545 = vld [vmem:[%s3 + $0x1c0] sm:$0xff]
  %v3546 = vld [vmem:[%s3 + $0x1c8] sm:$0xff]
  %v3547 = vld [vmem:[%s3 + $0x1d0] sm:$0xff]
  %v3548 = vld [vmem:[%s3 + $0x1d8] sm:$0xff]
  %v3549 = vld [vmem:[%s3 + $0x1e0] sm:$0xff]
  %v3550 = vld [vmem:[%s3 + $0x1e8] sm:$0xff]
  %v3551 = vld [vmem:[%s3 + $0x1f0] sm:$0xff]
  %v3552 = vld [vmem:[%s3 + $0x1f8] sm:$0xff]
  %v3553 = vld [vmem:[%s3 + $0x200] sm:$0xff]
  %v3554 = vld [vmem:[%s3 + $0x208] sm:$0xff]
  %v3555 = vld [vmem:[%s3 + $0x210] sm:$0xff]
  %v3556 = vld [vmem:[%s3 + $0x218] sm:$0xff]
  %v3557 = vld [vmem:[%s3 + $0x220] sm:$0xff]
  %v3558 = vld [vmem:[%s3 + $0x228] sm:$0xff]
  %v3559 = vld [vmem:[%s3 + $0x230] sm:$0xff]
  %v3560 = vld [vmem:[%s3 + $0x238] sm:$0xff]
  %v3561 = vld [vmem:[%s3 + $0x240] sm:$0xff]
  %v3562 = vld [vmem:[%s3 + $0x248] sm:$0xff]
  %v3563 = vld [vmem:[%s3 + $0x250] sm:$0xff]
  %v3564 = vld [vmem:[%s3 + $0x258] sm:$0xff]
  %v3565 = vld [vmem:[%s3 + $0x260] sm:$0xff]
  %v3566 = vld [vmem:[%s3 + $0x268] sm:$0xff]
  %v3567 = vld [vmem:[%s3 + $0x270] sm:$0xff]
  %v3568 = vld [vmem:[%s3 + $0x278] sm:$0xff]
  %v3569 = vld [vmem:[%s3 + $0x280] sm:$0xff]
  %v3570 = vld [vmem:[%s3 + $0x288] sm:$0xff]
  %v3571 = vld [vmem:[%s3 + $0x290] sm:$0xff]
  %v3572 = vld [vmem:[%s3 + $0x298] sm:$0xff]
  %v3573 = vld [vmem:[%s3 + $0x2a0] sm:$0xff]
  %v3574 = vld [vmem:[%s3 + $0x2a8] sm:$0xff]
  %v3575 = vld [vmem:[%s3 + $0x2b0] sm:$0xff]
  %v3576 = vld [vmem:[%s3 + $0x2b8] sm:$0xff]
  %v3577 = vld [vmem:[%s3 + $0x2c0] sm:$0xff]
  %v3578 = vld [vmem:[%s3 + $0x2c8] sm:$0xff]
  %v3579 = vld [vmem:[%s3 + $0x2d0] sm:$0xff]
  %v3580 = vld [vmem:[%s3 + $0x2d8] sm:$0xff]
  %v3581 = vld [vmem:[%s3 + $0x2e0] sm:$0xff]
  %v3582 = vld [vmem:[%s3 + $0x2e8] sm:$0xff]
  %v3583 = vld [vmem:[%s3 + $0x2f0] sm:$0xff]
  %v3584 = vld [vmem:[%s3 + $0x2f8] sm:$0xff]
  %v3585 = vld [vmem:[%s3 + $0x300] sm:$0xff]
  %v3586 = vld [vmem:[%s3 + $0x308] sm:$0xff]
  %v3587 = vld [vmem:[%s3 + $0x310] sm:$0xff]
  %v3588 = vld [vmem:[%s3 + $0x318] sm:$0xff]
  %v3589 = vld [vmem:[%s3 + $0x320] sm:$0xff]
  %v3590 = vld [vmem:[%s3 + $0x328] sm:$0xff]
  %v3591 = vld [vmem:[%s3 + $0x330] sm:$0xff]
  %v3592 = vld [vmem:[%s3 + $0x338] sm:$0xff]
  %v3593 = vld [vmem:[%s3 + $0x340] sm:$0xff]
  %v3594 = vld [vmem:[%s3 + $0x348] sm:$0xff]
  %v3595 = vld [vmem:[%s3 + $0x350] sm:$0xff]
  %v3596 = vld [vmem:[%s3 + $0x358] sm:$0xff]
  %v3597 = vld [vmem:[%s3 + $0x360] sm:$0xff]
  %v3598 = vld [vmem:[%s3 + $0x368] sm:$0xff]
  %v3599 = vld [vmem:[%s3 + $0x370] sm:$0xff]
  %v3600 = vld [vmem:[%s3 + $0x378] sm:$0xff]
  %v3601 = vld [vmem:[%s3 + $0x380] sm:$0xff]
  %v3602 = vld [vmem:[%s3 + $0x388] sm:$0xff]
  %v3603 = vld [vmem:[%s3 + $0x390] sm:$0xff]
  %v3604 = vld [vmem:[%s3 + $0x398] sm:$0xff]
  %v3605 = vld [vmem:[%s3 + $0x3a0] sm:$0xff]
  %v3606 = vld [vmem:[%s3 + $0x3a8] sm:$0xff]
  %v3607 = vld [vmem:[%s3 + $0x3b0] sm:$0xff]
  %v3608 = vld [vmem:[%s3 + $0x3b8] sm:$0xff]
  %v3609 = vld [vmem:[%s3 + $0x3c0] sm:$0xff]
  %v3610 = vld [vmem:[%s3 + $0x3c8] sm:$0xff]
  %v3611 = vld [vmem:[%s3 + $0x3d0] sm:$0xff]
  %v3612 = vld [vmem:[%s3 + $0x3d8] sm:$0xff]
  %v3613 = vld [vmem:[%s3 + $0x3e0] sm:$0xff]
  %v3614 = vld [vmem:[%s3 + $0x3e8] sm:$0xff]
  %v3615 = vld [vmem:[%s3 + $0x3f0] sm:$0xff]
  %v3616 = vld [vmem:[%s3 + $0x3f8] sm:$0xff]
  %3617 = vmatpush.msra.mxu0 %v3609
  %3618 = vmatpush.msra.mxu0 %v3601
  %3619 = vmatpush.msra.mxu0 %v3593
  %3620 = vmatpush.msra.mxu0 %v3585
  %3621 = vmatpush.msra.mxu0 %v3577
  %3622 = vmatpush.msra.mxu0 %v3569
  %3623 = vmatpush.msra.mxu0 %v3561
  %3624 = vmatpush.msra.mxu0 %v3553
  %3625 = vmatpush.msra.mxu0 %v3545
  %3626 = vmatpush.msra.mxu0 %v3537
  %3627 = vmatpush.msra.mxu0 %v3529
  %3628 = vmatpush.msra.mxu0 %v3521
  %3629 = vmatpush.msra.mxu0 %v3513
  %3630 = vmatpush.msra.mxu0 %v3505
  %3631 = vmatpush.msra.mxu0 %v3497
  %3632 = vmatpush.msra.mxu0 %v3489
  %3633 = vmatmul.f32.gmra.mxu0 %v3460
  %v3634 = vpop.f32.mrf.mxu0
  %v3635 = vadd.f32 0.0, %v3634
  %3636 = vdwg.mxu0
  %3637 = vmatpush.msra.mxu0 %v3610
  %3638 = vmatpush.msra.mxu0 %v3602
  %3639 = vmatpush.msra.mxu0 %v3594
  %3640 = vmatpush.msra.mxu0 %v3586
  %3641 = vmatpush.msra.mxu0 %v3578
  %3642 = vmatpush.msra.mxu0 %v3570
  %3643 = vmatpush.msra.mxu0 %v3562
  %3644 = vmatpush.msra.mxu0 %v3554
  %3645 = vmatpush.msra.mxu0 %v3546
  %3646 = vmatpush.msra.mxu0 %v3538
  %3647 = vmatpush.msra.mxu0 %v3530
  %3648 = vmatpush.msra.mxu0 %v3522
  %3649 = vmatpush.msra.mxu0 %v3514
  %3650 = vmatpush.msra.mxu0 %v3506
  %3651 = vmatpush.msra.mxu0 %v3498
  %3652 = vmatpush.msra.mxu0 %v3490
  %3653 = vmatmul.f32.gmra.mxu0 %v3460
  %v3654 = vpop.f32.mrf.mxu0
  %v3655 = vadd.f32 0.0, %v3654
  %3656 = vdwg.mxu0
  %3657 = vmatpush.msra.mxu0 %v3611
  %3658 = vmatpush.msra.mxu0 %v3603
  %3659 = vmatpush.msra.mxu0 %v3595
  %3660 = vmatpush.msra.mxu0 %v3587
  %3661 = vmatpush.msra.mxu0 %v3579
  %3662 = vmatpush.msra.mxu0 %v3571
  %3663 = vmatpush.msra.mxu0 %v3563
  %3664 = vmatpush.msra.mxu0 %v3555
  %3665 = vmatpush.msra.mxu0 %v3547
  %3666 = vmatpush.msra.mxu0 %v3539
  %3667 = vmatpush.msra.mxu0 %v3531
  %3668 = vmatpush.msra.mxu0 %v3523
  %3669 = vmatpush.msra.mxu0 %v3515
  %3670 = vmatpush.msra.mxu0 %v3507
  %3671 = vmatpush.msra.mxu0 %v3499
  %3672 = vmatpush.msra.mxu0 %v3491
  %3673 = vmatmul.f32.gmra.mxu0 %v3460
  %v3674 = vpop.f32.mrf.mxu0
  %v3675 = vadd.f32 0.0, %v3674
  %3676 = vdwg.mxu0
  %3677 = vmatpush.msra.mxu0 %v3612
  %3678 = vmatpush.msra.mxu0 %v3604
  %3679 = vmatpush.msra.mxu0 %v3596
  %3680 = vmatpush.msra.mxu0 %v3588
  %3681 = vmatpush.msra.mxu0 %v3580
  %3682 = vmatpush.msra.mxu0 %v3572
  %3683 = vmatpush.msra.mxu0 %v3564
  %3684 = vmatpush.msra.mxu0 %v3556
  %3685 = vmatpush.msra.mxu0 %v3548
  %3686 = vmatpush.msra.mxu0 %v3540
  %3687 = vmatpush.msra.mxu0 %v3532
  %3688 = vmatpush.msra.mxu0 %v3524
  %3689 = vmatpush.msra.mxu0 %v3516
  %3690 = vmatpush.msra.mxu0 %v3508
  %3691 = vmatpush.msra.mxu0 %v3500
  %3692 = vmatpush.msra.mxu0 %v3492
  %3693 = vmatmul.f32.gmra.mxu0 %v3460
  %v3694 = vpop.f32.mrf.mxu0
  %v3695 = vadd.f32 0.0, %v3694
  %3696 = vdwg.mxu0
  %3697 = vmatpush.msra.mxu0 %v3613
  %3698 = vmatpush.msra.mxu0 %v3605
  %3699 = vmatpush.msra.mxu0 %v3597
  %3700 = vmatpush.msra.mxu0 %v3589
  %3701 = vmatpush.msra.mxu0 %v3581
  %3702 = vmatpush.msra.mxu0 %v3573
  %3703 = vmatpush.msra.mxu0 %v3565
  %3704 = vmatpush.msra.mxu0 %v3557
  %3705 = vmatpush.msra.mxu0 %v3549
  %3706 = vmatpush.msra.mxu0 %v3541
  %3707 = vmatpush.msra.mxu0 %v3533
  %3708 = vmatpush.msra.mxu0 %v3525
  %3709 = vmatpush.msra.mxu0 %v3517
  %3710 = vmatpush.msra.mxu0 %v3509
  %3711 = vmatpush.msra.mxu0 %v3501
  %3712 = vmatpush.msra.mxu0 %v3493
  %3713 = vmatmul.f32.gmra.mxu0 %v3460
  %v3714 = vpop.f32.mrf.mxu0
  %v3715 = vadd.f32 0.0, %v3714
  %3716 = vdwg.mxu0
  %3717 = vmatpush.msra.mxu0 %v3614
  %3718 = vmatpush.msra.mxu0 %v3606
  %3719 = vmatpush.msra.mxu0 %v3598
  %3720 = vmatpush.msra.mxu0 %v3590
  %3721 = vmatpush.msra.mxu0 %v3582
  %3722 = vmatpush.msra.mxu0 %v3574
  %3723 = vmatpush.msra.mxu0 %v3566
  %3724 = vmatpush.msra.mxu0 %v3558
  %3725 = vmatpush.msra.mxu0 %v3550
  %3726 = vmatpush.msra.mxu0 %v3542
  %3727 = vmatpush.msra.mxu0 %v3534
  %3728 = vmatpush.msra.mxu0 %v3526
  %3729 = vmatpush.msra.mxu0 %v3518
  %3730 = vmatpush.msra.mxu0 %v3510
  %3731 = vmatpush.msra.mxu0 %v3502
  %3732 = vmatpush.msra.mxu0 %v3494
  %3733 = vmatmul.f32.gmra.mxu0 %v3460
  %v3734 = vpop.f32.mrf.mxu0
  %v3735 = vadd.f32 0.0, %v3734
  %3736 = vdwg.mxu0
  %3737 = vmatpush.msra.mxu0 %v3615
  %3738 = vmatpush.msra.mxu0 %v3607
  %3739 = vmatpush.msra.mxu0 %v3599
  %3740 = vmatpush.msra.mxu0 %v3591
  %3741 = vmatpush.msra.mxu0 %v3583
  %3742 = vmatpush.msra.mxu0 %v3575
  %3743 = vmatpush.msra.mxu0 %v3567
  %3744 = vmatpush.msra.mxu0 %v3559
  %3745 = vmatpush.msra.mxu0 %v3551
  %3746 = vmatpush.msra.mxu0 %v3543
  %3747 = vmatpush.msra.mxu0 %v3535
  %3748 = vmatpush.msra.mxu0 %v3527
  %3749 = vmatpush.msra.mxu0 %v3519
  %3750 = vmatpush.msra.mxu0 %v3511
  %3751 = vmatpush.msra.mxu0 %v3503
  %3752 = vmatpush.msra.mxu0 %v3495
  %3753 = vmatmul.f32.gmra.mxu0 %v3460
  %v3754 = vpop.f32.mrf.mxu0
  %v3755 = vadd.f32 0.0, %v3754
  %3756 = vdwg.mxu0
  %3757 = vmatpush.msra.mxu0 %v3616
  %3758 = vmatpush.msra.mxu0 %v3608
  %3759 = vmatpush.msra.mxu0 %v3600
  %3760 = vmatpush.msra.mxu0 %v3592
  %3761 = vmatpush.msra.mxu0 %v3584
  %3762 = vmatpush.msra.mxu0 %v3576
  %3763 = vmatpush.msra.mxu0 %v3568
  %3764 = vmatpush.msra.mxu0 %v3560
  %3765 = vmatpush.msra.mxu0 %v3552
  %3766 = vmatpush.msra.mxu0 %v3544
  %3767 = vmatpush.msra.mxu0 %v3536
  %3768 = vmatpush.msra.mxu0 %v3528
  %3769 = vmatpush.msra.mxu0 %v3520
  %3770 = vmatpush.msra.mxu0 %v3512
  %3771 = vmatpush.msra.mxu0 %v3504
  %3772 = vmatpush.msra.mxu0 %v3496
  %3773 = vmatmul.f32.gmra.mxu0 %v3460
  %v3774 = vpop.f32.mrf.mxu0
  %v3775 = vadd.f32 0.0, %v3774
  %3776 = vdwg.mxu0
  %s3777 = scalar_lea.vmem [#allocation4], 288
  %v3778 = vld [vmem:[%s3777] sm:$0xff]
  %v3779 = vadd.f32 %v3778, %v3775
  %3780 = vst [vmem:[%s3777] sm:$0xff] %v3779
  %s3781 = scalar_lea.vmem [#allocation4], 8
  %v3782 = vld [vmem:[%s3781] sm:$0xff]
  %v3783 = vadd.f32 %v3782, %v3635
  %3784 = vst [vmem:[%s3781] sm:$0xff] %v3783
  %s3785 = scalar_lea.vmem [#allocation4], 48
  %v3786 = vld [vmem:[%s3785] sm:$0xff]
  %v3787 = vadd.f32 %v3786, %v3655
  %3788 = vst [vmem:[%s3785] sm:$0xff] %v3787
  %s3789 = scalar_lea.vmem [#allocation4], 88
  %v3790 = vld [vmem:[%s3789] sm:$0xff]
  %v3791 = vadd.f32 %v3790, %v3675
  %3792 = vst [vmem:[%s3789] sm:$0xff] %v3791
  %s3793 = scalar_lea.vmem [#allocation4], 128
  %v3794 = vld [vmem:[%s3793] sm:$0xff]
  %v3795 = vadd.f32 %v3794, %v3695
  %3796 = vst [vmem:[%s3793] sm:$0xff] %v3795
  %s3797 = scalar_lea.vmem [#allocation4], 168
  %v3798 = vld [vmem:[%s3797] sm:$0xff]
  %v3799 = vadd.f32 %v3798, %v3715
  %3800 = vst [vmem:[%s3797] sm:$0xff] %v3799
  %s3801 = scalar_lea.vmem [#allocation4], 208
  %v3802 = vld [vmem:[%s3801] sm:$0xff]
  %v3803 = vadd.f32 %v3802, %v3735
  %3804 = vst [vmem:[%s3801] sm:$0xff] %v3803
  %s3805 = scalar_lea.vmem [#allocation4], 248
  %v3806 = vld [vmem:[%s3805] sm:$0xff]
  %v3807 = vadd.f32 %v3806, %v3755
  %3808 = vst [vmem:[%s3805] sm:$0xff] %v3807
  %v3809 = vld [vmem:[%s3] sm:$0xff]
  %v3810 = vld [vmem:[%s3 + $0x8] sm:$0xff]
  %v3811 = vld [vmem:[%s3 + $0x10] sm:$0xff]
  %v3812 = vld [vmem:[%s3 + $0x18] sm:$0xff]
  %v3813 = vld [vmem:[%s3 + $0x20] sm:$0xff]
  %v3814 = vld [vmem:[%s3 + $0x28] sm:$0xff]
  %v3815 = vld [vmem:[%s3 + $0x30] sm:$0xff]
  %v3816 = vld [vmem:[%s3 + $0x38] sm:$0xff]
  %v3817 = vld [vmem:[%s3 + $0x40] sm:$0xff]
  %v3818 = vld [vmem:[%s3 + $0x48] sm:$0xff]
  %v3819 = vld [vmem:[%s3 + $0x50] sm:$0xff]
  %v3820 = vld [vmem:[%s3 + $0x58] sm:$0xff]
  %v3821 = vld [vmem:[%s3 + $0x60] sm:$0xff]
  %v3822 = vld [vmem:[%s3 + $0x68] sm:$0xff]
  %v3823 = vld [vmem:[%s3 + $0x70] sm:$0xff]
  %v3824 = vld [vmem:[%s3 + $0x78] sm:$0xff]
  %v3825 = vld [vmem:[%s3 + $0x80] sm:$0xff]
  %v3826 = vld [vmem:[%s3 + $0x88] sm:$0xff]
  %v3827 = vld [vmem:[%s3 + $0x90] sm:$0xff]
  %v3828 = vld [vmem:[%s3 + $0x98] sm:$0xff]
  %v3829 = vld [vmem:[%s3 + $0xa0] sm:$0xff]
  %v3830 = vld [vmem:[%s3 + $0xa8] sm:$0xff]
  %v3831 = vld [vmem:[%s3 + $0xb0] sm:$0xff]
  %v3832 = vld [vmem:[%s3 + $0xb8] sm:$0xff]
  %v3833 = vld [vmem:[%s3 + $0xc0] sm:$0xff]
  %v3834 = vld [vmem:[%s3 + $0xc8] sm:$0xff]
  %v3835 = vld [vmem:[%s3 + $0xd0] sm:$0xff]
  %v3836 = vld [vmem:[%s3 + $0xd8] sm:$0xff]
  %v3837 = vld [vmem:[%s3 + $0xe0] sm:$0xff]
  %v3838 = vld [vmem:[%s3 + $0xe8] sm:$0xff]
  %v3839 = vld [vmem:[%s3 + $0xf0] sm:$0xff]
  %v3840 = vld [vmem:[%s3 + $0xf8] sm:$0xff]
  %v3841 = vld [vmem:[%s3 + $0x100] sm:$0xff]
  %v3842 = vld [vmem:[%s3 + $0x108] sm:$0xff]
  %v3843 = vld [vmem:[%s3 + $0x110] sm:$0xff]
  %v3844 = vld [vmem:[%s3 + $0x118] sm:$0xff]
  %v3845 = vld [vmem:[%s3 + $0x120] sm:$0xff]
  %v3846 = vld [vmem:[%s3 + $0x128] sm:$0xff]
  %v3847 = vld [vmem:[%s3 + $0x130] sm:$0xff]
  %v3848 = vld [vmem:[%s3 + $0x138] sm:$0xff]
  %v3849 = vld [vmem:[%s3 + $0x140] sm:$0xff]
  %v3850 = vld [vmem:[%s3 + $0x148] sm:$0xff]
  %v3851 = vld [vmem:[%s3 + $0x150] sm:$0xff]
  %v3852 = vld [vmem:[%s3 + $0x158] sm:$0xff]
  %v3853 = vld [vmem:[%s3 + $0x160] sm:$0xff]
  %v3854 = vld [vmem:[%s3 + $0x168] sm:$0xff]
  %v3855 = vld [vmem:[%s3 + $0x170] sm:$0xff]
  %v3856 = vld [vmem:[%s3 + $0x178] sm:$0xff]
  %v3857 = vld [vmem:[%s3 + $0x180] sm:$0xff]
  %v3858 = vld [vmem:[%s3 + $0x188] sm:$0xff]
  %v3859 = vld [vmem:[%s3 + $0x190] sm:$0xff]
  %v3860 = vld [vmem:[%s3 + $0x198] sm:$0xff]
  %v3861 = vld [vmem:[%s3 + $0x1a0] sm:$0xff]
  %v3862 = vld [vmem:[%s3 + $0x1a8] sm:$0xff]
  %v3863 = vld [vmem:[%s3 + $0x1b0] sm:$0xff]
  %v3864 = vld [vmem:[%s3 + $0x1b8] sm:$0xff]
  %v3865 = vld [vmem:[%s3 + $0x1c0] sm:$0xff]
  %v3866 = vld [vmem:[%s3 + $0x1c8] sm:$0xff]
  %v3867 = vld [vmem:[%s3 + $0x1d0] sm:$0xff]
  %v3868 = vld [vmem:[%s3 + $0x1d8] sm:$0xff]
  %v3869 = vld [vmem:[%s3 + $0x1e0] sm:$0xff]
  %v3870 = vld [vmem:[%s3 + $0x1e8] sm:$0xff]
  %v3871 = vld [vmem:[%s3 + $0x1f0] sm:$0xff]
  %v3872 = vld [vmem:[%s3 + $0x1f8] sm:$0xff]
  %v3873 = vld [vmem:[%s3 + $0x200] sm:$0xff]
  %v3874 = vld [vmem:[%s3 + $0x208] sm:$0xff]
  %v3875 = vld [vmem:[%s3 + $0x210] sm:$0xff]
  %v3876 = vld [vmem:[%s3 + $0x218] sm:$0xff]
  %v3877 = vld [vmem:[%s3 + $0x220] sm:$0xff]
  %v3878 = vld [vmem:[%s3 + $0x228] sm:$0xff]
  %v3879 = vld [vmem:[%s3 + $0x230] sm:$0xff]
  %v3880 = vld [vmem:[%s3 + $0x238] sm:$0xff]
  %v3881 = vld [vmem:[%s3 + $0x240] sm:$0xff]
  %v3882 = vld [vmem:[%s3 + $0x248] sm:$0xff]
  %v3883 = vld [vmem:[%s3 + $0x250] sm:$0xff]
  %v3884 = vld [vmem:[%s3 + $0x258] sm:$0xff]
  %v3885 = vld [vmem:[%s3 + $0x260] sm:$0xff]
  %v3886 = vld [vmem:[%s3 + $0x268] sm:$0xff]
  %v3887 = vld [vmem:[%s3 + $0x270] sm:$0xff]
  %v3888 = vld [vmem:[%s3 + $0x278] sm:$0xff]
  %v3889 = vld [vmem:[%s3 + $0x280] sm:$0xff]
  %v3890 = vld [vmem:[%s3 + $0x288] sm:$0xff]
  %v3891 = vld [vmem:[%s3 + $0x290] sm:$0xff]
  %v3892 = vld [vmem:[%s3 + $0x298] sm:$0xff]
  %v3893 = vld [vmem:[%s3 + $0x2a0] sm:$0xff]
  %v3894 = vld [vmem:[%s3 + $0x2a8] sm:$0xff]
  %v3895 = vld [vmem:[%s3 + $0x2b0] sm:$0xff]
  %v3896 = vld [vmem:[%s3 + $0x2b8] sm:$0xff]
  %v3897 = vld [vmem:[%s3 + $0x2c0] sm:$0xff]
  %v3898 = vld [vmem:[%s3 + $0x2c8] sm:$0xff]
  %v3899 = vld [vmem:[%s3 + $0x2d0] sm:$0xff]
  %v3900 = vld [vmem:[%s3 + $0x2d8] sm:$0xff]
  %v3901 = vld [vmem:[%s3 + $0x2e0] sm:$0xff]
  %v3902 = vld [vmem:[%s3 + $0x2e8] sm:$0xff]
  %v3903 = vld [vmem:[%s3 + $0x2f0] sm:$0xff]
  %v3904 = vld [vmem:[%s3 + $0x2f8] sm:$0xff]
  %v3905 = vld [vmem:[%s3 + $0x300] sm:$0xff]
  %v3906 = vld [vmem:[%s3 + $0x308] sm:$0xff]
  %v3907 = vld [vmem:[%s3 + $0x310] sm:$0xff]
  %v3908 = vld [vmem:[%s3 + $0x318] sm:$0xff]
  %v3909 = vld [vmem:[%s3 + $0x320] sm:$0xff]
  %v3910 = vld [vmem:[%s3 + $0x328] sm:$0xff]
  %v3911 = vld [vmem:[%s3 + $0x330] sm:$0xff]
  %v3912 = vld [vmem:[%s3 + $0x338] sm:$0xff]
  %v3913 = vld [vmem:[%s3 + $0x340] sm:$0xff]
  %v3914 = vld [vmem:[%s3 + $0x348] sm:$0xff]
  %v3915 = vld [vmem:[%s3 + $0x350] sm:$0xff]
  %v3916 = vld [vmem:[%s3 + $0x358] sm:$0xff]
  %v3917 = vld [vmem:[%s3 + $0x360] sm:$0xff]
  %v3918 = vld [vmem:[%s3 + $0x368] sm:$0xff]
  %v3919 = vld [vmem:[%s3 + $0x370] sm:$0xff]
  %v3920 = vld [vmem:[%s3 + $0x378] sm:$0xff]
  %v3921 = vld [vmem:[%s3 + $0x380] sm:$0xff]
  %v3922 = vld [vmem:[%s3 + $0x388] sm:$0xff]
  %v3923 = vld [vmem:[%s3 + $0x390] sm:$0xff]
  %v3924 = vld [vmem:[%s3 + $0x398] sm:$0xff]
  %v3925 = vld [vmem:[%s3 + $0x3a0] sm:$0xff]
  %v3926 = vld [vmem:[%s3 + $0x3a8] sm:$0xff]
  %v3927 = vld [vmem:[%s3 + $0x3b0] sm:$0xff]
  %v3928 = vld [vmem:[%s3 + $0x3b8] sm:$0xff]
  %v3929 = vld [vmem:[%s3 + $0x3c0] sm:$0xff]
  %v3930 = vld [vmem:[%s3 + $0x3c8] sm:$0xff]
  %v3931 = vld [vmem:[%s3 + $0x3d0] sm:$0xff]
  %v3932 = vld [vmem:[%s3 + $0x3d8] sm:$0xff]
  %v3933 = vld [vmem:[%s3 + $0x3e0] sm:$0xff]
  %v3934 = vld [vmem:[%s3 + $0x3e8] sm:$0xff]
  %v3935 = vld [vmem:[%s3 + $0x3f0] sm:$0xff]
  %v3936 = vld [vmem:[%s3 + $0x3f8] sm:$0xff]
  %3937 = vmatpush.msra.mxu0 %v3929
  %3938 = vmatpush.msra.mxu0 %v3921
  %3939 = vmatpush.msra.mxu0 %v3913
  %3940 = vmatpush.msra.mxu0 %v3905
  %3941 = vmatpush.msra.mxu0 %v3897
  %3942 = vmatpush.msra.mxu0 %v3889
  %3943 = vmatpush.msra.mxu0 %v3881
  %3944 = vmatpush.msra.mxu0 %v3873
  %3945 = vmatpush.msra.mxu0 %v3865
  %3946 = vmatpush.msra.mxu0 %v3857
  %3947 = vmatpush.msra.mxu0 %v3849
  %3948 = vmatpush.msra.mxu0 %v3841
  %3949 = vmatpush.msra.mxu0 %v3833
  %3950 = vmatpush.msra.mxu0 %v3825
  %3951 = vmatpush.msra.mxu0 %v3817
  %3952 = vmatpush.msra.mxu0 %v3809
  %3953 = vmatmul.f32.gmra.mxu0 %v3779
  %v3954 = vpop.f32.mrf.mxu0
  %v3955 = vadd.f32 0.0, %v3954
  %3956 = vdwg.mxu0
  %3957 = vmatpush.msra.mxu0 %v3930
  %3958 = vmatpush.msra.mxu0 %v3922
  %3959 = vmatpush.msra.mxu0 %v3914
  %3960 = vmatpush.msra.mxu0 %v3906
  %3961 = vmatpush.msra.mxu0 %v3898
  %3962 = vmatpush.msra.mxu0 %v3890
  %3963 = vmatpush.msra.mxu0 %v3882
  %3964 = vmatpush.msra.mxu0 %v3874
  %3965 = vmatpush.msra.mxu0 %v3866
  %3966 = vmatpush.msra.mxu0 %v3858
  %3967 = vmatpush.msra.mxu0 %v3850
  %3968 = vmatpush.msra.mxu0 %v3842
  %3969 = vmatpush.msra.mxu0 %v3834
  %3970 = vmatpush.msra.mxu0 %v3826
  %3971 = vmatpush.msra.mxu0 %v3818
  %3972 = vmatpush.msra.mxu0 %v3810
  %3973 = vmatmul.f32.gmra.mxu0 %v3779
  %v3974 = vpop.f32.mrf.mxu0
  %v3975 = vadd.f32 0.0, %v3974
  %3976 = vdwg.mxu0
  %3977 = vmatpush.msra.mxu0 %v3931
  %3978 = vmatpush.msra.mxu0 %v3923
  %3979 = vmatpush.msra.mxu0 %v3915
  %3980 = vmatpush.msra.mxu0 %v3907
  %3981 = vmatpush.msra.mxu0 %v3899
  %3982 = vmatpush.msra.mxu0 %v3891
  %3983 = vmatpush.msra.mxu0 %v3883
  %3984 = vmatpush.msra.mxu0 %v3875
  %3985 = vmatpush.msra.mxu0 %v3867
  %3986 = vmatpush.msra.mxu0 %v3859
  %3987 = vmatpush.msra.mxu0 %v3851
  %3988 = vmatpush.msra.mxu0 %v3843
  %3989 = vmatpush.msra.mxu0 %v3835
  %3990 = vmatpush.msra.mxu0 %v3827
  %3991 = vmatpush.msra.mxu0 %v3819
  %3992 = vmatpush.msra.mxu0 %v3811
  %3993 = vmatmul.f32.gmra.mxu0 %v3779
  %v3994 = vpop.f32.mrf.mxu0
  %v3995 = vadd.f32 0.0, %v3994
  %3996 = vdwg.mxu0
  %3997 = vmatpush.msra.mxu0 %v3932
  %3998 = vmatpush.msra.mxu0 %v3924
  %3999 = vmatpush.msra.mxu0 %v3916
  %4000 = vmatpush.msra.mxu0 %v3908
  %4001 = vmatpush.msra.mxu0 %v3900
  %4002 = vmatpush.msra.mxu0 %v3892
  %4003 = vmatpush.msra.mxu0 %v3884
  %4004 = vmatpush.msra.mxu0 %v3876
  %4005 = vmatpush.msra.mxu0 %v3868
  %4006 = vmatpush.msra.mxu0 %v3860
  %4007 = vmatpush.msra.mxu0 %v3852
  %4008 = vmatpush.msra.mxu0 %v3844
  %4009 = vmatpush.msra.mxu0 %v3836
  %4010 = vmatpush.msra.mxu0 %v3828
  %4011 = vmatpush.msra.mxu0 %v3820
  %4012 = vmatpush.msra.mxu0 %v3812
  %4013 = vmatmul.f32.gmra.mxu0 %v3779
  %v4014 = vpop.f32.mrf.mxu0
  %v4015 = vadd.f32 0.0, %v4014
  %4016 = vdwg.mxu0
  %4017 = vmatpush.msra.mxu0 %v3933
  %4018 = vmatpush.msra.mxu0 %v3925
  %4019 = vmatpush.msra.mxu0 %v3917
  %4020 = vmatpush.msra.mxu0 %v3909
  %4021 = vmatpush.msra.mxu0 %v3901
  %4022 = vmatpush.msra.mxu0 %v3893
  %4023 = vmatpush.msra.mxu0 %v3885
  %4024 = vmatpush.msra.mxu0 %v3877
  %4025 = vmatpush.msra.mxu0 %v3869
  %4026 = vmatpush.msra.mxu0 %v3861
  %4027 = vmatpush.msra.mxu0 %v3853
  %4028 = vmatpush.msra.mxu0 %v3845
  %4029 = vmatpush.msra.mxu0 %v3837
  %4030 = vmatpush.msra.mxu0 %v3829
  %4031 = vmatpush.msra.mxu0 %v3821
  %4032 = vmatpush.msra.mxu0 %v3813
  %4033 = vmatmul.f32.gmra.mxu0 %v3779
  %v4034 = vpop.f32.mrf.mxu0
  %v4035 = vadd.f32 0.0, %v4034
  %4036 = vdwg.mxu0
  %4037 = vmatpush.msra.mxu0 %v3934
  %4038 = vmatpush.msra.mxu0 %v3926
  %4039 = vmatpush.msra.mxu0 %v3918
  %4040 = vmatpush.msra.mxu0 %v3910
  %4041 = vmatpush.msra.mxu0 %v3902
  %4042 = vmatpush.msra.mxu0 %v3894
  %4043 = vmatpush.msra.mxu0 %v3886
  %4044 = vmatpush.msra.mxu0 %v3878
  %4045 = vmatpush.msra.mxu0 %v3870
  %4046 = vmatpush.msra.mxu0 %v3862
  %4047 = vmatpush.msra.mxu0 %v3854
  %4048 = vmatpush.msra.mxu0 %v3846
  %4049 = vmatpush.msra.mxu0 %v3838
  %4050 = vmatpush.msra.mxu0 %v3830
  %4051 = vmatpush.msra.mxu0 %v3822
  %4052 = vmatpush.msra.mxu0 %v3814
  %4053 = vmatmul.f32.gmra.mxu0 %v3779
  %v4054 = vpop.f32.mrf.mxu0
  %v4055 = vadd.f32 0.0, %v4054
  %4056 = vdwg.mxu0
  %4057 = vmatpush.msra.mxu0 %v3935
  %4058 = vmatpush.msra.mxu0 %v3927
  %4059 = vmatpush.msra.mxu0 %v3919
  %4060 = vmatpush.msra.mxu0 %v3911
  %4061 = vmatpush.msra.mxu0 %v3903
  %4062 = vmatpush.msra.mxu0 %v3895
  %4063 = vmatpush.msra.mxu0 %v3887
  %4064 = vmatpush.msra.mxu0 %v3879
  %4065 = vmatpush.msra.mxu0 %v3871
  %4066 = vmatpush.msra.mxu0 %v3863
  %4067 = vmatpush.msra.mxu0 %v3855
  %4068 = vmatpush.msra.mxu0 %v3847
  %4069 = vmatpush.msra.mxu0 %v3839
  %4070 = vmatpush.msra.mxu0 %v3831
  %4071 = vmatpush.msra.mxu0 %v3823
  %4072 = vmatpush.msra.mxu0 %v3815
  %4073 = vmatmul.f32.gmra.mxu0 %v3779
  %v4074 = vpop.f32.mrf.mxu0
  %v4075 = vadd.f32 0.0, %v4074
  %4076 = vdwg.mxu0
  %4077 = vmatpush.msra.mxu0 %v3936
  %4078 = vmatpush.msra.mxu0 %v3928
  %4079 = vmatpush.msra.mxu0 %v3920
  %4080 = vmatpush.msra.mxu0 %v3912
  %4081 = vmatpush.msra.mxu0 %v3904
  %4082 = vmatpush.msra.mxu0 %v3896
  %4083 = vmatpush.msra.mxu0 %v3888
  %4084 = vmatpush.msra.mxu0 %v3880
  %4085 = vmatpush.msra.mxu0 %v3872
  %4086 = vmatpush.msra.mxu0 %v3864
  %4087 = vmatpush.msra.mxu0 %v3856
  %4088 = vmatpush.msra.mxu0 %v3848
  %4089 = vmatpush.msra.mxu0 %v3840
  %4090 = vmatpush.msra.mxu0 %v3832
  %4091 = vmatpush.msra.mxu0 %v3824
  %4092 = vmatpush.msra.mxu0 %v3816
  %4093 = vmatmul.f32.gmra.mxu0 %v3779
  %v4094 = vpop.f32.mrf.mxu0
  %v4095 = vadd.f32 0.0, %v4094
  %4096 = vdwg.mxu0
  %s4097 = scalar_lea.vmem [#allocation4], 296
  %v4098 = vld [vmem:[%s4097] sm:$0xff]
  %v4099 = vadd.f32 %v4098, %v4095
  %4100 = vst [vmem:[%s4097] sm:$0xff] %v4099
  %s4101 = scalar_lea.vmem [#allocation4], 16
  %v4102 = vld [vmem:[%s4101] sm:$0xff]
  %v4103 = vadd.f32 %v4102, %v3955
  %4104 = vst [vmem:[%s4101] sm:$0xff] %v4103
  %s4105 = scalar_lea.vmem [#allocation4], 56
  %v4106 = vld [vmem:[%s4105] sm:$0xff]
  %v4107 = vadd.f32 %v4106, %v3975
  %4108 = vst [vmem:[%s4105] sm:$0xff] %v4107
  %s4109 = scalar_lea.vmem [#allocation4], 96
  %v4110 = vld [vmem:[%s4109] sm:$0xff]
  %v4111 = vadd.f32 %v4110, %v3995
  %4112 = vst [vmem:[%s4109] sm:$0xff] %v4111
  %s4113 = scalar_lea.vmem [#allocation4], 136
  %v4114 = vld [vmem:[%s4113] sm:$0xff]
  %v4115 = vadd.f32 %v4114, %v4015
  %4116 = vst [vmem:[%s4113] sm:$0xff] %v4115
  %s4117 = scalar_lea.vmem [#allocation4], 176
  %v4118 = vld [vmem:[%s4117] sm:$0xff]
  %v4119 = vadd.f32 %v4118, %v4035
  %4120 = vst [vmem:[%s4117] sm:$0xff] %v4119
  %s4121 = scalar_lea.vmem [#allocation4], 216
  %v4122 = vld [vmem:[%s4121] sm:$0xff]
  %v4123 = vadd.f32 %v4122, %v4055
  %4124 = vst [vmem:[%s4121] sm:$0xff] %v4123
  %s4125 = scalar_lea.vmem [#allocation4], 256
  %v4126 = vld [vmem:[%s4125] sm:$0xff]
  %v4127 = vadd.f32 %v4126, %v4075
  %4128 = vst [vmem:[%s4125] sm:$0xff] %v4127
  %v4129 = vld [vmem:[%s3] sm:$0xff]
  %v4130 = vld [vmem:[%s3 + $0x8] sm:$0xff]
  %v4131 = vld [vmem:[%s3 + $0x10] sm:$0xff]
  %v4132 = vld [vmem:[%s3 + $0x18] sm:$0xff]
  %v4133 = vld [vmem:[%s3 + $0x20] sm:$0xff]
  %v4134 = vld [vmem:[%s3 + $0x28] sm:$0xff]
  %v4135 = vld [vmem:[%s3 + $0x30] sm:$0xff]
  %v4136 = vld [vmem:[%s3 + $0x38] sm:$0xff]
  %v4137 = vld [vmem:[%s3 + $0x40] sm:$0xff]
  %v4138 = vld [vmem:[%s3 + $0x48] sm:$0xff]
  %v4139 = vld [vmem:[%s3 + $0x50] sm:$0xff]
  %v4140 = vld [vmem:[%s3 + $0x58] sm:$0xff]
  %v4141 = vld [vmem:[%s3 + $0x60] sm:$0xff]
  %v4142 = vld [vmem:[%s3 + $0x68] sm:$0xff]
  %v4143 = vld [vmem:[%s3 + $0x70] sm:$0xff]
  %v4144 = vld [vmem:[%s3 + $0x78] sm:$0xff]
  %v4145 = vld [vmem:[%s3 + $0x80] sm:$0xff]
  %v4146 = vld [vmem:[%s3 + $0x88] sm:$0xff]
  %v4147 = vld [vmem:[%s3 + $0x90] sm:$0xff]
  %v4148 = vld [vmem:[%s3 + $0x98] sm:$0xff]
  %v4149 = vld [vmem:[%s3 + $0xa0] sm:$0xff]
  %v4150 = vld [vmem:[%s3 + $0xa8] sm:$0xff]
  %v4151 = vld [vmem:[%s3 + $0xb0] sm:$0xff]
  %v4152 = vld [vmem:[%s3 + $0xb8] sm:$0xff]
  %v4153 = vld [vmem:[%s3 + $0xc0] sm:$0xff]
  %v4154 = vld [vmem:[%s3 + $0xc8] sm:$0xff]
  %v4155 = vld [vmem:[%s3 + $0xd0] sm:$0xff]
  %v4156 = vld [vmem:[%s3 + $0xd8] sm:$0xff]
  %v4157 = vld [vmem:[%s3 + $0xe0] sm:$0xff]
  %v4158 = vld [vmem:[%s3 + $0xe8] sm:$0xff]
  %v4159 = vld [vmem:[%s3 + $0xf0] sm:$0xff]
  %v4160 = vld [vmem:[%s3 + $0xf8] sm:$0xff]
  %v4161 = vld [vmem:[%s3 + $0x100] sm:$0xff]
  %v4162 = vld [vmem:[%s3 + $0x108] sm:$0xff]
  %v4163 = vld [vmem:[%s3 + $0x110] sm:$0xff]
  %v4164 = vld [vmem:[%s3 + $0x118] sm:$0xff]
  %v4165 = vld [vmem:[%s3 + $0x120] sm:$0xff]
  %v4166 = vld [vmem:[%s3 + $0x128] sm:$0xff]
  %v4167 = vld [vmem:[%s3 + $0x130] sm:$0xff]
  %v4168 = vld [vmem:[%s3 + $0x138] sm:$0xff]
  %v4169 = vld [vmem:[%s3 + $0x140] sm:$0xff]
  %v4170 = vld [vmem:[%s3 + $0x148] sm:$0xff]
  %v4171 = vld [vmem:[%s3 + $0x150] sm:$0xff]
  %v4172 = vld [vmem:[%s3 + $0x158] sm:$0xff]
  %v4173 = vld [vmem:[%s3 + $0x160] sm:$0xff]
  %v4174 = vld [vmem:[%s3 + $0x168] sm:$0xff]
  %v4175 = vld [vmem:[%s3 + $0x170] sm:$0xff]
  %v4176 = vld [vmem:[%s3 + $0x178] sm:$0xff]
  %v4177 = vld [vmem:[%s3 + $0x180] sm:$0xff]
  %v4178 = vld [vmem:[%s3 + $0x188] sm:$0xff]
  %v4179 = vld [vmem:[%s3 + $0x190] sm:$0xff]
  %v4180 = vld [vmem:[%s3 + $0x198] sm:$0xff]
  %v4181 = vld [vmem:[%s3 + $0x1a0] sm:$0xff]
  %v4182 = vld [vmem:[%s3 + $0x1a8] sm:$0xff]
  %v4183 = vld [vmem:[%s3 + $0x1b0] sm:$0xff]
  %v4184 = vld [vmem:[%s3 + $0x1b8] sm:$0xff]
  %v4185 = vld [vmem:[%s3 + $0x1c0] sm:$0xff]
  %v4186 = vld [vmem:[%s3 + $0x1c8] sm:$0xff]
  %v4187 = vld [vmem:[%s3 + $0x1d0] sm:$0xff]
  %v4188 = vld [vmem:[%s3 + $0x1d8] sm:$0xff]
  %v4189 = vld [vmem:[%s3 + $0x1e0] sm:$0xff]
  %v4190 = vld [vmem:[%s3 + $0x1e8] sm:$0xff]
  %v4191 = vld [vmem:[%s3 + $0x1f0] sm:$0xff]
  %v4192 = vld [vmem:[%s3 + $0x1f8] sm:$0xff]
  %v4193 = vld [vmem:[%s3 + $0x200] sm:$0xff]
  %v4194 = vld [vmem:[%s3 + $0x208] sm:$0xff]
  %v4195 = vld [vmem:[%s3 + $0x210] sm:$0xff]
  %v4196 = vld [vmem:[%s3 + $0x218] sm:$0xff]
  %v4197 = vld [vmem:[%s3 + $0x220] sm:$0xff]
  %v4198 = vld [vmem:[%s3 + $0x228] sm:$0xff]
  %v4199 = vld [vmem:[%s3 + $0x230] sm:$0xff]
  %v4200 = vld [vmem:[%s3 + $0x238] sm:$0xff]
  %v4201 = vld [vmem:[%s3 + $0x240] sm:$0xff]
  %v4202 = vld [vmem:[%s3 + $0x248] sm:$0xff]
  %v4203 = vld [vmem:[%s3 + $0x250] sm:$0xff]
  %v4204 = vld [vmem:[%s3 + $0x258] sm:$0xff]
  %v4205 = vld [vmem:[%s3 + $0x260] sm:$0xff]
  %v4206 = vld [vmem:[%s3 + $0x268] sm:$0xff]
  %v4207 = vld [vmem:[%s3 + $0x270] sm:$0xff]
  %v4208 = vld [vmem:[%s3 + $0x278] sm:$0xff]
  %v4209 = vld [vmem:[%s3 + $0x280] sm:$0xff]
  %v4210 = vld [vmem:[%s3 + $0x288] sm:$0xff]
  %v4211 = vld [vmem:[%s3 + $0x290] sm:$0xff]
  %v4212 = vld [vmem:[%s3 + $0x298] sm:$0xff]
  %v4213 = vld [vmem:[%s3 + $0x2a0] sm:$0xff]
  %v4214 = vld [vmem:[%s3 + $0x2a8] sm:$0xff]
  %v4215 = vld [vmem:[%s3 + $0x2b0] sm:$0xff]
  %v4216 = vld [vmem:[%s3 + $0x2b8] sm:$0xff]
  %v4217 = vld [vmem:[%s3 + $0x2c0] sm:$0xff]
  %v4218 = vld [vmem:[%s3 + $0x2c8] sm:$0xff]
  %v4219 = vld [vmem:[%s3 + $0x2d0] sm:$0xff]
  %v4220 = vld [vmem:[%s3 + $0x2d8] sm:$0xff]
  %v4221 = vld [vmem:[%s3 + $0x2e0] sm:$0xff]
  %v4222 = vld [vmem:[%s3 + $0x2e8] sm:$0xff]
  %v4223 = vld [vmem:[%s3 + $0x2f0] sm:$0xff]
  %v4224 = vld [vmem:[%s3 + $0x2f8] sm:$0xff]
  %v4225 = vld [vmem:[%s3 + $0x300] sm:$0xff]
  %v4226 = vld [vmem:[%s3 + $0x308] sm:$0xff]
  %v4227 = vld [vmem:[%s3 + $0x310] sm:$0xff]
  %v4228 = vld [vmem:[%s3 + $0x318] sm:$0xff]
  %v4229 = vld [vmem:[%s3 + $0x320] sm:$0xff]
  %v4230 = vld [vmem:[%s3 + $0x328] sm:$0xff]
  %v4231 = vld [vmem:[%s3 + $0x330] sm:$0xff]
  %v4232 = vld [vmem:[%s3 + $0x338] sm:$0xff]
  %v4233 = vld [vmem:[%s3 + $0x340] sm:$0xff]
  %v4234 = vld [vmem:[%s3 + $0x348] sm:$0xff]
  %v4235 = vld [vmem:[%s3 + $0x350] sm:$0xff]
  %v4236 = vld [vmem:[%s3 + $0x358] sm:$0xff]
  %v4237 = vld [vmem:[%s3 + $0x360] sm:$0xff]
  %v4238 = vld [vmem:[%s3 + $0x368] sm:$0xff]
  %v4239 = vld [vmem:[%s3 + $0x370] sm:$0xff]
  %v4240 = vld [vmem:[%s3 + $0x378] sm:$0xff]
  %v4241 = vld [vmem:[%s3 + $0x380] sm:$0xff]
  %v4242 = vld [vmem:[%s3 + $0x388] sm:$0xff]
  %v4243 = vld [vmem:[%s3 + $0x390] sm:$0xff]
  %v4244 = vld [vmem:[%s3 + $0x398] sm:$0xff]
  %v4245 = vld [vmem:[%s3 + $0x3a0] sm:$0xff]
  %v4246 = vld [vmem:[%s3 + $0x3a8] sm:$0xff]
  %v4247 = vld [vmem:[%s3 + $0x3b0] sm:$0xff]
  %v4248 = vld [vmem:[%s3 + $0x3b8] sm:$0xff]
  %v4249 = vld [vmem:[%s3 + $0x3c0] sm:$0xff]
  %v4250 = vld [vmem:[%s3 + $0x3c8] sm:$0xff]
  %v4251 = vld [vmem:[%s3 + $0x3d0] sm:$0xff]
  %v4252 = vld [vmem:[%s3 + $0x3d8] sm:$0xff]
  %v4253 = vld [vmem:[%s3 + $0x3e0] sm:$0xff]
  %v4254 = vld [vmem:[%s3 + $0x3e8] sm:$0xff]
  %v4255 = vld [vmem:[%s3 + $0x3f0] sm:$0xff]
  %v4256 = vld [vmem:[%s3 + $0x3f8] sm:$0xff]
  %4257 = vmatpush.msra.mxu0 %v4249
  %4258 = vmatpush.msra.mxu0 %v4241
  %4259 = vmatpush.msra.mxu0 %v4233
  %4260 = vmatpush.msra.mxu0 %v4225
  %4261 = vmatpush.msra.mxu0 %v4217
  %4262 = vmatpush.msra.mxu0 %v4209
  %4263 = vmatpush.msra.mxu0 %v4201
  %4264 = vmatpush.msra.mxu0 %v4193
  %4265 = vmatpush.msra.mxu0 %v4185
  %4266 = vmatpush.msra.mxu0 %v4177
  %4267 = vmatpush.msra.mxu0 %v4169
  %4268 = vmatpush.msra.mxu0 %v4161
  %4269 = vmatpush.msra.mxu0 %v4153
  %4270 = vmatpush.msra.mxu0 %v4145
  %4271 = vmatpush.msra.mxu0 %v4137
  %4272 = vmatpush.msra.mxu0 %v4129
  %4273 = vmatmul.f32.gmra.mxu0 %v4099
  %v4274 = vpop.f32.mrf.mxu0
  %v4275 = vadd.f32 0.0, %v4274
  %4276 = vdwg.mxu0
  %4277 = vmatpush.msra.mxu0 %v4250
  %4278 = vmatpush.msra.mxu0 %v4242
  %4279 = vmatpush.msra.mxu0 %v4234
  %4280 = vmatpush.msra.mxu0 %v4226
  %4281 = vmatpush.msra.mxu0 %v4218
  %4282 = vmatpush.msra.mxu0 %v4210
  %4283 = vmatpush.msra.mxu0 %v4202
  %4284 = vmatpush.msra.mxu0 %v4194
  %4285 = vmatpush.msra.mxu0 %v4186
  %4286 = vmatpush.msra.mxu0 %v4178
  %4287 = vmatpush.msra.mxu0 %v4170
  %4288 = vmatpush.msra.mxu0 %v4162
  %4289 = vmatpush.msra.mxu0 %v4154
  %4290 = vmatpush.msra.mxu0 %v4146
  %4291 = vmatpush.msra.mxu0 %v4138
  %4292 = vmatpush.msra.mxu0 %v4130
  %4293 = vmatmul.f32.gmra.mxu0 %v4099
  %v4294 = vpop.f32.mrf.mxu0
  %v4295 = vadd.f32 0.0, %v4294
  %4296 = vdwg.mxu0
  %4297 = vmatpush.msra.mxu0 %v4251
  %4298 = vmatpush.msra.mxu0 %v4243
  %4299 = vmatpush.msra.mxu0 %v4235
  %4300 = vmatpush.msra.mxu0 %v4227
  %4301 = vmatpush.msra.mxu0 %v4219
  %4302 = vmatpush.msra.mxu0 %v4211
  %4303 = vmatpush.msra.mxu0 %v4203
  %4304 = vmatpush.msra.mxu0 %v4195
  %4305 = vmatpush.msra.mxu0 %v4187
  %4306 = vmatpush.msra.mxu0 %v4179
  %4307 = vmatpush.msra.mxu0 %v4171
  %4308 = vmatpush.msra.mxu0 %v4163
  %4309 = vmatpush.msra.mxu0 %v4155
  %4310 = vmatpush.msra.mxu0 %v4147
  %4311 = vmatpush.msra.mxu0 %v4139
  %4312 = vmatpush.msra.mxu0 %v4131
  %4313 = vmatmul.f32.gmra.mxu0 %v4099
  %v4314 = vpop.f32.mrf.mxu0
  %v4315 = vadd.f32 0.0, %v4314
  %4316 = vdwg.mxu0
  %4317 = vmatpush.msra.mxu0 %v4252
  %4318 = vmatpush.msra.mxu0 %v4244
  %4319 = vmatpush.msra.mxu0 %v4236
  %4320 = vmatpush.msra.mxu0 %v4228
  %4321 = vmatpush.msra.mxu0 %v4220
  %4322 = vmatpush.msra.mxu0 %v4212
  %4323 = vmatpush.msra.mxu0 %v4204
  %4324 = vmatpush.msra.mxu0 %v4196
  %4325 = vmatpush.msra.mxu0 %v4188
  %4326 = vmatpush.msra.mxu0 %v4180
  %4327 = vmatpush.msra.mxu0 %v4172
  %4328 = vmatpush.msra.mxu0 %v4164
  %4329 = vmatpush.msra.mxu0 %v4156
  %4330 = vmatpush.msra.mxu0 %v4148
  %4331 = vmatpush.msra.mxu0 %v4140
  %4332 = vmatpush.msra.mxu0 %v4132
  %4333 = vmatmul.f32.gmra.mxu0 %v4099
  %v4334 = vpop.f32.mrf.mxu0
  %v4335 = vadd.f32 0.0, %v4334
  %4336 = vdwg.mxu0
  %4337 = vmatpush.msra.mxu0 %v4253
  %4338 = vmatpush.msra.mxu0 %v4245
  %4339 = vmatpush.msra.mxu0 %v4237
  %4340 = vmatpush.msra.mxu0 %v4229
  %4341 = vmatpush.msra.mxu0 %v4221
  %4342 = vmatpush.msra.mxu0 %v4213
  %4343 = vmatpush.msra.mxu0 %v4205
  %4344 = vmatpush.msra.mxu0 %v4197
  %4345 = vmatpush.msra.mxu0 %v4189
  %4346 = vmatpush.msra.mxu0 %v4181
  %4347 = vmatpush.msra.mxu0 %v4173
  %4348 = vmatpush.msra.mxu0 %v4165
  %4349 = vmatpush.msra.mxu0 %v4157
  %4350 = vmatpush.msra.mxu0 %v4149
  %4351 = vmatpush.msra.mxu0 %v4141
  %4352 = vmatpush.msra.mxu0 %v4133
  %4353 = vmatmul.f32.gmra.mxu0 %v4099
  %v4354 = vpop.f32.mrf.mxu0
  %v4355 = vadd.f32 0.0, %v4354
  %4356 = vdwg.mxu0
  %4357 = vmatpush.msra.mxu0 %v4254
  %4358 = vmatpush.msra.mxu0 %v4246
  %4359 = vmatpush.msra.mxu0 %v4238
  %4360 = vmatpush.msra.mxu0 %v4230
  %4361 = vmatpush.msra.mxu0 %v4222
  %4362 = vmatpush.msra.mxu0 %v4214
  %4363 = vmatpush.msra.mxu0 %v4206
  %4364 = vmatpush.msra.mxu0 %v4198
  %4365 = vmatpush.msra.mxu0 %v4190
  %4366 = vmatpush.msra.mxu0 %v4182
  %4367 = vmatpush.msra.mxu0 %v4174
  %4368 = vmatpush.msra.mxu0 %v4166
  %4369 = vmatpush.msra.mxu0 %v4158
  %4370 = vmatpush.msra.mxu0 %v4150
  %4371 = vmatpush.msra.mxu0 %v4142
  %4372 = vmatpush.msra.mxu0 %v4134
  %4373 = vmatmul.f32.gmra.mxu0 %v4099
  %v4374 = vpop.f32.mrf.mxu0
  %v4375 = vadd.f32 0.0, %v4374
  %4376 = vdwg.mxu0
  %4377 = vmatpush.msra.mxu0 %v4255
  %4378 = vmatpush.msra.mxu0 %v4247
  %4379 = vmatpush.msra.mxu0 %v4239
  %4380 = vmatpush.msra.mxu0 %v4231
  %4381 = vmatpush.msra.mxu0 %v4223
  %4382 = vmatpush.msra.mxu0 %v4215
  %4383 = vmatpush.msra.mxu0 %v4207
  %4384 = vmatpush.msra.mxu0 %v4199
  %4385 = vmatpush.msra.mxu0 %v4191
  %4386 = vmatpush.msra.mxu0 %v4183
  %4387 = vmatpush.msra.mxu0 %v4175
  %4388 = vmatpush.msra.mxu0 %v4167
  %4389 = vmatpush.msra.mxu0 %v4159
  %4390 = vmatpush.msra.mxu0 %v4151
  %4391 = vmatpush.msra.mxu0 %v4143
  %4392 = vmatpush.msra.mxu0 %v4135
  %4393 = vmatmul.f32.gmra.mxu0 %v4099
  %v4394 = vpop.f32.mrf.mxu0
  %v4395 = vadd.f32 0.0, %v4394
  %4396 = vdwg.mxu0
  %4397 = vmatpush.msra.mxu0 %v4256
  %4398 = vmatpush.msra.mxu0 %v4248
  %4399 = vmatpush.msra.mxu0 %v4240
  %4400 = vmatpush.msra.mxu0 %v4232
  %4401 = vmatpush.msra.mxu0 %v4224
  %4402 = vmatpush.msra.mxu0 %v4216
  %4403 = vmatpush.msra.mxu0 %v4208
  %4404 = vmatpush.msra.mxu0 %v4200
  %4405 = vmatpush.msra.mxu0 %v4192
  %4406 = vmatpush.msra.mxu0 %v4184
  %4407 = vmatpush.msra.mxu0 %v4176
  %4408 = vmatpush.msra.mxu0 %v4168
  %4409 = vmatpush.msra.mxu0 %v4160
  %4410 = vmatpush.msra.mxu0 %v4152
  %4411 = vmatpush.msra.mxu0 %v4144
  %4412 = vmatpush.msra.mxu0 %v4136
  %4413 = vmatmul.f32.gmra.mxu0 %v4099
  %v4414 = vpop.f32.mrf.mxu0
  %v4415 = vadd.f32 0.0, %v4414
  %4416 = vdwg.mxu0
  %s4417 = scalar_lea.vmem [#allocation4], 304
  %v4418 = vld [vmem:[%s4417] sm:$0xff]
  %v4419 = vadd.f32 %v4418, %v4415
  %4420 = vst [vmem:[%s4417] sm:$0xff] %v4419
  %s4421 = scalar_lea.vmem [#allocation4], 24
  %v4422 = vld [vmem:[%s4421] sm:$0xff]
  %v4423 = vadd.f32 %v4422, %v4275
  %4424 = vst [vmem:[%s4421] sm:$0xff] %v4423
  %s4425 = scalar_lea.vmem [#allocation4], 64
  %v4426 = vld [vmem:[%s4425] sm:$0xff]
  %v4427 = vadd.f32 %v4426, %v4295
  %4428 = vst [vmem:[%s4425] sm:$0xff] %v4427
  %s4429 = scalar_lea.vmem [#allocation4], 104
  %v4430 = vld [vmem:[%s4429] sm:$0xff]
  %v4431 = vadd.f32 %v4430, %v4315
  %4432 = vst [vmem:[%s4429] sm:$0xff] %v4431
  %s4433 = scalar_lea.vmem [#allocation4], 144
  %v4434 = vld [vmem:[%s4433] sm:$0xff]
  %v4435 = vadd.f32 %v4434, %v4335
  %4436 = vst [vmem:[%s4433] sm:$0xff] %v4435
  %s4437 = scalar_lea.vmem [#allocation4], 184
  %v4438 = vld [vmem:[%s4437] sm:$0xff]
  %v4439 = vadd.f32 %v4438, %v4355
  %4440 = vst [vmem:[%s4437] sm:$0xff] %v4439
  %s4441 = scalar_lea.vmem [#allocation4], 224
  %v4442 = vld [vmem:[%s4441] sm:$0xff]
  %v4443 = vadd.f32 %v4442, %v4375
  %4444 = vst [vmem:[%s4441] sm:$0xff] %v4443
  %s4445 = scalar_lea.vmem [#allocation4], 264
  %v4446 = vld [vmem:[%s4445] sm:$0xff]
  %v4447 = vadd.f32 %v4446, %v4395
  %4448 = vst [vmem:[%s4445] sm:$0xff] %v4447
  %v4449 = vld [vmem:[%s3] sm:$0xff]
  %v4450 = vld [vmem:[%s3 + $0x8] sm:$0xff]
  %v4451 = vld [vmem:[%s3 + $0x10] sm:$0xff]
  %v4452 = vld [vmem:[%s3 + $0x18] sm:$0xff]
  %v4453 = vld [vmem:[%s3 + $0x20] sm:$0xff]
  %v4454 = vld [vmem:[%s3 + $0x28] sm:$0xff]
  %v4455 = vld [vmem:[%s3 + $0x30] sm:$0xff]
  %v4456 = vld [vmem:[%s3 + $0x38] sm:$0xff]
  %v4457 = vld [vmem:[%s3 + $0x40] sm:$0xff]
  %v4458 = vld [vmem:[%s3 + $0x48] sm:$0xff]
  %v4459 = vld [vmem:[%s3 + $0x50] sm:$0xff]
  %v4460 = vld [vmem:[%s3 + $0x58] sm:$0xff]
  %v4461 = vld [vmem:[%s3 + $0x60] sm:$0xff]
  %v4462 = vld [vmem:[%s3 + $0x68] sm:$0xff]
  %v4463 = vld [vmem:[%s3 + $0x70] sm:$0xff]
  %v4464 = vld [vmem:[%s3 + $0x78] sm:$0xff]
  %v4465 = vld [vmem:[%s3 + $0x80] sm:$0xff]
  %v4466 = vld [vmem:[%s3 + $0x88] sm:$0xff]
  %v4467 = vld [vmem:[%s3 + $0x90] sm:$0xff]
  %v4468 = vld [vmem:[%s3 + $0x98] sm:$0xff]
  %v4469 = vld [vmem:[%s3 + $0xa0] sm:$0xff]
  %v4470 = vld [vmem:[%s3 + $0xa8] sm:$0xff]
  %v4471 = vld [vmem:[%s3 + $0xb0] sm:$0xff]
  %v4472 = vld [vmem:[%s3 + $0xb8] sm:$0xff]
  %v4473 = vld [vmem:[%s3 + $0xc0] sm:$0xff]
  %v4474 = vld [vmem:[%s3 + $0xc8] sm:$0xff]
  %v4475 = vld [vmem:[%s3 + $0xd0] sm:$0xff]
  %v4476 = vld [vmem:[%s3 + $0xd8] sm:$0xff]
  %v4477 = vld [vmem:[%s3 + $0xe0] sm:$0xff]
  %v4478 = vld [vmem:[%s3 + $0xe8] sm:$0xff]
  %v4479 = vld [vmem:[%s3 + $0xf0] sm:$0xff]
  %v4480 = vld [vmem:[%s3 + $0xf8] sm:$0xff]
  %v4481 = vld [vmem:[%s3 + $0x100] sm:$0xff]
  %v4482 = vld [vmem:[%s3 + $0x108] sm:$0xff]
  %v4483 = vld [vmem:[%s3 + $0x110] sm:$0xff]
  %v4484 = vld [vmem:[%s3 + $0x118] sm:$0xff]
  %v4485 = vld [vmem:[%s3 + $0x120] sm:$0xff]
  %v4486 = vld [vmem:[%s3 + $0x128] sm:$0xff]
  %v4487 = vld [vmem:[%s3 + $0x130] sm:$0xff]
  %v4488 = vld [vmem:[%s3 + $0x138] sm:$0xff]
  %v4489 = vld [vmem:[%s3 + $0x140] sm:$0xff]
  %v4490 = vld [vmem:[%s3 + $0x148] sm:$0xff]
  %v4491 = vld [vmem:[%s3 + $0x150] sm:$0xff]
  %v4492 = vld [vmem:[%s3 + $0x158] sm:$0xff]
  %v4493 = vld [vmem:[%s3 + $0x160] sm:$0xff]
  %v4494 = vld [vmem:[%s3 + $0x168] sm:$0xff]
  %v4495 = vld [vmem:[%s3 + $0x170] sm:$0xff]
  %v4496 = vld [vmem:[%s3 + $0x178] sm:$0xff]
  %v4497 = vld [vmem:[%s3 + $0x180] sm:$0xff]
  %v4498 = vld [vmem:[%s3 + $0x188] sm:$0xff]
  %v4499 = vld [vmem:[%s3 + $0x190] sm:$0xff]
  %v4500 = vld [vmem:[%s3 + $0x198] sm:$0xff]
  %v4501 = vld [vmem:[%s3 + $0x1a0] sm:$0xff]
  %v4502 = vld [vmem:[%s3 + $0x1a8] sm:$0xff]
  %v4503 = vld [vmem:[%s3 + $0x1b0] sm:$0xff]
  %v4504 = vld [vmem:[%s3 + $0x1b8] sm:$0xff]
  %v4505 = vld [vmem:[%s3 + $0x1c0] sm:$0xff]
  %v4506 = vld [vmem:[%s3 + $0x1c8] sm:$0xff]
  %v4507 = vld [vmem:[%s3 + $0x1d0] sm:$0xff]
  %v4508 = vld [vmem:[%s3 + $0x1d8] sm:$0xff]
  %v4509 = vld [vmem:[%s3 + $0x1e0] sm:$0xff]
  %v4510 = vld [vmem:[%s3 + $0x1e8] sm:$0xff]
  %v4511 = vld [vmem:[%s3 + $0x1f0] sm:$0xff]
  %v4512 = vld [vmem:[%s3 + $0x1f8] sm:$0xff]
  %v4513 = vld [vmem:[%s3 + $0x200] sm:$0xff]
  %v4514 = vld [vmem:[%s3 + $0x208] sm:$0xff]
  %v4515 = vld [vmem:[%s3 + $0x210] sm:$0xff]
  %v4516 = vld [vmem:[%s3 + $0x218] sm:$0xff]
  %v4517 = vld [vmem:[%s3 + $0x220] sm:$0xff]
  %v4518 = vld [vmem:[%s3 + $0x228] sm:$0xff]
  %v4519 = vld [vmem:[%s3 + $0x230] sm:$0xff]
  %v4520 = vld [vmem:[%s3 + $0x238] sm:$0xff]
  %v4521 = vld [vmem:[%s3 + $0x240] sm:$0xff]
  %v4522 = vld [vmem:[%s3 + $0x248] sm:$0xff]
  %v4523 = vld [vmem:[%s3 + $0x250] sm:$0xff]
  %v4524 = vld [vmem:[%s3 + $0x258] sm:$0xff]
  %v4525 = vld [vmem:[%s3 + $0x260] sm:$0xff]
  %v4526 = vld [vmem:[%s3 + $0x268] sm:$0xff]
  %v4527 = vld [vmem:[%s3 + $0x270] sm:$0xff]
  %v4528 = vld [vmem:[%s3 + $0x278] sm:$0xff]
  %v4529 = vld [vmem:[%s3 + $0x280] sm:$0xff]
  %v4530 = vld [vmem:[%s3 + $0x288] sm:$0xff]
  %v4531 = vld [vmem:[%s3 + $0x290] sm:$0xff]
  %v4532 = vld [vmem:[%s3 + $0x298] sm:$0xff]
  %v4533 = vld [vmem:[%s3 + $0x2a0] sm:$0xff]
  %v4534 = vld [vmem:[%s3 + $0x2a8] sm:$0xff]
  %v4535 = vld [vmem:[%s3 + $0x2b0] sm:$0xff]
  %v4536 = vld [vmem:[%s3 + $0x2b8] sm:$0xff]
  %v4537 = vld [vmem:[%s3 + $0x2c0] sm:$0xff]
  %v4538 = vld [vmem:[%s3 + $0x2c8] sm:$0xff]
  %v4539 = vld [vmem:[%s3 + $0x2d0] sm:$0xff]
  %v4540 = vld [vmem:[%s3 + $0x2d8] sm:$0xff]
  %v4541 = vld [vmem:[%s3 + $0x2e0] sm:$0xff]
  %v4542 = vld [vmem:[%s3 + $0x2e8] sm:$0xff]
  %v4543 = vld [vmem:[%s3 + $0x2f0] sm:$0xff]
  %v4544 = vld [vmem:[%s3 + $0x2f8] sm:$0xff]
  %v4545 = vld [vmem:[%s3 + $0x300] sm:$0xff]
  %v4546 = vld [vmem:[%s3 + $0x308] sm:$0xff]
  %v4547 = vld [vmem:[%s3 + $0x310] sm:$0xff]
  %v4548 = vld [vmem:[%s3 + $0x318] sm:$0xff]
  %v4549 = vld [vmem:[%s3 + $0x320] sm:$0xff]
  %v4550 = vld [vmem:[%s3 + $0x328] sm:$0xff]
  %v4551 = vld [vmem:[%s3 + $0x330] sm:$0xff]
  %v4552 = vld [vmem:[%s3 + $0x338] sm:$0xff]
  %v4553 = vld [vmem:[%s3 + $0x340] sm:$0xff]
  %v4554 = vld [vmem:[%s3 + $0x348] sm:$0xff]
  %v4555 = vld [vmem:[%s3 + $0x350] sm:$0xff]
  %v4556 = vld [vmem:[%s3 + $0x358] sm:$0xff]
  %v4557 = vld [vmem:[%s3 + $0x360] sm:$0xff]
  %v4558 = vld [vmem:[%s3 + $0x368] sm:$0xff]
  %v4559 = vld [vmem:[%s3 + $0x370] sm:$0xff]
  %v4560 = vld [vmem:[%s3 + $0x378] sm:$0xff]
  %v4561 = vld [vmem:[%s3 + $0x380] sm:$0xff]
  %v4562 = vld [vmem:[%s3 + $0x388] sm:$0xff]
  %v4563 = vld [vmem:[%s3 + $0x390] sm:$0xff]
  %v4564 = vld [vmem:[%s3 + $0x398] sm:$0xff]
  %v4565 = vld [vmem:[%s3 + $0x3a0] sm:$0xff]
  %v4566 = vld [vmem:[%s3 + $0x3a8] sm:$0xff]
  %v4567 = vld [vmem:[%s3 + $0x3b0] sm:$0xff]
  %v4568 = vld [vmem:[%s3 + $0x3b8] sm:$0xff]
  %v4569 = vld [vmem:[%s3 + $0x3c0] sm:$0xff]
  %v4570 = vld [vmem:[%s3 + $0x3c8] sm:$0xff]
  %v4571 = vld [vmem:[%s3 + $0x3d0] sm:$0xff]
  %v4572 = vld [vmem:[%s3 + $0x3d8] sm:$0xff]
  %v4573 = vld [vmem:[%s3 + $0x3e0] sm:$0xff]
  %v4574 = vld [vmem:[%s3 + $0x3e8] sm:$0xff]
  %v4575 = vld [vmem:[%s3 + $0x3f0] sm:$0xff]
  %v4576 = vld [vmem:[%s3 + $0x3f8] sm:$0xff]
  %4577 = vmatpush.msra.mxu0 %v4569
  %4578 = vmatpush.msra.mxu0 %v4561
  %4579 = vmatpush.msra.mxu0 %v4553
  %4580 = vmatpush.msra.mxu0 %v4545
  %4581 = vmatpush.msra.mxu0 %v4537
  %4582 = vmatpush.msra.mxu0 %v4529
  %4583 = vmatpush.msra.mxu0 %v4521
  %4584 = vmatpush.msra.mxu0 %v4513
  %4585 = vmatpush.msra.mxu0 %v4505
  %4586 = vmatpush.msra.mxu0 %v4497
  %4587 = vmatpush.msra.mxu0 %v4489
  %4588 = vmatpush.msra.mxu0 %v4481
  %4589 = vmatpush.msra.mxu0 %v4473
  %4590 = vmatpush.msra.mxu0 %v4465
  %4591 = vmatpush.msra.mxu0 %v4457
  %4592 = vmatpush.msra.mxu0 %v4449
  %4593 = vmatmul.f32.gmra.mxu0 %v4419
  %v4594 = vpop.f32.mrf.mxu0
  %v4595 = vadd.f32 0.0, %v4594
  %4596 = vdwg.mxu0
  %4597 = vmatpush.msra.mxu0 %v4570
  %4598 = vmatpush.msra.mxu0 %v4562
  %4599 = vmatpush.msra.mxu0 %v4554
  %4600 = vmatpush.msra.mxu0 %v4546
  %4601 = vmatpush.msra.mxu0 %v4538
  %4602 = vmatpush.msra.mxu0 %v4530
  %4603 = vmatpush.msra.mxu0 %v4522
  %4604 = vmatpush.msra.mxu0 %v4514
  %4605 = vmatpush.msra.mxu0 %v4506
  %4606 = vmatpush.msra.mxu0 %v4498
  %4607 = vmatpush.msra.mxu0 %v4490
  %4608 = vmatpush.msra.mxu0 %v4482
  %4609 = vmatpush.msra.mxu0 %v4474
  %4610 = vmatpush.msra.mxu0 %v4466
  %4611 = vmatpush.msra.mxu0 %v4458
  %4612 = vmatpush.msra.mxu0 %v4450
  %4613 = vmatmul.f32.gmra.mxu0 %v4419
  %v4614 = vpop.f32.mrf.mxu0
  %v4615 = vadd.f32 0.0, %v4614
  %4616 = vdwg.mxu0
  %4617 = vmatpush.msra.mxu0 %v4571
  %4618 = vmatpush.msra.mxu0 %v4563
  %4619 = vmatpush.msra.mxu0 %v4555
  %4620 = vmatpush.msra.mxu0 %v4547
  %4621 = vmatpush.msra.mxu0 %v4539
  %4622 = vmatpush.msra.mxu0 %v4531
  %4623 = vmatpush.msra.mxu0 %v4523
  %4624 = vmatpush.msra.mxu0 %v4515
  %4625 = vmatpush.msra.mxu0 %v4507
  %4626 = vmatpush.msra.mxu0 %v4499
  %4627 = vmatpush.msra.mxu0 %v4491
  %4628 = vmatpush.msra.mxu0 %v4483
  %4629 = vmatpush.msra.mxu0 %v4475
  %4630 = vmatpush.msra.mxu0 %v4467
  %4631 = vmatpush.msra.mxu0 %v4459
  %4632 = vmatpush.msra.mxu0 %v4451
  %4633 = vmatmul.f32.gmra.mxu0 %v4419
  %v4634 = vpop.f32.mrf.mxu0
  %v4635 = vadd.f32 0.0, %v4634
  %4636 = vdwg.mxu0
  %4637 = vmatpush.msra.mxu0 %v4572
  %4638 = vmatpush.msra.mxu0 %v4564
  %4639 = vmatpush.msra.mxu0 %v4556
  %4640 = vmatpush.msra.mxu0 %v4548
  %4641 = vmatpush.msra.mxu0 %v4540
  %4642 = vmatpush.msra.mxu0 %v4532
  %4643 = vmatpush.msra.mxu0 %v4524
  %4644 = vmatpush.msra.mxu0 %v4516
  %4645 = vmatpush.msra.mxu0 %v4508
  %4646 = vmatpush.msra.mxu0 %v4500
  %4647 = vmatpush.msra.mxu0 %v4492
  %4648 = vmatpush.msra.mxu0 %v4484
  %4649 = vmatpush.msra.mxu0 %v4476
  %4650 = vmatpush.msra.mxu0 %v4468
  %4651 = vmatpush.msra.mxu0 %v4460
  %4652 = vmatpush.msra.mxu0 %v4452
  %4653 = vmatmul.f32.gmra.mxu0 %v4419
  %v4654 = vpop.f32.mrf.mxu0
  %v4655 = vadd.f32 0.0, %v4654
  %4656 = vdwg.mxu0
  %4657 = vmatpush.msra.mxu0 %v4573
  %4658 = vmatpush.msra.mxu0 %v4565
  %4659 = vmatpush.msra.mxu0 %v4557
  %4660 = vmatpush.msra.mxu0 %v4549
  %4661 = vmatpush.msra.mxu0 %v4541
  %4662 = vmatpush.msra.mxu0 %v4533
  %4663 = vmatpush.msra.mxu0 %v4525
  %4664 = vmatpush.msra.mxu0 %v4517
  %4665 = vmatpush.msra.mxu0 %v4509
  %4666 = vmatpush.msra.mxu0 %v4501
  %4667 = vmatpush.msra.mxu0 %v4493
  %4668 = vmatpush.msra.mxu0 %v4485
  %4669 = vmatpush.msra.mxu0 %v4477
  %4670 = vmatpush.msra.mxu0 %v4469
  %4671 = vmatpush.msra.mxu0 %v4461
  %4672 = vmatpush.msra.mxu0 %v4453
  %4673 = vmatmul.f32.gmra.mxu0 %v4419
  %v4674 = vpop.f32.mrf.mxu0
  %v4675 = vadd.f32 0.0, %v4674
  %4676 = vdwg.mxu0
  %4677 = vmatpush.msra.mxu0 %v4574
  %4678 = vmatpush.msra.mxu0 %v4566
  %4679 = vmatpush.msra.mxu0 %v4558
  %4680 = vmatpush.msra.mxu0 %v4550
  %4681 = vmatpush.msra.mxu0 %v4542
  %4682 = vmatpush.msra.mxu0 %v4534
  %4683 = vmatpush.msra.mxu0 %v4526
  %4684 = vmatpush.msra.mxu0 %v4518
  %4685 = vmatpush.msra.mxu0 %v4510
  %4686 = vmatpush.msra.mxu0 %v4502
  %4687 = vmatpush.msra.mxu0 %v4494
  %4688 = vmatpush.msra.mxu0 %v4486
  %4689 = vmatpush.msra.mxu0 %v4478
  %4690 = vmatpush.msra.mxu0 %v4470
  %4691 = vmatpush.msra.mxu0 %v4462
  %4692 = vmatpush.msra.mxu0 %v4454
  %4693 = vmatmul.f32.gmra.mxu0 %v4419
  %v4694 = vpop.f32.mrf.mxu0
  %v4695 = vadd.f32 0.0, %v4694
  %4696 = vdwg.mxu0
  %4697 = vmatpush.msra.mxu0 %v4575
  %4698 = vmatpush.msra.mxu0 %v4567
  %4699 = vmatpush.msra.mxu0 %v4559
  %4700 = vmatpush.msra.mxu0 %v4551
  %4701 = vmatpush.msra.mxu0 %v4543
  %4702 = vmatpush.msra.mxu0 %v4535
  %4703 = vmatpush.msra.mxu0 %v4527
  %4704 = vmatpush.msra.mxu0 %v4519
  %4705 = vmatpush.msra.mxu0 %v4511
  %4706 = vmatpush.msra.mxu0 %v4503
  %4707 = vmatpush.msra.mxu0 %v4495
  %4708 = vmatpush.msra.mxu0 %v4487
  %4709 = vmatpush.msra.mxu0 %v4479
  %4710 = vmatpush.msra.mxu0 %v4471
  %4711 = vmatpush.msra.mxu0 %v4463
  %4712 = vmatpush.msra.mxu0 %v4455
  %4713 = vmatmul.f32.gmra.mxu0 %v4419
  %v4714 = vpop.f32.mrf.mxu0
  %v4715 = vadd.f32 0.0, %v4714
  %4716 = vdwg.mxu0
  %4717 = vmatpush.msra.mxu0 %v4576
  %4718 = vmatpush.msra.mxu0 %v4568
  %4719 = vmatpush.msra.mxu0 %v4560
  %4720 = vmatpush.msra.mxu0 %v4552
  %4721 = vmatpush.msra.mxu0 %v4544
  %4722 = vmatpush.msra.mxu0 %v4536
  %4723 = vmatpush.msra.mxu0 %v4528
  %4724 = vmatpush.msra.mxu0 %v4520
  %4725 = vmatpush.msra.mxu0 %v4512
  %4726 = vmatpush.msra.mxu0 %v4504
  %4727 = vmatpush.msra.mxu0 %v4496
  %4728 = vmatpush.msra.mxu0 %v4488
  %4729 = vmatpush.msra.mxu0 %v4480
  %4730 = vmatpush.msra.mxu0 %v4472
  %4731 = vmatpush.msra.mxu0 %v4464
  %4732 = vmatpush.msra.mxu0 %v4456
  %4733 = vmatmul.f32.gmra.mxu0 %v4419
  %v4734 = vpop.f32.mrf.mxu0
  %v4735 = vadd.f32 0.0, %v4734
  %4736 = vdwg.mxu0
  %s4737 = scalar_lea.vmem [#allocation4], 312
  %v4738 = vld [vmem:[%s4737] sm:$0xff]
  %v4739 = vadd.f32 %v4738, %v4735
  %4740 = vst [vmem:[%s4737] sm:$0xff] %v4739
  %s4741 = scalar_lea.vmem [#allocation4], 32
  %v4742 = vld [vmem:[%s4741] sm:$0xff]
  %v4743 = vadd.f32 %v4742, %v4595
  %4744 = vst [vmem:[%s4741] sm:$0xff] %v4743
  %s4745 = scalar_lea.vmem [#allocation4], 72
  %v4746 = vld [vmem:[%s4745] sm:$0xff]
  %v4747 = vadd.f32 %v4746, %v4615
  %4748 = vst [vmem:[%s4745] sm:$0xff] %v4747
  %s4749 = scalar_lea.vmem [#allocation4], 112
  %v4750 = vld [vmem:[%s4749] sm:$0xff]
  %v4751 = vadd.f32 %v4750, %v4635
  %4752 = vst [vmem:[%s4749] sm:$0xff] %v4751
  %s4753 = scalar_lea.vmem [#allocation4], 152
  %v4754 = vld [vmem:[%s4753] sm:$0xff]
  %v4755 = vadd.f32 %v4754, %v4655
  %4756 = vst [vmem:[%s4753] sm:$0xff] %v4755
  %s4757 = scalar_lea.vmem [#allocation4], 192
  %v4758 = vld [vmem:[%s4757] sm:$0xff]
  %v4759 = vadd.f32 %v4758, %v4675
  %4760 = vst [vmem:[%s4757] sm:$0xff] %v4759
  %s4761 = scalar_lea.vmem [#allocation4], 232
  %v4762 = vld [vmem:[%s4761] sm:$0xff]
  %v4763 = vadd.f32 %v4762, %v4695
  %4764 = vst [vmem:[%s4761] sm:$0xff] %v4763
  %s4765 = scalar_lea.vmem [#allocation4], 272
  %v4766 = vld [vmem:[%s4765] sm:$0xff]
  %v4767 = vadd.f32 %v4766, %v4715
  %4768 = vst [vmem:[%s4765] sm:$0xff] %v4767
  %4769 = vst [vmem:[%s3168] sm:$0xff] %v4739
  %v4770 = vld [vmem:[#allocation4] sm:$0xff]
  %v4771 = vld [vmem:[#allocation4 + $0x8] sm:$0xff]
  %v4772 = vld [vmem:[#allocation4 + $0x10] sm:$0xff]
  %v4773 = vld [vmem:[#allocation4 + $0x18] sm:$0xff]
  %v4774 = vld [vmem:[#allocation4 + $0x20] sm:$0xff]
  %v4775 = vld [vmem:[#allocation4 + $0x28] sm:$0xff]
  %v4776 = vld [vmem:[#allocation4 + $0x30] sm:$0xff]
  %v4777 = vld [vmem:[#allocation4 + $0x38] sm:$0xff]
  %v4778 = vld [vmem:[#allocation4 + $0x40] sm:$0xff]
  %v4779 = vld [vmem:[#allocation4 + $0x48] sm:$0xff]
  %v4780 = vld [vmem:[#allocation4 + $0x50] sm:$0xff]
  %v4781 = vld [vmem:[#allocation4 + $0x58] sm:$0xff]
  %v4782 = vld [vmem:[#allocation4 + $0x60] sm:$0xff]
  %v4783 = vld [vmem:[#allocation4 + $0x68] sm:$0xff]
  %v4784 = vld [vmem:[#allocation4 + $0x70] sm:$0xff]
  %v4785 = vld [vmem:[#allocation4 + $0x78] sm:$0xff]
  %v4786 = vld [vmem:[#allocation4 + $0x80] sm:$0xff]
  %v4787 = vld [vmem:[#allocation4 + $0x88] sm:$0xff]
  %v4788 = vld [vmem:[#allocation4 + $0x90] sm:$0xff]
  %v4789 = vld [vmem:[#allocation4 + $0x98] sm:$0xff]
  %v4790 = vld [vmem:[#allocation4 + $0xa0] sm:$0xff]
  %v4791 = vld [vmem:[#allocation4 + $0xa8] sm:$0xff]
  %v4792 = vld [vmem:[#allocation4 + $0xb0] sm:$0xff]
  %v4793 = vld [vmem:[#allocation4 + $0xb8] sm:$0xff]
  %v4794 = vld [vmem:[#allocation4 + $0xc0] sm:$0xff]
  %v4795 = vld [vmem:[#allocation4 + $0xc8] sm:$0xff]
  %v4796 = vld [vmem:[#allocation4 + $0xd0] sm:$0xff]
  %v4797 = vld [vmem:[#allocation4 + $0xd8] sm:$0xff]
  %v4798 = vld [vmem:[#allocation4 + $0xe0] sm:$0xff]
  %v4799 = vld [vmem:[#allocation4 + $0xe8] sm:$0xff]
  %v4800 = vld [vmem:[#allocation4 + $0xf0] sm:$0xff]
  %v4801 = vld [vmem:[#allocation4 + $0xf8] sm:$0xff]
  %v4802 = vld [vmem:[#allocation4 + $0x100] sm:$0xff]
  %v4803 = vld [vmem:[#allocation4 + $0x108] sm:$0xff]
  %v4804 = vld [vmem:[#allocation4 + $0x110] sm:$0xff]
  %v4805 = vld [vmem:[#allocation4 + $0x118] sm:$0xff]
  %v4806 = vld [vmem:[#allocation4 + $0x120] sm:$0xff]
  %v4807 = vld [vmem:[#allocation4 + $0x128] sm:$0xff]
  %v4808 = vld [vmem:[#allocation4 + $0x130] sm:$0xff]
  %v4809 = vld [vmem:[#allocation4 + $0x138] sm:$0xff]
  %v4810 = vld [vmem:[%s6] sm:$0xff]
  %v4811 = vld [vmem:[%s6 + $0x8] sm:$0xff]
  %v4812 = vld [vmem:[%s6 + $0x10] sm:$0xff]
  %v4813 = vld [vmem:[%s6 + $0x18] sm:$0xff]
  %v4814 = vld [vmem:[%s6 + $0x20] sm:$0xff]
  %v4815 = vld [vmem:[%s6 + $0x28] sm:$0xff]
  %v4816 = vld [vmem:[%s6 + $0x30] sm:$0xff]
  %v4817 = vld [vmem:[%s6 + $0x38] sm:$0xff]
  %v4818 = vld [vmem:[%s6 + $0x40] sm:$0xff]
  %v4819 = vld [vmem:[%s6 + $0x48] sm:$0xff]
  %v4820 = vld [vmem:[%s6 + $0x50] sm:$0xff]
  %v4821 = vld [vmem:[%s6 + $0x58] sm:$0xff]
  %v4822 = vld [vmem:[%s6 + $0x60] sm:$0xff]
  %v4823 = vld [vmem:[%s6 + $0x68] sm:$0xff]
  %v4824 = vld [vmem:[%s6 + $0x70] sm:$0xff]
  %v4825 = vld [vmem:[%s6 + $0x78] sm:$0xff]
  %4826 = vmatpush.msra.mxu0 %v4825
  %4827 = vmatpush.msra.mxu0 %v4824
  %4828 = vmatpush.msra.mxu0 %v4823
  %4829 = vmatpush.msra.mxu0 %v4822
  %4830 = vmatpush.msra.mxu0 %v4821
  %4831 = vmatpush.msra.mxu0 %v4820
  %4832 = vmatpush.msra.mxu0 %v4819
  %4833 = vmatpush.msra.mxu0 %v4818
  %4834 = vmatpush.msra.mxu0 %v4817
  %4835 = vmatpush.msra.mxu0 %v4816
  %4836 = vmatpush.msra.mxu0 %v4815
  %4837 = vmatpush.msra.mxu0 %v4814
  %4838 = vmatpush.msra.mxu0 %v4813
  %4839 = vmatpush.msra.mxu0 %v4812
  %4840 = vmatpush.msra.mxu0 %v4811
  %4841 = vmatpush.msra.mxu0 %v4810
  %4842 = vmatmul.f32.gmra.mxu0 %v4770
  %v4843 = vpop.f32.mrf.mxu0
  %v4844 = vadd.f32 0.0, %v4843
  %4845 = vmatmul.f32.gmra.mxu0 %v4771
  %v4846 = vpop.f32.mrf.mxu0
  %v4847 = vadd.f32 0.0, %v4846
  %4848 = vmatmul.f32.gmra.mxu0 %v4772
  %v4849 = vpop.f32.mrf.mxu0
  %v4850 = vadd.f32 0.0, %v4849
  %4851 = vmatmul.f32.gmra.mxu0 %v4773
  %v4852 = vpop.f32.mrf.mxu0
  %v4853 = vadd.f32 0.0, %v4852
  %4854 = vmatmul.f32.gmra.mxu0 %v4774
  %v4855 = vpop.f32.mrf.mxu0
  %v4856 = vadd.f32 0.0, %v4855
  %4857 = vmatmul.f32.gmra.mxu0 %v4775
  %v4858 = vpop.f32.mrf.mxu0
  %v4859 = vadd.f32 0.0, %v4858
  %4860 = vmatmul.f32.gmra.mxu0 %v4776
  %v4861 = vpop.f32.mrf.mxu0
  %v4862 = vadd.f32 0.0, %v4861
  %4863 = vmatmul.f32.gmra.mxu0 %v4777
  %v4864 = vpop.f32.mrf.mxu0
  %v4865 = vadd.f32 0.0, %v4864
  %4866 = vmatmul.f32.gmra.mxu0 %v4778
  %v4867 = vpop.f32.mrf.mxu0
  %v4868 = vadd.f32 0.0, %v4867
  %4869 = vmatmul.f32.gmra.mxu0 %v4779
  %v4870 = vpop.f32.mrf.mxu0
  %v4871 = vadd.f32 0.0, %v4870
  %4872 = vmatmul.f32.gmra.mxu0 %v4780
  %v4873 = vpop.f32.mrf.mxu0
  %v4874 = vadd.f32 0.0, %v4873
  %4875 = vmatmul.f32.gmra.mxu0 %v4781
  %v4876 = vpop.f32.mrf.mxu0
  %v4877 = vadd.f32 0.0, %v4876
  %4878 = vmatmul.f32.gmra.mxu0 %v4782
  %v4879 = vpop.f32.mrf.mxu0
  %v4880 = vadd.f32 0.0, %v4879
  %4881 = vmatmul.f32.gmra.mxu0 %v4783
  %v4882 = vpop.f32.mrf.mxu0
  %v4883 = vadd.f32 0.0, %v4882
  %4884 = vmatmul.f32.gmra.mxu0 %v4784
  %v4885 = vpop.f32.mrf.mxu0
  %v4886 = vadd.f32 0.0, %v4885
  %4887 = vmatmul.f32.gmra.mxu0 %v4785
  %v4888 = vpop.f32.mrf.mxu0
  %v4889 = vadd.f32 0.0, %v4888
  %4890 = vmatmul.f32.gmra.mxu0 %v4786
  %v4891 = vpop.f32.mrf.mxu0
  %v4892 = vadd.f32 0.0, %v4891
  %4893 = vmatmul.f32.gmra.mxu0 %v4787
  %v4894 = vpop.f32.mrf.mxu0
  %v4895 = vadd.f32 0.0, %v4894
  %4896 = vmatmul.f32.gmra.mxu0 %v4788
  %v4897 = vpop.f32.mrf.mxu0
  %v4898 = vadd.f32 0.0, %v4897
  %4899 = vmatmul.f32.gmra.mxu0 %v4789
  %v4900 = vpop.f32.mrf.mxu0
  %v4901 = vadd.f32 0.0, %v4900
  %4902 = vmatmul.f32.gmra.mxu0 %v4790
  %v4903 = vpop.f32.mrf.mxu0
  %v4904 = vadd.f32 0.0, %v4903
  %4905 = vmatmul.f32.gmra.mxu0 %v4791
  %v4906 = vpop.f32.mrf.mxu0
  %v4907 = vadd.f32 0.0, %v4906
  %4908 = vmatmul.f32.gmra.mxu0 %v4792
  %v4909 = vpop.f32.mrf.mxu0
  %v4910 = vadd.f32 0.0, %v4909
  %4911 = vmatmul.f32.gmra.mxu0 %v4793
  %v4912 = vpop.f32.mrf.mxu0
  %v4913 = vadd.f32 0.0, %v4912
  %4914 = vmatmul.f32.gmra.mxu0 %v4794
  %v4915 = vpop.f32.mrf.mxu0
  %v4916 = vadd.f32 0.0, %v4915
  %4917 = vmatmul.f32.gmra.mxu0 %v4795
  %v4918 = vpop.f32.mrf.mxu0
  %v4919 = vadd.f32 0.0, %v4918
  %4920 = vmatmul.f32.gmra.mxu0 %v4796
  %v4921 = vpop.f32.mrf.mxu0
  %v4922 = vadd.f32 0.0, %v4921
  %4923 = vmatmul.f32.gmra.mxu0 %v4797
  %v4924 = vpop.f32.mrf.mxu0
  %v4925 = vadd.f32 0.0, %v4924
  %4926 = vmatmul.f32.gmra.mxu0 %v4798
  %v4927 = vpop.f32.mrf.mxu0
  %v4928 = vadd.f32 0.0, %v4927
  %4929 = vmatmul.f32.gmra.mxu0 %v4799
  %v4930 = vpop.f32.mrf.mxu0
  %v4931 = vadd.f32 0.0, %v4930
  %4932 = vmatmul.f32.gmra.mxu0 %v4800
  %v4933 = vpop.f32.mrf.mxu0
  %v4934 = vadd.f32 0.0, %v4933
  %4935 = vmatmul.f32.gmra.mxu0 %v4801
  %v4936 = vpop.f32.mrf.mxu0
  %v4937 = vadd.f32 0.0, %v4936
  %4938 = vmatmul.f32.gmra.mxu0 %v4802
  %v4939 = vpop.f32.mrf.mxu0
  %v4940 = vadd.f32 0.0, %v4939
  %4941 = vmatmul.f32.gmra.mxu0 %v4803
  %v4942 = vpop.f32.mrf.mxu0
  %v4943 = vadd.f32 0.0, %v4942
  %4944 = vmatmul.f32.gmra.mxu0 %v4804
  %v4945 = vpop.f32.mrf.mxu0
  %v4946 = vadd.f32 0.0, %v4945
  %4947 = vmatmul.f32.gmra.mxu0 %v4805
  %v4948 = vpop.f32.mrf.mxu0
  %v4949 = vadd.f32 0.0, %v4948
  %4950 = vmatmul.f32.gmra.mxu0 %v4806
  %v4951 = vpop.f32.mrf.mxu0
  %v4952 = vadd.f32 0.0, %v4951
  %4953 = vmatmul.f32.gmra.mxu0 %v4807
  %v4954 = vpop.f32.mrf.mxu0
  %v4955 = vadd.f32 0.0, %v4954
  %4956 = vmatmul.f32.gmra.mxu0 %v4808
  %v4957 = vpop.f32.mrf.mxu0
  %v4958 = vadd.f32 0.0, %v4957
  %4959 = vmatmul.f32.gmra.mxu0 %v4809
  %v4960 = vpop.f32.mrf.mxu0
  %v4961 = vadd.f32 0.0, %v4960
  %4962 = vdwg.mxu0
  %4963 = vst [vmem:[#allocation3] sm:$0xff] %v4844
  %4964 = vst [vmem:[#allocation3 + $0x8] sm:$0xff] %v4847
  %4965 = vst [vmem:[#allocation3 + $0x10] sm:$0xff] %v4850
  %4966 = vst [vmem:[#allocation3 + $0x18] sm:$0xff] %v4853
  %4967 = vst [vmem:[#allocation3 + $0x20] sm:$0xff] %v4856
  %4968 = vst [vmem:[#allocation3 + $0x28] sm:$0xff] %v4859
  %4969 = vst [vmem:[#allocation3 + $0x30] sm:$0xff] %v4862
  %4970 = vst [vmem:[#allocation3 + $0x38] sm:$0xff] %v4865
  %4971 = vst [vmem:[#allocation3 + $0x40] sm:$0xff] %v4868
  %4972 = vst [vmem:[#allocation3 + $0x48] sm:$0xff] %v4871
  %4973 = vst [vmem:[#allocation3 + $0x50] sm:$0xff] %v4874
  %4974 = vst [vmem:[#allocation3 + $0x58] sm:$0xff] %v4877
  %4975 = vst [vmem:[#allocation3 + $0x60] sm:$0xff] %v4880
  %4976 = vst [vmem:[#allocation3 + $0x68] sm:$0xff] %v4883
  %4977 = vst [vmem:[#allocation3 + $0x70] sm:$0xff] %v4886
  %4978 = vst [vmem:[#allocation3 + $0x78] sm:$0xff] %v4889
  %4979 = vst [vmem:[#allocation3 + $0x80] sm:$0xff] %v4892
  %4980 = vst [vmem:[#allocation3 + $0x88] sm:$0xff] %v4895
  %4981 = vst [vmem:[#allocation3 + $0x90] sm:$0xff] %v4898
  %4982 = vst [vmem:[#allocation3 + $0x98] sm:$0xff] %v4901
  %4983 = vst [vmem:[#allocation3 + $0xa0] sm:$0xff] %v4904
  %4984 = vst [vmem:[#allocation3 + $0xa8] sm:$0xff] %v4907
  %4985 = vst [vmem:[#allocation3 + $0xb0] sm:$0xff] %v4910
  %4986 = vst [vmem:[#allocation3 + $0xb8] sm:$0xff] %v4913
  %4987 = vst [vmem:[#allocation3 + $0xc0] sm:$0xff] %v4916
  %4988 = vst [vmem:[#allocation3 + $0xc8] sm:$0xff] %v4919
  %4989 = vst [vmem:[#allocation3 + $0xd0] sm:$0xff] %v4922
  %4990 = vst [vmem:[#allocation3 + $0xd8] sm:$0xff] %v4925
  %4991 = vst [vmem:[#allocation3 + $0xe0] sm:$0xff] %v4928
  %4992 = vst [vmem:[#allocation3 + $0xe8] sm:$0xff] %v4931
  %4993 = vst [vmem:[#allocation3 + $0xf0] sm:$0xff] %v4934
  %4994 = vst [vmem:[#allocation3 + $0xf8] sm:$0xff] %v4937
  %4995 = vst [vmem:[#allocation3 + $0x100] sm:$0xff] %v4940
  %4996 = vst [vmem:[#allocation3 + $0x108] sm:$0xff] %v4943
  %4997 = vst [vmem:[#allocation3 + $0x110] sm:$0xff] %v4946
  %4998 = vst [vmem:[#allocation3 + $0x118] sm:$0xff] %v4949
  %4999 = vst [vmem:[#allocation3 + $0x120] sm:$0xff] %v4952
  %5000 = vst [vmem:[#allocation3 + $0x128] sm:$0xff] %v4955
  %5001 = vst [vmem:[#allocation3 + $0x130] sm:$0xff] %v4958
  %5002 = vst [vmem:[#allocation3 + $0x138] sm:$0xff] %v4961
  %v5003 = vld [vmem:[#allocation3] sm:$0xff]
  %v5004 = vld [vmem:[#allocation3 + $0x8] sm:$0xff]
  %v5005 = vld [vmem:[#allocation3 + $0x10] sm:$0xff]
  %v5006 = vld [vmem:[#allocation3 + $0x18] sm:$0xff]
  %v5007 = vld [vmem:[#allocation3 + $0x20] sm:$0xff]
  %v5008 = vld [vmem:[#allocation3 + $0x28] sm:$0xff]
  %v5009 = vld [vmem:[#allocation3 + $0x30] sm:$0xff]
  %v5010 = vld [vmem:[#allocation3 + $0x38] sm:$0xff]
  %v5011 = vld [vmem:[#allocation3 + $0x40] sm:$0xff]
  %v5012 = vld [vmem:[#allocation3 + $0x48] sm:$0xff]
  %v5013 = vld [vmem:[%s5] sm:$0xff]
  %v5014 = vld [vmem:[%s5 + $0x40] sm:$0xff]
  %v5015 = vld [vmem:[%s5 + $0x80] sm:$0xff]
  %v5016 = vld [vmem:[%s5 + $0xc0] sm:$0xff]
  %v5017 = vld [vmem:[%s5 + $0x100] sm:$0xff]
  %v5018 = vld [vmem:[%s5 + $0x140] sm:$0xff]
  %v5019 = vld [vmem:[%s5 + $0x180] sm:$0xff]
  %v5020 = vld [vmem:[%s5 + $0x1c0] sm:$0xff]
  %v5021 = vld [vmem:[%s5 + $0x200] sm:$0xff]
  %v5022 = vld [vmem:[%s5 + $0x240] sm:$0xff]
  %v5023 = vld [vmem:[%s5 + $0x280] sm:$0xff]
  %v5024 = vld [vmem:[%s5 + $0x2c0] sm:$0xff]
  %v5025 = vld [vmem:[%s5 + $0x300] sm:$0xff]
  %v5026 = vld [vmem:[%s5 + $0x340] sm:$0xff]
  %v5027 = vld [vmem:[%s5 + $0x380] sm:$0xff]
  %v5028 = vld [vmem:[%s5 + $0x3c0] sm:$0xff]
  %5029 = vmatpush.msra.mxu0 %v5028
  %5030 = vmatpush.msra.mxu0 %v5027
  %5031 = vmatpush.msra.mxu0 %v5026
  %5032 = vmatpush.msra.mxu0 %v5025
  %5033 = vmatpush.msra.mxu0 %v5024
  %5034 = vmatpush.msra.mxu0 %v5023
  %5035 = vmatpush.msra.mxu0 %v5022
  %5036 = vmatpush.msra.mxu0 %v5021
  %5037 = vmatpush.msra.mxu0 %v5020
  %5038 = vmatpush.msra.mxu0 %v5019
  %5039 = vmatpush.msra.mxu0 %v5018
  %5040 = vmatpush.msra.mxu0 %v5017
  %5041 = vmatpush.msra.mxu0 %v5016
  %5042 = vmatpush.msra.mxu0 %v5015
  %5043 = vmatpush.msra.mxu0 %v5014
  %5044 = vmatpush.msra.mxu0 %v5013
  %5045 = vmatmul.f32.gmra.mxu0 %v5003
  %v5046 = vpop.f32.mrf.mxu0
  %v5047 = vadd.f32 0.0, %v5046
  %5048 = vmatmul.f32.gmra.mxu0 %v5004
  %v5049 = vpop.f32.mrf.mxu0
  %v5050 = vadd.f32 0.0, %v5049
  %5051 = vmatmul.f32.gmra.mxu0 %v5005
  %v5052 = vpop.f32.mrf.mxu0
  %v5053 = vadd.f32 0.0, %v5052
  %5054 = vmatmul.f32.gmra.mxu0 %v5006
  %v5055 = vpop.f32.mrf.mxu0
  %v5056 = vadd.f32 0.0, %v5055
  %5057 = vmatmul.f32.gmra.mxu0 %v5007
  %v5058 = vpop.f32.mrf.mxu0
  %v5059 = vadd.f32 0.0, %v5058
  %5060 = vdwg.mxu0
  %v5061 = vadd.f32 %v5008, %v5047
  %v5062 = vadd.f32 %v5009, %v5050
  %v5063 = vadd.f32 %v5010, %v5053
  %v5064 = vadd.f32 %v5011, %v5056
  %v5065 = vadd.f32 %v5012, %v5059
  %5066 = vst [vmem:[#allocation3 + $0x28] sm:$0xff] %v5061
  %5067 = vst [vmem:[#allocation3 + $0x30] sm:$0xff] %v5062
  %5068 = vst [vmem:[#allocation3 + $0x38] sm:$0xff] %v5063
  %5069 = vst [vmem:[#allocation3 + $0x40] sm:$0xff] %v5064
  %5070 = vst [vmem:[#allocation3 + $0x48] sm:$0xff] %v5065
  %v5071 = vld [vmem:[#allocation3 + $0x28] sm:$0xff]
  %v5072 = vld [vmem:[#allocation3 + $0x30] sm:$0xff]
  %v5073 = vld [vmem:[#allocation3 + $0x38] sm:$0xff]
  %v5074 = vld [vmem:[#allocation3 + $0x40] sm:$0xff]
  %v5075 = vld [vmem:[#allocation3 + $0x48] sm:$0xff]
  %v5076 = vld [vmem:[#allocation3 + $0x50] sm:$0xff]
  %v5077 = vld [vmem:[#allocation3 + $0x58] sm:$0xff]
  %v5078 = vld [vmem:[#allocation3 + $0x60] sm:$0xff]
  %v5079 = vld [vmem:[#allocation3 + $0x68] sm:$0xff]
  %v5080 = vld [vmem:[#allocation3 + $0x70] sm:$0xff]
  %v5081 = vld [vmem:[%s5] sm:$0xff]
  %v5082 = vld [vmem:[%s5 + $0x40] sm:$0xff]
  %v5083 = vld [vmem:[%s5 + $0x80] sm:$0xff]
  %v5084 = vld [vmem:[%s5 + $0xc0] sm:$0xff]
  %v5085 = vld [vmem:[%s5 + $0x100] sm:$0xff]
  %v5086 = vld [vmem:[%s5 + $0x140] sm:$0xff]
  %v5087 = vld [vmem:[%s5 + $0x180] sm:$0xff]
  %v5088 = vld [vmem:[%s5 + $0x1c0] sm:$0xff]
  %v5089 = vld [vmem:[%s5 + $0x200] sm:$0xff]
  %v5090 = vld [vmem:[%s5 + $0x240] sm:$0xff]
  %v5091 = vld [vmem:[%s5 + $0x280] sm:$0xff]
  %v5092 = vld [vmem:[%s5 + $0x2c0] sm:$0xff]
  %v5093 = vld [vmem:[%s5 + $0x300] sm:$0xff]
  %v5094 = vld [vmem:[%s5 + $0x340] sm:$0xff]
  %v5095 = vld [vmem:[%s5 + $0x380] sm:$0xff]
  %v5096 = vld [vmem:[%s5 + $0x3c0] sm:$0xff]
  %5097 = vmatpush.msra.mxu0 %v5096
  %5098 = vmatpush.msra.mxu0 %v5095
  %5099 = vmatpush.msra.mxu0 %v5094
  %5100 = vmatpush.msra.mxu0 %v5093
  %5101 = vmatpush.msra.mxu0 %v5092
  %5102 = vmatpush.msra.mxu0 %v5091
  %5103 = vmatpush.msra.mxu0 %v5090
  %5104 = vmatpush.msra.mxu0 %v5089
  %5105 = vmatpush.msra.mxu0 %v5088
  %5106 = vmatpush.msra.mxu0 %v5087
  %5107 = vmatpush.msra.mxu0 %v5086
  %5108 = vmatpush.msra.mxu0 %v5085
  %5109 = vmatpush.msra.mxu0 %v5084
  %5110 = vmatpush.msra.mxu0 %v5083
  %5111 = vmatpush.msra.mxu0 %v5082
  %5112 = vmatpush.msra.mxu0 %v5081
  %5113 = vmatmul.f32.gmra.mxu0 %v5071
  %v5114 = vpop.f32.mrf.mxu0
  %v5115 = vadd.f32 0.0, %v5114
  %5116 = vmatmul.f32.gmra.mxu0 %v5072
  %v5117 = vpop.f32.mrf.mxu0
  %v5118 = vadd.f32 0.0, %v5117
  %5119 = vmatmul.f32.gmra.mxu0 %v5073
  %v5120 = vpop.f32.mrf.mxu0
  %v5121 = vadd.f32 0.0, %v5120
  %5122 = vmatmul.f32.gmra.mxu0 %v5074
  %v5123 = vpop.f32.mrf.mxu0
  %v5124 = vadd.f32 0.0, %v5123
  %5125 = vmatmul.f32.gmra.mxu0 %v5075
  %v5126 = vpop.f32.mrf.mxu0
  %v5127 = vadd.f32 0.0, %v5126
  %5128 = vdwg.mxu0
  %v5129 = vadd.f32 %v5076, %v5115
  %v5130 = vadd.f32 %v5077, %v5118
  %v5131 = vadd.f32 %v5078, %v5121
  %v5132 = vadd.f32 %v5079, %v5124
  %v5133 = vadd.f32 %v5080, %v5127
  %5134 = vst [vmem:[#allocation3 + $0x50] sm:$0xff] %v5129
  %5135 = vst [vmem:[#allocation3 + $0x58] sm:$0xff] %v5130
  %5136 = vst [vmem:[#allocation3 + $0x60] sm:$0xff] %v5131
  %5137 = vst [vmem:[#allocation3 + $0x68] sm:$0xff] %v5132
  %5138 = vst [vmem:[#allocation3 + $0x70] sm:$0xff] %v5133
  %v5139 = vld [vmem:[#allocation3 + $0x50] sm:$0xff]
  %v5140 = vld [vmem:[#allocation3 + $0x58] sm:$0xff]
  %v5141 = vld [vmem:[#allocation3 + $0x60] sm:$0xff]
  %v5142 = vld [vmem:[#allocation3 + $0x68] sm:$0xff]
  %v5143 = vld [vmem:[#allocation3 + $0x70] sm:$0xff]
  %v5144 = vld [vmem:[#allocation3 + $0x78] sm:$0xff]
  %v5145 = vld [vmem:[#allocation3 + $0x80] sm:$0xff]
  %v5146 = vld [vmem:[#allocation3 + $0x88] sm:$0xff]
  %v5147 = vld [vmem:[#allocation3 + $0x90] sm:$0xff]
  %v5148 = vld [vmem:[#allocation3 + $0x98] sm:$0xff]
  %v5149 = vld [vmem:[%s5] sm:$0xff]
  %v5150 = vld [vmem:[%s5 + $0x40] sm:$0xff]
  %v5151 = vld [vmem:[%s5 + $0x80] sm:$0xff]
  %v5152 = vld [vmem:[%s5 + $0xc0] sm:$0xff]
  %v5153 = vld [vmem:[%s5 + $0x100] sm:$0xff]
  %v5154 = vld [vmem:[%s5 + $0x140] sm:$0xff]
  %v5155 = vld [vmem:[%s5 + $0x180] sm:$0xff]
  %v5156 = vld [vmem:[%s5 + $0x1c0] sm:$0xff]
  %v5157 = vld [vmem:[%s5 + $0x200] sm:$0xff]
  %v5158 = vld [vmem:[%s5 + $0x240] sm:$0xff]
  %v5159 = vld [vmem:[%s5 + $0x280] sm:$0xff]
  %v5160 = vld [vmem:[%s5 + $0x2c0] sm:$0xff]
  %v5161 = vld [vmem:[%s5 + $0x300] sm:$0xff]
  %v5162 = vld [vmem:[%s5 + $0x340] sm:$0xff]
  %v5163 = vld [vmem:[%s5 + $0x380] sm:$0xff]
  %v5164 = vld [vmem:[%s5 + $0x3c0] sm:$0xff]
  %5165 = vmatpush.msra.mxu0 %v5164
  %5166 = vmatpush.msra.mxu0 %v5163
  %5167 = vmatpush.msra.mxu0 %v5162
  %5168 = vmatpush.msra.mxu0 %v5161
  %5169 = vmatpush.msra.mxu0 %v5160
  %5170 = vmatpush.msra.mxu0 %v5159
  %5171 = vmatpush.msra.mxu0 %v5158
  %5172 = vmatpush.msra.mxu0 %v5157
  %5173 = vmatpush.msra.mxu0 %v5156
  %5174 = vmatpush.msra.mxu0 %v5155
  %5175 = vmatpush.msra.mxu0 %v5154
  %5176 = vmatpush.msra.mxu0 %v5153
  %5177 = vmatpush.msra.mxu0 %v5152
  %5178 = vmatpush.msra.mxu0 %v5151
  %5179 = vmatpush.msra.mxu0 %v5150
  %5180 = vmatpush.msra.mxu0 %v5149
  %5181 = vmatmul.f32.gmra.mxu0 %v5139
  %v5182 = vpop.f32.mrf.mxu0
  %v5183 = vadd.f32 0.0, %v5182
  %5184 = vmatmul.f32.gmra.mxu0 %v5140
  %v5185 = vpop.f32.mrf.mxu0
  %v5186 = vadd.f32 0.0, %v5185
  %5187 = vmatmul.f32.gmra.mxu0 %v5141
  %v5188 = vpop.f32.mrf.mxu0
  %v5189 = vadd.f32 0.0, %v5188
  %5190 = vmatmul.f32.gmra.mxu0 %v5142
  %v5191 = vpop.f32.mrf.mxu0
  %v5192 = vadd.f32 0.0, %v5191
  %5193 = vmatmul.f32.gmra.mxu0 %v5143
  %v5194 = vpop.f32.mrf.mxu0
  %v5195 = vadd.f32 0.0, %v5194
  %5196 = vdwg.mxu0
  %v5197 = vadd.f32 %v5144, %v5183
  %v5198 = vadd.f32 %v5145, %v5186
  %v5199 = vadd.f32 %v5146, %v5189
  %v5200 = vadd.f32 %v5147, %v5192
  %v5201 = vadd.f32 %v5148, %v5195
  %5202 = vst [vmem:[#allocation3 + $0x78] sm:$0xff] %v5197
  %5203 = vst [vmem:[#allocation3 + $0x80] sm:$0xff] %v5198
  %5204 = vst [vmem:[#allocation3 + $0x88] sm:$0xff] %v5199
  %5205 = vst [vmem:[#allocation3 + $0x90] sm:$0xff] %v5200
  %5206 = vst [vmem:[#allocation3 + $0x98] sm:$0xff] %v5201
  %v5207 = vld [vmem:[#allocation3 + $0x78] sm:$0xff]
  %v5208 = vld [vmem:[#allocation3 + $0x80] sm:$0xff]
  %v5209 = vld [vmem:[#allocation3 + $0x88] sm:$0xff]
  %v5210 = vld [vmem:[#allocation3 + $0x90] sm:$0xff]
  %v5211 = vld [vmem:[#allocation3 + $0x98] sm:$0xff]
  %v5212 = vld [vmem:[#allocation3 + $0xa0] sm:$0xff]
  %v5213 = vld [vmem:[#allocation3 + $0xa8] sm:$0xff]
  %v5214 = vld [vmem:[#allocation3 + $0xb0] sm:$0xff]
  %v5215 = vld [vmem:[#allocation3 + $0xb8] sm:$0xff]
  %v5216 = vld [vmem:[#allocation3 + $0xc0] sm:$0xff]
  %v5217 = vld [vmem:[%s5] sm:$0xff]
  %v5218 = vld [vmem:[%s5 + $0x40] sm:$0xff]
  %v5219 = vld [vmem:[%s5 + $0x80] sm:$0xff]
  %v5220 = vld [vmem:[%s5 + $0xc0] sm:$0xff]
  %v5221 = vld [vmem:[%s5 + $0x100] sm:$0xff]
  %v5222 = vld [vmem:[%s5 + $0x140] sm:$0xff]
  %v5223 = vld [vmem:[%s5 + $0x180] sm:$0xff]
  %v5224 = vld [vmem:[%s5 + $0x1c0] sm:$0xff]
  %v5225 = vld [vmem:[%s5 + $0x200] sm:$0xff]
  %v5226 = vld [vmem:[%s5 + $0x240] sm:$0xff]
  %v5227 = vld [vmem:[%s5 + $0x280] sm:$0xff]
  %v5228 = vld [vmem:[%s5 + $0x2c0] sm:$0xff]
  %v5229 = vld [vmem:[%s5 + $0x300] sm:$0xff]
  %v5230 = vld [vmem:[%s5 + $0x340] sm:$0xff]
  %v5231 = vld [vmem:[%s5 + $0x380] sm:$0xff]
  %v5232 = vld [vmem:[%s5 + $0x3c0] sm:$0xff]
  %5233 = vmatpush.msra.mxu0 %v5232
  %5234 = vmatpush.msra.mxu0 %v5231
  %5235 = vmatpush.msra.mxu0 %v5230
  %5236 = vmatpush.msra.mxu0 %v5229
  %5237 = vmatpush.msra.mxu0 %v5228
  %5238 = vmatpush.msra.mxu0 %v5227
  %5239 = vmatpush.msra.mxu0 %v5226
  %5240 = vmatpush.msra.mxu0 %v5225
  %5241 = vmatpush.msra.mxu0 %v5224
  %5242 = vmatpush.msra.mxu0 %v5223
  %5243 = vmatpush.msra.mxu0 %v5222
  %5244 = vmatpush.msra.mxu0 %v5221
  %5245 = vmatpush.msra.mxu0 %v5220
  %5246 = vmatpush.msra.mxu0 %v5219
  %5247 = vmatpush.msra.mxu0 %v5218
  %5248 = vmatpush.msra.mxu0 %v5217
  %5249 = vmatmul.f32.gmra.mxu0 %v5207
  %v5250 = vpop.f32.mrf.mxu0
  %v5251 = vadd.f32 0.0, %v5250
  %5252 = vmatmul.f32.gmra.mxu0 %v5208
  %v5253 = vpop.f32.mrf.mxu0
  %v5254 = vadd.f32 0.0, %v5253
  %5255 = vmatmul.f32.gmra.mxu0 %v5209
  %v5256 = vpop.f32.mrf.mxu0
  %v5257 = vadd.f32 0.0, %v5256
  %5258 = vmatmul.f32.gmra.mxu0 %v5210
  %v5259 = vpop.f32.mrf.mxu0
  %v5260 = vadd.f32 0.0, %v5259
  %5261 = vmatmul.f32.gmra.mxu0 %v5211
  %v5262 = vpop.f32.mrf.mxu0
  %v5263 = vadd.f32 0.0, %v5262
  %5264 = vdwg.mxu0
  %v5265 = vadd.f32 %v5212, %v5251
  %v5266 = vadd.f32 %v5213, %v5254
  %v5267 = vadd.f32 %v5214, %v5257
  %v5268 = vadd.f32 %v5215, %v5260
  %v5269 = vadd.f32 %v5216, %v5263
  %5270 = vst [vmem:[#allocation3 + $0xa0] sm:$0xff] %v5265
  %5271 = vst [vmem:[#allocation3 + $0xa8] sm:$0xff] %v5266
  %5272 = vst [vmem:[#allocation3 + $0xb0] sm:$0xff] %v5267
  %5273 = vst [vmem:[#allocation3 + $0xb8] sm:$0xff] %v5268
  %5274 = vst [vmem:[#allocation3 + $0xc0] sm:$0xff] %v5269
  %v5275 = vld [vmem:[#allocation3 + $0xa0] sm:$0xff]
  %v5276 = vld [vmem:[#allocation3 + $0xa8] sm:$0xff]
  %v5277 = vld [vmem:[#allocation3 + $0xb0] sm:$0xff]
  %v5278 = vld [vmem:[#allocation3 + $0xb8] sm:$0xff]
  %v5279 = vld [vmem:[#allocation3 + $0xc0] sm:$0xff]
  %v5280 = vld [vmem:[#allocation3 + $0xc8] sm:$0xff]
  %v5281 = vld [vmem:[#allocation3 + $0xd0] sm:$0xff]
  %v5282 = vld [vmem:[#allocation3 + $0xd8] sm:$0xff]
  %v5283 = vld [vmem:[#allocation3 + $0xe0] sm:$0xff]
  %v5284 = vld [vmem:[#allocation3 + $0xe8] sm:$0xff]
  %v5285 = vld [vmem:[%s5] sm:$0xff]
  %v5286 = vld [vmem:[%s5 + $0x40] sm:$0xff]
  %v5287 = vld [vmem:[%s5 + $0x80] sm:$0xff]
  %v5288 = vld [vmem:[%s5 + $0xc0] sm:$0xff]
  %v5289 = vld [vmem:[%s5 + $0x100] sm:$0xff]
  %v5290 = vld [vmem:[%s5 + $0x140] sm:$0xff]
  %v5291 = vld [vmem:[%s5 + $0x180] sm:$0xff]
  %v5292 = vld [vmem:[%s5 + $0x1c0] sm:$0xff]
  %v5293 = vld [vmem:[%s5 + $0x200] sm:$0xff]
  %v5294 = vld [vmem:[%s5 + $0x240] sm:$0xff]
  %v5295 = vld [vmem:[%s5 + $0x280] sm:$0xff]
  %v5296 = vld [vmem:[%s5 + $0x2c0] sm:$0xff]
  %v5297 = vld [vmem:[%s5 + $0x300] sm:$0xff]
  %v5298 = vld [vmem:[%s5 + $0x340] sm:$0xff]
  %v5299 = vld [vmem:[%s5 + $0x380] sm:$0xff]
  %v5300 = vld [vmem:[%s5 + $0x3c0] sm:$0xff]
  %5301 = vmatpush.msra.mxu0 %v5300
  %5302 = vmatpush.msra.mxu0 %v5299
  %5303 = vmatpush.msra.mxu0 %v5298
  %5304 = vmatpush.msra.mxu0 %v5297
  %5305 = vmatpush.msra.mxu0 %v5296
  %5306 = vmatpush.msra.mxu0 %v5295
  %5307 = vmatpush.msra.mxu0 %v5294
  %5308 = vmatpush.msra.mxu0 %v5293
  %5309 = vmatpush.msra.mxu0 %v5292
  %5310 = vmatpush.msra.mxu0 %v5291
  %5311 = vmatpush.msra.mxu0 %v5290
  %5312 = vmatpush.msra.mxu0 %v5289
  %5313 = vmatpush.msra.mxu0 %v5288
  %5314 = vmatpush.msra.mxu0 %v5287
  %5315 = vmatpush.msra.mxu0 %v5286
  %5316 = vmatpush.msra.mxu0 %v5285
  %5317 = vmatmul.f32.gmra.mxu0 %v5275
  %v5318 = vpop.f32.mrf.mxu0
  %v5319 = vadd.f32 0.0, %v5318
  %5320 = vmatmul.f32.gmra.mxu0 %v5276
  %v5321 = vpop.f32.mrf.mxu0
  %v5322 = vadd.f32 0.0, %v5321
  %5323 = vmatmul.f32.gmra.mxu0 %v5277
  %v5324 = vpop.f32.mrf.mxu0
  %v5325 = vadd.f32 0.0, %v5324
  %5326 = vmatmul.f32.gmra.mxu0 %v5278
  %v5327 = vpop.f32.mrf.mxu0
  %v5328 = vadd.f32 0.0, %v5327
  %5329 = vmatmul.f32.gmra.mxu0 %v5279
  %v5330 = vpop.f32.mrf.mxu0
  %v5331 = vadd.f32 0.0, %v5330
  %5332 = vdwg.mxu0
  %v5333 = vadd.f32 %v5280, %v5319
  %v5334 = vadd.f32 %v5281, %v5322
  %v5335 = vadd.f32 %v5282, %v5325
  %v5336 = vadd.f32 %v5283, %v5328
  %v5337 = vadd.f32 %v5284, %v5331
  %5338 = vst [vmem:[#allocation3 + $0xc8] sm:$0xff] %v5333
  %5339 = vst [vmem:[#allocation3 + $0xd0] sm:$0xff] %v5334
  %5340 = vst [vmem:[#allocation3 + $0xd8] sm:$0xff] %v5335
  %5341 = vst [vmem:[#allocation3 + $0xe0] sm:$0xff] %v5336
  %5342 = vst [vmem:[#allocation3 + $0xe8] sm:$0xff] %v5337
  %v5343 = vld [vmem:[#allocation3 + $0xc8] sm:$0xff]
  %v5344 = vld [vmem:[#allocation3 + $0xd0] sm:$0xff]
  %v5345 = vld [vmem:[#allocation3 + $0xd8] sm:$0xff]
  %v5346 = vld [vmem:[#allocation3 + $0xe0] sm:$0xff]
  %v5347 = vld [vmem:[#allocation3 + $0xe8] sm:$0xff]
  %v5348 = vld [vmem:[#allocation3 + $0xf0] sm:$0xff]
  %v5349 = vld [vmem:[#allocation3 + $0xf8] sm:$0xff]
  %v5350 = vld [vmem:[#allocation3 + $0x100] sm:$0xff]
  %v5351 = vld [vmem:[#allocation3 + $0x108] sm:$0xff]
  %v5352 = vld [vmem:[#allocation3 + $0x110] sm:$0xff]
  %v5353 = vld [vmem:[%s5] sm:$0xff]
  %v5354 = vld [vmem:[%s5 + $0x40] sm:$0xff]
  %v5355 = vld [vmem:[%s5 + $0x80] sm:$0xff]
  %v5356 = vld [vmem:[%s5 + $0xc0] sm:$0xff]
  %v5357 = vld [vmem:[%s5 + $0x100] sm:$0xff]
  %v5358 = vld [vmem:[%s5 + $0x140] sm:$0xff]
  %v5359 = vld [vmem:[%s5 + $0x180] sm:$0xff]
  %v5360 = vld [vmem:[%s5 + $0x1c0] sm:$0xff]
  %v5361 = vld [vmem:[%s5 + $0x200] sm:$0xff]
  %v5362 = vld [vmem:[%s5 + $0x240] sm:$0xff]
  %v5363 = vld [vmem:[%s5 + $0x280] sm:$0xff]
  %v5364 = vld [vmem:[%s5 + $0x2c0] sm:$0xff]
  %v5365 = vld [vmem:[%s5 + $0x300] sm:$0xff]
  %v5366 = vld [vmem:[%s5 + $0x340] sm:$0xff]
  %v5367 = vld [vmem:[%s5 + $0x380] sm:$0xff]
  %v5368 = vld [vmem:[%s5 + $0x3c0] sm:$0xff]
  %5369 = vmatpush.msra.mxu0 %v5368
  %5370 = vmatpush.msra.mxu0 %v5367
  %5371 = vmatpush.msra.mxu0 %v5366
  %5372 = vmatpush.msra.mxu0 %v5365
  %5373 = vmatpush.msra.mxu0 %v5364
  %5374 = vmatpush.msra.mxu0 %v5363
  %5375 = vmatpush.msra.mxu0 %v5362
  %5376 = vmatpush.msra.mxu0 %v5361
  %5377 = vmatpush.msra.mxu0 %v5360
  %5378 = vmatpush.msra.mxu0 %v5359
  %5379 = vmatpush.msra.mxu0 %v5358
  %5380 = vmatpush.msra.mxu0 %v5357
  %5381 = vmatpush.msra.mxu0 %v5356
  %5382 = vmatpush.msra.mxu0 %v5355
  %5383 = vmatpush.msra.mxu0 %v5354
  %5384 = vmatpush.msra.mxu0 %v5353
  %5385 = vmatmul.f32.gmra.mxu0 %v5343
  %v5386 = vpop.f32.mrf.mxu0
  %v5387 = vadd.f32 0.0, %v5386
  %5388 = vmatmul.f32.gmra.mxu0 %v5344
  %v5389 = vpop.f32.mrf.mxu0
  %v5390 = vadd.f32 0.0, %v5389
  %5391 = vmatmul.f32.gmra.mxu0 %v5345
  %v5392 = vpop.f32.mrf.mxu0
  %v5393 = vadd.f32 0.0, %v5392
  %5394 = vmatmul.f32.gmra.mxu0 %v5346
  %v5395 = vpop.f32.mrf.mxu0
  %v5396 = vadd.f32 0.0, %v5395
  %5397 = vmatmul.f32.gmra.mxu0 %v5347
  %v5398 = vpop.f32.mrf.mxu0
  %v5399 = vadd.f32 0.0, %v5398
  %5400 = vdwg.mxu0
  %v5401 = vadd.f32 %v5348, %v5387
  %v5402 = vadd.f32 %v5349, %v5390
  %v5403 = vadd.f32 %v5350, %v5393
  %v5404 = vadd.f32 %v5351, %v5396
  %v5405 = vadd.f32 %v5352, %v5399
  %5406 = vst [vmem:[#allocation3 + $0xf0] sm:$0xff] %v5401
  %5407 = vst [vmem:[#allocation3 + $0xf8] sm:$0xff] %v5402
  %5408 = vst [vmem:[#allocation3 + $0x100] sm:$0xff] %v5403
  %5409 = vst [vmem:[#allocation3 + $0x108] sm:$0xff] %v5404
  %5410 = vst [vmem:[#allocation3 + $0x110] sm:$0xff] %v5405
  %v5411 = vld [vmem:[#allocation3 + $0xf0] sm:$0xff]
  %v5412 = vld [vmem:[#allocation3 + $0xf8] sm:$0xff]
  %v5413 = vld [vmem:[#allocation3 + $0x100] sm:$0xff]
  %v5414 = vld [vmem:[#allocation3 + $0x108] sm:$0xff]
  %v5415 = vld [vmem:[#allocation3 + $0x110] sm:$0xff]
  %v5416 = vld [vmem:[#allocation3 + $0x118] sm:$0xff]
  %v5417 = vld [vmem:[#allocation3 + $0x120] sm:$0xff]
  %v5418 = vld [vmem:[#allocation3 + $0x128] sm:$0xff]
  %v5419 = vld [vmem:[#allocation3 + $0x130] sm:$0xff]
  %v5420 = vld [vmem:[#allocation3 + $0x138] sm:$0xff]
  %v5421 = vld [vmem:[%s5] sm:$0xff]
  %v5422 = vld [vmem:[%s5 + $0x40] sm:$0xff]
  %v5423 = vld [vmem:[%s5 + $0x80] sm:$0xff]
  %v5424 = vld [vmem:[%s5 + $0xc0] sm:$0xff]
  %v5425 = vld [vmem:[%s5 + $0x100] sm:$0xff]
  %v5426 = vld [vmem:[%s5 + $0x140] sm:$0xff]
  %v5427 = vld [vmem:[%s5 + $0x180] sm:$0xff]
  %v5428 = vld [vmem:[%s5 + $0x1c0] sm:$0xff]
  %v5429 = vld [vmem:[%s5 + $0x200] sm:$0xff]
  %v5430 = vld [vmem:[%s5 + $0x240] sm:$0xff]
  %v5431 = vld [vmem:[%s5 + $0x280] sm:$0xff]
  %v5432 = vld [vmem:[%s5 + $0x2c0] sm:$0xff]
  %v5433 = vld [vmem:[%s5 + $0x300] sm:$0xff]
  %v5434 = vld [vmem:[%s5 + $0x340] sm:$0xff]
  %v5435 = vld [vmem:[%s5 + $0x380] sm:$0xff]
  %v5436 = vld [vmem:[%s5 + $0x3c0] sm:$0xff]
  %5437 = vmatpush.msra.mxu0 %v5436
  %5438 = vmatpush.msra.mxu0 %v5435
  %5439 = vmatpush.msra.mxu0 %v5434
  %5440 = vmatpush.msra.mxu0 %v5433
  %5441 = vmatpush.msra.mxu0 %v5432
  %5442 = vmatpush.msra.mxu0 %v5431
  %5443 = vmatpush.msra.mxu0 %v5430
  %5444 = vmatpush.msra.mxu0 %v5429
  %5445 = vmatpush.msra.mxu0 %v5428
  %5446 = vmatpush.msra.mxu0 %v5427
  %5447 = vmatpush.msra.mxu0 %v5426
  %5448 = vmatpush.msra.mxu0 %v5425
  %5449 = vmatpush.msra.mxu0 %v5424
  %5450 = vmatpush.msra.mxu0 %v5423
  %5451 = vmatpush.msra.mxu0 %v5422
  %5452 = vmatpush.msra.mxu0 %v5421
  %5453 = vmatmul.f32.gmra.mxu0 %v5411
  %v5454 = vpop.f32.mrf.mxu0
  %v5455 = vadd.f32 0.0, %v5454
  %5456 = vmatmul.f32.gmra.mxu0 %v5412
  %v5457 = vpop.f32.mrf.mxu0
  %v5458 = vadd.f32 0.0, %v5457
  %5459 = vmatmul.f32.gmra.mxu0 %v5413
  %v5460 = vpop.f32.mrf.mxu0
  %v5461 = vadd.f32 0.0, %v5460
  %5462 = vmatmul.f32.gmra.mxu0 %v5414
  %v5463 = vpop.f32.mrf.mxu0
  %v5464 = vadd.f32 0.0, %v5463
  %5465 = vmatmul.f32.gmra.mxu0 %v5415
  %v5466 = vpop.f32.mrf.mxu0
  %v5467 = vadd.f32 0.0, %v5466
  %5468 = vdwg.mxu0
  %v5469 = vadd.f32 %v5416, %v5455
  %v5470 = vadd.f32 %v5417, %v5458
  %v5471 = vadd.f32 %v5418, %v5461
  %v5472 = vadd.f32 %v5419, %v5464
  %v5473 = vadd.f32 %v5420, %v5467
  %5474 = vst [vmem:[#allocation3 + $0x118] sm:$0xff] %v5469
  %5475 = vst [vmem:[#allocation3 + $0x120] sm:$0xff] %v5470
  %5476 = vst [vmem:[#allocation3 + $0x128] sm:$0xff] %v5471
  %5477 = vst [vmem:[#allocation3 + $0x130] sm:$0xff] %v5472
  %5478 = vst [vmem:[#allocation3 + $0x138] sm:$0xff] %v5473
  %s5479 = scalar_lea.vmem [#allocation2], 16
  %v5480 = vld [vmem:[%s5479] sm:$0xff]
  %v5481 = vld [vmem:[%s5] sm:$0xff]
  %v5482 = vld [vmem:[%s5 + $0x8] sm:$0xff]
  %v5483 = vld [vmem:[%s5 + $0x10] sm:$0xff]
  %v5484 = vld [vmem:[%s5 + $0x18] sm:$0xff]
  %v5485 = vld [vmem:[%s5 + $0x20] sm:$0xff]
  %v5486 = vld [vmem:[%s5 + $0x28] sm:$0xff]
  %v5487 = vld [vmem:[%s5 + $0x30] sm:$0xff]
  %v5488 = vld [vmem:[%s5 + $0x38] sm:$0xff]
  %v5489 = vld [vmem:[%s5 + $0x40] sm:$0xff]
  %v5490 = vld [vmem:[%s5 + $0x48] sm:$0xff]
  %v5491 = vld [vmem:[%s5 + $0x50] sm:$0xff]
  %v5492 = vld [vmem:[%s5 + $0x58] sm:$0xff]
  %v5493 = vld [vmem:[%s5 + $0x60] sm:$0xff]
  %v5494 = vld [vmem:[%s5 + $0x68] sm:$0xff]
  %v5495 = vld [vmem:[%s5 + $0x70] sm:$0xff]
  %v5496 = vld [vmem:[%s5 + $0x78] sm:$0xff]
  %v5497 = vld [vmem:[%s5 + $0x80] sm:$0xff]
  %v5498 = vld [vmem:[%s5 + $0x88] sm:$0xff]
  %v5499 = vld [vmem:[%s5 + $0x90] sm:$0xff]
  %v5500 = vld [vmem:[%s5 + $0x98] sm:$0xff]
  %v5501 = vld [vmem:[%s5 + $0xa0] sm:$0xff]
  %v5502 = vld [vmem:[%s5 + $0xa8] sm:$0xff]
  %v5503 = vld [vmem:[%s5 + $0xb0] sm:$0xff]
  %v5504 = vld [vmem:[%s5 + $0xb8] sm:$0xff]
  %v5505 = vld [vmem:[%s5 + $0xc0] sm:$0xff]
  %v5506 = vld [vmem:[%s5 + $0xc8] sm:$0xff]
  %v5507 = vld [vmem:[%s5 + $0xd0] sm:$0xff]
  %v5508 = vld [vmem:[%s5 + $0xd8] sm:$0xff]
  %v5509 = vld [vmem:[%s5 + $0xe0] sm:$0xff]
  %v5510 = vld [vmem:[%s5 + $0xe8] sm:$0xff]
  %v5511 = vld [vmem:[%s5 + $0xf0] sm:$0xff]
  %v5512 = vld [vmem:[%s5 + $0xf8] sm:$0xff]
  %v5513 = vld [vmem:[%s5 + $0x100] sm:$0xff]
  %v5514 = vld [vmem:[%s5 + $0x108] sm:$0xff]
  %v5515 = vld [vmem:[%s5 + $0x110] sm:$0xff]
  %v5516 = vld [vmem:[%s5 + $0x118] sm:$0xff]
  %v5517 = vld [vmem:[%s5 + $0x120] sm:$0xff]
  %v5518 = vld [vmem:[%s5 + $0x128] sm:$0xff]
  %v5519 = vld [vmem:[%s5 + $0x130] sm:$0xff]
  %v5520 = vld [vmem:[%s5 + $0x138] sm:$0xff]
  %v5521 = vld [vmem:[%s5 + $0x140] sm:$0xff]
  %v5522 = vld [vmem:[%s5 + $0x148] sm:$0xff]
  %v5523 = vld [vmem:[%s5 + $0x150] sm:$0xff]
  %v5524 = vld [vmem:[%s5 + $0x158] sm:$0xff]
  %v5525 = vld [vmem:[%s5 + $0x160] sm:$0xff]
  %v5526 = vld [vmem:[%s5 + $0x168] sm:$0xff]
  %v5527 = vld [vmem:[%s5 + $0x170] sm:$0xff]
  %v5528 = vld [vmem:[%s5 + $0x178] sm:$0xff]
  %v5529 = vld [vmem:[%s5 + $0x180] sm:$0xff]
  %v5530 = vld [vmem:[%s5 + $0x188] sm:$0xff]
  %v5531 = vld [vmem:[%s5 + $0x190] sm:$0xff]
  %v5532 = vld [vmem:[%s5 + $0x198] sm:$0xff]
  %v5533 = vld [vmem:[%s5 + $0x1a0] sm:$0xff]
  %v5534 = vld [vmem:[%s5 + $0x1a8] sm:$0xff]
  %v5535 = vld [vmem:[%s5 + $0x1b0] sm:$0xff]
  %v5536 = vld [vmem:[%s5 + $0x1b8] sm:$0xff]
  %v5537 = vld [vmem:[%s5 + $0x1c0] sm:$0xff]
  %v5538 = vld [vmem:[%s5 + $0x1c8] sm:$0xff]
  %v5539 = vld [vmem:[%s5 + $0x1d0] sm:$0xff]
  %v5540 = vld [vmem:[%s5 + $0x1d8] sm:$0xff]
  %v5541 = vld [vmem:[%s5 + $0x1e0] sm:$0xff]
  %v5542 = vld [vmem:[%s5 + $0x1e8] sm:$0xff]
  %v5543 = vld [vmem:[%s5 + $0x1f0] sm:$0xff]
  %v5544 = vld [vmem:[%s5 + $0x1f8] sm:$0xff]
  %v5545 = vld [vmem:[%s5 + $0x200] sm:$0xff]
  %v5546 = vld [vmem:[%s5 + $0x208] sm:$0xff]
  %v5547 = vld [vmem:[%s5 + $0x210] sm:$0xff]
  %v5548 = vld [vmem:[%s5 + $0x218] sm:$0xff]
  %v5549 = vld [vmem:[%s5 + $0x220] sm:$0xff]
  %v5550 = vld [vmem:[%s5 + $0x228] sm:$0xff]
  %v5551 = vld [vmem:[%s5 + $0x230] sm:$0xff]
  %v5552 = vld [vmem:[%s5 + $0x238] sm:$0xff]
  %v5553 = vld [vmem:[%s5 + $0x240] sm:$0xff]
  %v5554 = vld [vmem:[%s5 + $0x248] sm:$0xff]
  %v5555 = vld [vmem:[%s5 + $0x250] sm:$0xff]
  %v5556 = vld [vmem:[%s5 + $0x258] sm:$0xff]
  %v5557 = vld [vmem:[%s5 + $0x260] sm:$0xff]
  %v5558 = vld [vmem:[%s5 + $0x268] sm:$0xff]
  %v5559 = vld [vmem:[%s5 + $0x270] sm:$0xff]
  %v5560 = vld [vmem:[%s5 + $0x278] sm:$0xff]
  %v5561 = vld [vmem:[%s5 + $0x280] sm:$0xff]
  %v5562 = vld [vmem:[%s5 + $0x288] sm:$0xff]
  %v5563 = vld [vmem:[%s5 + $0x290] sm:$0xff]
  %v5564 = vld [vmem:[%s5 + $0x298] sm:$0xff]
  %v5565 = vld [vmem:[%s5 + $0x2a0] sm:$0xff]
  %v5566 = vld [vmem:[%s5 + $0x2a8] sm:$0xff]
  %v5567 = vld [vmem:[%s5 + $0x2b0] sm:$0xff]
  %v5568 = vld [vmem:[%s5 + $0x2b8] sm:$0xff]
  %v5569 = vld [vmem:[%s5 + $0x2c0] sm:$0xff]
  %v5570 = vld [vmem:[%s5 + $0x2c8] sm:$0xff]
  %v5571 = vld [vmem:[%s5 + $0x2d0] sm:$0xff]
  %v5572 = vld [vmem:[%s5 + $0x2d8] sm:$0xff]
  %v5573 = vld [vmem:[%s5 + $0x2e0] sm:$0xff]
  %v5574 = vld [vmem:[%s5 + $0x2e8] sm:$0xff]
  %v5575 = vld [vmem:[%s5 + $0x2f0] sm:$0xff]
  %v5576 = vld [vmem:[%s5 + $0x2f8] sm:$0xff]
  %v5577 = vld [vmem:[%s5 + $0x300] sm:$0xff]
  %v5578 = vld [vmem:[%s5 + $0x308] sm:$0xff]
  %v5579 = vld [vmem:[%s5 + $0x310] sm:$0xff]
  %v5580 = vld [vmem:[%s5 + $0x318] sm:$0xff]
  %v5581 = vld [vmem:[%s5 + $0x320] sm:$0xff]
  %v5582 = vld [vmem:[%s5 + $0x328] sm:$0xff]
  %v5583 = vld [vmem:[%s5 + $0x330] sm:$0xff]
  %v5584 = vld [vmem:[%s5 + $0x338] sm:$0xff]
  %v5585 = vld [vmem:[%s5 + $0x340] sm:$0xff]
  %v5586 = vld [vmem:[%s5 + $0x348] sm:$0xff]
  %v5587 = vld [vmem:[%s5 + $0x350] sm:$0xff]
  %v5588 = vld [vmem:[%s5 + $0x358] sm:$0xff]
  %v5589 = vld [vmem:[%s5 + $0x360] sm:$0xff]
  %v5590 = vld [vmem:[%s5 + $0x368] sm:$0xff]
  %v5591 = vld [vmem:[%s5 + $0x370] sm:$0xff]
  %v5592 = vld [vmem:[%s5 + $0x378] sm:$0xff]
  %v5593 = vld [vmem:[%s5 + $0x380] sm:$0xff]
  %v5594 = vld [vmem:[%s5 + $0x388] sm:$0xff]
  %v5595 = vld [vmem:[%s5 + $0x390] sm:$0xff]
  %v5596 = vld [vmem:[%s5 + $0x398] sm:$0xff]
  %v5597 = vld [vmem:[%s5 + $0x3a0] sm:$0xff]
  %v5598 = vld [vmem:[%s5 + $0x3a8] sm:$0xff]
  %v5599 = vld [vmem:[%s5 + $0x3b0] sm:$0xff]
  %v5600 = vld [vmem:[%s5 + $0x3b8] sm:$0xff]
  %v5601 = vld [vmem:[%s5 + $0x3c0] sm:$0xff]
  %v5602 = vld [vmem:[%s5 + $0x3c8] sm:$0xff]
  %v5603 = vld [vmem:[%s5 + $0x3d0] sm:$0xff]
  %v5604 = vld [vmem:[%s5 + $0x3d8] sm:$0xff]
  %v5605 = vld [vmem:[%s5 + $0x3e0] sm:$0xff]
  %v5606 = vld [vmem:[%s5 + $0x3e8] sm:$0xff]
  %v5607 = vld [vmem:[%s5 + $0x3f0] sm:$0xff]
  %v5608 = vld [vmem:[%s5 + $0x3f8] sm:$0xff]
  %5609 = vmatpush.msra.mxu0 %v5601
  %5610 = vmatpush.msra.mxu0 %v5593
  %5611 = vmatpush.msra.mxu0 %v5585
  %5612 = vmatpush.msra.mxu0 %v5577
  %5613 = vmatpush.msra.mxu0 %v5569
  %5614 = vmatpush.msra.mxu0 %v5561
  %5615 = vmatpush.msra.mxu0 %v5553
  %5616 = vmatpush.msra.mxu0 %v5545
  %5617 = vmatpush.msra.mxu0 %v5537
  %5618 = vmatpush.msra.mxu0 %v5529
  %5619 = vmatpush.msra.mxu0 %v5521
  %5620 = vmatpush.msra.mxu0 %v5513
  %5621 = vmatpush.msra.mxu0 %v5505
  %5622 = vmatpush.msra.mxu0 %v5497
  %5623 = vmatpush.msra.mxu0 %v5489
  %5624 = vmatpush.msra.mxu0 %v5481
  %5625 = vmatmul.f32.gmra.mxu0 %v5480
  %v5626 = vpop.f32.mrf.mxu0
  %v5627 = vadd.f32 0.0, %v5626
  %5628 = vdwg.mxu0
  %5629 = vmatpush.msra.mxu0 %v5602
  %5630 = vmatpush.msra.mxu0 %v5594
  %5631 = vmatpush.msra.mxu0 %v5586
  %5632 = vmatpush.msra.mxu0 %v5578
  %5633 = vmatpush.msra.mxu0 %v5570
  %5634 = vmatpush.msra.mxu0 %v5562
  %5635 = vmatpush.msra.mxu0 %v5554
  %5636 = vmatpush.msra.mxu0 %v5546
  %5637 = vmatpush.msra.mxu0 %v5538
  %5638 = vmatpush.msra.mxu0 %v5530
  %5639 = vmatpush.msra.mxu0 %v5522
  %5640 = vmatpush.msra.mxu0 %v5514
  %5641 = vmatpush.msra.mxu0 %v5506
  %5642 = vmatpush.msra.mxu0 %v5498
  %5643 = vmatpush.msra.mxu0 %v5490
  %5644 = vmatpush.msra.mxu0 %v5482
  %5645 = vmatmul.f32.gmra.mxu0 %v5480
  %v5646 = vpop.f32.mrf.mxu0
  %v5647 = vadd.f32 0.0, %v5646
  %5648 = vdwg.mxu0
  %5649 = vmatpush.msra.mxu0 %v5603
  %5650 = vmatpush.msra.mxu0 %v5595
  %5651 = vmatpush.msra.mxu0 %v5587
  %5652 = vmatpush.msra.mxu0 %v5579
  %5653 = vmatpush.msra.mxu0 %v5571
  %5654 = vmatpush.msra.mxu0 %v5563
  %5655 = vmatpush.msra.mxu0 %v5555
  %5656 = vmatpush.msra.mxu0 %v5547
  %5657 = vmatpush.msra.mxu0 %v5539
  %5658 = vmatpush.msra.mxu0 %v5531
  %5659 = vmatpush.msra.mxu0 %v5523
  %5660 = vmatpush.msra.mxu0 %v5515
  %5661 = vmatpush.msra.mxu0 %v5507
  %5662 = vmatpush.msra.mxu0 %v5499
  %5663 = vmatpush.msra.mxu0 %v5491
  %5664 = vmatpush.msra.mxu0 %v5483
  %5665 = vmatmul.f32.gmra.mxu0 %v5480
  %v5666 = vpop.f32.mrf.mxu0
  %v5667 = vadd.f32 0.0, %v5666
  %5668 = vdwg.mxu0
  %5669 = vmatpush.msra.mxu0 %v5604
  %5670 = vmatpush.msra.mxu0 %v5596
  %5671 = vmatpush.msra.mxu0 %v5588
  %5672 = vmatpush.msra.mxu0 %v5580
  %5673 = vmatpush.msra.mxu0 %v5572
  %5674 = vmatpush.msra.mxu0 %v5564
  %5675 = vmatpush.msra.mxu0 %v5556
  %5676 = vmatpush.msra.mxu0 %v5548
  %5677 = vmatpush.msra.mxu0 %v5540
  %5678 = vmatpush.msra.mxu0 %v5532
  %5679 = vmatpush.msra.mxu0 %v5524
  %5680 = vmatpush.msra.mxu0 %v5516
  %5681 = vmatpush.msra.mxu0 %v5508
  %5682 = vmatpush.msra.mxu0 %v5500
  %5683 = vmatpush.msra.mxu0 %v5492
  %5684 = vmatpush.msra.mxu0 %v5484
  %5685 = vmatmul.f32.gmra.mxu0 %v5480
  %v5686 = vpop.f32.mrf.mxu0
  %v5687 = vadd.f32 0.0, %v5686
  %5688 = vdwg.mxu0
  %5689 = vmatpush.msra.mxu0 %v5605
  %5690 = vmatpush.msra.mxu0 %v5597
  %5691 = vmatpush.msra.mxu0 %v5589
  %5692 = vmatpush.msra.mxu0 %v5581
  %5693 = vmatpush.msra.mxu0 %v5573
  %5694 = vmatpush.msra.mxu0 %v5565
  %5695 = vmatpush.msra.mxu0 %v5557
  %5696 = vmatpush.msra.mxu0 %v5549
  %5697 = vmatpush.msra.mxu0 %v5541
  %5698 = vmatpush.msra.mxu0 %v5533
  %5699 = vmatpush.msra.mxu0 %v5525
  %5700 = vmatpush.msra.mxu0 %v5517
  %5701 = vmatpush.msra.mxu0 %v5509
  %5702 = vmatpush.msra.mxu0 %v5501
  %5703 = vmatpush.msra.mxu0 %v5493
  %5704 = vmatpush.msra.mxu0 %v5485
  %5705 = vmatmul.f32.gmra.mxu0 %v5480
  %v5706 = vpop.f32.mrf.mxu0
  %v5707 = vadd.f32 0.0, %v5706
  %5708 = vdwg.mxu0
  %5709 = vmatpush.msra.mxu0 %v5606
  %5710 = vmatpush.msra.mxu0 %v5598
  %5711 = vmatpush.msra.mxu0 %v5590
  %5712 = vmatpush.msra.mxu0 %v5582
  %5713 = vmatpush.msra.mxu0 %v5574
  %5714 = vmatpush.msra.mxu0 %v5566
  %5715 = vmatpush.msra.mxu0 %v5558
  %5716 = vmatpush.msra.mxu0 %v5550
  %5717 = vmatpush.msra.mxu0 %v5542
  %5718 = vmatpush.msra.mxu0 %v5534
  %5719 = vmatpush.msra.mxu0 %v5526
  %5720 = vmatpush.msra.mxu0 %v5518
  %5721 = vmatpush.msra.mxu0 %v5510
  %5722 = vmatpush.msra.mxu0 %v5502
  %5723 = vmatpush.msra.mxu0 %v5494
  %5724 = vmatpush.msra.mxu0 %v5486
  %5725 = vmatmul.f32.gmra.mxu0 %v5480
  %v5726 = vpop.f32.mrf.mxu0
  %v5727 = vadd.f32 0.0, %v5726
  %5728 = vdwg.mxu0
  %5729 = vmatpush.msra.mxu0 %v5607
  %5730 = vmatpush.msra.mxu0 %v5599
  %5731 = vmatpush.msra.mxu0 %v5591
  %5732 = vmatpush.msra.mxu0 %v5583
  %5733 = vmatpush.msra.mxu0 %v5575
  %5734 = vmatpush.msra.mxu0 %v5567
  %5735 = vmatpush.msra.mxu0 %v5559
  %5736 = vmatpush.msra.mxu0 %v5551
  %5737 = vmatpush.msra.mxu0 %v5543
  %5738 = vmatpush.msra.mxu0 %v5535
  %5739 = vmatpush.msra.mxu0 %v5527
  %5740 = vmatpush.msra.mxu0 %v5519
  %5741 = vmatpush.msra.mxu0 %v5511
  %5742 = vmatpush.msra.mxu0 %v5503
  %5743 = vmatpush.msra.mxu0 %v5495
  %5744 = vmatpush.msra.mxu0 %v5487
  %5745 = vmatmul.f32.gmra.mxu0 %v5480
  %v5746 = vpop.f32.mrf.mxu0
  %v5747 = vadd.f32 0.0, %v5746
  %5748 = vdwg.mxu0
  %5749 = vmatpush.msra.mxu0 %v5608
  %5750 = vmatpush.msra.mxu0 %v5600
  %5751 = vmatpush.msra.mxu0 %v5592
  %5752 = vmatpush.msra.mxu0 %v5584
  %5753 = vmatpush.msra.mxu0 %v5576
  %5754 = vmatpush.msra.mxu0 %v5568
  %5755 = vmatpush.msra.mxu0 %v5560
  %5756 = vmatpush.msra.mxu0 %v5552
  %5757 = vmatpush.msra.mxu0 %v5544
  %5758 = vmatpush.msra.mxu0 %v5536
  %5759 = vmatpush.msra.mxu0 %v5528
  %5760 = vmatpush.msra.mxu0 %v5520
  %5761 = vmatpush.msra.mxu0 %v5512
  %5762 = vmatpush.msra.mxu0 %v5504
  %5763 = vmatpush.msra.mxu0 %v5496
  %5764 = vmatpush.msra.mxu0 %v5488
  %5765 = vmatmul.f32.gmra.mxu0 %v5480
  %v5766 = vpop.f32.mrf.mxu0
  %v5767 = vadd.f32 0.0, %v5766
  %5768 = vdwg.mxu0
  %v5769 = vld [vmem:[%s1147] sm:$0xff]
  %v5770 = vadd.f32 %v5769, %v5767
  %5771 = vst [vmem:[%s1147] sm:$0xff] %v5770
  %v5772 = vld [vmem:[#allocation3] sm:$0xff]
  %v5773 = vadd.f32 %v5772, %v5627
  %5774 = vst [vmem:[#allocation3] sm:$0xff] %v5773
  %v5775 = vld [vmem:[%s1154] sm:$0xff]
  %v5776 = vadd.f32 %v5775, %v5647
  %5777 = vst [vmem:[%s1154] sm:$0xff] %v5776
  %v5778 = vld [vmem:[%s1158] sm:$0xff]
  %v5779 = vadd.f32 %v5778, %v5667
  %5780 = vst [vmem:[%s1158] sm:$0xff] %v5779
  %v5781 = vld [vmem:[%s1162] sm:$0xff]
  %v5782 = vadd.f32 %v5781, %v5687
  %5783 = vst [vmem:[%s1162] sm:$0xff] %v5782
  %v5784 = vld [vmem:[%s1166] sm:$0xff]
  %v5785 = vadd.f32 %v5784, %v5707
  %5786 = vst [vmem:[%s1166] sm:$0xff] %v5785
  %v5787 = vld [vmem:[%s1170] sm:$0xff]
  %v5788 = vadd.f32 %v5787, %v5727
  %5789 = vst [vmem:[%s1170] sm:$0xff] %v5788
  %v5790 = vld [vmem:[%s1174] sm:$0xff]
  %v5791 = vadd.f32 %v5790, %v5747
  %5792 = vst [vmem:[%s1174] sm:$0xff] %v5791
  %v5793 = vld [vmem:[%s5] sm:$0xff]
  %v5794 = vld [vmem:[%s5 + $0x8] sm:$0xff]
  %v5795 = vld [vmem:[%s5 + $0x10] sm:$0xff]
  %v5796 = vld [vmem:[%s5 + $0x18] sm:$0xff]
  %v5797 = vld [vmem:[%s5 + $0x20] sm:$0xff]
  %v5798 = vld [vmem:[%s5 + $0x28] sm:$0xff]
  %v5799 = vld [vmem:[%s5 + $0x30] sm:$0xff]
  %v5800 = vld [vmem:[%s5 + $0x38] sm:$0xff]
  %v5801 = vld [vmem:[%s5 + $0x40] sm:$0xff]
  %v5802 = vld [vmem:[%s5 + $0x48] sm:$0xff]
  %v5803 = vld [vmem:[%s5 + $0x50] sm:$0xff]
  %v5804 = vld [vmem:[%s5 + $0x58] sm:$0xff]
  %v5805 = vld [vmem:[%s5 + $0x60] sm:$0xff]
  %v5806 = vld [vmem:[%s5 + $0x68] sm:$0xff]
  %v5807 = vld [vmem:[%s5 + $0x70] sm:$0xff]
  %v5808 = vld [vmem:[%s5 + $0x78] sm:$0xff]
  %v5809 = vld [vmem:[%s5 + $0x80] sm:$0xff]
  %v5810 = vld [vmem:[%s5 + $0x88] sm:$0xff]
  %v5811 = vld [vmem:[%s5 + $0x90] sm:$0xff]
  %v5812 = vld [vmem:[%s5 + $0x98] sm:$0xff]
  %v5813 = vld [vmem:[%s5 + $0xa0] sm:$0xff]
  %v5814 = vld [vmem:[%s5 + $0xa8] sm:$0xff]
  %v5815 = vld [vmem:[%s5 + $0xb0] sm:$0xff]
  %v5816 = vld [vmem:[%s5 + $0xb8] sm:$0xff]
  %v5817 = vld [vmem:[%s5 + $0xc0] sm:$0xff]
  %v5818 = vld [vmem:[%s5 + $0xc8] sm:$0xff]
  %v5819 = vld [vmem:[%s5 + $0xd0] sm:$0xff]
  %v5820 = vld [vmem:[%s5 + $0xd8] sm:$0xff]
  %v5821 = vld [vmem:[%s5 + $0xe0] sm:$0xff]
  %v5822 = vld [vmem:[%s5 + $0xe8] sm:$0xff]
  %v5823 = vld [vmem:[%s5 + $0xf0] sm:$0xff]
  %v5824 = vld [vmem:[%s5 + $0xf8] sm:$0xff]
  %v5825 = vld [vmem:[%s5 + $0x100] sm:$0xff]
  %v5826 = vld [vmem:[%s5 + $0x108] sm:$0xff]
  %v5827 = vld [vmem:[%s5 + $0x110] sm:$0xff]
  %v5828 = vld [vmem:[%s5 + $0x118] sm:$0xff]
  %v5829 = vld [vmem:[%s5 + $0x120] sm:$0xff]
  %v5830 = vld [vmem:[%s5 + $0x128] sm:$0xff]
  %v5831 = vld [vmem:[%s5 + $0x130] sm:$0xff]
  %v5832 = vld [vmem:[%s5 + $0x138] sm:$0xff]
  %v5833 = vld [vmem:[%s5 + $0x140] sm:$0xff]
  %v5834 = vld [vmem:[%s5 + $0x148] sm:$0xff]
  %v5835 = vld [vmem:[%s5 + $0x150] sm:$0xff]
  %v5836 = vld [vmem:[%s5 + $0x158] sm:$0xff]
  %v5837 = vld [vmem:[%s5 + $0x160] sm:$0xff]
  %v5838 = vld [vmem:[%s5 + $0x168] sm:$0xff]
  %v5839 = vld [vmem:[%s5 + $0x170] sm:$0xff]
  %v5840 = vld [vmem:[%s5 + $0x178] sm:$0xff]
  %v5841 = vld [vmem:[%s5 + $0x180] sm:$0xff]
  %v5842 = vld [vmem:[%s5 + $0x188] sm:$0xff]
  %v5843 = vld [vmem:[%s5 + $0x190] sm:$0xff]
  %v5844 = vld [vmem:[%s5 + $0x198] sm:$0xff]
  %v5845 = vld [vmem:[%s5 + $0x1a0] sm:$0xff]
  %v5846 = vld [vmem:[%s5 + $0x1a8] sm:$0xff]
  %v5847 = vld [vmem:[%s5 + $0x1b0] sm:$0xff]
  %v5848 = vld [vmem:[%s5 + $0x1b8] sm:$0xff]
  %v5849 = vld [vmem:[%s5 + $0x1c0] sm:$0xff]
  %v5850 = vld [vmem:[%s5 + $0x1c8] sm:$0xff]
  %v5851 = vld [vmem:[%s5 + $0x1d0] sm:$0xff]
  %v5852 = vld [vmem:[%s5 + $0x1d8] sm:$0xff]
  %v5853 = vld [vmem:[%s5 + $0x1e0] sm:$0xff]
  %v5854 = vld [vmem:[%s5 + $0x1e8] sm:$0xff]
  %v5855 = vld [vmem:[%s5 + $0x1f0] sm:$0xff]
  %v5856 = vld [vmem:[%s5 + $0x1f8] sm:$0xff]
  %v5857 = vld [vmem:[%s5 + $0x200] sm:$0xff]
  %v5858 = vld [vmem:[%s5 + $0x208] sm:$0xff]
  %v5859 = vld [vmem:[%s5 + $0x210] sm:$0xff]
  %v5860 = vld [vmem:[%s5 + $0x218] sm:$0xff]
  %v5861 = vld [vmem:[%s5 + $0x220] sm:$0xff]
  %v5862 = vld [vmem:[%s5 + $0x228] sm:$0xff]
  %v5863 = vld [vmem:[%s5 + $0x230] sm:$0xff]
  %v5864 = vld [vmem:[%s5 + $0x238] sm:$0xff]
  %v5865 = vld [vmem:[%s5 + $0x240] sm:$0xff]
  %v5866 = vld [vmem:[%s5 + $0x248] sm:$0xff]
  %v5867 = vld [vmem:[%s5 + $0x250] sm:$0xff]
  %v5868 = vld [vmem:[%s5 + $0x258] sm:$0xff]
  %v5869 = vld [vmem:[%s5 + $0x260] sm:$0xff]
  %v5870 = vld [vmem:[%s5 + $0x268] sm:$0xff]
  %v5871 = vld [vmem:[%s5 + $0x270] sm:$0xff]
  %v5872 = vld [vmem:[%s5 + $0x278] sm:$0xff]
  %v5873 = vld [vmem:[%s5 + $0x280] sm:$0xff]
  %v5874 = vld [vmem:[%s5 + $0x288] sm:$0xff]
  %v5875 = vld [vmem:[%s5 + $0x290] sm:$0xff]
  %v5876 = vld [vmem:[%s5 + $0x298] sm:$0xff]
  %v5877 = vld [vmem:[%s5 + $0x2a0] sm:$0xff]
  %v5878 = vld [vmem:[%s5 + $0x2a8] sm:$0xff]
  %v5879 = vld [vmem:[%s5 + $0x2b0] sm:$0xff]
  %v5880 = vld [vmem:[%s5 + $0x2b8] sm:$0xff]
  %v5881 = vld [vmem:[%s5 + $0x2c0] sm:$0xff]
  %v5882 = vld [vmem:[%s5 + $0x2c8] sm:$0xff]
  %v5883 = vld [vmem:[%s5 + $0x2d0] sm:$0xff]
  %v5884 = vld [vmem:[%s5 + $0x2d8] sm:$0xff]
  %v5885 = vld [vmem:[%s5 + $0x2e0] sm:$0xff]
  %v5886 = vld [vmem:[%s5 + $0x2e8] sm:$0xff]
  %v5887 = vld [vmem:[%s5 + $0x2f0] sm:$0xff]
  %v5888 = vld [vmem:[%s5 + $0x2f8] sm:$0xff]
  %v5889 = vld [vmem:[%s5 + $0x300] sm:$0xff]
  %v5890 = vld [vmem:[%s5 + $0x308] sm:$0xff]
  %v5891 = vld [vmem:[%s5 + $0x310] sm:$0xff]
  %v5892 = vld [vmem:[%s5 + $0x318] sm:$0xff]
  %v5893 = vld [vmem:[%s5 + $0x320] sm:$0xff]
  %v5894 = vld [vmem:[%s5 + $0x328] sm:$0xff]
  %v5895 = vld [vmem:[%s5 + $0x330] sm:$0xff]
  %v5896 = vld [vmem:[%s5 + $0x338] sm:$0xff]
  %v5897 = vld [vmem:[%s5 + $0x340] sm:$0xff]
  %v5898 = vld [vmem:[%s5 + $0x348] sm:$0xff]
  %v5899 = vld [vmem:[%s5 + $0x350] sm:$0xff]
  %v5900 = vld [vmem:[%s5 + $0x358] sm:$0xff]
  %v5901 = vld [vmem:[%s5 + $0x360] sm:$0xff]
  %v5902 = vld [vmem:[%s5 + $0x368] sm:$0xff]
  %v5903 = vld [vmem:[%s5 + $0x370] sm:$0xff]
  %v5904 = vld [vmem:[%s5 + $0x378] sm:$0xff]
  %v5905 = vld [vmem:[%s5 + $0x380] sm:$0xff]
  %v5906 = vld [vmem:[%s5 + $0x388] sm:$0xff]
  %v5907 = vld [vmem:[%s5 + $0x390] sm:$0xff]
  %v5908 = vld [vmem:[%s5 + $0x398] sm:$0xff]
  %v5909 = vld [vmem:[%s5 + $0x3a0] sm:$0xff]
  %v5910 = vld [vmem:[%s5 + $0x3a8] sm:$0xff]
  %v5911 = vld [vmem:[%s5 + $0x3b0] sm:$0xff]
  %v5912 = vld [vmem:[%s5 + $0x3b8] sm:$0xff]
  %v5913 = vld [vmem:[%s5 + $0x3c0] sm:$0xff]
  %v5914 = vld [vmem:[%s5 + $0x3c8] sm:$0xff]
  %v5915 = vld [vmem:[%s5 + $0x3d0] sm:$0xff]
  %v5916 = vld [vmem:[%s5 + $0x3d8] sm:$0xff]
  %v5917 = vld [vmem:[%s5 + $0x3e0] sm:$0xff]
  %v5918 = vld [vmem:[%s5 + $0x3e8] sm:$0xff]
  %v5919 = vld [vmem:[%s5 + $0x3f0] sm:$0xff]
  %v5920 = vld [vmem:[%s5 + $0x3f8] sm:$0xff]
  %5921 = vmatpush.msra.mxu0 %v5913
  %5922 = vmatpush.msra.mxu0 %v5905
  %5923 = vmatpush.msra.mxu0 %v5897
  %5924 = vmatpush.msra.mxu0 %v5889
  %5925 = vmatpush.msra.mxu0 %v5881
  %5926 = vmatpush.msra.mxu0 %v5873
  %5927 = vmatpush.msra.mxu0 %v5865
  %5928 = vmatpush.msra.mxu0 %v5857
  %5929 = vmatpush.msra.mxu0 %v5849
  %5930 = vmatpush.msra.mxu0 %v5841
  %5931 = vmatpush.msra.mxu0 %v5833
  %5932 = vmatpush.msra.mxu0 %v5825
  %5933 = vmatpush.msra.mxu0 %v5817
  %5934 = vmatpush.msra.mxu0 %v5809
  %5935 = vmatpush.msra.mxu0 %v5801
  %5936 = vmatpush.msra.mxu0 %v5793
  %5937 = vmatmul.f32.gmra.mxu0 %v5770
  %v5938 = vpop.f32.mrf.mxu0
  %v5939 = vadd.f32 0.0, %v5938
  %5940 = vdwg.mxu0
  %5941 = vmatpush.msra.mxu0 %v5914
  %5942 = vmatpush.msra.mxu0 %v5906
  %5943 = vmatpush.msra.mxu0 %v5898
  %5944 = vmatpush.msra.mxu0 %v5890
  %5945 = vmatpush.msra.mxu0 %v5882
  %5946 = vmatpush.msra.mxu0 %v5874
  %5947 = vmatpush.msra.mxu0 %v5866
  %5948 = vmatpush.msra.mxu0 %v5858
  %5949 = vmatpush.msra.mxu0 %v5850
  %5950 = vmatpush.msra.mxu0 %v5842
  %5951 = vmatpush.msra.mxu0 %v5834
  %5952 = vmatpush.msra.mxu0 %v5826
  %5953 = vmatpush.msra.mxu0 %v5818
  %5954 = vmatpush.msra.mxu0 %v5810
  %5955 = vmatpush.msra.mxu0 %v5802
  %5956 = vmatpush.msra.mxu0 %v5794
  %5957 = vmatmul.f32.gmra.mxu0 %v5770
  %v5958 = vpop.f32.mrf.mxu0
  %v5959 = vadd.f32 0.0, %v5958
  %5960 = vdwg.mxu0
  %5961 = vmatpush.msra.mxu0 %v5915
  %5962 = vmatpush.msra.mxu0 %v5907
  %5963 = vmatpush.msra.mxu0 %v5899
  %5964 = vmatpush.msra.mxu0 %v5891
  %5965 = vmatpush.msra.mxu0 %v5883
  %5966 = vmatpush.msra.mxu0 %v5875
  %5967 = vmatpush.msra.mxu0 %v5867
  %5968 = vmatpush.msra.mxu0 %v5859
  %5969 = vmatpush.msra.mxu0 %v5851
  %5970 = vmatpush.msra.mxu0 %v5843
  %5971 = vmatpush.msra.mxu0 %v5835
  %5972 = vmatpush.msra.mxu0 %v5827
  %5973 = vmatpush.msra.mxu0 %v5819
  %5974 = vmatpush.msra.mxu0 %v5811
  %5975 = vmatpush.msra.mxu0 %v5803
  %5976 = vmatpush.msra.mxu0 %v5795
  %5977 = vmatmul.f32.gmra.mxu0 %v5770
  %v5978 = vpop.f32.mrf.mxu0
  %v5979 = vadd.f32 0.0, %v5978
  %5980 = vdwg.mxu0
  %5981 = vmatpush.msra.mxu0 %v5916
  %5982 = vmatpush.msra.mxu0 %v5908
  %5983 = vmatpush.msra.mxu0 %v5900
  %5984 = vmatpush.msra.mxu0 %v5892
  %5985 = vmatpush.msra.mxu0 %v5884
  %5986 = vmatpush.msra.mxu0 %v5876
  %5987 = vmatpush.msra.mxu0 %v5868
  %5988 = vmatpush.msra.mxu0 %v5860
  %5989 = vmatpush.msra.mxu0 %v5852
  %5990 = vmatpush.msra.mxu0 %v5844
  %5991 = vmatpush.msra.mxu0 %v5836
  %5992 = vmatpush.msra.mxu0 %v5828
  %5993 = vmatpush.msra.mxu0 %v5820
  %5994 = vmatpush.msra.mxu0 %v5812
  %5995 = vmatpush.msra.mxu0 %v5804
  %5996 = vmatpush.msra.mxu0 %v5796
  %5997 = vmatmul.f32.gmra.mxu0 %v5770
  %v5998 = vpop.f32.mrf.mxu0
  %v5999 = vadd.f32 0.0, %v5998
  %6000 = vdwg.mxu0
  %6001 = vmatpush.msra.mxu0 %v5917
  %6002 = vmatpush.msra.mxu0 %v5909
  %6003 = vmatpush.msra.mxu0 %v5901
  %6004 = vmatpush.msra.mxu0 %v5893
  %6005 = vmatpush.msra.mxu0 %v5885
  %6006 = vmatpush.msra.mxu0 %v5877
  %6007 = vmatpush.msra.mxu0 %v5869
  %6008 = vmatpush.msra.mxu0 %v5861
  %6009 = vmatpush.msra.mxu0 %v5853
  %6010 = vmatpush.msra.mxu0 %v5845
  %6011 = vmatpush.msra.mxu0 %v5837
  %6012 = vmatpush.msra.mxu0 %v5829
  %6013 = vmatpush.msra.mxu0 %v5821
  %6014 = vmatpush.msra.mxu0 %v5813
  %6015 = vmatpush.msra.mxu0 %v5805
  %6016 = vmatpush.msra.mxu0 %v5797
  %6017 = vmatmul.f32.gmra.mxu0 %v5770
  %v6018 = vpop.f32.mrf.mxu0
  %v6019 = vadd.f32 0.0, %v6018
  %6020 = vdwg.mxu0
  %6021 = vmatpush.msra.mxu0 %v5918
  %6022 = vmatpush.msra.mxu0 %v5910
  %6023 = vmatpush.msra.mxu0 %v5902
  %6024 = vmatpush.msra.mxu0 %v5894
  %6025 = vmatpush.msra.mxu0 %v5886
  %6026 = vmatpush.msra.mxu0 %v5878
  %6027 = vmatpush.msra.mxu0 %v5870
  %6028 = vmatpush.msra.mxu0 %v5862
  %6029 = vmatpush.msra.mxu0 %v5854
  %6030 = vmatpush.msra.mxu0 %v5846
  %6031 = vmatpush.msra.mxu0 %v5838
  %6032 = vmatpush.msra.mxu0 %v5830
  %6033 = vmatpush.msra.mxu0 %v5822
  %6034 = vmatpush.msra.mxu0 %v5814
  %6035 = vmatpush.msra.mxu0 %v5806
  %6036 = vmatpush.msra.mxu0 %v5798
  %6037 = vmatmul.f32.gmra.mxu0 %v5770
  %v6038 = vpop.f32.mrf.mxu0
  %v6039 = vadd.f32 0.0, %v6038
  %6040 = vdwg.mxu0
  %6041 = vmatpush.msra.mxu0 %v5919
  %6042 = vmatpush.msra.mxu0 %v5911
  %6043 = vmatpush.msra.mxu0 %v5903
  %6044 = vmatpush.msra.mxu0 %v5895
  %6045 = vmatpush.msra.mxu0 %v5887
  %6046 = vmatpush.msra.mxu0 %v5879
  %6047 = vmatpush.msra.mxu0 %v5871
  %6048 = vmatpush.msra.mxu0 %v5863
  %6049 = vmatpush.msra.mxu0 %v5855
  %6050 = vmatpush.msra.mxu0 %v5847
  %6051 = vmatpush.msra.mxu0 %v5839
  %6052 = vmatpush.msra.mxu0 %v5831
  %6053 = vmatpush.msra.mxu0 %v5823
  %6054 = vmatpush.msra.mxu0 %v5815
  %6055 = vmatpush.msra.mxu0 %v5807
  %6056 = vmatpush.msra.mxu0 %v5799
  %6057 = vmatmul.f32.gmra.mxu0 %v5770
  %v6058 = vpop.f32.mrf.mxu0
  %v6059 = vadd.f32 0.0, %v6058
  %6060 = vdwg.mxu0
  %6061 = vmatpush.msra.mxu0 %v5920
  %6062 = vmatpush.msra.mxu0 %v5912
  %6063 = vmatpush.msra.mxu0 %v5904
  %6064 = vmatpush.msra.mxu0 %v5896
  %6065 = vmatpush.msra.mxu0 %v5888
  %6066 = vmatpush.msra.mxu0 %v5880
  %6067 = vmatpush.msra.mxu0 %v5872
  %6068 = vmatpush.msra.mxu0 %v5864
  %6069 = vmatpush.msra.mxu0 %v5856
  %6070 = vmatpush.msra.mxu0 %v5848
  %6071 = vmatpush.msra.mxu0 %v5840
  %6072 = vmatpush.msra.mxu0 %v5832
  %6073 = vmatpush.msra.mxu0 %v5824
  %6074 = vmatpush.msra.mxu0 %v5816
  %6075 = vmatpush.msra.mxu0 %v5808
  %6076 = vmatpush.msra.mxu0 %v5800
  %6077 = vmatmul.f32.gmra.mxu0 %v5770
  %v6078 = vpop.f32.mrf.mxu0
  %v6079 = vadd.f32 0.0, %v6078
  %6080 = vdwg.mxu0
  %v6081 = vld [vmem:[%s1466] sm:$0xff]
  %v6082 = vadd.f32 %v6081, %v6079
  %6083 = vst [vmem:[%s1466] sm:$0xff] %v6082
  %v6084 = vld [vmem:[%s1470] sm:$0xff]
  %v6085 = vadd.f32 %v6084, %v5939
  %6086 = vst [vmem:[%s1470] sm:$0xff] %v6085
  %v6087 = vld [vmem:[%s1474] sm:$0xff]
  %v6088 = vadd.f32 %v6087, %v5959
  %6089 = vst [vmem:[%s1474] sm:$0xff] %v6088
  %v6090 = vld [vmem:[%s1478] sm:$0xff]
  %v6091 = vadd.f32 %v6090, %v5979
  %6092 = vst [vmem:[%s1478] sm:$0xff] %v6091
  %v6093 = vld [vmem:[%s1482] sm:$0xff]
  %v6094 = vadd.f32 %v6093, %v5999
  %6095 = vst [vmem:[%s1482] sm:$0xff] %v6094
  %v6096 = vld [vmem:[%s1486] sm:$0xff]
  %v6097 = vadd.f32 %v6096, %v6019
  %6098 = vst [vmem:[%s1486] sm:$0xff] %v6097
  %v6099 = vld [vmem:[%s1490] sm:$0xff]
  %v6100 = vadd.f32 %v6099, %v6039
  %6101 = vst [vmem:[%s1490] sm:$0xff] %v6100
  %v6102 = vld [vmem:[%s1494] sm:$0xff]
  %v6103 = vadd.f32 %v6102, %v6059
  %6104 = vst [vmem:[%s1494] sm:$0xff] %v6103
  %v6105 = vld [vmem:[%s5] sm:$0xff]
  %v6106 = vld [vmem:[%s5 + $0x8] sm:$0xff]
  %v6107 = vld [vmem:[%s5 + $0x10] sm:$0xff]
  %v6108 = vld [vmem:[%s5 + $0x18] sm:$0xff]
  %v6109 = vld [vmem:[%s5 + $0x20] sm:$0xff]
  %v6110 = vld [vmem:[%s5 + $0x28] sm:$0xff]
  %v6111 = vld [vmem:[%s5 + $0x30] sm:$0xff]
  %v6112 = vld [vmem:[%s5 + $0x38] sm:$0xff]
  %v6113 = vld [vmem:[%s5 + $0x40] sm:$0xff]
  %v6114 = vld [vmem:[%s5 + $0x48] sm:$0xff]
  %v6115 = vld [vmem:[%s5 + $0x50] sm:$0xff]
  %v6116 = vld [vmem:[%s5 + $0x58] sm:$0xff]
  %v6117 = vld [vmem:[%s5 + $0x60] sm:$0xff]
  %v6118 = vld [vmem:[%s5 + $0x68] sm:$0xff]
  %v6119 = vld [vmem:[%s5 + $0x70] sm:$0xff]
  %v6120 = vld [vmem:[%s5 + $0x78] sm:$0xff]
  %v6121 = vld [vmem:[%s5 + $0x80] sm:$0xff]
  %v6122 = vld [vmem:[%s5 + $0x88] sm:$0xff]
  %v6123 = vld [vmem:[%s5 + $0x90] sm:$0xff]
  %v6124 = vld [vmem:[%s5 + $0x98] sm:$0xff]
  %v6125 = vld [vmem:[%s5 + $0xa0] sm:$0xff]
  %v6126 = vld [vmem:[%s5 + $0xa8] sm:$0xff]
  %v6127 = vld [vmem:[%s5 + $0xb0] sm:$0xff]
  %v6128 = vld [vmem:[%s5 + $0xb8] sm:$0xff]
  %v6129 = vld [vmem:[%s5 + $0xc0] sm:$0xff]
  %v6130 = vld [vmem:[%s5 + $0xc8] sm:$0xff]
  %v6131 = vld [vmem:[%s5 + $0xd0] sm:$0xff]
  %v6132 = vld [vmem:[%s5 + $0xd8] sm:$0xff]
  %v6133 = vld [vmem:[%s5 + $0xe0] sm:$0xff]
  %v6134 = vld [vmem:[%s5 + $0xe8] sm:$0xff]
  %v6135 = vld [vmem:[%s5 + $0xf0] sm:$0xff]
  %v6136 = vld [vmem:[%s5 + $0xf8] sm:$0xff]
  %v6137 = vld [vmem:[%s5 + $0x100] sm:$0xff]
  %v6138 = vld [vmem:[%s5 + $0x108] sm:$0xff]
  %v6139 = vld [vmem:[%s5 + $0x110] sm:$0xff]
  %v6140 = vld [vmem:[%s5 + $0x118] sm:$0xff]
  %v6141 = vld [vmem:[%s5 + $0x120] sm:$0xff]
  %v6142 = vld [vmem:[%s5 + $0x128] sm:$0xff]
  %v6143 = vld [vmem:[%s5 + $0x130] sm:$0xff]
  %v6144 = vld [vmem:[%s5 + $0x138] sm:$0xff]
  %v6145 = vld [vmem:[%s5 + $0x140] sm:$0xff]
  %v6146 = vld [vmem:[%s5 + $0x148] sm:$0xff]
  %v6147 = vld [vmem:[%s5 + $0x150] sm:$0xff]
  %v6148 = vld [vmem:[%s5 + $0x158] sm:$0xff]
  %v6149 = vld [vmem:[%s5 + $0x160] sm:$0xff]
  %v6150 = vld [vmem:[%s5 + $0x168] sm:$0xff]
  %v6151 = vld [vmem:[%s5 + $0x170] sm:$0xff]
  %v6152 = vld [vmem:[%s5 + $0x178] sm:$0xff]
  %v6153 = vld [vmem:[%s5 + $0x180] sm:$0xff]
  %v6154 = vld [vmem:[%s5 + $0x188] sm:$0xff]
  %v6155 = vld [vmem:[%s5 + $0x190] sm:$0xff]
  %v6156 = vld [vmem:[%s5 + $0x198] sm:$0xff]
  %v6157 = vld [vmem:[%s5 + $0x1a0] sm:$0xff]
  %v6158 = vld [vmem:[%s5 + $0x1a8] sm:$0xff]
  %v6159 = vld [vmem:[%s5 + $0x1b0] sm:$0xff]
  %v6160 = vld [vmem:[%s5 + $0x1b8] sm:$0xff]
  %v6161 = vld [vmem:[%s5 + $0x1c0] sm:$0xff]
  %v6162 = vld [vmem:[%s5 + $0x1c8] sm:$0xff]
  %v6163 = vld [vmem:[%s5 + $0x1d0] sm:$0xff]
  %v6164 = vld [vmem:[%s5 + $0x1d8] sm:$0xff]
  %v6165 = vld [vmem:[%s5 + $0x1e0] sm:$0xff]
  %v6166 = vld [vmem:[%s5 + $0x1e8] sm:$0xff]
  %v6167 = vld [vmem:[%s5 + $0x1f0] sm:$0xff]
  %v6168 = vld [vmem:[%s5 + $0x1f8] sm:$0xff]
  %v6169 = vld [vmem:[%s5 + $0x200] sm:$0xff]
  %v6170 = vld [vmem:[%s5 + $0x208] sm:$0xff]
  %v6171 = vld [vmem:[%s5 + $0x210] sm:$0xff]
  %v6172 = vld [vmem:[%s5 + $0x218] sm:$0xff]
  %v6173 = vld [vmem:[%s5 + $0x220] sm:$0xff]
  %v6174 = vld [vmem:[%s5 + $0x228] sm:$0xff]
  %v6175 = vld [vmem:[%s5 + $0x230] sm:$0xff]
  %v6176 = vld [vmem:[%s5 + $0x238] sm:$0xff]
  %v6177 = vld [vmem:[%s5 + $0x240] sm:$0xff]
  %v6178 = vld [vmem:[%s5 + $0x248] sm:$0xff]
  %v6179 = vld [vmem:[%s5 + $0x250] sm:$0xff]
  %v6180 = vld [vmem:[%s5 + $0x258] sm:$0xff]
  %v6181 = vld [vmem:[%s5 + $0x260] sm:$0xff]
  %v6182 = vld [vmem:[%s5 + $0x268] sm:$0xff]
  %v6183 = vld [vmem:[%s5 + $0x270] sm:$0xff]
  %v6184 = vld [vmem:[%s5 + $0x278] sm:$0xff]
  %v6185 = vld [vmem:[%s5 + $0x280] sm:$0xff]
  %v6186 = vld [vmem:[%s5 + $0x288] sm:$0xff]
  %v6187 = vld [vmem:[%s5 + $0x290] sm:$0xff]
  %v6188 = vld [vmem:[%s5 + $0x298] sm:$0xff]
  %v6189 = vld [vmem:[%s5 + $0x2a0] sm:$0xff]
  %v6190 = vld [vmem:[%s5 + $0x2a8] sm:$0xff]
  %v6191 = vld [vmem:[%s5 + $0x2b0] sm:$0xff]
  %v6192 = vld [vmem:[%s5 + $0x2b8] sm:$0xff]
  %v6193 = vld [vmem:[%s5 + $0x2c0] sm:$0xff]
  %v6194 = vld [vmem:[%s5 + $0x2c8] sm:$0xff]
  %v6195 = vld [vmem:[%s5 + $0x2d0] sm:$0xff]
  %v6196 = vld [vmem:[%s5 + $0x2d8] sm:$0xff]
  %v6197 = vld [vmem:[%s5 + $0x2e0] sm:$0xff]
  %v6198 = vld [vmem:[%s5 + $0x2e8] sm:$0xff]
  %v6199 = vld [vmem:[%s5 + $0x2f0] sm:$0xff]
  %v6200 = vld [vmem:[%s5 + $0x2f8] sm:$0xff]
  %v6201 = vld [vmem:[%s5 + $0x300] sm:$0xff]
  %v6202 = vld [vmem:[%s5 + $0x308] sm:$0xff]
  %v6203 = vld [vmem:[%s5 + $0x310] sm:$0xff]
  %v6204 = vld [vmem:[%s5 + $0x318] sm:$0xff]
  %v6205 = vld [vmem:[%s5 + $0x320] sm:$0xff]
  %v6206 = vld [vmem:[%s5 + $0x328] sm:$0xff]
  %v6207 = vld [vmem:[%s5 + $0x330] sm:$0xff]
  %v6208 = vld [vmem:[%s5 + $0x338] sm:$0xff]
  %v6209 = vld [vmem:[%s5 + $0x340] sm:$0xff]
  %v6210 = vld [vmem:[%s5 + $0x348] sm:$0xff]
  %v6211 = vld [vmem:[%s5 + $0x350] sm:$0xff]
  %v6212 = vld [vmem:[%s5 + $0x358] sm:$0xff]
  %v6213 = vld [vmem:[%s5 + $0x360] sm:$0xff]
  %v6214 = vld [vmem:[%s5 + $0x368] sm:$0xff]
  %v6215 = vld [vmem:[%s5 + $0x370] sm:$0xff]
  %v6216 = vld [vmem:[%s5 + $0x378] sm:$0xff]
  %v6217 = vld [vmem:[%s5 + $0x380] sm:$0xff]
  %v6218 = vld [vmem:[%s5 + $0x388] sm:$0xff]
  %v6219 = vld [vmem:[%s5 + $0x390] sm:$0xff]
  %v6220 = vld [vmem:[%s5 + $0x398] sm:$0xff]
  %v6221 = vld [vmem:[%s5 + $0x3a0] sm:$0xff]
  %v6222 = vld [vmem:[%s5 + $0x3a8] sm:$0xff]
  %v6223 = vld [vmem:[%s5 + $0x3b0] sm:$0xff]
  %v6224 = vld [vmem:[%s5 + $0x3b8] sm:$0xff]
  %v6225 = vld [vmem:[%s5 + $0x3c0] sm:$0xff]
  %v6226 = vld [vmem:[%s5 + $0x3c8] sm:$0xff]
  %v6227 = vld [vmem:[%s5 + $0x3d0] sm:$0xff]
  %v6228 = vld [vmem:[%s5 + $0x3d8] sm:$0xff]
  %v6229 = vld [vmem:[%s5 + $0x3e0] sm:$0xff]
  %v6230 = vld [vmem:[%s5 + $0x3e8] sm:$0xff]
  %v6231 = vld [vmem:[%s5 + $0x3f0] sm:$0xff]
  %v6232 = vld [vmem:[%s5 + $0x3f8] sm:$0xff]
  %6233 = vmatpush.msra.mxu0 %v6225
  %6234 = vmatpush.msra.mxu0 %v6217
  %6235 = vmatpush.msra.mxu0 %v6209
  %6236 = vmatpush.msra.mxu0 %v6201
  %6237 = vmatpush.msra.mxu0 %v6193
  %6238 = vmatpush.msra.mxu0 %v6185
  %6239 = vmatpush.msra.mxu0 %v6177
  %6240 = vmatpush.msra.mxu0 %v6169
  %6241 = vmatpush.msra.mxu0 %v6161
  %6242 = vmatpush.msra.mxu0 %v6153
  %6243 = vmatpush.msra.mxu0 %v6145
  %6244 = vmatpush.msra.mxu0 %v6137
  %6245 = vmatpush.msra.mxu0 %v6129
  %6246 = vmatpush.msra.mxu0 %v6121
  %6247 = vmatpush.msra.mxu0 %v6113
  %6248 = vmatpush.msra.mxu0 %v6105
  %6249 = vmatmul.f32.gmra.mxu0 %v6082
  %v6250 = vpop.f32.mrf.mxu0
  %v6251 = vadd.f32 0.0, %v6250
  %6252 = vdwg.mxu0
  %6253 = vmatpush.msra.mxu0 %v6226
  %6254 = vmatpush.msra.mxu0 %v6218
  %6255 = vmatpush.msra.mxu0 %v6210
  %6256 = vmatpush.msra.mxu0 %v6202
  %6257 = vmatpush.msra.mxu0 %v6194
  %6258 = vmatpush.msra.mxu0 %v6186
  %6259 = vmatpush.msra.mxu0 %v6178
  %6260 = vmatpush.msra.mxu0 %v6170
  %6261 = vmatpush.msra.mxu0 %v6162
  %6262 = vmatpush.msra.mxu0 %v6154
  %6263 = vmatpush.msra.mxu0 %v6146
  %6264 = vmatpush.msra.mxu0 %v6138
  %6265 = vmatpush.msra.mxu0 %v6130
  %6266 = vmatpush.msra.mxu0 %v6122
  %6267 = vmatpush.msra.mxu0 %v6114
  %6268 = vmatpush.msra.mxu0 %v6106
  %6269 = vmatmul.f32.gmra.mxu0 %v6082
  %v6270 = vpop.f32.mrf.mxu0
  %v6271 = vadd.f32 0.0, %v6270
  %6272 = vdwg.mxu0
  %6273 = vmatpush.msra.mxu0 %v6227
  %6274 = vmatpush.msra.mxu0 %v6219
  %6275 = vmatpush.msra.mxu0 %v6211
  %6276 = vmatpush.msra.mxu0 %v6203
  %6277 = vmatpush.msra.mxu0 %v6195
  %6278 = vmatpush.msra.mxu0 %v6187
  %6279 = vmatpush.msra.mxu0 %v6179
  %6280 = vmatpush.msra.mxu0 %v6171
  %6281 = vmatpush.msra.mxu0 %v6163
  %6282 = vmatpush.msra.mxu0 %v6155
  %6283 = vmatpush.msra.mxu0 %v6147
  %6284 = vmatpush.msra.mxu0 %v6139
  %6285 = vmatpush.msra.mxu0 %v6131
  %6286 = vmatpush.msra.mxu0 %v6123
  %6287 = vmatpush.msra.mxu0 %v6115
  %6288 = vmatpush.msra.mxu0 %v6107
  %6289 = vmatmul.f32.gmra.mxu0 %v6082
  %v6290 = vpop.f32.mrf.mxu0
  %v6291 = vadd.f32 0.0, %v6290
  %6292 = vdwg.mxu0
  %6293 = vmatpush.msra.mxu0 %v6228
  %6294 = vmatpush.msra.mxu0 %v6220
  %6295 = vmatpush.msra.mxu0 %v6212
  %6296 = vmatpush.msra.mxu0 %v6204
  %6297 = vmatpush.msra.mxu0 %v6196
  %6298 = vmatpush.msra.mxu0 %v6188
  %6299 = vmatpush.msra.mxu0 %v6180
  %6300 = vmatpush.msra.mxu0 %v6172
  %6301 = vmatpush.msra.mxu0 %v6164
  %6302 = vmatpush.msra.mxu0 %v6156
  %6303 = vmatpush.msra.mxu0 %v6148
  %6304 = vmatpush.msra.mxu0 %v6140
  %6305 = vmatpush.msra.mxu0 %v6132
  %6306 = vmatpush.msra.mxu0 %v6124
  %6307 = vmatpush.msra.mxu0 %v6116
  %6308 = vmatpush.msra.mxu0 %v6108
  %6309 = vmatmul.f32.gmra.mxu0 %v6082
  %v6310 = vpop.f32.mrf.mxu0
  %v6311 = vadd.f32 0.0, %v6310
  %6312 = vdwg.mxu0
  %6313 = vmatpush.msra.mxu0 %v6229
  %6314 = vmatpush.msra.mxu0 %v6221
  %6315 = vmatpush.msra.mxu0 %v6213
  %6316 = vmatpush.msra.mxu0 %v6205
  %6317 = vmatpush.msra.mxu0 %v6197
  %6318 = vmatpush.msra.mxu0 %v6189
  %6319 = vmatpush.msra.mxu0 %v6181
  %6320 = vmatpush.msra.mxu0 %v6173
  %6321 = vmatpush.msra.mxu0 %v6165
  %6322 = vmatpush.msra.mxu0 %v6157
  %6323 = vmatpush.msra.mxu0 %v6149
  %6324 = vmatpush.msra.mxu0 %v6141
  %6325 = vmatpush.msra.mxu0 %v6133
  %6326 = vmatpush.msra.mxu0 %v6125
  %6327 = vmatpush.msra.mxu0 %v6117
  %6328 = vmatpush.msra.mxu0 %v6109
  %6329 = vmatmul.f32.gmra.mxu0 %v6082
  %v6330 = vpop.f32.mrf.mxu0
  %v6331 = vadd.f32 0.0, %v6330
  %6332 = vdwg.mxu0
  %6333 = vmatpush.msra.mxu0 %v6230
  %6334 = vmatpush.msra.mxu0 %v6222
  %6335 = vmatpush.msra.mxu0 %v6214
  %6336 = vmatpush.msra.mxu0 %v6206
  %6337 = vmatpush.msra.mxu0 %v6198
  %6338 = vmatpush.msra.mxu0 %v6190
  %6339 = vmatpush.msra.mxu0 %v6182
  %6340 = vmatpush.msra.mxu0 %v6174
  %6341 = vmatpush.msra.mxu0 %v6166
  %6342 = vmatpush.msra.mxu0 %v6158
  %6343 = vmatpush.msra.mxu0 %v6150
  %6344 = vmatpush.msra.mxu0 %v6142
  %6345 = vmatpush.msra.mxu0 %v6134
  %6346 = vmatpush.msra.mxu0 %v6126
  %6347 = vmatpush.msra.mxu0 %v6118
  %6348 = vmatpush.msra.mxu0 %v6110
  %6349 = vmatmul.f32.gmra.mxu0 %v6082
  %v6350 = vpop.f32.mrf.mxu0
  %v6351 = vadd.f32 0.0, %v6350
  %6352 = vdwg.mxu0
  %6353 = vmatpush.msra.mxu0 %v6231
  %6354 = vmatpush.msra.mxu0 %v6223
  %6355 = vmatpush.msra.mxu0 %v6215
  %6356 = vmatpush.msra.mxu0 %v6207
  %6357 = vmatpush.msra.mxu0 %v6199
  %6358 = vmatpush.msra.mxu0 %v6191
  %6359 = vmatpush.msra.mxu0 %v6183
  %6360 = vmatpush.msra.mxu0 %v6175
  %6361 = vmatpush.msra.mxu0 %v6167
  %6362 = vmatpush.msra.mxu0 %v6159
  %6363 = vmatpush.msra.mxu0 %v6151
  %6364 = vmatpush.msra.mxu0 %v6143
  %6365 = vmatpush.msra.mxu0 %v6135
  %6366 = vmatpush.msra.mxu0 %v6127
  %6367 = vmatpush.msra.mxu0 %v6119
  %6368 = vmatpush.msra.mxu0 %v6111
  %6369 = vmatmul.f32.gmra.mxu0 %v6082
  %v6370 = vpop.f32.mrf.mxu0
  %v6371 = vadd.f32 0.0, %v6370
  %6372 = vdwg.mxu0
  %6373 = vmatpush.msra.mxu0 %v6232
  %6374 = vmatpush.msra.mxu0 %v6224
  %6375 = vmatpush.msra.mxu0 %v6216
  %6376 = vmatpush.msra.mxu0 %v6208
  %6377 = vmatpush.msra.mxu0 %v6200
  %6378 = vmatpush.msra.mxu0 %v6192
  %6379 = vmatpush.msra.mxu0 %v6184
  %6380 = vmatpush.msra.mxu0 %v6176
  %6381 = vmatpush.msra.mxu0 %v6168
  %6382 = vmatpush.msra.mxu0 %v6160
  %6383 = vmatpush.msra.mxu0 %v6152
  %6384 = vmatpush.msra.mxu0 %v6144
  %6385 = vmatpush.msra.mxu0 %v6136
  %6386 = vmatpush.msra.mxu0 %v6128
  %6387 = vmatpush.msra.mxu0 %v6120
  %6388 = vmatpush.msra.mxu0 %v6112
  %6389 = vmatmul.f32.gmra.mxu0 %v6082
  %v6390 = vpop.f32.mrf.mxu0
  %v6391 = vadd.f32 0.0, %v6390
  %6392 = vdwg.mxu0
  %v6393 = vld [vmem:[%s1786] sm:$0xff]
  %v6394 = vadd.f32 %v6393, %v6391
  %6395 = vst [vmem:[%s1786] sm:$0xff] %v6394
  %v6396 = vld [vmem:[%s1790] sm:$0xff]
  %v6397 = vadd.f32 %v6396, %v6251
  %6398 = vst [vmem:[%s1790] sm:$0xff] %v6397
  %v6399 = vld [vmem:[%s1794] sm:$0xff]
  %v6400 = vadd.f32 %v6399, %v6271
  %6401 = vst [vmem:[%s1794] sm:$0xff] %v6400
  %v6402 = vld [vmem:[%s1798] sm:$0xff]
  %v6403 = vadd.f32 %v6402, %v6291
  %6404 = vst [vmem:[%s1798] sm:$0xff] %v6403
  %v6405 = vld [vmem:[%s1802] sm:$0xff]
  %v6406 = vadd.f32 %v6405, %v6311
  %6407 = vst [vmem:[%s1802] sm:$0xff] %v6406
  %v6408 = vld [vmem:[%s1806] sm:$0xff]
  %v6409 = vadd.f32 %v6408, %v6331
  %6410 = vst [vmem:[%s1806] sm:$0xff] %v6409
  %v6411 = vld [vmem:[%s1810] sm:$0xff]
  %v6412 = vadd.f32 %v6411, %v6351
  %6413 = vst [vmem:[%s1810] sm:$0xff] %v6412
  %v6414 = vld [vmem:[%s1814] sm:$0xff]
  %v6415 = vadd.f32 %v6414, %v6371
  %6416 = vst [vmem:[%s1814] sm:$0xff] %v6415
  %v6417 = vld [vmem:[%s5] sm:$0xff]
  %v6418 = vld [vmem:[%s5 + $0x8] sm:$0xff]
  %v6419 = vld [vmem:[%s5 + $0x10] sm:$0xff]
  %v6420 = vld [vmem:[%s5 + $0x18] sm:$0xff]
  %v6421 = vld [vmem:[%s5 + $0x20] sm:$0xff]
  %v6422 = vld [vmem:[%s5 + $0x28] sm:$0xff]
  %v6423 = vld [vmem:[%s5 + $0x30] sm:$0xff]
  %v6424 = vld [vmem:[%s5 + $0x38] sm:$0xff]
  %v6425 = vld [vmem:[%s5 + $0x40] sm:$0xff]
  %v6426 = vld [vmem:[%s5 + $0x48] sm:$0xff]
  %v6427 = vld [vmem:[%s5 + $0x50] sm:$0xff]
  %v6428 = vld [vmem:[%s5 + $0x58] sm:$0xff]
  %v6429 = vld [vmem:[%s5 + $0x60] sm:$0xff]
  %v6430 = vld [vmem:[%s5 + $0x68] sm:$0xff]
  %v6431 = vld [vmem:[%s5 + $0x70] sm:$0xff]
  %v6432 = vld [vmem:[%s5 + $0x78] sm:$0xff]
  %v6433 = vld [vmem:[%s5 + $0x80] sm:$0xff]
  %v6434 = vld [vmem:[%s5 + $0x88] sm:$0xff]
  %v6435 = vld [vmem:[%s5 + $0x90] sm:$0xff]
  %v6436 = vld [vmem:[%s5 + $0x98] sm:$0xff]
  %v6437 = vld [vmem:[%s5 + $0xa0] sm:$0xff]
  %v6438 = vld [vmem:[%s5 + $0xa8] sm:$0xff]
  %v6439 = vld [vmem:[%s5 + $0xb0] sm:$0xff]
  %v6440 = vld [vmem:[%s5 + $0xb8] sm:$0xff]
  %v6441 = vld [vmem:[%s5 + $0xc0] sm:$0xff]
  %v6442 = vld [vmem:[%s5 + $0xc8] sm:$0xff]
  %v6443 = vld [vmem:[%s5 + $0xd0] sm:$0xff]
  %v6444 = vld [vmem:[%s5 + $0xd8] sm:$0xff]
  %v6445 = vld [vmem:[%s5 + $0xe0] sm:$0xff]
  %v6446 = vld [vmem:[%s5 + $0xe8] sm:$0xff]
  %v6447 = vld [vmem:[%s5 + $0xf0] sm:$0xff]
  %v6448 = vld [vmem:[%s5 + $0xf8] sm:$0xff]
  %v6449 = vld [vmem:[%s5 + $0x100] sm:$0xff]
  %v6450 = vld [vmem:[%s5 + $0x108] sm:$0xff]
  %v6451 = vld [vmem:[%s5 + $0x110] sm:$0xff]
  %v6452 = vld [vmem:[%s5 + $0x118] sm:$0xff]
  %v6453 = vld [vmem:[%s5 + $0x120] sm:$0xff]
  %v6454 = vld [vmem:[%s5 + $0x128] sm:$0xff]
  %v6455 = vld [vmem:[%s5 + $0x130] sm:$0xff]
  %v6456 = vld [vmem:[%s5 + $0x138] sm:$0xff]
  %v6457 = vld [vmem:[%s5 + $0x140] sm:$0xff]
  %v6458 = vld [vmem:[%s5 + $0x148] sm:$0xff]
  %v6459 = vld [vmem:[%s5 + $0x150] sm:$0xff]
  %v6460 = vld [vmem:[%s5 + $0x158] sm:$0xff]
  %v6461 = vld [vmem:[%s5 + $0x160] sm:$0xff]
  %v6462 = vld [vmem:[%s5 + $0x168] sm:$0xff]
  %v6463 = vld [vmem:[%s5 + $0x170] sm:$0xff]
  %v6464 = vld [vmem:[%s5 + $0x178] sm:$0xff]
  %v6465 = vld [vmem:[%s5 + $0x180] sm:$0xff]
  %v6466 = vld [vmem:[%s5 + $0x188] sm:$0xff]
  %v6467 = vld [vmem:[%s5 + $0x190] sm:$0xff]
  %v6468 = vld [vmem:[%s5 + $0x198] sm:$0xff]
  %v6469 = vld [vmem:[%s5 + $0x1a0] sm:$0xff]
  %v6470 = vld [vmem:[%s5 + $0x1a8] sm:$0xff]
  %v6471 = vld [vmem:[%s5 + $0x1b0] sm:$0xff]
  %v6472 = vld [vmem:[%s5 + $0x1b8] sm:$0xff]
  %v6473 = vld [vmem:[%s5 + $0x1c0] sm:$0xff]
  %v6474 = vld [vmem:[%s5 + $0x1c8] sm:$0xff]
  %v6475 = vld [vmem:[%s5 + $0x1d0] sm:$0xff]
  %v6476 = vld [vmem:[%s5 + $0x1d8] sm:$0xff]
  %v6477 = vld [vmem:[%s5 + $0x1e0] sm:$0xff]
  %v6478 = vld [vmem:[%s5 + $0x1e8] sm:$0xff]
  %v6479 = vld [vmem:[%s5 + $0x1f0] sm:$0xff]
  %v6480 = vld [vmem:[%s5 + $0x1f8] sm:$0xff]
  %v6481 = vld [vmem:[%s5 + $0x200] sm:$0xff]
  %v6482 = vld [vmem:[%s5 + $0x208] sm:$0xff]
  %v6483 = vld [vmem:[%s5 + $0x210] sm:$0xff]
  %v6484 = vld [vmem:[%s5 + $0x218] sm:$0xff]
  %v6485 = vld [vmem:[%s5 + $0x220] sm:$0xff]
  %v6486 = vld [vmem:[%s5 + $0x228] sm:$0xff]
  %v6487 = vld [vmem:[%s5 + $0x230] sm:$0xff]
  %v6488 = vld [vmem:[%s5 + $0x238] sm:$0xff]
  %v6489 = vld [vmem:[%s5 + $0x240] sm:$0xff]
  %v6490 = vld [vmem:[%s5 + $0x248] sm:$0xff]
  %v6491 = vld [vmem:[%s5 + $0x250] sm:$0xff]
  %v6492 = vld [vmem:[%s5 + $0x258] sm:$0xff]
  %v6493 = vld [vmem:[%s5 + $0x260] sm:$0xff]
  %v6494 = vld [vmem:[%s5 + $0x268] sm:$0xff]
  %v6495 = vld [vmem:[%s5 + $0x270] sm:$0xff]
  %v6496 = vld [vmem:[%s5 + $0x278] sm:$0xff]
  %v6497 = vld [vmem:[%s5 + $0x280] sm:$0xff]
  %v6498 = vld [vmem:[%s5 + $0x288] sm:$0xff]
  %v6499 = vld [vmem:[%s5 + $0x290] sm:$0xff]
  %v6500 = vld [vmem:[%s5 + $0x298] sm:$0xff]
  %v6501 = vld [vmem:[%s5 + $0x2a0] sm:$0xff]
  %v6502 = vld [vmem:[%s5 + $0x2a8] sm:$0xff]
  %v6503 = vld [vmem:[%s5 + $0x2b0] sm:$0xff]
  %v6504 = vld [vmem:[%s5 + $0x2b8] sm:$0xff]
  %v6505 = vld [vmem:[%s5 + $0x2c0] sm:$0xff]
  %v6506 = vld [vmem:[%s5 + $0x2c8] sm:$0xff]
  %v6507 = vld [vmem:[%s5 + $0x2d0] sm:$0xff]
  %v6508 = vld [vmem:[%s5 + $0x2d8] sm:$0xff]
  %v6509 = vld [vmem:[%s5 + $0x2e0] sm:$0xff]
  %v6510 = vld [vmem:[%s5 + $0x2e8] sm:$0xff]
  %v6511 = vld [vmem:[%s5 + $0x2f0] sm:$0xff]
  %v6512 = vld [vmem:[%s5 + $0x2f8] sm:$0xff]
  %v6513 = vld [vmem:[%s5 + $0x300] sm:$0xff]
  %v6514 = vld [vmem:[%s5 + $0x308] sm:$0xff]
  %v6515 = vld [vmem:[%s5 + $0x310] sm:$0xff]
  %v6516 = vld [vmem:[%s5 + $0x318] sm:$0xff]
  %v6517 = vld [vmem:[%s5 + $0x320] sm:$0xff]
  %v6518 = vld [vmem:[%s5 + $0x328] sm:$0xff]
  %v6519 = vld [vmem:[%s5 + $0x330] sm:$0xff]
  %v6520 = vld [vmem:[%s5 + $0x338] sm:$0xff]
  %v6521 = vld [vmem:[%s5 + $0x340] sm:$0xff]
  %v6522 = vld [vmem:[%s5 + $0x348] sm:$0xff]
  %v6523 = vld [vmem:[%s5 + $0x350] sm:$0xff]
  %v6524 = vld [vmem:[%s5 + $0x358] sm:$0xff]
  %v6525 = vld [vmem:[%s5 + $0x360] sm:$0xff]
  %v6526 = vld [vmem:[%s5 + $0x368] sm:$0xff]
  %v6527 = vld [vmem:[%s5 + $0x370] sm:$0xff]
  %v6528 = vld [vmem:[%s5 + $0x378] sm:$0xff]
  %v6529 = vld [vmem:[%s5 + $0x380] sm:$0xff]
  %v6530 = vld [vmem:[%s5 + $0x388] sm:$0xff]
  %v6531 = vld [vmem:[%s5 + $0x390] sm:$0xff]
  %v6532 = vld [vmem:[%s5 + $0x398] sm:$0xff]
  %v6533 = vld [vmem:[%s5 + $0x3a0] sm:$0xff]
  %v6534 = vld [vmem:[%s5 + $0x3a8] sm:$0xff]
  %v6535 = vld [vmem:[%s5 + $0x3b0] sm:$0xff]
  %v6536 = vld [vmem:[%s5 + $0x3b8] sm:$0xff]
  %v6537 = vld [vmem:[%s5 + $0x3c0] sm:$0xff]
  %v6538 = vld [vmem:[%s5 + $0x3c8] sm:$0xff]
  %v6539 = vld [vmem:[%s5 + $0x3d0] sm:$0xff]
  %v6540 = vld [vmem:[%s5 + $0x3d8] sm:$0xff]
  %v6541 = vld [vmem:[%s5 + $0x3e0] sm:$0xff]
  %v6542 = vld [vmem:[%s5 + $0x3e8] sm:$0xff]
  %v6543 = vld [vmem:[%s5 + $0x3f0] sm:$0xff]
  %v6544 = vld [vmem:[%s5 + $0x3f8] sm:$0xff]
  %6545 = vmatpush.msra.mxu0 %v6537
  %6546 = vmatpush.msra.mxu0 %v6529
  %6547 = vmatpush.msra.mxu0 %v6521
  %6548 = vmatpush.msra.mxu0 %v6513
  %6549 = vmatpush.msra.mxu0 %v6505
  %6550 = vmatpush.msra.mxu0 %v6497
  %6551 = vmatpush.msra.mxu0 %v6489
  %6552 = vmatpush.msra.mxu0 %v6481
  %6553 = vmatpush.msra.mxu0 %v6473
  %6554 = vmatpush.msra.mxu0 %v6465
  %6555 = vmatpush.msra.mxu0 %v6457
  %6556 = vmatpush.msra.mxu0 %v6449
  %6557 = vmatpush.msra.mxu0 %v6441
  %6558 = vmatpush.msra.mxu0 %v6433
  %6559 = vmatpush.msra.mxu0 %v6425
  %6560 = vmatpush.msra.mxu0 %v6417
  %6561 = vmatmul.f32.gmra.mxu0 %v6394
  %v6562 = vpop.f32.mrf.mxu0
  %v6563 = vadd.f32 0.0, %v6562
  %6564 = vdwg.mxu0
  %6565 = vmatpush.msra.mxu0 %v6538
  %6566 = vmatpush.msra.mxu0 %v6530
  %6567 = vmatpush.msra.mxu0 %v6522
  %6568 = vmatpush.msra.mxu0 %v6514
  %6569 = vmatpush.msra.mxu0 %v6506
  %6570 = vmatpush.msra.mxu0 %v6498
  %6571 = vmatpush.msra.mxu0 %v6490
  %6572 = vmatpush.msra.mxu0 %v6482
  %6573 = vmatpush.msra.mxu0 %v6474
  %6574 = vmatpush.msra.mxu0 %v6466
  %6575 = vmatpush.msra.mxu0 %v6458
  %6576 = vmatpush.msra.mxu0 %v6450
  %6577 = vmatpush.msra.mxu0 %v6442
  %6578 = vmatpush.msra.mxu0 %v6434
  %6579 = vmatpush.msra.mxu0 %v6426
  %6580 = vmatpush.msra.mxu0 %v6418
  %6581 = vmatmul.f32.gmra.mxu0 %v6394
  %v6582 = vpop.f32.mrf.mxu0
  %v6583 = vadd.f32 0.0, %v6582
  %6584 = vdwg.mxu0
  %6585 = vmatpush.msra.mxu0 %v6539
  %6586 = vmatpush.msra.mxu0 %v6531
  %6587 = vmatpush.msra.mxu0 %v6523
  %6588 = vmatpush.msra.mxu0 %v6515
  %6589 = vmatpush.msra.mxu0 %v6507
  %6590 = vmatpush.msra.mxu0 %v6499
  %6591 = vmatpush.msra.mxu0 %v6491
  %6592 = vmatpush.msra.mxu0 %v6483
  %6593 = vmatpush.msra.mxu0 %v6475
  %6594 = vmatpush.msra.mxu0 %v6467
  %6595 = vmatpush.msra.mxu0 %v6459
  %6596 = vmatpush.msra.mxu0 %v6451
  %6597 = vmatpush.msra.mxu0 %v6443
  %6598 = vmatpush.msra.mxu0 %v6435
  %6599 = vmatpush.msra.mxu0 %v6427
  %6600 = vmatpush.msra.mxu0 %v6419
  %6601 = vmatmul.f32.gmra.mxu0 %v6394
  %v6602 = vpop.f32.mrf.mxu0
  %v6603 = vadd.f32 0.0, %v6602
  %6604 = vdwg.mxu0
  %6605 = vmatpush.msra.mxu0 %v6540
  %6606 = vmatpush.msra.mxu0 %v6532
  %6607 = vmatpush.msra.mxu0 %v6524
  %6608 = vmatpush.msra.mxu0 %v6516
  %6609 = vmatpush.msra.mxu0 %v6508
  %6610 = vmatpush.msra.mxu0 %v6500
  %6611 = vmatpush.msra.mxu0 %v6492
  %6612 = vmatpush.msra.mxu0 %v6484
  %6613 = vmatpush.msra.mxu0 %v6476
  %6614 = vmatpush.msra.mxu0 %v6468
  %6615 = vmatpush.msra.mxu0 %v6460
  %6616 = vmatpush.msra.mxu0 %v6452
  %6617 = vmatpush.msra.mxu0 %v6444
  %6618 = vmatpush.msra.mxu0 %v6436
  %6619 = vmatpush.msra.mxu0 %v6428
  %6620 = vmatpush.msra.mxu0 %v6420
  %6621 = vmatmul.f32.gmra.mxu0 %v6394
  %v6622 = vpop.f32.mrf.mxu0
  %v6623 = vadd.f32 0.0, %v6622
  %6624 = vdwg.mxu0
  %6625 = vmatpush.msra.mxu0 %v6541
  %6626 = vmatpush.msra.mxu0 %v6533
  %6627 = vmatpush.msra.mxu0 %v6525
  %6628 = vmatpush.msra.mxu0 %v6517
  %6629 = vmatpush.msra.mxu0 %v6509
  %6630 = vmatpush.msra.mxu0 %v6501
  %6631 = vmatpush.msra.mxu0 %v6493
  %6632 = vmatpush.msra.mxu0 %v6485
  %6633 = vmatpush.msra.mxu0 %v6477
  %6634 = vmatpush.msra.mxu0 %v6469
  %6635 = vmatpush.msra.mxu0 %v6461
  %6636 = vmatpush.msra.mxu0 %v6453
  %6637 = vmatpush.msra.mxu0 %v6445
  %6638 = vmatpush.msra.mxu0 %v6437
  %6639 = vmatpush.msra.mxu0 %v6429
  %6640 = vmatpush.msra.mxu0 %v6421
  %6641 = vmatmul.f32.gmra.mxu0 %v6394
  %v6642 = vpop.f32.mrf.mxu0
  %v6643 = vadd.f32 0.0, %v6642
  %6644 = vdwg.mxu0
  %6645 = vmatpush.msra.mxu0 %v6542
  %6646 = vmatpush.msra.mxu0 %v6534
  %6647 = vmatpush.msra.mxu0 %v6526
  %6648 = vmatpush.msra.mxu0 %v6518
  %6649 = vmatpush.msra.mxu0 %v6510
  %6650 = vmatpush.msra.mxu0 %v6502
  %6651 = vmatpush.msra.mxu0 %v6494
  %6652 = vmatpush.msra.mxu0 %v6486
  %6653 = vmatpush.msra.mxu0 %v6478
  %6654 = vmatpush.msra.mxu0 %v6470
  %6655 = vmatpush.msra.mxu0 %v6462
  %6656 = vmatpush.msra.mxu0 %v6454
  %6657 = vmatpush.msra.mxu0 %v6446
  %6658 = vmatpush.msra.mxu0 %v6438
  %6659 = vmatpush.msra.mxu0 %v6430
  %6660 = vmatpush.msra.mxu0 %v6422
  %6661 = vmatmul.f32.gmra.mxu0 %v6394
  %v6662 = vpop.f32.mrf.mxu0
  %v6663 = vadd.f32 0.0, %v6662
  %6664 = vdwg.mxu0
  %6665 = vmatpush.msra.mxu0 %v6543
  %6666 = vmatpush.msra.mxu0 %v6535
  %6667 = vmatpush.msra.mxu0 %v6527
  %6668 = vmatpush.msra.mxu0 %v6519
  %6669 = vmatpush.msra.mxu0 %v6511
  %6670 = vmatpush.msra.mxu0 %v6503
  %6671 = vmatpush.msra.mxu0 %v6495
  %6672 = vmatpush.msra.mxu0 %v6487
  %6673 = vmatpush.msra.mxu0 %v6479
  %6674 = vmatpush.msra.mxu0 %v6471
  %6675 = vmatpush.msra.mxu0 %v6463
  %6676 = vmatpush.msra.mxu0 %v6455
  %6677 = vmatpush.msra.mxu0 %v6447
  %6678 = vmatpush.msra.mxu0 %v6439
  %6679 = vmatpush.msra.mxu0 %v6431
  %6680 = vmatpush.msra.mxu0 %v6423
  %6681 = vmatmul.f32.gmra.mxu0 %v6394
  %v6682 = vpop.f32.mrf.mxu0
  %v6683 = vadd.f32 0.0, %v6682
  %6684 = vdwg.mxu0
  %6685 = vmatpush.msra.mxu0 %v6544
  %6686 = vmatpush.msra.mxu0 %v6536
  %6687 = vmatpush.msra.mxu0 %v6528
  %6688 = vmatpush.msra.mxu0 %v6520
  %6689 = vmatpush.msra.mxu0 %v6512
  %6690 = vmatpush.msra.mxu0 %v6504
  %6691 = vmatpush.msra.mxu0 %v6496
  %6692 = vmatpush.msra.mxu0 %v6488
  %6693 = vmatpush.msra.mxu0 %v6480
  %6694 = vmatpush.msra.mxu0 %v6472
  %6695 = vmatpush.msra.mxu0 %v6464
  %6696 = vmatpush.msra.mxu0 %v6456
  %6697 = vmatpush.msra.mxu0 %v6448
  %6698 = vmatpush.msra.mxu0 %v6440
  %6699 = vmatpush.msra.mxu0 %v6432
  %6700 = vmatpush.msra.mxu0 %v6424
  %6701 = vmatmul.f32.gmra.mxu0 %v6394
  %v6702 = vpop.f32.mrf.mxu0
  %v6703 = vadd.f32 0.0, %v6702
  %6704 = vdwg.mxu0
  %v6705 = vld [vmem:[%s2106] sm:$0xff]
  %v6706 = vadd.f32 %v6705, %v6703
  %6707 = vst [vmem:[%s2106] sm:$0xff] %v6706
  %v6708 = vld [vmem:[%s2110] sm:$0xff]
  %v6709 = vadd.f32 %v6708, %v6563
  %6710 = vst [vmem:[%s2110] sm:$0xff] %v6709
  %v6711 = vld [vmem:[%s2114] sm:$0xff]
  %v6712 = vadd.f32 %v6711, %v6583
  %6713 = vst [vmem:[%s2114] sm:$0xff] %v6712
  %v6714 = vld [vmem:[%s2118] sm:$0xff]
  %v6715 = vadd.f32 %v6714, %v6603
  %6716 = vst [vmem:[%s2118] sm:$0xff] %v6715
  %v6717 = vld [vmem:[%s2122] sm:$0xff]
  %v6718 = vadd.f32 %v6717, %v6623
  %6719 = vst [vmem:[%s2122] sm:$0xff] %v6718
  %v6720 = vld [vmem:[%s2126] sm:$0xff]
  %v6721 = vadd.f32 %v6720, %v6643
  %6722 = vst [vmem:[%s2126] sm:$0xff] %v6721
  %v6723 = vld [vmem:[%s2130] sm:$0xff]
  %v6724 = vadd.f32 %v6723, %v6663
  %6725 = vst [vmem:[%s2130] sm:$0xff] %v6724
  %v6726 = vld [vmem:[%s2134] sm:$0xff]
  %v6727 = vadd.f32 %v6726, %v6683
  %6728 = vst [vmem:[%s2134] sm:$0xff] %v6727
  %v6729 = vld [vmem:[%s5] sm:$0xff]
  %v6730 = vld [vmem:[%s5 + $0x8] sm:$0xff]
  %v6731 = vld [vmem:[%s5 + $0x10] sm:$0xff]
  %v6732 = vld [vmem:[%s5 + $0x18] sm:$0xff]
  %v6733 = vld [vmem:[%s5 + $0x20] sm:$0xff]
  %v6734 = vld [vmem:[%s5 + $0x28] sm:$0xff]
  %v6735 = vld [vmem:[%s5 + $0x30] sm:$0xff]
  %v6736 = vld [vmem:[%s5 + $0x38] sm:$0xff]
  %v6737 = vld [vmem:[%s5 + $0x40] sm:$0xff]
  %v6738 = vld [vmem:[%s5 + $0x48] sm:$0xff]
  %v6739 = vld [vmem:[%s5 + $0x50] sm:$0xff]
  %v6740 = vld [vmem:[%s5 + $0x58] sm:$0xff]
  %v6741 = vld [vmem:[%s5 + $0x60] sm:$0xff]
  %v6742 = vld [vmem:[%s5 + $0x68] sm:$0xff]
  %v6743 = vld [vmem:[%s5 + $0x70] sm:$0xff]
  %v6744 = vld [vmem:[%s5 + $0x78] sm:$0xff]
  %v6745 = vld [vmem:[%s5 + $0x80] sm:$0xff]
  %v6746 = vld [vmem:[%s5 + $0x88] sm:$0xff]
  %v6747 = vld [vmem:[%s5 + $0x90] sm:$0xff]
  %v6748 = vld [vmem:[%s5 + $0x98] sm:$0xff]
  %v6749 = vld [vmem:[%s5 + $0xa0] sm:$0xff]
  %v6750 = vld [vmem:[%s5 + $0xa8] sm:$0xff]
  %v6751 = vld [vmem:[%s5 + $0xb0] sm:$0xff]
  %v6752 = vld [vmem:[%s5 + $0xb8] sm:$0xff]
  %v6753 = vld [vmem:[%s5 + $0xc0] sm:$0xff]
  %v6754 = vld [vmem:[%s5 + $0xc8] sm:$0xff]
  %v6755 = vld [vmem:[%s5 + $0xd0] sm:$0xff]
  %v6756 = vld [vmem:[%s5 + $0xd8] sm:$0xff]
  %v6757 = vld [vmem:[%s5 + $0xe0] sm:$0xff]
  %v6758 = vld [vmem:[%s5 + $0xe8] sm:$0xff]
  %v6759 = vld [vmem:[%s5 + $0xf0] sm:$0xff]
  %v6760 = vld [vmem:[%s5 + $0xf8] sm:$0xff]
  %v6761 = vld [vmem:[%s5 + $0x100] sm:$0xff]
  %v6762 = vld [vmem:[%s5 + $0x108] sm:$0xff]
  %v6763 = vld [vmem:[%s5 + $0x110] sm:$0xff]
  %v6764 = vld [vmem:[%s5 + $0x118] sm:$0xff]
  %v6765 = vld [vmem:[%s5 + $0x120] sm:$0xff]
  %v6766 = vld [vmem:[%s5 + $0x128] sm:$0xff]
  %v6767 = vld [vmem:[%s5 + $0x130] sm:$0xff]
  %v6768 = vld [vmem:[%s5 + $0x138] sm:$0xff]
  %v6769 = vld [vmem:[%s5 + $0x140] sm:$0xff]
  %v6770 = vld [vmem:[%s5 + $0x148] sm:$0xff]
  %v6771 = vld [vmem:[%s5 + $0x150] sm:$0xff]
  %v6772 = vld [vmem:[%s5 + $0x158] sm:$0xff]
  %v6773 = vld [vmem:[%s5 + $0x160] sm:$0xff]
  %v6774 = vld [vmem:[%s5 + $0x168] sm:$0xff]
  %v6775 = vld [vmem:[%s5 + $0x170] sm:$0xff]
  %v6776 = vld [vmem:[%s5 + $0x178] sm:$0xff]
  %v6777 = vld [vmem:[%s5 + $0x180] sm:$0xff]
  %v6778 = vld [vmem:[%s5 + $0x188] sm:$0xff]
  %v6779 = vld [vmem:[%s5 + $0x190] sm:$0xff]
  %v6780 = vld [vmem:[%s5 + $0x198] sm:$0xff]
  %v6781 = vld [vmem:[%s5 + $0x1a0] sm:$0xff]
  %v6782 = vld [vmem:[%s5 + $0x1a8] sm:$0xff]
  %v6783 = vld [vmem:[%s5 + $0x1b0] sm:$0xff]
  %v6784 = vld [vmem:[%s5 + $0x1b8] sm:$0xff]
  %v6785 = vld [vmem:[%s5 + $0x1c0] sm:$0xff]
  %v6786 = vld [vmem:[%s5 + $0x1c8] sm:$0xff]
  %v6787 = vld [vmem:[%s5 + $0x1d0] sm:$0xff]
  %v6788 = vld [vmem:[%s5 + $0x1d8] sm:$0xff]
  %v6789 = vld [vmem:[%s5 + $0x1e0] sm:$0xff]
  %v6790 = vld [vmem:[%s5 + $0x1e8] sm:$0xff]
  %v6791 = vld [vmem:[%s5 + $0x1f0] sm:$0xff]
  %v6792 = vld [vmem:[%s5 + $0x1f8] sm:$0xff]
  %v6793 = vld [vmem:[%s5 + $0x200] sm:$0xff]
  %v6794 = vld [vmem:[%s5 + $0x208] sm:$0xff]
  %v6795 = vld [vmem:[%s5 + $0x210] sm:$0xff]
  %v6796 = vld [vmem:[%s5 + $0x218] sm:$0xff]
  %v6797 = vld [vmem:[%s5 + $0x220] sm:$0xff]
  %v6798 = vld [vmem:[%s5 + $0x228] sm:$0xff]
  %v6799 = vld [vmem:[%s5 + $0x230] sm:$0xff]
  %v6800 = vld [vmem:[%s5 + $0x238] sm:$0xff]
  %v6801 = vld [vmem:[%s5 + $0x240] sm:$0xff]
  %v6802 = vld [vmem:[%s5 + $0x248] sm:$0xff]
  %v6803 = vld [vmem:[%s5 + $0x250] sm:$0xff]
  %v6804 = vld [vmem:[%s5 + $0x258] sm:$0xff]
  %v6805 = vld [vmem:[%s5 + $0x260] sm:$0xff]
  %v6806 = vld [vmem:[%s5 + $0x268] sm:$0xff]
  %v6807 = vld [vmem:[%s5 + $0x270] sm:$0xff]
  %v6808 = vld [vmem:[%s5 + $0x278] sm:$0xff]
  %v6809 = vld [vmem:[%s5 + $0x280] sm:$0xff]
  %v6810 = vld [vmem:[%s5 + $0x288] sm:$0xff]
  %v6811 = vld [vmem:[%s5 + $0x290] sm:$0xff]
  %v6812 = vld [vmem:[%s5 + $0x298] sm:$0xff]
  %v6813 = vld [vmem:[%s5 + $0x2a0] sm:$0xff]
  %v6814 = vld [vmem:[%s5 + $0x2a8] sm:$0xff]
  %v6815 = vld [vmem:[%s5 + $0x2b0] sm:$0xff]
  %v6816 = vld [vmem:[%s5 + $0x2b8] sm:$0xff]
  %v6817 = vld [vmem:[%s5 + $0x2c0] sm:$0xff]
  %v6818 = vld [vmem:[%s5 + $0x2c8] sm:$0xff]
  %v6819 = vld [vmem:[%s5 + $0x2d0] sm:$0xff]
  %v6820 = vld [vmem:[%s5 + $0x2d8] sm:$0xff]
  %v6821 = vld [vmem:[%s5 + $0x2e0] sm:$0xff]
  %v6822 = vld [vmem:[%s5 + $0x2e8] sm:$0xff]
  %v6823 = vld [vmem:[%s5 + $0x2f0] sm:$0xff]
  %v6824 = vld [vmem:[%s5 + $0x2f8] sm:$0xff]
  %v6825 = vld [vmem:[%s5 + $0x300] sm:$0xff]
  %v6826 = vld [vmem:[%s5 + $0x308] sm:$0xff]
  %v6827 = vld [vmem:[%s5 + $0x310] sm:$0xff]
  %v6828 = vld [vmem:[%s5 + $0x318] sm:$0xff]
  %v6829 = vld [vmem:[%s5 + $0x320] sm:$0xff]
  %v6830 = vld [vmem:[%s5 + $0x328] sm:$0xff]
  %v6831 = vld [vmem:[%s5 + $0x330] sm:$0xff]
  %v6832 = vld [vmem:[%s5 + $0x338] sm:$0xff]
  %v6833 = vld [vmem:[%s5 + $0x340] sm:$0xff]
  %v6834 = vld [vmem:[%s5 + $0x348] sm:$0xff]
  %v6835 = vld [vmem:[%s5 + $0x350] sm:$0xff]
  %v6836 = vld [vmem:[%s5 + $0x358] sm:$0xff]
  %v6837 = vld [vmem:[%s5 + $0x360] sm:$0xff]
  %v6838 = vld [vmem:[%s5 + $0x368] sm:$0xff]
  %v6839 = vld [vmem:[%s5 + $0x370] sm:$0xff]
  %v6840 = vld [vmem:[%s5 + $0x378] sm:$0xff]
  %v6841 = vld [vmem:[%s5 + $0x380] sm:$0xff]
  %v6842 = vld [vmem:[%s5 + $0x388] sm:$0xff]
  %v6843 = vld [vmem:[%s5 + $0x390] sm:$0xff]
  %v6844 = vld [vmem:[%s5 + $0x398] sm:$0xff]
  %v6845 = vld [vmem:[%s5 + $0x3a0] sm:$0xff]
  %v6846 = vld [vmem:[%s5 + $0x3a8] sm:$0xff]
  %v6847 = vld [vmem:[%s5 + $0x3b0] sm:$0xff]
  %v6848 = vld [vmem:[%s5 + $0x3b8] sm:$0xff]
  %v6849 = vld [vmem:[%s5 + $0x3c0] sm:$0xff]
  %v6850 = vld [vmem:[%s5 + $0x3c8] sm:$0xff]
  %v6851 = vld [vmem:[%s5 + $0x3d0] sm:$0xff]
  %v6852 = vld [vmem:[%s5 + $0x3d8] sm:$0xff]
  %v6853 = vld [vmem:[%s5 + $0x3e0] sm:$0xff]
  %v6854 = vld [vmem:[%s5 + $0x3e8] sm:$0xff]
  %v6855 = vld [vmem:[%s5 + $0x3f0] sm:$0xff]
  %v6856 = vld [vmem:[%s5 + $0x3f8] sm:$0xff]
  %6857 = vmatpush.msra.mxu0 %v6849
  %6858 = vmatpush.msra.mxu0 %v6841
  %6859 = vmatpush.msra.mxu0 %v6833
  %6860 = vmatpush.msra.mxu0 %v6825
  %6861 = vmatpush.msra.mxu0 %v6817
  %6862 = vmatpush.msra.mxu0 %v6809
  %6863 = vmatpush.msra.mxu0 %v6801
  %6864 = vmatpush.msra.mxu0 %v6793
  %6865 = vmatpush.msra.mxu0 %v6785
  %6866 = vmatpush.msra.mxu0 %v6777
  %6867 = vmatpush.msra.mxu0 %v6769
  %6868 = vmatpush.msra.mxu0 %v6761
  %6869 = vmatpush.msra.mxu0 %v6753
  %6870 = vmatpush.msra.mxu0 %v6745
  %6871 = vmatpush.msra.mxu0 %v6737
  %6872 = vmatpush.msra.mxu0 %v6729
  %6873 = vmatmul.f32.gmra.mxu0 %v6706
  %v6874 = vpop.f32.mrf.mxu0
  %v6875 = vadd.f32 0.0, %v6874
  %6876 = vdwg.mxu0
  %6877 = vmatpush.msra.mxu0 %v6850
  %6878 = vmatpush.msra.mxu0 %v6842
  %6879 = vmatpush.msra.mxu0 %v6834
  %6880 = vmatpush.msra.mxu0 %v6826
  %6881 = vmatpush.msra.mxu0 %v6818
  %6882 = vmatpush.msra.mxu0 %v6810
  %6883 = vmatpush.msra.mxu0 %v6802
  %6884 = vmatpush.msra.mxu0 %v6794
  %6885 = vmatpush.msra.mxu0 %v6786
  %6886 = vmatpush.msra.mxu0 %v6778
  %6887 = vmatpush.msra.mxu0 %v6770
  %6888 = vmatpush.msra.mxu0 %v6762
  %6889 = vmatpush.msra.mxu0 %v6754
  %6890 = vmatpush.msra.mxu0 %v6746
  %6891 = vmatpush.msra.mxu0 %v6738
  %6892 = vmatpush.msra.mxu0 %v6730
  %6893 = vmatmul.f32.gmra.mxu0 %v6706
  %v6894 = vpop.f32.mrf.mxu0
  %v6895 = vadd.f32 0.0, %v6894
  %6896 = vdwg.mxu0
  %6897 = vmatpush.msra.mxu0 %v6851
  %6898 = vmatpush.msra.mxu0 %v6843
  %6899 = vmatpush.msra.mxu0 %v6835
  %6900 = vmatpush.msra.mxu0 %v6827
  %6901 = vmatpush.msra.mxu0 %v6819
  %6902 = vmatpush.msra.mxu0 %v6811
  %6903 = vmatpush.msra.mxu0 %v6803
  %6904 = vmatpush.msra.mxu0 %v6795
  %6905 = vmatpush.msra.mxu0 %v6787
  %6906 = vmatpush.msra.mxu0 %v6779
  %6907 = vmatpush.msra.mxu0 %v6771
  %6908 = vmatpush.msra.mxu0 %v6763
  %6909 = vmatpush.msra.mxu0 %v6755
  %6910 = vmatpush.msra.mxu0 %v6747
  %6911 = vmatpush.msra.mxu0 %v6739
  %6912 = vmatpush.msra.mxu0 %v6731
  %6913 = vmatmul.f32.gmra.mxu0 %v6706
  %v6914 = vpop.f32.mrf.mxu0
  %v6915 = vadd.f32 0.0, %v6914
  %6916 = vdwg.mxu0
  %6917 = vmatpush.msra.mxu0 %v6852
  %6918 = vmatpush.msra.mxu0 %v6844
  %6919 = vmatpush.msra.mxu0 %v6836
  %6920 = vmatpush.msra.mxu0 %v6828
  %6921 = vmatpush.msra.mxu0 %v6820
  %6922 = vmatpush.msra.mxu0 %v6812
  %6923 = vmatpush.msra.mxu0 %v6804
  %6924 = vmatpush.msra.mxu0 %v6796
  %6925 = vmatpush.msra.mxu0 %v6788
  %6926 = vmatpush.msra.mxu0 %v6780
  %6927 = vmatpush.msra.mxu0 %v6772
  %6928 = vmatpush.msra.mxu0 %v6764
  %6929 = vmatpush.msra.mxu0 %v6756
  %6930 = vmatpush.msra.mxu0 %v6748
  %6931 = vmatpush.msra.mxu0 %v6740
  %6932 = vmatpush.msra.mxu0 %v6732
  %6933 = vmatmul.f32.gmra.mxu0 %v6706
  %v6934 = vpop.f32.mrf.mxu0
  %v6935 = vadd.f32 0.0, %v6934
  %6936 = vdwg.mxu0
  %6937 = vmatpush.msra.mxu0 %v6853
  %6938 = vmatpush.msra.mxu0 %v6845
  %6939 = vmatpush.msra.mxu0 %v6837
  %6940 = vmatpush.msra.mxu0 %v6829
  %6941 = vmatpush.msra.mxu0 %v6821
  %6942 = vmatpush.msra.mxu0 %v6813
  %6943 = vmatpush.msra.mxu0 %v6805
  %6944 = vmatpush.msra.mxu0 %v6797
  %6945 = vmatpush.msra.mxu0 %v6789
  %6946 = vmatpush.msra.mxu0 %v6781
  %6947 = vmatpush.msra.mxu0 %v6773
  %6948 = vmatpush.msra.mxu0 %v6765
  %6949 = vmatpush.msra.mxu0 %v6757
  %6950 = vmatpush.msra.mxu0 %v6749
  %6951 = vmatpush.msra.mxu0 %v6741
  %6952 = vmatpush.msra.mxu0 %v6733
  %6953 = vmatmul.f32.gmra.mxu0 %v6706
  %v6954 = vpop.f32.mrf.mxu0
  %v6955 = vadd.f32 0.0, %v6954
  %6956 = vdwg.mxu0
  %6957 = vmatpush.msra.mxu0 %v6854
  %6958 = vmatpush.msra.mxu0 %v6846
  %6959 = vmatpush.msra.mxu0 %v6838
  %6960 = vmatpush.msra.mxu0 %v6830
  %6961 = vmatpush.msra.mxu0 %v6822
  %6962 = vmatpush.msra.mxu0 %v6814
  %6963 = vmatpush.msra.mxu0 %v6806
  %6964 = vmatpush.msra.mxu0 %v6798
  %6965 = vmatpush.msra.mxu0 %v6790
  %6966 = vmatpush.msra.mxu0 %v6782
  %6967 = vmatpush.msra.mxu0 %v6774
  %6968 = vmatpush.msra.mxu0 %v6766
  %6969 = vmatpush.msra.mxu0 %v6758
  %6970 = vmatpush.msra.mxu0 %v6750
  %6971 = vmatpush.msra.mxu0 %v6742
  %6972 = vmatpush.msra.mxu0 %v6734
  %6973 = vmatmul.f32.gmra.mxu0 %v6706
  %v6974 = vpop.f32.mrf.mxu0
  %v6975 = vadd.f32 0.0, %v6974
  %6976 = vdwg.mxu0
  %6977 = vmatpush.msra.mxu0 %v6855
  %6978 = vmatpush.msra.mxu0 %v6847
  %6979 = vmatpush.msra.mxu0 %v6839
  %6980 = vmatpush.msra.mxu0 %v6831
  %6981 = vmatpush.msra.mxu0 %v6823
  %6982 = vmatpush.msra.mxu0 %v6815
  %6983 = vmatpush.msra.mxu0 %v6807
  %6984 = vmatpush.msra.mxu0 %v6799
  %6985 = vmatpush.msra.mxu0 %v6791
  %6986 = vmatpush.msra.mxu0 %v6783
  %6987 = vmatpush.msra.mxu0 %v6775
  %6988 = vmatpush.msra.mxu0 %v6767
  %6989 = vmatpush.msra.mxu0 %v6759
  %6990 = vmatpush.msra.mxu0 %v6751
  %6991 = vmatpush.msra.mxu0 %v6743
  %6992 = vmatpush.msra.mxu0 %v6735
  %6993 = vmatmul.f32.gmra.mxu0 %v6706
  %v6994 = vpop.f32.mrf.mxu0
  %v6995 = vadd.f32 0.0, %v6994
  %6996 = vdwg.mxu0
  %6997 = vmatpush.msra.mxu0 %v6856
  %6998 = vmatpush.msra.mxu0 %v6848
  %6999 = vmatpush.msra.mxu0 %v6840
  %7000 = vmatpush.msra.mxu0 %v6832
  %7001 = vmatpush.msra.mxu0 %v6824
  %7002 = vmatpush.msra.mxu0 %v6816
  %7003 = vmatpush.msra.mxu0 %v6808
  %7004 = vmatpush.msra.mxu0 %v6800
  %7005 = vmatpush.msra.mxu0 %v6792
  %7006 = vmatpush.msra.mxu0 %v6784
  %7007 = vmatpush.msra.mxu0 %v6776
  %7008 = vmatpush.msra.mxu0 %v6768
  %7009 = vmatpush.msra.mxu0 %v6760
  %7010 = vmatpush.msra.mxu0 %v6752
  %7011 = vmatpush.msra.mxu0 %v6744
  %7012 = vmatpush.msra.mxu0 %v6736
  %7013 = vmatmul.f32.gmra.mxu0 %v6706
  %v7014 = vpop.f32.mrf.mxu0
  %v7015 = vadd.f32 0.0, %v7014
  %7016 = vdwg.mxu0
  %v7017 = vld [vmem:[%s2426] sm:$0xff]
  %v7018 = vadd.f32 %v7017, %v7015
  %7019 = vst [vmem:[%s2426] sm:$0xff] %v7018
  %v7020 = vld [vmem:[%s2430] sm:$0xff]
  %v7021 = vadd.f32 %v7020, %v6875
  %7022 = vst [vmem:[%s2430] sm:$0xff] %v7021
  %v7023 = vld [vmem:[%s2434] sm:$0xff]
  %v7024 = vadd.f32 %v7023, %v6895
  %7025 = vst [vmem:[%s2434] sm:$0xff] %v7024
  %v7026 = vld [vmem:[%s2438] sm:$0xff]
  %v7027 = vadd.f32 %v7026, %v6915
  %7028 = vst [vmem:[%s2438] sm:$0xff] %v7027
  %v7029 = vld [vmem:[%s2442] sm:$0xff]
  %v7030 = vadd.f32 %v7029, %v6935
  %7031 = vst [vmem:[%s2442] sm:$0xff] %v7030
  %v7032 = vld [vmem:[%s2446] sm:$0xff]
  %v7033 = vadd.f32 %v7032, %v6955
  %7034 = vst [vmem:[%s2446] sm:$0xff] %v7033
  %v7035 = vld [vmem:[%s2450] sm:$0xff]
  %v7036 = vadd.f32 %v7035, %v6975
  %7037 = vst [vmem:[%s2450] sm:$0xff] %v7036
  %v7038 = vld [vmem:[%s2454] sm:$0xff]
  %v7039 = vadd.f32 %v7038, %v6995
  %7040 = vst [vmem:[%s2454] sm:$0xff] %v7039
  %7041 = vst [vmem:[%s5479] sm:$0xff] %v7018
  %v7042 = vld [vmem:[#allocation3] sm:$0xff]
  %v7043 = vld [vmem:[#allocation3 + $0x8] sm:$0xff]
  %v7044 = vld [vmem:[#allocation3 + $0x10] sm:$0xff]
  %v7045 = vld [vmem:[#allocation3 + $0x18] sm:$0xff]
  %v7046 = vld [vmem:[#allocation3 + $0x20] sm:$0xff]
  %v7047 = vld [vmem:[#allocation3 + $0x28] sm:$0xff]
  %v7048 = vld [vmem:[#allocation3 + $0x30] sm:$0xff]
  %v7049 = vld [vmem:[#allocation3 + $0x38] sm:$0xff]
  %v7050 = vld [vmem:[#allocation3 + $0x40] sm:$0xff]
  %v7051 = vld [vmem:[#allocation3 + $0x48] sm:$0xff]
  %v7052 = vld [vmem:[#allocation3 + $0x50] sm:$0xff]
  %v7053 = vld [vmem:[#allocation3 + $0x58] sm:$0xff]
  %v7054 = vld [vmem:[#allocation3 + $0x60] sm:$0xff]
  %v7055 = vld [vmem:[#allocation3 + $0x68] sm:$0xff]
  %v7056 = vld [vmem:[#allocation3 + $0x70] sm:$0xff]
  %v7057 = vld [vmem:[#allocation3 + $0x78] sm:$0xff]
  %v7058 = vld [vmem:[#allocation3 + $0x80] sm:$0xff]
  %v7059 = vld [vmem:[#allocation3 + $0x88] sm:$0xff]
  %v7060 = vld [vmem:[#allocation3 + $0x90] sm:$0xff]
  %v7061 = vld [vmem:[#allocation3 + $0x98] sm:$0xff]
  %v7062 = vld [vmem:[#allocation3 + $0xa0] sm:$0xff]
  %v7063 = vld [vmem:[#allocation3 + $0xa8] sm:$0xff]
  %v7064 = vld [vmem:[#allocation3 + $0xb0] sm:$0xff]
  %v7065 = vld [vmem:[#allocation3 + $0xb8] sm:$0xff]
  %v7066 = vld [vmem:[#allocation3 + $0xc0] sm:$0xff]
  %v7067 = vld [vmem:[#allocation3 + $0xc8] sm:$0xff]
  %v7068 = vld [vmem:[#allocation3 + $0xd0] sm:$0xff]
  %v7069 = vld [vmem:[#allocation3 + $0xd8] sm:$0xff]
  %v7070 = vld [vmem:[#allocation3 + $0xe0] sm:$0xff]
  %v7071 = vld [vmem:[#allocation3 + $0xe8] sm:$0xff]
  %v7072 = vld [vmem:[#allocation3 + $0xf0] sm:$0xff]
  %v7073 = vld [vmem:[#allocation3 + $0xf8] sm:$0xff]
  %v7074 = vld [vmem:[#allocation3 + $0x100] sm:$0xff]
  %v7075 = vld [vmem:[#allocation3 + $0x108] sm:$0xff]
  %v7076 = vld [vmem:[#allocation3 + $0x110] sm:$0xff]
  %v7077 = vld [vmem:[#allocation3 + $0x118] sm:$0xff]
  %v7078 = vld [vmem:[#allocation3 + $0x120] sm:$0xff]
  %v7079 = vld [vmem:[#allocation3 + $0x128] sm:$0xff]
  %v7080 = vld [vmem:[#allocation3 + $0x130] sm:$0xff]
  %v7081 = vld [vmem:[#allocation3 + $0x138] sm:$0xff]
  %v7082 = vld [vmem:[%s7] sm:$0xff]
  %v7083 = vld [vmem:[%s7 + $0x8] sm:$0xff]
  %v7084 = vld [vmem:[%s7 + $0x10] sm:$0xff]
  %v7085 = vld [vmem:[%s7 + $0x18] sm:$0xff]
  %v7086 = vld [vmem:[%s7 + $0x20] sm:$0xff]
  %v7087 = vld [vmem:[%s7 + $0x28] sm:$0xff]
  %v7088 = vld [vmem:[%s7 + $0x30] sm:$0xff]
  %v7089 = vld [vmem:[%s7 + $0x38] sm:$0xff]
  %v7090 = vld [vmem:[%s7 + $0x40] sm:$0xff]
  %v7091 = vld [vmem:[%s7 + $0x48] sm:$0xff]
  %v7092 = vld [vmem:[%s7 + $0x50] sm:$0xff]
  %v7093 = vld [vmem:[%s7 + $0x58] sm:$0xff]
  %v7094 = vld [vmem:[%s7 + $0x60] sm:$0xff]
  %v7095 = vld [vmem:[%s7 + $0x68] sm:$0xff]
  %v7096 = vld [vmem:[%s7 + $0x70] sm:$0xff]
  %v7097 = vld [vmem:[%s7 + $0x78] sm:$0xff]
  %v7098 = vld [vmem:[#allocation4] sm:$0xff]
  %v7099 = vld [vmem:[#allocation4 + $0x8] sm:$0xff]
  %v7100 = vld [vmem:[#allocation4 + $0x10] sm:$0xff]
  %v7101 = vld [vmem:[#allocation4 + $0x18] sm:$0xff]
  %v7102 = vld [vmem:[#allocation4 + $0x20] sm:$0xff]
  %v7103 = vld [vmem:[#allocation4 + $0x28] sm:$0xff]
  %v7104 = vld [vmem:[#allocation4 + $0x30] sm:$0xff]
  %v7105 = vld [vmem:[#allocation4 + $0x38] sm:$0xff]
  %v7106 = vld [vmem:[#allocation4 + $0x40] sm:$0xff]
  %v7107 = vld [vmem:[#allocation4 + $0x48] sm:$0xff]
  %v7108 = vld [vmem:[#allocation4 + $0x50] sm:$0xff]
  %v7109 = vld [vmem:[#allocation4 + $0x58] sm:$0xff]
  %v7110 = vld [vmem:[#allocation4 + $0x60] sm:$0xff]
  %v7111 = vld [vmem:[#allocation4 + $0x68] sm:$0xff]
  %v7112 = vld [vmem:[#allocation4 + $0x70] sm:$0xff]
  %v7113 = vld [vmem:[#allocation4 + $0x78] sm:$0xff]
  %v7114 = vld [vmem:[#allocation4 + $0x80] sm:$0xff]
  %v7115 = vld [vmem:[#allocation4 + $0x88] sm:$0xff]
  %v7116 = vld [vmem:[#allocation4 + $0x90] sm:$0xff]
  %v7117 = vld [vmem:[#allocation4 + $0x98] sm:$0xff]
  %v7118 = vld [vmem:[#allocation4 + $0xa0] sm:$0xff]
  %v7119 = vld [vmem:[#allocation4 + $0xa8] sm:$0xff]
  %v7120 = vld [vmem:[#allocation4 + $0xb0] sm:$0xff]
  %v7121 = vld [vmem:[#allocation4 + $0xb8] sm:$0xff]
  %v7122 = vld [vmem:[#allocation4 + $0xc0] sm:$0xff]
  %v7123 = vld [vmem:[#allocation4 + $0xc8] sm:$0xff]
  %v7124 = vld [vmem:[#allocation4 + $0xd0] sm:$0xff]
  %v7125 = vld [vmem:[#allocation4 + $0xd8] sm:$0xff]
  %v7126 = vld [vmem:[#allocation4 + $0xe0] sm:$0xff]
  %v7127 = vld [vmem:[#allocation4 + $0xe8] sm:$0xff]
  %v7128 = vld [vmem:[#allocation4 + $0xf0] sm:$0xff]
  %v7129 = vld [vmem:[#allocation4 + $0xf8] sm:$0xff]
  %v7130 = vld [vmem:[#allocation4 + $0x100] sm:$0xff]
  %v7131 = vld [vmem:[#allocation4 + $0x108] sm:$0xff]
  %v7132 = vld [vmem:[#allocation4 + $0x110] sm:$0xff]
  %v7133 = vld [vmem:[#allocation4 + $0x118] sm:$0xff]
  %v7134 = vld [vmem:[#allocation4 + $0x120] sm:$0xff]
  %v7135 = vld [vmem:[#allocation4 + $0x128] sm:$0xff]
  %v7136 = vld [vmem:[#allocation4 + $0x130] sm:$0xff]
  %v7137 = vld [vmem:[#allocation4 + $0x138] sm:$0xff]
  %v7138 = vld [vmem:[%s8] sm:$0xff]
  %v7139 = vld [vmem:[%s8 + $0x8] sm:$0xff]
  %v7140 = vld [vmem:[%s8 + $0x10] sm:$0xff]
  %v7141 = vld [vmem:[%s8 + $0x18] sm:$0xff]
  %v7142 = vld [vmem:[%s8 + $0x20] sm:$0xff]
  %v7143 = vld [vmem:[%s8 + $0x28] sm:$0xff]
  %v7144 = vld [vmem:[%s8 + $0x30] sm:$0xff]
  %v7145 = vld [vmem:[%s8 + $0x38] sm:$0xff]
  %v7146 = vld [vmem:[%s8 + $0x40] sm:$0xff]
  %v7147 = vld [vmem:[%s8 + $0x48] sm:$0xff]
  %v7148 = vld [vmem:[%s8 + $0x50] sm:$0xff]
  %v7149 = vld [vmem:[%s8 + $0x58] sm:$0xff]
  %v7150 = vld [vmem:[%s8 + $0x60] sm:$0xff]
  %v7151 = vld [vmem:[%s8 + $0x68] sm:$0xff]
  %v7152 = vld [vmem:[%s8 + $0x70] sm:$0xff]
  %v7153 = vld [vmem:[%s8 + $0x78] sm:$0xff]
  %7154 = vmatpush.msra.mxu0 %v7153
  %7155 = vmatpush.msra.mxu0 %v7152
  %7156 = vmatpush.msra.mxu0 %v7151
  %7157 = vmatpush.msra.mxu0 %v7150
  %7158 = vmatpush.msra.mxu0 %v7149
  %7159 = vmatpush.msra.mxu0 %v7148
  %7160 = vmatpush.msra.mxu0 %v7147
  %7161 = vmatpush.msra.mxu0 %v7146
  %7162 = vmatpush.msra.mxu0 %v7145
  %7163 = vmatpush.msra.mxu0 %v7144
  %7164 = vmatpush.msra.mxu0 %v7143
  %7165 = vmatpush.msra.mxu0 %v7142
  %7166 = vmatpush.msra.mxu0 %v7141
  %7167 = vmatpush.msra.mxu0 %v7140
  %7168 = vmatpush.msra.mxu0 %v7139
  %7169 = vmatpush.msra.mxu0 %v7138
  %7170 = vmatmul.f32.gmra.mxu0 %v7098
  %v7171 = vpop.f32.mrf.mxu0
  %v7172 = vadd.f32 0.0, %v7171
  %7173 = vmatmul.f32.gmra.mxu0 %v7099
  %v7174 = vpop.f32.mrf.mxu0
  %v7175 = vadd.f32 0.0, %v7174
  %7176 = vmatmul.f32.gmra.mxu0 %v7100
  %v7177 = vpop.f32.mrf.mxu0
  %v7178 = vadd.f32 0.0, %v7177
  %7179 = vmatmul.f32.gmra.mxu0 %v7101
  %v7180 = vpop.f32.mrf.mxu0
  %v7181 = vadd.f32 0.0, %v7180
  %7182 = vmatmul.f32.gmra.mxu0 %v7102
  %v7183 = vpop.f32.mrf.mxu0
  %v7184 = vadd.f32 0.0, %v7183
  %7185 = vmatmul.f32.gmra.mxu0 %v7103
  %v7186 = vpop.f32.mrf.mxu0
  %v7187 = vadd.f32 0.0, %v7186
  %7188 = vmatmul.f32.gmra.mxu0 %v7104
  %v7189 = vpop.f32.mrf.mxu0
  %v7190 = vadd.f32 0.0, %v7189
  %7191 = vmatmul.f32.gmra.mxu0 %v7105
  %v7192 = vpop.f32.mrf.mxu0
  %v7193 = vadd.f32 0.0, %v7192
  %7194 = vmatmul.f32.gmra.mxu0 %v7106
  %v7195 = vpop.f32.mrf.mxu0
  %v7196 = vadd.f32 0.0, %v7195
  %7197 = vmatmul.f32.gmra.mxu0 %v7107
  %v7198 = vpop.f32.mrf.mxu0
  %v7199 = vadd.f32 0.0, %v7198
  %7200 = vmatmul.f32.gmra.mxu0 %v7108
  %v7201 = vpop.f32.mrf.mxu0
  %v7202 = vadd.f32 0.0, %v7201
  %7203 = vmatmul.f32.gmra.mxu0 %v7109
  %v7204 = vpop.f32.mrf.mxu0
  %v7205 = vadd.f32 0.0, %v7204
  %7206 = vmatmul.f32.gmra.mxu0 %v7110
  %v7207 = vpop.f32.mrf.mxu0
  %v7208 = vadd.f32 0.0, %v7207
  %7209 = vmatmul.f32.gmra.mxu0 %v7111
  %v7210 = vpop.f32.mrf.mxu0
  %v7211 = vadd.f32 0.0, %v7210
  %7212 = vmatmul.f32.gmra.mxu0 %v7112
  %v7213 = vpop.f32.mrf.mxu0
  %v7214 = vadd.f32 0.0, %v7213
  %7215 = vmatmul.f32.gmra.mxu0 %v7113
  %v7216 = vpop.f32.mrf.mxu0
  %v7217 = vadd.f32 0.0, %v7216
  %7218 = vmatmul.f32.gmra.mxu0 %v7114
  %v7219 = vpop.f32.mrf.mxu0
  %v7220 = vadd.f32 0.0, %v7219
  %7221 = vmatmul.f32.gmra.mxu0 %v7115
  %v7222 = vpop.f32.mrf.mxu0
  %v7223 = vadd.f32 0.0, %v7222
  %7224 = vmatmul.f32.gmra.mxu0 %v7116
  %v7225 = vpop.f32.mrf.mxu0
  %v7226 = vadd.f32 0.0, %v7225
  %7227 = vmatmul.f32.gmra.mxu0 %v7117
  %v7228 = vpop.f32.mrf.mxu0
  %v7229 = vadd.f32 0.0, %v7228
  %7230 = vmatmul.f32.gmra.mxu0 %v7118
  %v7231 = vpop.f32.mrf.mxu0
  %v7232 = vadd.f32 0.0, %v7231
  %7233 = vmatmul.f32.gmra.mxu0 %v7119
  %v7234 = vpop.f32.mrf.mxu0
  %v7235 = vadd.f32 0.0, %v7234
  %7236 = vmatmul.f32.gmra.mxu0 %v7120
  %v7237 = vpop.f32.mrf.mxu0
  %v7238 = vadd.f32 0.0, %v7237
  %7239 = vmatmul.f32.gmra.mxu0 %v7121
  %v7240 = vpop.f32.mrf.mxu0
  %v7241 = vadd.f32 0.0, %v7240
  %7242 = vmatmul.f32.gmra.mxu0 %v7122
  %v7243 = vpop.f32.mrf.mxu0
  %v7244 = vadd.f32 0.0, %v7243
  %7245 = vmatmul.f32.gmra.mxu0 %v7123
  %v7246 = vpop.f32.mrf.mxu0
  %v7247 = vadd.f32 0.0, %v7246
  %7248 = vmatmul.f32.gmra.mxu0 %v7124
  %v7249 = vpop.f32.mrf.mxu0
  %v7250 = vadd.f32 0.0, %v7249
  %7251 = vmatmul.f32.gmra.mxu0 %v7125
  %v7252 = vpop.f32.mrf.mxu0
  %v7253 = vadd.f32 0.0, %v7252
  %7254 = vmatmul.f32.gmra.mxu0 %v7126
  %v7255 = vpop.f32.mrf.mxu0
  %v7256 = vadd.f32 0.0, %v7255
  %7257 = vmatmul.f32.gmra.mxu0 %v7127
  %v7258 = vpop.f32.mrf.mxu0
  %v7259 = vadd.f32 0.0, %v7258
  %7260 = vmatmul.f32.gmra.mxu0 %v7128
  %v7261 = vpop.f32.mrf.mxu0
  %v7262 = vadd.f32 0.0, %v7261
  %7263 = vmatmul.f32.gmra.mxu0 %v7129
  %v7264 = vpop.f32.mrf.mxu0
  %v7265 = vadd.f32 0.0, %v7264
  %7266 = vmatmul.f32.gmra.mxu0 %v7130
  %v7267 = vpop.f32.mrf.mxu0
  %v7268 = vadd.f32 0.0, %v7267
  %7269 = vmatmul.f32.gmra.mxu0 %v7131
  %v7270 = vpop.f32.mrf.mxu0
  %v7271 = vadd.f32 0.0, %v7270
  %7272 = vmatmul.f32.gmra.mxu0 %v7132
  %v7273 = vpop.f32.mrf.mxu0
  %v7274 = vadd.f32 0.0, %v7273
  %7275 = vmatmul.f32.gmra.mxu0 %v7133
  %v7276 = vpop.f32.mrf.mxu0
  %v7277 = vadd.f32 0.0, %v7276
  %7278 = vmatmul.f32.gmra.mxu0 %v7134
  %v7279 = vpop.f32.mrf.mxu0
  %v7280 = vadd.f32 0.0, %v7279
  %7281 = vmatmul.f32.gmra.mxu0 %v7135
  %v7282 = vpop.f32.mrf.mxu0
  %v7283 = vadd.f32 0.0, %v7282
  %7284 = vmatmul.f32.gmra.mxu0 %v7136
  %v7285 = vpop.f32.mrf.mxu0
  %v7286 = vadd.f32 0.0, %v7285
  %7287 = vmatmul.f32.gmra.mxu0 %v7137
  %v7288 = vpop.f32.mrf.mxu0
  %v7289 = vadd.f32 0.0, %v7288
  %7290 = vdwg.mxu0
  %7291 = vmatpush.msra.mxu0 %v7097
  %7292 = vmatpush.msra.mxu0 %v7096
  %7293 = vmatpush.msra.mxu0 %v7095
  %7294 = vmatpush.msra.mxu0 %v7094
  %7295 = vmatpush.msra.mxu0 %v7093
  %7296 = vmatpush.msra.mxu0 %v7092
  %7297 = vmatpush.msra.mxu0 %v7091
  %7298 = vmatpush.msra.mxu0 %v7090
  %7299 = vmatpush.msra.mxu0 %v7089
  %7300 = vmatpush.msra.mxu0 %v7088
  %7301 = vmatpush.msra.mxu0 %v7087
  %7302 = vmatpush.msra.mxu0 %v7086
  %7303 = vmatpush.msra.mxu0 %v7085
  %7304 = vmatpush.msra.mxu0 %v7084
  %7305 = vmatpush.msra.mxu0 %v7083
  %7306 = vmatpush.msra.mxu0 %v7082
  %7307 = vmatmul.f32.gmra.mxu0 %v7042
  %v7308 = vpop.f32.mrf.mxu0
  %v7309 = vadd.f32 %v7172, %v7308
  %7310 = vmatmul.f32.gmra.mxu0 %v7043
  %v7311 = vpop.f32.mrf.mxu0
  %v7312 = vadd.f32 %v7175, %v7311
  %7313 = vmatmul.f32.gmra.mxu0 %v7044
  %v7314 = vpop.f32.mrf.mxu0
  %v7315 = vadd.f32 %v7178, %v7314
  %7316 = vmatmul.f32.gmra.mxu0 %v7045
  %v7317 = vpop.f32.mrf.mxu0
  %v7318 = vadd.f32 %v7181, %v7317
  %7319 = vmatmul.f32.gmra.mxu0 %v7046
  %v7320 = vpop.f32.mrf.mxu0
  %v7321 = vadd.f32 %v7184, %v7320
  %7322 = vmatmul.f32.gmra.mxu0 %v7047
  %v7323 = vpop.f32.mrf.mxu0
  %v7324 = vadd.f32 %v7187, %v7323
  %7325 = vmatmul.f32.gmra.mxu0 %v7048
  %v7326 = vpop.f32.mrf.mxu0
  %v7327 = vadd.f32 %v7190, %v7326
  %7328 = vmatmul.f32.gmra.mxu0 %v7049
  %v7329 = vpop.f32.mrf.mxu0
  %v7330 = vadd.f32 %v7193, %v7329
  %7331 = vmatmul.f32.gmra.mxu0 %v7050
  %v7332 = vpop.f32.mrf.mxu0
  %v7333 = vadd.f32 %v7196, %v7332
  %7334 = vmatmul.f32.gmra.mxu0 %v7051
  %v7335 = vpop.f32.mrf.mxu0
  %v7336 = vadd.f32 %v7199, %v7335
  %7337 = vmatmul.f32.gmra.mxu0 %v7052
  %v7338 = vpop.f32.mrf.mxu0
  %v7339 = vadd.f32 %v7202, %v7338
  %7340 = vmatmul.f32.gmra.mxu0 %v7053
  %v7341 = vpop.f32.mrf.mxu0
  %v7342 = vadd.f32 %v7205, %v7341
  %7343 = vmatmul.f32.gmra.mxu0 %v7054
  %v7344 = vpop.f32.mrf.mxu0
  %v7345 = vadd.f32 %v7208, %v7344
  %7346 = vmatmul.f32.gmra.mxu0 %v7055
  %v7347 = vpop.f32.mrf.mxu0
  %v7348 = vadd.f32 %v7211, %v7347
  %7349 = vmatmul.f32.gmra.mxu0 %v7056
  %v7350 = vpop.f32.mrf.mxu0
  %v7351 = vadd.f32 %v7214, %v7350
  %7352 = vmatmul.f32.gmra.mxu0 %v7057
  %v7353 = vpop.f32.mrf.mxu0
  %v7354 = vadd.f32 %v7217, %v7353
  %7355 = vmatmul.f32.gmra.mxu0 %v7058
  %v7356 = vpop.f32.mrf.mxu0
  %v7357 = vadd.f32 %v7220, %v7356
  %7358 = vmatmul.f32.gmra.mxu0 %v7059
  %v7359 = vpop.f32.mrf.mxu0
  %v7360 = vadd.f32 %v7223, %v7359
  %7361 = vmatmul.f32.gmra.mxu0 %v7060
  %v7362 = vpop.f32.mrf.mxu0
  %v7363 = vadd.f32 %v7226, %v7362
  %7364 = vmatmul.f32.gmra.mxu0 %v7061
  %v7365 = vpop.f32.mrf.mxu0
  %v7366 = vadd.f32 %v7229, %v7365
  %7367 = vmatmul.f32.gmra.mxu0 %v7062
  %v7368 = vpop.f32.mrf.mxu0
  %v7369 = vadd.f32 %v7232, %v7368
  %7370 = vmatmul.f32.gmra.mxu0 %v7063
  %v7371 = vpop.f32.mrf.mxu0
  %v7372 = vadd.f32 %v7235, %v7371
  %7373 = vmatmul.f32.gmra.mxu0 %v7064
  %v7374 = vpop.f32.mrf.mxu0
  %v7375 = vadd.f32 %v7238, %v7374
  %7376 = vmatmul.f32.gmra.mxu0 %v7065
  %v7377 = vpop.f32.mrf.mxu0
  %v7378 = vadd.f32 %v7241, %v7377
  %7379 = vmatmul.f32.gmra.mxu0 %v7066
  %v7380 = vpop.f32.mrf.mxu0
  %v7381 = vadd.f32 %v7244, %v7380
  %7382 = vmatmul.f32.gmra.mxu0 %v7067
  %v7383 = vpop.f32.mrf.mxu0
  %v7384 = vadd.f32 %v7247, %v7383
  %7385 = vmatmul.f32.gmra.mxu0 %v7068
  %v7386 = vpop.f32.mrf.mxu0
  %v7387 = vadd.f32 %v7250, %v7386
  %7388 = vmatmul.f32.gmra.mxu0 %v7069
  %v7389 = vpop.f32.mrf.mxu0
  %v7390 = vadd.f32 %v7253, %v7389
  %7391 = vmatmul.f32.gmra.mxu0 %v7070
  %v7392 = vpop.f32.mrf.mxu0
  %v7393 = vadd.f32 %v7256, %v7392
  %7394 = vmatmul.f32.gmra.mxu0 %v7071
  %v7395 = vpop.f32.mrf.mxu0
  %v7396 = vadd.f32 %v7259, %v7395
  %7397 = vmatmul.f32.gmra.mxu0 %v7072
  %v7398 = vpop.f32.mrf.mxu0
  %v7399 = vadd.f32 %v7262, %v7398
  %7400 = vmatmul.f32.gmra.mxu0 %v7073
  %v7401 = vpop.f32.mrf.mxu0
  %v7402 = vadd.f32 %v7265, %v7401
  %7403 = vmatmul.f32.gmra.mxu0 %v7074
  %v7404 = vpop.f32.mrf.mxu0
  %v7405 = vadd.f32 %v7268, %v7404
  %7406 = vmatmul.f32.gmra.mxu0 %v7075
  %v7407 = vpop.f32.mrf.mxu0
  %v7408 = vadd.f32 %v7271, %v7407
  %7409 = vmatmul.f32.gmra.mxu0 %v7076
  %v7410 = vpop.f32.mrf.mxu0
  %v7411 = vadd.f32 %v7274, %v7410
  %7412 = vmatmul.f32.gmra.mxu0 %v7077
  %v7413 = vpop.f32.mrf.mxu0
  %v7414 = vadd.f32 %v7277, %v7413
  %7415 = vmatmul.f32.gmra.mxu0 %v7078
  %v7416 = vpop.f32.mrf.mxu0
  %v7417 = vadd.f32 %v7280, %v7416
  %7418 = vmatmul.f32.gmra.mxu0 %v7079
  %v7419 = vpop.f32.mrf.mxu0
  %v7420 = vadd.f32 %v7283, %v7419
  %7421 = vmatmul.f32.gmra.mxu0 %v7080
  %v7422 = vpop.f32.mrf.mxu0
  %v7423 = vadd.f32 %v7286, %v7422
  %7424 = vmatmul.f32.gmra.mxu0 %v7081
  %v7425 = vpop.f32.mrf.mxu0
  %v7426 = vadd.f32 %v7289, %v7425
  %7427 = vdwg.mxu0
  %7428 = vst [vmem:[%s9] sm:$0xff] %v7309
  %7429 = vst [vmem:[%s9 + $0x8] sm:$0xff] %v7312
  %7430 = vst [vmem:[%s9 + $0x10] sm:$0xff] %v7315
  %7431 = vst [vmem:[%s9 + $0x18] sm:$0xff] %v7318
  %7432 = vst [vmem:[%s9 + $0x20] sm:$0xff] %v7321
  %7433 = vst [vmem:[%s9 + $0x28] sm:$0xff] %v7324
  %7434 = vst [vmem:[%s9 + $0x30] sm:$0xff] %v7327
  %7435 = vst [vmem:[%s9 + $0x38] sm:$0xff] %v7330
  %7436 = vst [vmem:[%s9 + $0x40] sm:$0xff] %v7333
  %7437 = vst [vmem:[%s9 + $0x48] sm:$0xff] %v7336
  %7438 = vst [vmem:[%s9 + $0x50] sm:$0xff] %v7339
  %7439 = vst [vmem:[%s9 + $0x58] sm:$0xff] %v7342
  %7440 = vst [vmem:[%s9 + $0x60] sm:$0xff] %v7345
  %7441 = vst [vmem:[%s9 + $0x68] sm:$0xff] %v7348
  %7442 = vst [vmem:[%s9 + $0x70] sm:$0xff] %v7351
  %7443 = vst [vmem:[%s9 + $0x78] sm:$0xff] %v7354
  %7444 = vst [vmem:[%s9 + $0x80] sm:$0xff] %v7357
  %7445 = vst [vmem:[%s9 + $0x88] sm:$0xff] %v7360
  %7446 = vst [vmem:[%s9 + $0x90] sm:$0xff] %v7363
  %7447 = vst [vmem:[%s9 + $0x98] sm:$0xff] %v7366
  %7448 = vst [vmem:[%s9 + $0xa0] sm:$0xff] %v7369
  %7449 = vst [vmem:[%s9 + $0xa8] sm:$0xff] %v7372
  %7450 = vst [vmem:[%s9 + $0xb0] sm:$0xff] %v7375
  %7451 = vst [vmem:[%s9 + $0xb8] sm:$0xff] %v7378
  %7452 = vst [vmem:[%s9 + $0xc0] sm:$0xff] %v7381
  %7453 = vst [vmem:[%s9 + $0xc8] sm:$0xff] %v7384
  %7454 = vst [vmem:[%s9 + $0xd0] sm:$0xff] %v7387
  %7455 = vst [vmem:[%s9 + $0xd8] sm:$0xff] %v7390
  %7456 = vst [vmem:[%s9 + $0xe0] sm:$0xff] %v7393
  %7457 = vst [vmem:[%s9 + $0xe8] sm:$0xff] %v7396
  %7458 = vst [vmem:[%s9 + $0xf0] sm:$0xff] %v7399
  %7459 = vst [vmem:[%s9 + $0xf8] sm:$0xff] %v7402
  %7460 = vst [vmem:[%s9 + $0x100] sm:$0xff] %v7405
  %7461 = vst [vmem:[%s9 + $0x108] sm:$0xff] %v7408
  %7462 = vst [vmem:[%s9 + $0x110] sm:$0xff] %v7411
  %7463 = vst [vmem:[%s9 + $0x118] sm:$0xff] %v7414
  %7464 = vst [vmem:[%s9 + $0x120] sm:$0xff] %v7417
  %7465 = vst [vmem:[%s9 + $0x128] sm:$0xff] %v7420
  %7466 = vst [vmem:[%s9 + $0x130] sm:$0xff] %v7423
  %7467 = vst [vmem:[%s9 + $0x138] sm:$0xff] %v7426
  // Predicated region
  $region42: #{_deep_smm_forward_impl.1} parent=0 // pred_check
    _
  $region43: #{_deep_smm_forward_impl.1} parent=0 // pred_check_branch
    %7469 = sbr.rel (0) target = $region45
  $region44: #{_deep_smm_forward_impl.1} parent=0 // pred_region
    _
  $region45: #{_deep_smm_forward_impl.1} parent=0 // pred_fallthru
    _
  // Predicated region
  $region46: #{_deep_smm_forward_impl.1} parent=0 // pred_check
    _
  $region47: #{_deep_smm_forward_impl.1} parent=0 // pred_check_branch
    %7471 = sbr.rel (0) target = $region49
  $region48: #{_deep_smm_forward_impl.1} parent=0 // pred_region
    _
  $region49: #{_deep_smm_forward_impl.1} parent=0 // pred_fallthru
    _

</llo_original>
